<compile_context>
chip_gen: v6e
topology: v6e:2x2x1
jax: 0.10.0
libtpu: 0.0.40
codegen_flags: <defaults>
</compile_context>

<pallas_src>
import functools

import jax
import jax.numpy as jnp
from jax import lax
from jax.experimental import pallas as pl
from jax.experimental.pallas import tpu as pltpu

EPS = 1e-9        # from the reference module
BN_EPS = 1e-5     # nn.BatchNorm2d default eps
Z_SHARED = 18


# ----------------------------------------------------------------------------
# small helpers
# ----------------------------------------------------------------------------
def _round_up(x, m):
    return ((x + m - 1) // m) * m


def _row_tile(M, row_bytes, budget=8 * 1024 * 1024):
    """Largest row tile whose per-step footprint fits `budget`.

    Prefers a single full-extent block (no padding, no grid overhead);
    otherwise a power-of-two multiple of 8 — callers zero-pad M up to a
    multiple of the tile.
    """
    if M * row_bytes <= budget:
        return M
    tm = 2048
    while tm > 8 and tm * row_bytes > budget:
        tm //= 2
    return tm


def _fused_conv_fits(M, K, N, budget=12 * 1024 * 1024):
    """Can conv+BN+ReLU run as one grid=(1,) kernel within a VMEM budget?"""
    need = (2 * M * K * 2      # patches, bf16, double-buffered
            + 2 * K * N * 2    # weight, bf16, double-buffered
            + 2 * M * N * 2    # bf16 output, double-buffered
            + M * N * 4)       # f32 pre-BN activation live in VMEM/vregs
    return need <= budget


# ----------------------------------------------------------------------------
# Pallas kernels
# ----------------------------------------------------------------------------
def _mm_relu_kernel(a_ref, b_ref, o_ref):
    """relu(A @ B); single-K block, fused epilogue (conv1)."""
    y = jnp.dot(a_ref[...], b_ref[...], preferred_element_type=jnp.float32)
    o_ref[...] = jnp.maximum(y, 0.0).astype(o_ref.dtype)


def _conv_bn_relu_fused_kernel(a_ref, b_ref, g_ref, beta_ref, o_ref, *, n):
    """One-shot conv matmul + train-mode BatchNorm + ReLU (grid=(1,)).

    The f32 activation never leaves VMEM; variance is computed centered.
    """
    y = jnp.dot(a_ref[...], b_ref[...], preferred_element_type=jnp.float32)
    inv_n = 1.0 / n
    mean = jnp.sum(y, axis=0, keepdims=True) * inv_n
    yc = y - mean
    var = jnp.sum(yc * yc, axis=0, keepdims=True) * inv_n     # biased (training)
    scale = g_ref[...] * lax.rsqrt(var + BN_EPS)              # rsqrt -> EUP
    o_ref[...] = jnp.maximum(yc * scale + beta_ref[...], 0.0).astype(o_ref.dtype)


def _mm_stats_kernel(a_ref, b_ref, y_ref, sum_ref, sq_ref):
    """Large-batch pass 1: A @ B (bf16 out) + per-column sum / sum-of-squares."""
    @pl.when(pl.program_id(0) == 0)
    def _():
        sum_ref[...] = jnp.zeros_like(sum_ref)
        sq_ref[...] = jnp.zeros_like(sq_ref)

    y = jnp.dot(a_ref[...], b_ref[...], preferred_element_type=jnp.float32)
    y_ref[...] = y.astype(y_ref.dtype)           # bf16: halves the HBM stream
    sum_ref[...] += jnp.sum(y, axis=0, keepdims=True)
    sq_ref[...] += jnp.sum(y * y, axis=0, keepdims=True)


def _bn_affine_relu_kernel(y_ref, s_ref, sq_ref, g_ref, beta_ref, o_ref, *, n):
    """Large-batch pass 2: BN scale/shift computed in-kernel, then affine+ReLU."""
    inv_n = 1.0 / n
    mean = s_ref[...] * inv_n
    var = jnp.maximum(sq_ref[...] * inv_n - mean * mean, 0.0)
    scale = g_ref[...] * lax.rsqrt(var + BN_EPS)
    shift = beta_ref[...] - mean * scale
    o_ref[...] = jnp.maximum(
        y_ref[...].astype(jnp.float32) * scale + shift, 0.0).astype(o_ref.dtype)


def _fc_fused_kernel(h_ref, w1_ref, b1_ref, w2_ref, b2_ref, o_ref, acc_ref):
    """fc1 (K-tiled, f32 accumulator) + bias + ReLU + fc2 + bias, fully fused."""
    k = pl.program_id(0)

    @pl.when(k == 0)
    def _():
        acc_ref[...] = jnp.zeros_like(acc_ref)

    acc_ref[...] += jnp.dot(h_ref[...], w1_ref[...],
                            preferred_element_type=jnp.float32)

    @pl.when(k == pl.num_programs(0) - 1)
    def _():
        a1 = jnp.maximum(acc_ref[...] + b1_ref[...], 0.0)
        # TODO(synk): nn.Dropout(p=0.1) treated as eval-mode identity (no RNG mask).
        a2 = jnp.dot(a1.astype(w2_ref.dtype), w2_ref[...],
                     preferred_element_type=jnp.float32)
        o_ref[...] = a2 + b2_ref[...]


# ----------------------------------------------------------------------------
# Pallas wrappers
# ----------------------------------------------------------------------------
def matmul_relu(a, b):
    """relu(a @ b); bf16 MXU operands, bf16 output; K and N single blocks."""
    M, K = a.shape
    N = b.shape[1]
    a = a.astype(jnp.bfloat16)
    b = b.astype(jnp.bfloat16)
    row_bytes = 2 * 2 * K + 2 * 2 * N            # dbl-buffered bf16 in + out row
    tm = _row_tile(M, row_bytes)
    Mp = _round_up(M, tm)
    if Mp != M:
        a = jnp.pad(a, ((0, Mp - M), (0, 0)))
    out = pl.pallas_call(
        _mm_relu_kernel,
        out_shape=jax.ShapeDtypeStruct((Mp, N), jnp.bfloat16),
        grid_spec=pltpu.PrefetchScalarGridSpec(
            num_scalar_prefetch=0,
            grid=(Mp // tm,),
            in_specs=[pl.BlockSpec((tm, K), lambda i: (i, 0)),
                      pl.BlockSpec((K, N), lambda i: (0, 0))],
            out_specs=pl.BlockSpec((tm, N), lambda i: (i, 0))),
        compiler_params=pltpu.CompilerParams(
            dimension_semantics=("parallel",)),
    )(a, b)
    return out[:M] if Mp != M else out


def conv_bn_relu_fused(patches, w, gamma, beta):
    """Conv matmul + train-stats BN + ReLU in ONE kernel (grid=(1,))."""
    M, K = patches.shape
    N = w.shape[1]
    return pl.pallas_call(
        functools.partial(_conv_bn_relu_fused_kernel, n=float(M)),
        out_shape=jax.ShapeDtypeStruct((M, N), jnp.bfloat16),
        grid_spec=pltpu.PrefetchScalarGridSpec(
            num_scalar_prefetch=0,
            grid=(1,),
            in_specs=[pl.BlockSpec((M, K), lambda i: (0, 0)),
                      pl.BlockSpec((K, N), lambda i: (0, 0)),
                      pl.BlockSpec((1, N), lambda i: (0, 0)),
                      pl.BlockSpec((1, N), lambda i: (0, 0))],
            out_specs=pl.BlockSpec((M, N), lambda i: (0, 0))),
        compiler_params=pltpu.CompilerParams(
            dimension_semantics=("arbitrary",),
            vmem_limit_bytes=32 * 1024 * 1024),
    )(patches.astype(jnp.bfloat16), w.astype(jnp.bfloat16),
      gamma.reshape(1, -1).astype(jnp.float32),
      beta.reshape(1, -1).astype(jnp.float32))


def conv_bn_relu_twopass(patches, w, gamma, beta):
    """Large-batch fallback: matmul+stats (bf16 y), then in-kernel BN+ReLU."""
    M, K = patches.shape
    N = w.shape[1]
    a = patches.astype(jnp.bfloat16)
    b = w.astype(jnp.bfloat16)
    row_bytes = 2 * 2 * K + 2 * 2 * N
    tm = _row_tile(M, row_bytes)
    Mp = _round_up(M, tm)
    if Mp != M:
        a = jnp.pad(a, ((0, Mp - M), (0, 0)))     # zero rows: no effect on stats
    n_steps = Mp // tm

    y, s, sq = pl.pallas_call(
        _mm_stats_kernel,
        out_shape=(jax.ShapeDtypeStruct((Mp, N), jnp.bfloat16),
                   jax.ShapeDtypeStruct((1, N), jnp.float32),
                   jax.ShapeDtypeStruct((1, N), jnp.float32)),
        grid_spec=pltpu.PrefetchScalarGridSpec(
            num_scalar_prefetch=0,
            grid=(n_steps,),
            in_specs=[pl.BlockSpec((tm, K), lambda i: (i, 0)),
                      pl.BlockSpec((K, N), lambda i: (0, 0))],
            out_specs=(pl.BlockSpec((tm, N), lambda i: (i, 0)),
                       pl.BlockSpec((1, N), lambda i: (0, 0)),
                       pl.BlockSpec((1, N), lambda i: (0, 0)))),
        compiler_params=pltpu.CompilerParams(
            dimension_semantics=("arbitrary",)),   # stats accumulate over rows
    )(a, b)

    out = pl.pallas_call(
        functools.partial(_bn_affine_relu_kernel, n=float(M)),
        out_shape=jax.ShapeDtypeStruct((Mp, N), jnp.bfloat16),
        grid_spec=pltpu.PrefetchScalarGridSpec(
            num_scalar_prefetch=0,
            grid=(n_steps,),
            in_specs=[pl.BlockSpec((tm, N), lambda i: (i, 0)),
                      pl.BlockSpec((1, N), lambda i: (0, 0)),
                      pl.BlockSpec((1, N), lambda i: (0, 0)),
                      pl.BlockSpec((1, N), lambda i: (0, 0)),
                      pl.BlockSpec((1, N), lambda i: (0, 0))],
            out_specs=pl.BlockSpec((tm, N), lambda i: (i, 0))),
        compiler_params=pltpu.CompilerParams(
            dimension_semantics=("parallel",)),
    )(y, s, sq, gamma.reshape(1, -1).astype(jnp.float32),
      beta.reshape(1, -1).astype(jnp.float32))
    return out[:M] if Mp != M else out


def fc_fused(h, w1, b1, w2, b2):
    """(B,6400) -> fc1+ReLU -> fc2, one pallas_call; fc1 weight streamed over K."""
    B, K1 = h.shape
    N1 = w1.shape[1]
    N2 = w2.shape[1]
    Mp = max(8, _round_up(B, 8))                   # pad batch rows to a sublane tile
    N2p = _round_up(N2, 128)                       # lane-dense output tile
    tk = 1280 if K1 % 1280 == 0 else K1            # 6400 = 5 x 1280 (mult. of 128)
    nk = K1 // tk

    h_p = jnp.pad(h.astype(jnp.bfloat16), ((0, Mp - B), (0, 0)))
    w2_p = jnp.pad(w2.astype(jnp.bfloat16), ((0, 0), (0, N2p - N2)))
    b2_p = jnp.pad(b2.reshape(1, -1).astype(jnp.float32),
                   ((0, 0), (0, N2p - N2)))

    out = pl.pallas_call(
        _fc_fused_kernel,
        out_shape=jax.ShapeDtypeStruct((Mp, N2p), jnp.float32),
        grid_spec=pltpu.PrefetchScalarGridSpec(
            num_scalar_prefetch=0,
            grid=(nk,),
            in_specs=[pl.BlockSpec((Mp, tk), lambda k: (0, k)),
                      pl.BlockSpec((tk, N1), lambda k: (k, 0)),
                      pl.BlockSpec((1, N1), lambda k: (0, 0)),
                      pl.BlockSpec((N1, N2p), lambda k: (0, 0)),
                      pl.BlockSpec((1, N2p), lambda k: (0, 0))],
            out_specs=pl.BlockSpec((Mp, N2p), lambda k: (0, 0)),
            scratch_shapes=[pltpu.VMEM((Mp, N1), jnp.float32)]),
        compiler_params=pltpu.CompilerParams(
            dimension_semantics=("arbitrary",),
            vmem_limit_bytes=32 * 1024 * 1024),
    )(h_p, w1.astype(jnp.bfloat16), b1.reshape(1, -1).astype(jnp.float32),
      w2_p, b2_p)
    return out[:B, :N2]


# ----------------------------------------------------------------------------
# Model glue: im2col conv, BN (train-mode batch stats), FC stack, PoE
# ----------------------------------------------------------------------------
def _im2col(x, k, stride, pad):
    """x: NHWC -> (B*Ho*Wo, k*k*C) patches + output spatial shape."""
    # TODO(synk): patches are still materialized in HBM by this XLA glue;
    #             moving the strided-window gather into the Pallas kernels
    #             (Element index_map / manual DMA) is future work.
    B, H, W, C = x.shape
    if pad:
        x = jnp.pad(x, ((0, 0), (pad, pad), (pad, pad), (0, 0)))
    Hp, Wp = H + 2 * pad, W + 2 * pad
    Ho = (Hp - k) // stride + 1
    Wo = (Wp - k) // stride + 1
    cols = []
    for di in range(k):
        for dj in range(k):
            cols.append(x[:, di:di + (Ho - 1) * stride + 1:stride,
                          dj:dj + (Wo - 1) * stride + 1:stride, :])
    patches = jnp.stack(cols, axis=3)              # (B, Ho, Wo, k*k, C)
    return patches.reshape(B * Ho * Wo, k * k * C), (B, Ho, Wo)


def _conv_block(x, w, gamma, beta, stride, pad):
    """Conv2d(bias=False) [+ BatchNorm2d(train-mode batch stats)] + ReLU."""
    Cout, Cin, k, _ = w.shape
    patches, (B, Ho, Wo) = _im2col(x, k, stride, pad)
    M, K = patches.shape
    # PyTorch weight (Cout, Cin, kh, kw) -> (kh*kw*Cin, Cout) matching patches.
    w2 = jnp.transpose(w, (2, 3, 1, 0)).reshape(K, Cout)

    if gamma is None:
        # conv1 (no BN): Cout=32 would force masked lane-sparse stores. Pack
        # P = 128//Cout output pixels per 128-lane row via a block-diagonal
        # weight; the reshape back to (M, Cout) is a free row-major identity.
        P = 128 // Cout if (Cout < 128 and 128 % Cout == 0) else 1
        if P > 1 and M % P == 0:
            a = patches.reshape(M // P, P * K)
            w_bd = jnp.kron(jnp.eye(P, dtype=w2.dtype), w2)   # (P*K, 128)
            y = matmul_relu(a, w_bd).reshape(M, Cout)
        else:
            y = matmul_relu(patches, w2)
    else:
        if _fused_conv_fits(M, K, Cout):
            y = conv_bn_relu_fused(patches, w2, gamma, beta)   # 1 kernel, no HBM y
        else:
            y = conv_bn_relu_twopass(patches, w2, gamma, beta)
    return y.reshape(B, Ho, Wo, Cout)


def init_params(seed, zShared_dim=Z_SHARED):
    key = jax.random.PRNGKey(seed)
    ks = jax.random.split(key, 6)

    def kaiming_conv(k, cout, cin, ksz):
        fan_in = cin * ksz * ksz
        return jax.random.normal(k, (cout, cin, ksz, ksz),
                                 jnp.float32) * jnp.sqrt(2.0 / fan_in)

    def kaiming_linear(k, fin, fout):
        return jax.random.normal(k, (fin, fout),
                                 jnp.float32) * jnp.sqrt(2.0 / fin)

    return {
        'conv1_w': kaiming_conv(ks[0], 32, 3, 4),
        'conv2_w': kaiming_conv(ks[1], 64, 32, 4),
        'bn2_g': jnp.ones(64, jnp.float32), 'bn2_b': jnp.zeros(64, jnp.float32),
        'conv3_w': kaiming_conv(ks[2], 128, 64, 4),
        'bn3_g': jnp.ones(128, jnp.float32), 'bn3_b': jnp.zeros(128, jnp.float32),
        'conv4_w': kaiming_conv(ks[3], 256, 128, 4),
        'bn4_g': jnp.ones(256, jnp.float32), 'bn4_b': jnp.zeros(256, jnp.float32),
        'fc1_w': kaiming_linear(ks[4], 256 * 5 * 5, 512),
        'fc1_b': jnp.zeros(512, jnp.float32),
        'fc2_w': kaiming_linear(ks[5], 512, 2 * zShared_dim),
        'fc2_b': jnp.zeros(2 * zShared_dim, jnp.float32),
    }


def encoder_a_forward(params, x_nchw, zShared_dim=Z_SHARED):
    """Returns (mu_poe, std_poe) of the 'sharedA' Normal, shapes (1, B, 18)."""
    x = jnp.transpose(x_nchw, (0, 2, 3, 1)).astype(jnp.float32)   # NCHW -> NHWC
    B = x.shape[0]

    h = _conv_block(x, params['conv1_w'], None, None, stride=2, pad=1)
    h = _conv_block(h, params['conv2_w'], params['bn2_g'], params['bn2_b'], 2, 1)
    h = _conv_block(h, params['conv3_w'], params['bn3_g'], params['bn3_b'], 2, 1)
    h = _conv_block(h, params['conv4_w'], params['bn4_g'], params['bn4_b'], 1, 0)
    # h: (B, 5, 5, 256). Flatten in PyTorch NCHW order: view(B, 256*5*5).
    h_flat = jnp.transpose(h, (0, 3, 1, 2)).reshape(B, -1)

    # fc: Linear(6400,512) + ReLU + Dropout(0.1, eval) + Linear(512, 36), fused.
    a2 = fc_fused(h_flat, params['fc1_w'], params['fc1_b'],
                  params['fc2_w'], params['fc2_b'])

    stats = a2[None, :, :].astype(jnp.float32)      # unsqueeze(0): (1, B, 36)
    mu = stats[:, :, :zShared_dim]
    logvar = stats[:, :, zShared_dim:]
    std = jnp.sqrt(jnp.exp(logvar) + EPS)

    # product-of-experts with a unit-Gaussian prior (probtorch.util.apply_poe)
    T = 1.0 / (std * std)
    var_poe = 1.0 / (1.0 + T)
    mu_poe = mu * T * var_poe
    std_poe = jnp.sqrt(var_poe)
    # TODO(synk): probtorch.Trace / q.normal sampling has no Pallas equivalent;
    #             the Normal's parameters (mu_poe, std_poe) are returned instead.
    return mu_poe, std_poe


# ----------------------------------------------------------------------------
if __name__ == "__main__":
    # The FC layer requires 256*5*5 features, which forces a 64x64 input.
    key = jax.random.PRNGKey(0)
    x = jax.random.normal(key, (2, 3, 64, 64), jnp.float32)   # NCHW like PyTorch
    params = init_params(seed=0)

    mu_poe, std_poe = jax.jit(encoder_a_forward)(params, x)
    jax.block_until_ready((mu_poe, std_poe))

    assert mu_poe.shape == (1, 2, Z_SHARED)
    assert std_poe.shape == (1, 2, Z_SHARED)
    assert bool(jnp.all(jnp.isfinite(mu_poe))) and bool(jnp.all(std_poe > 0))
    print("KERNEL_OK")
</pallas_src>

<mosaic_0001>
module attributes {stable_mosaic.version = 11 : i64} {
  func.func @_mm_relu_kernel(%arg0: i32, %arg1: memref<512x192xbf16, #tpu.memory_space<vmem>>, %arg2: memref<192x128xbf16, #tpu.memory_space<vmem>>, %arg3: memref<512x128xbf16, #tpu.memory_space<vmem>>) attributes {dimension_semantics = [#tpu.dimension_semantics<parallel>], iteration_bounds = array<i64: 1>, scalar_prefetch = 0 : i64, scratch_operands = 0 : i64, tpu.core_type = #tpu.core_type<tc>, window_params = [{transform_indices = @transform_0, window_bounds = array<i64: 512, 192>}, {pipeline_mode = #tpu.pipeline_mode<synchronous>, transform_indices = @transform_1, window_bounds = array<i64: 192, 128>}, {transform_indices = @transform_2, window_bounds = array<i64: 512, 128>}]} {
    %c0 = arith.constant 0 : index
    %c0_0 = arith.constant 0 : index
    %0 = vector.load %arg1[%c0, %c0_0] : memref<512x192xbf16, #tpu.memory_space<vmem>>, vector<512x192xbf16>
    %c0_1 = arith.constant 0 : index
    %c0_2 = arith.constant 0 : index
    %1 = vector.load %arg2[%c0_1, %c0_2] : memref<192x128xbf16, #tpu.memory_space<vmem>>, vector<192x128xbf16>
    %cst = arith.constant dense<0.000000e+00> : vector<512x128xf32>
    %2 = tpu.matmul %0, %1, %cst {dimension_numbers = #tpu.dot_dimension_numbers<[1], [0], [0], [1], [0, 0, 1, 1], [], []>} : vector<512x192xbf16>, vector<192x128xbf16>, vector<512x128xf32> -> vector<512x128xf32>
    %cst_3 = arith.constant 0.000000e+00 : f32
    %3 = vector.broadcast %cst_3 : f32 to vector<512x128xf32>
    %4 = arith.maximumf %2, %3 : vector<512x128xf32>
    %5 = arith.truncf %4 : vector<512x128xf32> to vector<512x128xbf16>
    %c0_4 = arith.constant 0 : index
    %c0_5 = arith.constant 0 : index
    %6 = vector.load %arg3[%c0_4, %c0_5] : memref<512x128xbf16, #tpu.memory_space<vmem>>, vector<512x128xbf16>
    tpu.vector_store %arg3[%c0_4, %c0_5], %5 {strides = array<i32>} : memref<512x128xbf16, #tpu.memory_space<vmem>>, vector<512x128xbf16>,
    return
  }
  func.func @transform_0(%arg0: i32) -> (i32, i32) {
    %c0_i32 = arith.constant 0 : i32
    %c0_i32_0 = arith.constant 0 : i32
    return %arg0, %c0_i32 : i32, i32
  }
  func.func @transform_1(%arg0: i32) -> (i32, i32) {
    %c0_i32 = arith.constant 0 : i32
    %c0_i32_0 = arith.constant 0 : i32
    %c0_i32_1 = arith.constant 0 : i32
    return %c0_i32, %c0_i32_0 : i32, i32
  }
  func.func @transform_2(%arg0: i32) -> (i32, i32) {
    %c0_i32 = arith.constant 0 : i32
    %c0_i32_0 = arith.constant 0 : i32
    return %arg0, %c0_i32 : i32, i32
  }
}

module attributes {stable_mosaic.version = 11 : i64} {
  func.func @_conv_bn_relu_fused_kernel(%arg0: i32, %arg1: memref<512x512xbf16, #tpu.memory_space<vmem>>, %arg2: memref<512x64xbf16, #tpu.memory_space<vmem>>, %arg3: memref<1x64xf32, #tpu.memory_space<vmem>>, %arg4: memref<1x64xf32, #tpu.memory_space<vmem>>, %arg5: memref<512x64xbf16, #tpu.memory_space<vmem>>) attributes {dimension_semantics = [#tpu.dimension_semantics<arbitrary>], iteration_bounds = array<i64: 1>, scalar_prefetch = 0 : i64, scratch_operands = 0 : i64, tpu.core_type = #tpu.core_type<tc>, window_params = [{pipeline_mode = #tpu.pipeline_mode<synchronous>, transform_indices = @transform_0, window_bounds = array<i64: 512, 512>}, {pipeline_mode = #tpu.pipeline_mode<synchronous>, transform_indices = @transform_1, window_bounds = array<i64: 512, 64>}, {pipeline_mode = #tpu.pipeline_mode<synchronous>, transform_indices = @transform_2, window_bounds = array<i64: 1, 64>}, {pipeline_mode = #tpu.pipeline_mode<synchronous>, transform_indices = @transform_3, window_bounds = array<i64: 1, 64>}, {pipeline_mode = #tpu.pipeline_mode<synchronous>, transform_indices = @transform_4, window_bounds = array<i64: 512, 64>}]} {
    %c0 = arith.constant 0 : index
    %c0_0 = arith.constant 0 : index
    %0 = vector.load %arg1[%c0, %c0_0] : memref<512x512xbf16, #tpu.memory_space<vmem>>, vector<512x512xbf16>
    %c0_1 = arith.constant 0 : index
    %c0_2 = arith.constant 0 : index
    %1 = vector.load %arg2[%c0_1, %c0_2] : memref<512x64xbf16, #tpu.memory_space<vmem>>, vector<512x64xbf16>
    %cst = arith.constant dense<0.000000e+00> : vector<512x64xf32>
    %2 = tpu.matmul %0, %1, %cst {dimension_numbers = #tpu.dot_dimension_numbers<[1], [0], [0], [1], [0, 0, 1, 1], [], []>} : vector<512x512xbf16>, vector<512x64xbf16>, vector<512x64xf32> -> vector<512x64xf32>
    %cst_3 = arith.constant dense<0.000000e+00> : vector<64xf32>
    %3 = vector.multi_reduction <add>, %2, %cst_3 [0] : vector<512x64xf32> to vector<64xf32>
    %4 = vector.shape_cast %3 : vector<64xf32> to vector<1x64xf32>
    %cst_4 = arith.constant 0.001953125 : f32
    %5 = vector.broadcast %cst_4 : f32 to vector<1x64xf32>
    %6 = arith.mulf %4, %5 : vector<1x64xf32>
    %7 = vector.broadcast %6 : vector<1x64xf32> to vector<512x64xf32>
    %8 = arith.subf %2, %7 : vector<512x64xf32>
    %9 = arith.mulf %8, %8 : vector<512x64xf32>
    %cst_5 = arith.constant dense<0.000000e+00> : vector<64xf32>
    %10 = vector.multi_reduction <add>, %9, %cst_5 [0] : vector<512x64xf32> to vector<64xf32>
    %11 = vector.shape_cast %10 : vector<64xf32> to vector<1x64xf32>
    %cst_6 = arith.constant 0.001953125 : f32
    %12 = vector.broadcast %cst_6 : f32 to vector<1x64xf32>
    %13 = arith.mulf %11, %12 : vector<1x64xf32>
    %c0_7 = arith.constant 0 : index
    %c0_8 = arith.constant 0 : index
    %14 = vector.load %arg3[%c0_7, %c0_8] : memref<1x64xf32, #tpu.memory_space<vmem>>, vector<1x64xf32>
    %cst_9 = arith.constant 9.99999974E-6 : f32
    %15 = vector.broadcast %cst_9 : f32 to vector<1x64xf32>
    %16 = arith.addf %13, %15 : vector<1x64xf32>
    %17 = math.rsqrt %16 : vector<1x64xf32>
    %18 = arith.mulf %14, %17 : vector<1x64xf32>
    %19 = vector.broadcast %18 : vector<1x64xf32> to vector<512x64xf32>
    %20 = arith.mulf %8, %19 : vector<512x64xf32>
    %c0_10 = arith.constant 0 : index
    %c0_11 = arith.constant 0 : index
    %21 = vector.load %arg4[%c0_10, %c0_11] : memref<1x64xf32, #tpu.memory_space<vmem>>, vector<1x64xf32>
    %22 = vector.broadcast %21 : vector<1x64xf32> to vector<512x64xf32>
    %23 = arith.addf %20, %22 : vector<512x64xf32>
    %cst_12 = arith.constant 0.000000e+00 : f32
    %24 = vector.broadcast %cst_12 : f32 to vector<512x64xf32>
    %25 = arith.maximumf %23, %24 : vector<512x64xf32>
    %26 = arith.truncf %25 : vector<512x64xf32> to vector<512x64xbf16>
    %c0_13 = arith.constant 0 : index
    %c0_14 = arith.constant 0 : index
    %27 = vector.load %arg5[%c0_13, %c0_14] : memref<512x64xbf16, #tpu.memory_space<vmem>>, vector<512x64xbf16>
    tpu.vector_store %arg5[%c0_13, %c0_14], %26 {strides = array<i32>} : memref<512x64xbf16, #tpu.memory_space<vmem>>, vector<512x64xbf16>,
    return
  }
  func.func @transform_0(%arg0: i32) -> (i32, i32) {
    %c0_i32 = arith.constant 0 : i32
    %c0_i32_0 = arith.constant 0 : i32
    %c0_i32_1 = arith.constant 0 : i32
    return %c0_i32, %c0_i32_0 : i32, i32
  }
  func.func @transform_1(%arg0: i32) -> (i32, i32) {
    %c0_i32 = arith.constant 0 : i32
    %c0_i32_0 = arith.constant 0 : i32
    %c0_i32_1 = arith.constant 0 : i32
    return %c0_i32, %c0_i32_0 : i32, i32
  }
  func.func @transform_2(%arg0: i32) -> (i32, i32) {
    %c0_i32 = arith.constant 0 : i32
    %c0_i32_0 = arith.constant 0 : i32
    %c0_i32_1 = arith.constant 0 : i32
    return %c0_i32, %c0_i32_0 : i32, i32
  }
  func.func @transform_3(%arg0: i32) -> (i32, i32) {
    %c0_i32 = arith.constant 0 : i32
    %c0_i32_0 = arith.constant 0 : i32
    %c0_i32_1 = arith.constant 0 : i32
    return %c0_i32, %c0_i32_0 : i32, i32
  }
  func.func @transform_4(%arg0: i32) -> (i32, i32) {
    %c0_i32 = arith.constant 0 : i32
    %c0_i32_0 = arith.constant 0 : i32
    %c0_i32_1 = arith.constant 0 : i32
    return %c0_i32, %c0_i32_0 : i32, i32
  }
}

module attributes {stable_mosaic.version = 11 : i64} {
  func.func @_conv_bn_relu_fused_kernel(%arg0: i32, %arg1: memref<128x1024xbf16, #tpu.memory_space<vmem>>, %arg2: memref<1024x128xbf16, #tpu.memory_space<vmem>>, %arg3: memref<1x128xf32, #tpu.memory_space<vmem>>, %arg4: memref<1x128xf32, #tpu.memory_space<vmem>>, %arg5: memref<128x128xbf16, #tpu.memory_space<vmem>>) attributes {dimension_semantics = [#tpu.dimension_semantics<arbitrary>], iteration_bounds = array<i64: 1>, scalar_prefetch = 0 : i64, scratch_operands = 0 : i64, tpu.core_type = #tpu.core_type<tc>, window_params = [{pipeline_mode = #tpu.pipeline_mode<synchronous>, transform_indices = @transform_0, window_bounds = array<i64: 128, 1024>}, {pipeline_mode = #tpu.pipeline_mode<synchronous>, transform_indices = @transform_1, window_bounds = array<i64: 1024, 128>}, {pipeline_mode = #tpu.pipeline_mode<synchronous>, transform_indices = @transform_2, window_bounds = array<i64: 1, 128>}, {pipeline_mode = #tpu.pipeline_mode<synchronous>, transform_indices = @transform_3, window_bounds = array<i64: 1, 128>}, {pipeline_mode = #tpu.pipeline_mode<synchronous>, transform_indices = @transform_4, window_bounds = array<i64: 128, 128>}]} {
    %c0 = arith.constant 0 : index
    %c0_0 = arith.constant 0 : index
    %0 = vector.load %arg1[%c0, %c0_0] : memref<128x1024xbf16, #tpu.memory_space<vmem>>, vector<128x1024xbf16>
    %c0_1 = arith.constant 0 : index
    %c0_2 = arith.constant 0 : index
    %1 = vector.load %arg2[%c0_1, %c0_2] : memref<1024x128xbf16, #tpu.memory_space<vmem>>, vector<1024x128xbf16>
    %cst = arith.constant dense<0.000000e+00> : vector<128x128xf32>
    %2 = tpu.matmul %0, %1, %cst {dimension_numbers = #tpu.dot_dimension_numbers<[1], [0], [0], [1], [0, 0, 1, 1], [], []>} : vector<128x1024xbf16>, vector<1024x128xbf16>, vector<128x128xf32> -> vector<128x128xf32>
    %cst_3 = arith.constant dense<0.000000e+00> : vector<128xf32>
    %3 = vector.multi_reduction <add>, %2, %cst_3 [0] : vector<128x128xf32> to vector<128xf32>
    %4 = vector.shape_cast %3 : vector<128xf32> to vector<1x128xf32>
    %cst_4 = arith.constant 7.812500e-03 : f32
    %5 = vector.broadcast %cst_4 : f32 to vector<1x128xf32>
    %6 = arith.mulf %4, %5 : vector<1x128xf32>
    %7 = vector.broadcast %6 : vector<1x128xf32> to vector<128x128xf32>
    %8 = arith.subf %2, %7 : vector<128x128xf32>
    %9 = arith.mulf %8, %8 : vector<128x128xf32>
    %cst_5 = arith.constant dense<0.000000e+00> : vector<128xf32>
    %10 = vector.multi_reduction <add>, %9, %cst_5 [0] : vector<128x128xf32> to vector<128xf32>
    %11 = vector.shape_cast %10 : vector<128xf32> to vector<1x128xf32>
    %cst_6 = arith.constant 7.812500e-03 : f32
    %12 = vector.broadcast %cst_6 : f32 to vector<1x128xf32>
    %13 = arith.mulf %11, %12 : vector<1x128xf32>
    %c0_7 = arith.constant 0 : index
    %c0_8 = arith.constant 0 : index
    %14 = vector.load %arg3[%c0_7, %c0_8] : memref<1x128xf32, #tpu.memory_space<vmem>>, vector<1x128xf32>
    %cst_9 = arith.constant 9.99999974E-6 : f32
    %15 = vector.broadcast %cst_9 : f32 to vector<1x128xf32>
    %16 = arith.addf %13, %15 : vector<1x128xf32>
    %17 = math.rsqrt %16 : vector<1x128xf32>
    %18 = arith.mulf %14, %17 : vector<1x128xf32>
    %19 = vector.broadcast %18 : vector<1x128xf32> to vector<128x128xf32>
    %20 = arith.mulf %8, %19 : vector<128x128xf32>
    %c0_10 = arith.constant 0 : index
    %c0_11 = arith.constant 0 : index
    %21 = vector.load %arg4[%c0_10, %c0_11] : memref<1x128xf32, #tpu.memory_space<vmem>>, vector<1x128xf32>
    %22 = vector.broadcast %21 : vector<1x128xf32> to vector<128x128xf32>
    %23 = arith.addf %20, %22 : vector<128x128xf32>
    %cst_12 = arith.constant 0.000000e+00 : f32
    %24 = vector.broadcast %cst_12 : f32 to vector<128x128xf32>
    %25 = arith.maximumf %23, %24 : vector<128x128xf32>
    %26 = arith.truncf %25 : vector<128x128xf32> to vector<128x128xbf16>
    %c0_13 = arith.constant 0 : index
    %c0_14 = arith.constant 0 : index
    %27 = vector.load %arg5[%c0_13, %c0_14] : memref<128x128xbf16, #tpu.memory_space<vmem>>, vector<128x128xbf16>
    tpu.vector_store %arg5[%c0_13, %c0_14], %26 {strides = array<i32>} : memref<128x128xbf16, #tpu.memory_space<vmem>>, vector<128x128xbf16>,
    return
  }
  func.func @transform_0(%arg0: i32) -> (i32, i32) {
    %c0_i32 = arith.constant 0 : i32
    %c0_i32_0 = arith.constant 0 : i32
    %c0_i32_1 = arith.constant 0 : i32
    return %c0_i32, %c0_i32_0 : i32, i32
  }
  func.func @transform_1(%arg0: i32) -> (i32, i32) {
    %c0_i32 = arith.constant 0 : i32
    %c0_i32_0 = arith.constant 0 : i32
    %c0_i32_1 = arith.constant 0 : i32
    return %c0_i32, %c0_i32_0 : i32, i32
  }
  func.func @transform_2(%arg0: i32) -> (i32, i32) {
    %c0_i32 = arith.constant 0 : i32
    %c0_i32_0 = arith.constant 0 : i32
    %c0_i32_1 = arith.constant 0 : i32
    return %c0_i32, %c0_i32_0 : i32, i32
  }
  func.func @transform_3(%arg0: i32) -> (i32, i32) {
    %c0_i32 = arith.constant 0 : i32
    %c0_i32_0 = arith.constant 0 : i32
    %c0_i32_1 = arith.constant 0 : i32
    return %c0_i32, %c0_i32_0 : i32, i32
  }
  func.func @transform_4(%arg0: i32) -> (i32, i32) {
    %c0_i32 = arith.constant 0 : i32
    %c0_i32_0 = arith.constant 0 : i32
    %c0_i32_1 = arith.constant 0 : i32
    return %c0_i32, %c0_i32_0 : i32, i32
  }
}

module attributes {stable_mosaic.version = 11 : i64} {
  func.func @_conv_bn_relu_fused_kernel(%arg0: i32, %arg1: memref<50x2048xbf16, #tpu.memory_space<vmem>>, %arg2: memref<2048x256xbf16, #tpu.memory_space<vmem>>, %arg3: memref<1x256xf32, #tpu.memory_space<vmem>>, %arg4: memref<1x256xf32, #tpu.memory_space<vmem>>, %arg5: memref<50x256xbf16, #tpu.memory_space<vmem>>) attributes {dimension_semantics = [#tpu.dimension_semantics<arbitrary>], iteration_bounds = array<i64: 1>, scalar_prefetch = 0 : i64, scratch_operands = 0 : i64, tpu.core_type = #tpu.core_type<tc>, window_params = [{pipeline_mode = #tpu.pipeline_mode<synchronous>, transform_indices = @transform_0, window_bounds = array<i64: 50, 2048>}, {pipeline_mode = #tpu.pipeline_mode<synchronous>, transform_indices = @transform_1, window_bounds = array<i64: 2048, 256>}, {pipeline_mode = #tpu.pipeline_mode<synchronous>, transform_indices = @transform_2, window_bounds = array<i64: 1, 256>}, {pipeline_mode = #tpu.pipeline_mode<synchronous>, transform_indices = @transform_3, window_bounds = array<i64: 1, 256>}, {pipeline_mode = #tpu.pipeline_mode<synchronous>, transform_indices = @transform_4, window_bounds = array<i64: 50, 256>}]} {
    %c0 = arith.constant 0 : index
    %c0_0 = arith.constant 0 : index
    %0 = vector.load %arg1[%c0, %c0_0] : memref<50x2048xbf16, #tpu.memory_space<vmem>>, vector<50x2048xbf16>
    %c0_1 = arith.constant 0 : index
    %c0_2 = arith.constant 0 : index
    %1 = vector.load %arg2[%c0_1, %c0_2] : memref<2048x256xbf16, #tpu.memory_space<vmem>>, vector<2048x256xbf16>
    %cst = arith.constant dense<0.000000e+00> : vector<50x256xf32>
    %2 = tpu.matmul %0, %1, %cst {dimension_numbers = #tpu.dot_dimension_numbers<[1], [0], [0], [1], [0, 0, 1, 1], [], []>} : vector<50x2048xbf16>, vector<2048x256xbf16>, vector<50x256xf32> -> vector<50x256xf32>
    %cst_3 = arith.constant dense<0.000000e+00> : vector<256xf32>
    %3 = vector.multi_reduction <add>, %2, %cst_3 [0] : vector<50x256xf32> to vector<256xf32>
    %4 = vector.shape_cast %3 : vector<256xf32> to vector<1x256xf32>
    %cst_4 = arith.constant 2.000000e-02 : f32
    %5 = vector.broadcast %cst_4 : f32 to vector<1x256xf32>
    %6 = arith.mulf %4, %5 : vector<1x256xf32>
    %7 = vector.broadcast %6 : vector<1x256xf32> to vector<50x256xf32>
    %8 = arith.subf %2, %7 : vector<50x256xf32>
    %9 = arith.mulf %8, %8 : vector<50x256xf32>
    %cst_5 = arith.constant dense<0.000000e+00> : vector<256xf32>
    %10 = vector.multi_reduction <add>, %9, %cst_5 [0] : vector<50x256xf32> to vector<256xf32>
    %11 = vector.shape_cast %10 : vector<256xf32> to vector<1x256xf32>
    %cst_6 = arith.constant 2.000000e-02 : f32
    %12 = vector.broadcast %cst_6 : f32 to vector<1x256xf32>
    %13 = arith.mulf %11, %12 : vector<1x256xf32>
    %c0_7 = arith.constant 0 : index
    %c0_8 = arith.constant 0 : index
    %14 = vector.load %arg3[%c0_7, %c0_8] : memref<1x256xf32, #tpu.memory_space<vmem>>, vector<1x256xf32>
    %cst_9 = arith.constant 9.99999974E-6 : f32
    %15 = vector.broadcast %cst_9 : f32 to vector<1x256xf32>
    %16 = arith.addf %13, %15 : vector<1x256xf32>
    %17 = math.rsqrt %16 : vector<1x256xf32>
    %18 = arith.mulf %14, %17 : vector<1x256xf32>
    %19 = vector.broadcast %18 : vector<1x256xf32> to vector<50x256xf32>
    %20 = arith.mulf %8, %19 : vector<50x256xf32>
    %c0_10 = arith.constant 0 : index
    %c0_11 = arith.constant 0 : index
    %21 = vector.load %arg4[%c0_10, %c0_11] : memref<1x256xf32, #tpu.memory_space<vmem>>, vector<1x256xf32>
    %22 = vector.broadcast %21 : vector<1x256xf32> to vector<50x256xf32>
    %23 = arith.addf %20, %22 : vector<50x256xf32>
    %cst_12 = arith.constant 0.000000e+00 : f32
    %24 = vector.broadcast %cst_12 : f32 to vector<50x256xf32>
    %25 = arith.maximumf %23, %24 : vector<50x256xf32>
    %26 = arith.truncf %25 : vector<50x256xf32> to vector<50x256xbf16>
    %c0_13 = arith.constant 0 : index
    %c0_14 = arith.constant 0 : index
    %27 = vector.load %arg5[%c0_13, %c0_14] : memref<50x256xbf16, #tpu.memory_space<vmem>>, vector<50x256xbf16>
    tpu.vector_store %arg5[%c0_13, %c0_14], %26 {strides = array<i32>} : memref<50x256xbf16, #tpu.memory_space<vmem>>, vector<50x256xbf16>,
    return
  }
  func.func @transform_0(%arg0: i32) -> (i32, i32) {
    %c0_i32 = arith.constant 0 : i32
    %c0_i32_0 = arith.constant 0 : i32
    %c0_i32_1 = arith.constant 0 : i32
    return %c0_i32, %c0_i32_0 : i32, i32
  }
  func.func @transform_1(%arg0: i32) -> (i32, i32) {
    %c0_i32 = arith.constant 0 : i32
    %c0_i32_0 = arith.constant 0 : i32
    %c0_i32_1 = arith.constant 0 : i32
    return %c0_i32, %c0_i32_0 : i32, i32
  }
  func.func @transform_2(%arg0: i32) -> (i32, i32) {
    %c0_i32 = arith.constant 0 : i32
    %c0_i32_0 = arith.constant 0 : i32
    %c0_i32_1 = arith.constant 0 : i32
    return %c0_i32, %c0_i32_0 : i32, i32
  }
  func.func @transform_3(%arg0: i32) -> (i32, i32) {
    %c0_i32 = arith.constant 0 : i32
    %c0_i32_0 = arith.constant 0 : i32
    %c0_i32_1 = arith.constant 0 : i32
    return %c0_i32, %c0_i32_0 : i32, i32
  }
  func.func @transform_4(%arg0: i32) -> (i32, i32) {
    %c0_i32 = arith.constant 0 : i32
    %c0_i32_0 = arith.constant 0 : i32
    %c0_i32_1 = arith.constant 0 : i32
    return %c0_i32, %c0_i32_0 : i32, i32
  }
}

module attributes {stable_mosaic.version = 11 : i64} {
  func.func @_fc_fused_kernel(%arg0: i32, %arg1: memref<8x1280xbf16, #tpu.memory_space<vmem>>, %arg2: memref<1280x512xbf16, #tpu.memory_space<vmem>>, %arg3: memref<1x512xf32, #tpu.memory_space<vmem>>, %arg4: memref<512x128xbf16, #tpu.memory_space<vmem>>, %arg5: memref<1x128xf32, #tpu.memory_space<vmem>>, %arg6: memref<8x128xf32, #tpu.memory_space<vmem>>, %arg7: memref<8x512xf32, #tpu.memory_space<vmem>>) attributes {dimension_semantics = [#tpu.dimension_semantics<arbitrary>], iteration_bounds = array<i64: 5>, scalar_prefetch = 0 : i64, scratch_operands = 1 : i64, tpu.core_type = #tpu.core_type<tc>, window_params = [{transform_indices = @transform_0, window_bounds = array<i64: 8, 1280>}, {transform_indices = @transform_1, window_bounds = array<i64: 1280, 512>}, {pipeline_mode = #tpu.pipeline_mode<synchronous>, transform_indices = @transform_2, window_bounds = array<i64: 1, 512>}, {pipeline_mode = #tpu.pipeline_mode<synchronous>, transform_indices = @transform_3, window_bounds = array<i64: 512, 128>}, {pipeline_mode = #tpu.pipeline_mode<synchronous>, transform_indices = @transform_4, window_bounds = array<i64: 1, 128>}, {pipeline_mode = #tpu.pipeline_mode<synchronous>, transform_indices = @transform_5, window_bounds = array<i64: 8, 128>}]} {
    %c0_i32 = arith.constant 0 : i32
    %0 = arith.cmpi eq, %arg0, %c0_i32 : i32
    %1 = arith.extui %0 : i1 to i32
    %c0_i32_0 = arith.constant 0 : i32
    %2 = arith.cmpi ne, %1, %c0_i32_0 : i32
    scf.if %2 {
      %cst_9 = arith.constant 0.000000e+00 : f32
      %12 = vector.broadcast %cst_9 : f32 to vector<8x512xf32>
      %c0_10 = arith.constant 0 : index
      %c0_11 = arith.constant 0 : index
      %13 = vector.load %arg7[%c0_10, %c0_11] : memref<8x512xf32, #tpu.memory_space<vmem>>, vector<8x512xf32>
      tpu.vector_store %arg7[%c0_10, %c0_11], %12 {strides = array<i32>} : memref<8x512xf32, #tpu.memory_space<vmem>>, vector<8x512xf32>,
    } else {
    }
    %c0 = arith.constant 0 : index
    %c0_1 = arith.constant 0 : index
    %3 = vector.load %arg7[%c0, %c0_1] : memref<8x512xf32, #tpu.memory_space<vmem>>, vector<8x512xf32>
    %c0_2 = arith.constant 0 : index
    %c0_3 = arith.constant 0 : index
    %4 = vector.load %arg1[%c0_2, %c0_3] : memref<8x1280xbf16, #tpu.memory_space<vmem>>, vector<8x1280xbf16>
    %c0_4 = arith.constant 0 : index
    %c0_5 = arith.constant 0 : index
    %5 = vector.load %arg2[%c0_4, %c0_5] : memref<1280x512xbf16, #tpu.memory_space<vmem>>, vector<1280x512xbf16>
    %cst = arith.constant dense<0.000000e+00> : vector<8x512xf32>
    %6 = tpu.matmul %4, %5, %cst {dimension_numbers = #tpu.dot_dimension_numbers<[1], [0], [0], [1], [0, 0, 1, 1], [], []>} : vector<8x1280xbf16>, vector<1280x512xbf16>, vector<8x512xf32> -> vector<8x512xf32>
    %7 = arith.addf %3, %6 : vector<8x512xf32>
    %c0_6 = arith.constant 0 : index
    %c0_7 = arith.constant 0 : index
    %8 = vector.load %arg7[%c0_6, %c0_7] : memref<8x512xf32, #tpu.memory_space<vmem>>, vector<8x512xf32>
    tpu.vector_store %arg7[%c0_6, %c0_7], %7 {strides = array<i32>} : memref<8x512xf32, #tpu.memory_space<vmem>>, vector<8x512xf32>,
    %c4_i32 = arith.constant 4 : i32
    %9 = arith.cmpi eq, %arg0, %c4_i32 : i32
    %10 = arith.extui %9 : i1 to i32
    %c0_i32_8 = arith.constant 0 : i32
    %11 = arith.cmpi ne, %10, %c0_i32_8 : i32
    scf.if %11 {
      %c0_9 = arith.constant 0 : index
      %c0_10 = arith.constant 0 : index
      %12 = vector.load %arg7[%c0_9, %c0_10] : memref<8x512xf32, #tpu.memory_space<vmem>>, vector<8x512xf32>
      %c0_11 = arith.constant 0 : index
      %c0_12 = arith.constant 0 : index
      %13 = vector.load %arg3[%c0_11, %c0_12] : memref<1x512xf32, #tpu.memory_space<vmem>>, vector<1x512xf32>
      %14 = vector.broadcast %13 : vector<1x512xf32> to vector<8x512xf32>
      %15 = arith.addf %12, %14 : vector<8x512xf32>
      %cst_13 = arith.constant 0.000000e+00 : f32
      %16 = vector.broadcast %cst_13 : f32 to vector<8x512xf32>
      %17 = arith.maximumf %15, %16 : vector<8x512xf32>
      %18 = arith.truncf %17 : vector<8x512xf32> to vector<8x512xbf16>
      %c0_14 = arith.constant 0 : index
      %c0_15 = arith.constant 0 : index
      %19 = vector.load %arg4[%c0_14, %c0_15] : memref<512x128xbf16, #tpu.memory_space<vmem>>, vector<512x128xbf16>
      %cst_16 = arith.constant dense<0.000000e+00> : vector<8x128xf32>
      %20 = tpu.matmul %18, %19, %cst_16 {dimension_numbers = #tpu.dot_dimension_numbers<[1], [0], [0], [1], [0, 0, 1, 1], [], []>} : vector<8x512xbf16>, vector<512x128xbf16>, vector<8x128xf32> -> vector<8x128xf32>
      %c0_17 = arith.constant 0 : index
      %c0_18 = arith.constant 0 : index
      %21 = vector.load %arg5[%c0_17, %c0_18] : memref<1x128xf32, #tpu.memory_space<vmem>>, vector<1x128xf32>
      %22 = vector.broadcast %21 : vector<1x128xf32> to vector<8x128xf32>
      %23 = arith.addf %20, %22 : vector<8x128xf32>
      %c0_19 = arith.constant 0 : index
      %c0_20 = arith.constant 0 : index
      %24 = vector.load %arg6[%c0_19, %c0_20] : memref<8x128xf32, #tpu.memory_space<vmem>>, vector<8x128xf32>
      tpu.vector_store %arg6[%c0_19, %c0_20], %23 {strides = array<i32>} : memref<8x128xf32, #tpu.memory_space<vmem>>, vector<8x128xf32>,
    } else {
    }
    return
  }
  func.func @transform_0(%arg0: i32) -> (i32, i32) {
    %c0_i32 = arith.constant 0 : i32
    %c0_i32_0 = arith.constant 0 : i32
    return %c0_i32, %arg0 : i32, i32
  }
  func.func @transform_1(%arg0: i32) -> (i32, i32) {
    %c0_i32 = arith.constant 0 : i32
    %c0_i32_0 = arith.constant 0 : i32
    return %arg0, %c0_i32 : i32, i32
  }
  func.func @transform_2(%arg0: i32) -> (i32, i32) {
    %c0_i32 = arith.constant 0 : i32
    %c0_i32_0 = arith.constant 0 : i32
    %c0_i32_1 = arith.constant 0 : i32
    return %c0_i32, %c0_i32_0 : i32, i32
  }
  func.func @transform_3(%arg0: i32) -> (i32, i32) {
    %c0_i32 = arith.constant 0 : i32
    %c0_i32_0 = arith.constant 0 : i32
    %c0_i32_1 = arith.constant 0 : i32
    return %c0_i32, %c0_i32_0 : i32, i32
  }
  func.func @transform_4(%arg0: i32) -> (i32, i32) {
    %c0_i32 = arith.constant 0 : i32
    %c0_i32_0 = arith.constant 0 : i32
    %c0_i32_1 = arith.constant 0 : i32
    return %c0_i32, %c0_i32_0 : i32, i32
  }
  func.func @transform_5(%arg0: i32) -> (i32, i32) {
    %c0_i32 = arith.constant 0 : i32
    %c0_i32_0 = arith.constant 0 : i32
    %c0_i32_1 = arith.constant 0 : i32
    return %c0_i32, %c0_i32_0 : i32, i32
  }
}

</mosaic_0001>

<llo_original>
// kernel: mul.4
$region0: #{mul.4}
  %s0 = inlined_call_operand.vmem [shape: f32[4,4,3,32], index: 0, kind: input, shape index: {}]
  %s1 = inlined_call_operand.vmem [shape: f32[48,32], index: 1, kind: output, shape index: {}]
  $region1: #{mul.4} parent=0
    #allocation0 [shape = 'u8[65536]{0}', space=vmem, size = 0x10000, scoped, tag = 'scoped mem for input reshape']
    %s3 = sshll.u32 1, 4
    %s4 = ssub.s32 %s3, 1
    %s5 = smul.addr 4, 15
    %s6 = scalar_lea.vmem %s0, %s5
    %v7 = vld [vmem:[%s6] sm:%s4]
    %s8 = scalar_lea.vmem [#allocation0], 120
    %9 = vst [vmem:[%s8] sm:%s4] %v7
    %s10 = smul.addr 4, 14
    %s11 = scalar_lea.vmem %s0, %s10
    %v12 = vld [vmem:[%s11] sm:%s4]
    %s13 = scalar_lea.vmem [#allocation0], 112
    %14 = vst [vmem:[%s13] sm:%s4] %v12
    %s15 = smul.addr 4, 13
    %s16 = scalar_lea.vmem %s0, %s15
    %v17 = vld [vmem:[%s16] sm:%s4]
    %s18 = scalar_lea.vmem [#allocation0], 104
    %19 = vst [vmem:[%s18] sm:%s4] %v17
    %s20 = smul.addr 4, 12
    %s21 = scalar_lea.vmem %s0, %s20
    %v22 = vld [vmem:[%s21] sm:%s4]
    %s23 = scalar_lea.vmem [#allocation0], 96
    %24 = vst [vmem:[%s23] sm:%s4] %v22
    %s25 = smul.addr 4, 11
    %s26 = scalar_lea.vmem %s0, %s25
    %v27 = vld [vmem:[%s26] sm:%s4]
    %s28 = scalar_lea.vmem [#allocation0], 88
    %29 = vst [vmem:[%s28] sm:%s4] %v27
    %s30 = smul.addr 4, 10
    %s31 = scalar_lea.vmem %s0, %s30
    %v32 = vld [vmem:[%s31] sm:%s4]
    %s33 = scalar_lea.vmem [#allocation0], 80
    %34 = vst [vmem:[%s33] sm:%s4] %v32
    %s35 = smul.addr 4, 9
    %s36 = scalar_lea.vmem %s0, %s35
    %v37 = vld [vmem:[%s36] sm:%s4]
    %s38 = scalar_lea.vmem [#allocation0], 72
    %39 = vst [vmem:[%s38] sm:%s4] %v37
    %s40 = smul.addr 4, 8
    %s41 = scalar_lea.vmem %s0, %s40
    %v42 = vld [vmem:[%s41] sm:%s4]
    %s43 = scalar_lea.vmem [#allocation0], 64
    %44 = vst [vmem:[%s43] sm:%s4] %v42
    %s45 = smul.addr 4, 7
    %s46 = scalar_lea.vmem %s0, %s45
    %v47 = vld [vmem:[%s46] sm:%s4]
    %s48 = scalar_lea.vmem [#allocation0], 56
    %49 = vst [vmem:[%s48] sm:%s4] %v47
    %s50 = smul.addr 4, 6
    %s51 = scalar_lea.vmem %s0, %s50
    %v52 = vld [vmem:[%s51] sm:%s4]
    %s53 = scalar_lea.vmem [#allocation0], 48
    %54 = vst [vmem:[%s53] sm:%s4] %v52
    %s55 = smul.addr 4, 5
    %s56 = scalar_lea.vmem %s0, %s55
    %v57 = vld [vmem:[%s56] sm:%s4]
    %s58 = scalar_lea.vmem [#allocation0], 40
    %59 = vst [vmem:[%s58] sm:%s4] %v57
    %s60 = smul.addr 4, 4
    %s61 = scalar_lea.vmem %s0, %s60
    %v62 = vld [vmem:[%s61] sm:%s4]
    %s63 = scalar_lea.vmem [#allocation0], 32
    %64 = vst [vmem:[%s63] sm:%s4] %v62
    %s65 = smul.addr 4, 3
    %s66 = scalar_lea.vmem %s0, %s65
    %v67 = vld [vmem:[%s66] sm:%s4]
    %s68 = scalar_lea.vmem [#allocation0], 24
    %69 = vst [vmem:[%s68] sm:%s4] %v67
    %s70 = smul.addr 4, 2
    %s71 = scalar_lea.vmem %s0, %s70
    %v72 = vld [vmem:[%s71] sm:%s4]
    %s73 = scalar_lea.vmem [#allocation0], 16
    %74 = vst [vmem:[%s73] sm:%s4] %v72
    %s75 = scalar_lea.vmem %s0, 4
    %v76 = vld [vmem:[%s75] sm:%s4]
    %s77 = scalar_lea.vmem [#allocation0], 8
    %78 = vst [vmem:[%s77] sm:%s4] %v76
    %v79 = vld [vmem:[%s0] sm:%s4]
    %80 = vst [vmem:[#allocation0] sm:%s4] %v79
    %v81 = vld [vmem:[#allocation0] sm:$0x7]
    %vm82 = vcmask 261120
    %83 = vst.msk [vmem:[%s1] sm:$0x7] %vm82, %v81
    %s84 = scalar_lea.vmem [#allocation0], 8
    %v85 = vld [vmem:[%s84] sm:$0x7]
    %vm86 = vcmask 261120
    %s87 = scalar_lea.vmem %s1, 3
    %88 = vst.msk [vmem:[%s87] sm:$0x7] %vm86, %v85
    %s89 = scalar_lea.vmem [#allocation0], 16
    %v90 = vld [vmem:[%s89] sm:$0x7]
    %vm91 = vcmask 261120
    %s92 = scalar_lea.vmem %s1, 6
    %93 = vst.msk [vmem:[%s92] sm:$0x7] %vm91, %v90
    %s94 = scalar_lea.vmem [#allocation0], 24
    %v95 = vld [vmem:[%s94] sm:$0x7]
    %vm96 = vcmask 261120
    %s97 = scalar_lea.vmem %s1, 9
    %98 = vst.msk [vmem:[%s97] sm:$0x7] %vm96, %v95
    %s99 = scalar_lea.vmem [#allocation0], 32
    %v100 = vld [vmem:[%s99] sm:$0x7]
    %vm101 = vcmask 261120
    %s102 = scalar_lea.vmem %s1, 12
    %103 = vst.msk [vmem:[%s102] sm:$0x7] %vm101, %v100
    %s104 = scalar_lea.vmem [#allocation0], 40
    %v105 = vld [vmem:[%s104] sm:$0x7]
    %vm106 = vcmask 261120
    %s107 = scalar_lea.vmem %s1, 15
    %108 = vst.msk [vmem:[%s107] sm:$0x7] %vm106, %v105
    %s109 = scalar_lea.vmem [#allocation0], 48
    %v110 = vld [vmem:[%s109] sm:$0x7]
    %vm111 = vcmask 261120
    %s112 = scalar_lea.vmem %s1, 18
    %113 = vst.msk [vmem:[%s112] sm:$0x7] %vm111, %v110
    %s114 = scalar_lea.vmem [#allocation0], 56
    %v115 = vld [vmem:[%s114] sm:$0x7]
    %vm116 = vcmask 261120
    %s117 = scalar_lea.vmem %s1, 21
    %118 = vst.msk [vmem:[%s117] sm:$0x7] %vm116, %v115
    %s119 = scalar_lea.vmem [#allocation0], 64
    %v120 = vld [vmem:[%s119] sm:$0x7]
    %vm121 = vcmask 261120
    %s122 = scalar_lea.vmem %s1, 24
    %123 = vst.msk [vmem:[%s122] sm:$0x7] %vm121, %v120
    %s124 = scalar_lea.vmem [#allocation0], 72
    %v125 = vld [vmem:[%s124] sm:$0x7]
    %vm126 = vcmask 261120
    %s127 = scalar_lea.vmem %s1, 27
    %128 = vst.msk [vmem:[%s127] sm:$0x7] %vm126, %v125
    %s129 = scalar_lea.vmem [#allocation0], 80
    %v130 = vld [vmem:[%s129] sm:$0x7]
    %vm131 = vcmask 261120
    %s132 = scalar_lea.vmem %s1, 30
    %133 = vst.msk [vmem:[%s132] sm:$0x7] %vm131, %v130
    %s134 = scalar_lea.vmem [#allocation0], 88
    %v135 = vld [vmem:[%s134] sm:$0x7]
    %vm136 = vcmask 261120
    %s137 = scalar_lea.vmem %s1, 33
    %138 = vst.msk [vmem:[%s137] sm:$0x7] %vm136, %v135
    %s139 = scalar_lea.vmem [#allocation0], 96
    %v140 = vld [vmem:[%s139] sm:$0x7]
    %vm141 = vcmask 261120
    %s142 = scalar_lea.vmem %s1, 36
    %143 = vst.msk [vmem:[%s142] sm:$0x7] %vm141, %v140
    %s144 = scalar_lea.vmem [#allocation0], 104
    %v145 = vld [vmem:[%s144] sm:$0x7]
    %vm146 = vcmask 261120
    %s147 = scalar_lea.vmem %s1, 39
    %148 = vst.msk [vmem:[%s147] sm:$0x7] %vm146, %v145
    %s149 = scalar_lea.vmem [#allocation0], 112
    %v150 = vld [vmem:[%s149] sm:$0x7]
    %vm151 = vcmask 261120
    %s152 = scalar_lea.vmem %s1, 42
    %153 = vst.msk [vmem:[%s152] sm:$0x7] %vm151, %v150
    %s154 = scalar_lea.vmem [#allocation0], 120
    %v155 = vld [vmem:[%s154] sm:$0x7]
    %vm156 = vcmask 261120
    %s157 = scalar_lea.vmem %s1, 45
    %158 = vst.msk [vmem:[%s157] sm:$0x7] %vm156, %v155

// kernel: encoder_a_forward.5
$region0: #{encoder_a_forward.5}
  #allocation0 [shape = 'u32[]', space=smem, size = 0x4, offset = 0x4, fixed_abs, tag = 'smem constant byte address 0x4 - core index']
  #allocation1 [shape = 'u32[144,128]{1,0:T(1,128)}', space=vmem, size = 0x12000, scoped, tag = 'internal scratch']
  %s0 = inlined_call_operand.vmem [shape: bf16[512,192], index: 0, kind: input, shape index: {}]
  %s1 = inlined_call_operand.vmem [shape: bf16[192,128], index: 1, kind: input, shape index: {}]
  %s2 = inlined_call_operand.vmem [shape: bf16[512,128], index: 2, kind: output, shape index: {}]
  %s3 = sld [smem:[#allocation0]]
  $region18: #{encoder_a_forward.5} parent=0
    _
  %s5 = ssub.s32 1, %s3
  %s6 = scalar_select 0, %s5, %s3
  // Predicated region
  $region2: #{encoder_a_forward.5} parent=0 // pred_check
    _
  $region3: #{encoder_a_forward.5} parent=0 // pred_check_branch
    %8 = sbr.rel (0) target = $region5
  $region4: #{encoder_a_forward.5} parent=0 // pred_region
    _
  $region5: #{encoder_a_forward.5} parent=0 // pred_fallthru
    _
  // Predicated region
  $region6: #{encoder_a_forward.5} parent=0 // pred_check
    _
  $region7: #{encoder_a_forward.5} parent=0 // pred_check_branch
    %10 = sbr.rel (0) target = $region9
  $region8: #{encoder_a_forward.5} parent=0 // pred_region
    _
  $region9: #{encoder_a_forward.5} parent=0 // pred_fallthru
    _
  %v12 = vld [vmem:[%s0] sm:$0xff]
  %v13 = vld [vmem:[%s0 + $0x8] sm:$0xff]
  %v14 = vld [vmem:[%s0 + $0x10] sm:$0xff]
  %v15 = vld [vmem:[%s0 + $0x18] sm:$0xff]
  %v16 = vld [vmem:[%s0 + $0x20] sm:$0xff]
  %v17 = vld [vmem:[%s0 + $0x28] sm:$0xff]
  %v18 = vld [vmem:[%s0 + $0x30] sm:$0xff]
  %v19 = vld [vmem:[%s0 + $0x38] sm:$0xff]
  %v20 = vld [vmem:[%s0 + $0x40] sm:$0xff]
  %v21 = vld [vmem:[%s0 + $0x48] sm:$0xff]
  %v22 = vld [vmem:[%s0 + $0x50] sm:$0xff]
  %v23 = vld [vmem:[%s0 + $0x58] sm:$0xff]
  %v24 = vld [vmem:[%s0 + $0x60] sm:$0xff]
  %v25 = vld [vmem:[%s0 + $0x68] sm:$0xff]
  %v26 = vld [vmem:[%s0 + $0x70] sm:$0xff]
  %v27 = vld [vmem:[%s0 + $0x78] sm:$0xff]
  %v28 = vld [vmem:[%s0 + $0x80] sm:$0xff]
  %v29 = vld [vmem:[%s0 + $0x88] sm:$0xff]
  %v30 = vld [vmem:[%s0 + $0x90] sm:$0xff]
  %v31 = vld [vmem:[%s0 + $0x98] sm:$0xff]
  %v32 = vld [vmem:[%s0 + $0xa0] sm:$0xff]
  %v33 = vld [vmem:[%s0 + $0xa8] sm:$0xff]
  %v34 = vld [vmem:[%s0 + $0xb0] sm:$0xff]
  %v35 = vld [vmem:[%s0 + $0xb8] sm:$0xff]
  %v36 = vld [vmem:[%s0 + $0xc0] sm:$0xff]
  %v37 = vld [vmem:[%s0 + $0xc8] sm:$0xff]
  %v38 = vld [vmem:[%s0 + $0xd0] sm:$0xff]
  %v39 = vld [vmem:[%s0 + $0xd8] sm:$0xff]
  %v40 = vld [vmem:[%s0 + $0xe0] sm:$0xff]
  %v41 = vld [vmem:[%s0 + $0xe8] sm:$0xff]
  %v42 = vld [vmem:[%s0 + $0xf0] sm:$0xff]
  %v43 = vld [vmem:[%s0 + $0xf8] sm:$0xff]
  %v44 = vld [vmem:[%s0 + $0x100] sm:$0xff]
  %v45 = vld [vmem:[%s0 + $0x108] sm:$0xff]
  %v46 = vld [vmem:[%s0 + $0x110] sm:$0xff]
  %v47 = vld [vmem:[%s0 + $0x118] sm:$0xff]
  %v48 = vld [vmem:[%s0 + $0x120] sm:$0xff]
  %v49 = vld [vmem:[%s0 + $0x128] sm:$0xff]
  %v50 = vld [vmem:[%s0 + $0x130] sm:$0xff]
  %v51 = vld [vmem:[%s0 + $0x138] sm:$0xff]
  %v52 = vld [vmem:[%s0 + $0x140] sm:$0xff]
  %v53 = vld [vmem:[%s0 + $0x148] sm:$0xff]
  %v54 = vld [vmem:[%s0 + $0x150] sm:$0xff]
  %v55 = vld [vmem:[%s0 + $0x158] sm:$0xff]
  %v56 = vld [vmem:[%s0 + $0x160] sm:$0xff]
  %v57 = vld [vmem:[%s0 + $0x168] sm:$0xff]
  %v58 = vld [vmem:[%s0 + $0x170] sm:$0xff]
  %v59 = vld [vmem:[%s0 + $0x178] sm:$0xff]
  %v60 = vld [vmem:[%s0 + $0x180] sm:$0xff]
  %v61 = vld [vmem:[%s0 + $0x188] sm:$0xff]
  %v62 = vld [vmem:[%s0 + $0x190] sm:$0xff]
  %v63 = vld [vmem:[%s0 + $0x198] sm:$0xff]
  %v64 = vld [vmem:[%s0 + $0x1a0] sm:$0xff]
  %v65 = vld [vmem:[%s0 + $0x1a8] sm:$0xff]
  %v66 = vld [vmem:[%s0 + $0x1b0] sm:$0xff]
  %v67 = vld [vmem:[%s0 + $0x1b8] sm:$0xff]
  %v68 = vld [vmem:[%s0 + $0x1c0] sm:$0xff]
  %v69 = vld [vmem:[%s0 + $0x1c8] sm:$0xff]
  %v70 = vld [vmem:[%s0 + $0x1d0] sm:$0xff]
  %v71 = vld [vmem:[%s0 + $0x1d8] sm:$0xff]
  %v72 = vld [vmem:[%s0 + $0x1e0] sm:$0xff]
  %v73 = vld [vmem:[%s0 + $0x1e8] sm:$0xff]
  %v74 = vld [vmem:[%s0 + $0x1f0] sm:$0xff]
  %v75 = vld [vmem:[%s0 + $0x1f8] sm:$0xff]
  %v76 = vld [vmem:[%s1] sm:$0xf]
  %v77 = vld [vmem:[%s1 + $0x4] sm:$0xf]
  %v78 = vld [vmem:[%s1 + $0x8] sm:$0xf]
  %v79 = vld [vmem:[%s1 + $0xc] sm:$0xf]
  %v80 = vld [vmem:[%s1 + $0x10] sm:$0xf]
  %v81 = vld [vmem:[%s1 + $0x14] sm:$0xf]
  %v82 = vld [vmem:[%s1 + $0x18] sm:$0xf]
  %v83 = vld [vmem:[%s1 + $0x1c] sm:$0xf]
  %v84 = vld [vmem:[%s1 + $0x20] sm:$0xf]
  %v85 = vld [vmem:[%s1 + $0x24] sm:$0xf]
  %v86 = vld [vmem:[%s1 + $0x28] sm:$0xf]
  %v87 = vld [vmem:[%s1 + $0x2c] sm:$0xf]
  %v88 = vld [vmem:[%s1 + $0x30] sm:$0xf]
  %v89 = vld [vmem:[%s1 + $0x34] sm:$0xf]
  %v90 = vld [vmem:[%s1 + $0x38] sm:$0xf]
  %v91 = vld [vmem:[%s1 + $0x3c] sm:$0xf]
  %v92 = vld [vmem:[%s1 + $0x40] sm:$0xf]
  %v93 = vld [vmem:[%s1 + $0x44] sm:$0xf]
  %v94 = vld [vmem:[%s1 + $0x48] sm:$0xf]
  %v95 = vld [vmem:[%s1 + $0x4c] sm:$0xf]
  %v96 = vld [vmem:[%s1 + $0x50] sm:$0xf]
  %v97 = vld [vmem:[%s1 + $0x54] sm:$0xf]
  %v98 = vld [vmem:[%s1 + $0x58] sm:$0xf]
  %v99 = vld [vmem:[%s1 + $0x5c] sm:$0xf]
  %v164 = vunpack.c.l.b16 %v12
  %v165 = vunpack.c.h.b16 %v12
  %v166 = vunpack.c.l.b16 %v13
  %v167 = vunpack.c.h.b16 %v13
  %v168 = vunpack.c.l.b16 %v14
  %v169 = vunpack.c.h.b16 %v14
  %v170 = vunpack.c.l.b16 %v15
  %v171 = vunpack.c.h.b16 %v15
  %v172 = vunpack.c.l.b16 %v16
  %v173 = vunpack.c.h.b16 %v16
  %v174 = vunpack.c.l.b16 %v17
  %v175 = vunpack.c.h.b16 %v17
  %v176 = vunpack.c.l.b16 %v18
  %v177 = vunpack.c.h.b16 %v18
  %v178 = vunpack.c.l.b16 %v19
  %v179 = vunpack.c.h.b16 %v19
  %v180 = vunpack.c.l.b16 %v20
  %v181 = vunpack.c.h.b16 %v20
  %v182 = vunpack.c.l.b16 %v21
  %v183 = vunpack.c.h.b16 %v21
  %v184 = vunpack.c.l.b16 %v22
  %v185 = vunpack.c.h.b16 %v22
  %v186 = vunpack.c.l.b16 %v23
  %v187 = vunpack.c.h.b16 %v23
  %v188 = vunpack.c.l.b16 %v24
  %v189 = vunpack.c.h.b16 %v24
  %v190 = vunpack.c.l.b16 %v25
  %v191 = vunpack.c.h.b16 %v25
  %v192 = vunpack.c.l.b16 %v26
  %v193 = vunpack.c.h.b16 %v26
  %v194 = vunpack.c.l.b16 %v27
  %v195 = vunpack.c.h.b16 %v27
  %v196 = vunpack.c.l.b16 %v28
  %v197 = vunpack.c.h.b16 %v28
  %v198 = vunpack.c.l.b16 %v29
  %v199 = vunpack.c.h.b16 %v29
  %v200 = vunpack.c.l.b16 %v30
  %v201 = vunpack.c.h.b16 %v30
  %v202 = vunpack.c.l.b16 %v31
  %v203 = vunpack.c.h.b16 %v31
  %v204 = vunpack.c.l.b16 %v32
  %v205 = vunpack.c.h.b16 %v32
  %v206 = vunpack.c.l.b16 %v33
  %v207 = vunpack.c.h.b16 %v33
  %v208 = vunpack.c.l.b16 %v34
  %v209 = vunpack.c.h.b16 %v34
  %v210 = vunpack.c.l.b16 %v35
  %v211 = vunpack.c.h.b16 %v35
  %v212 = vunpack.c.l.b16 %v36
  %v213 = vunpack.c.h.b16 %v36
  %v214 = vunpack.c.l.b16 %v37
  %v215 = vunpack.c.h.b16 %v37
  %v216 = vunpack.c.l.b16 %v38
  %v217 = vunpack.c.h.b16 %v38
  %v218 = vunpack.c.l.b16 %v39
  %v219 = vunpack.c.h.b16 %v39
  %v220 = vunpack.c.l.b16 %v40
  %v221 = vunpack.c.h.b16 %v40
  %v222 = vunpack.c.l.b16 %v41
  %v223 = vunpack.c.h.b16 %v41
  %v224 = vunpack.c.l.b16 %v42
  %v225 = vunpack.c.h.b16 %v42
  %v226 = vunpack.c.l.b16 %v43
  %v227 = vunpack.c.h.b16 %v43
  %v228 = vunpack.c.l.b16 %v44
  %v229 = vunpack.c.h.b16 %v44
  %v230 = vunpack.c.l.b16 %v45
  %v231 = vunpack.c.h.b16 %v45
  %v232 = vunpack.c.l.b16 %v46
  %v233 = vunpack.c.h.b16 %v46
  %v234 = vunpack.c.l.b16 %v47
  %v235 = vunpack.c.h.b16 %v47
  %v236 = vunpack.c.l.b16 %v48
  %v237 = vunpack.c.h.b16 %v48
  %v238 = vunpack.c.l.b16 %v49
  %v239 = vunpack.c.h.b16 %v49
  %v240 = vunpack.c.l.b16 %v50
  %v241 = vunpack.c.h.b16 %v50
  %v242 = vunpack.c.l.b16 %v51
  %v243 = vunpack.c.h.b16 %v51
  %v244 = vunpack.c.l.b16 %v52
  %v245 = vunpack.c.h.b16 %v52
  %v246 = vunpack.c.l.b16 %v53
  %v247 = vunpack.c.h.b16 %v53
  %v248 = vunpack.c.l.b16 %v54
  %v249 = vunpack.c.h.b16 %v54
  %v250 = vunpack.c.l.b16 %v55
  %v251 = vunpack.c.h.b16 %v55
  %v252 = vunpack.c.l.b16 %v56
  %v253 = vunpack.c.h.b16 %v56
  %v254 = vunpack.c.l.b16 %v57
  %v255 = vunpack.c.h.b16 %v57
  %v256 = vunpack.c.l.b16 %v58
  %v257 = vunpack.c.h.b16 %v58
  %v258 = vunpack.c.l.b16 %v59
  %v259 = vunpack.c.h.b16 %v59
  %v260 = vunpack.c.l.b16 %v60
  %v261 = vunpack.c.h.b16 %v60
  %v262 = vunpack.c.l.b16 %v61
  %v263 = vunpack.c.h.b16 %v61
  %v264 = vunpack.c.l.b16 %v62
  %v265 = vunpack.c.h.b16 %v62
  %v266 = vunpack.c.l.b16 %v63
  %v267 = vunpack.c.h.b16 %v63
  %v268 = vunpack.c.l.b16 %v64
  %v269 = vunpack.c.h.b16 %v64
  %v270 = vunpack.c.l.b16 %v65
  %v271 = vunpack.c.h.b16 %v65
  %v272 = vunpack.c.l.b16 %v66
  %v273 = vunpack.c.h.b16 %v66
  %v274 = vunpack.c.l.b16 %v67
  %v275 = vunpack.c.h.b16 %v67
  %v276 = vunpack.c.l.b16 %v68
  %v277 = vunpack.c.h.b16 %v68
  %v278 = vunpack.c.l.b16 %v69
  %v279 = vunpack.c.h.b16 %v69
  %v280 = vunpack.c.l.b16 %v70
  %v281 = vunpack.c.h.b16 %v70
  %v282 = vunpack.c.l.b16 %v71
  %v283 = vunpack.c.h.b16 %v71
  %v284 = vunpack.c.l.b16 %v72
  %v285 = vunpack.c.h.b16 %v72
  %v286 = vunpack.c.l.b16 %v73
  %v287 = vunpack.c.h.b16 %v73
  %v288 = vunpack.c.l.b16 %v74
  %v289 = vunpack.c.h.b16 %v74
  %v290 = vunpack.c.l.b16 %v75
  %v291 = vunpack.c.h.b16 %v75
  %v292 = vpack.c.b16 %v166, %v164
  %v293 = vpack.c.b16 %v167, %v165
  %v294 = vpack.c.b16 %v170, %v168
  %v295 = vpack.c.b16 %v171, %v169
  %v296 = vpack.c.b16 %v174, %v172
  %v297 = vpack.c.b16 %v175, %v173
  %v298 = vpack.c.b16 %v178, %v176
  %v299 = vpack.c.b16 %v179, %v177
  %v300 = vpack.c.b16 %v182, %v180
  %v301 = vpack.c.b16 %v183, %v181
  %v302 = vpack.c.b16 %v186, %v184
  %v303 = vpack.c.b16 %v187, %v185
  %v304 = vpack.c.b16 %v190, %v188
  %v305 = vpack.c.b16 %v191, %v189
  %v306 = vpack.c.b16 %v194, %v192
  %v307 = vpack.c.b16 %v195, %v193
  %v308 = vpack.c.b16 %v198, %v196
  %v309 = vpack.c.b16 %v199, %v197
  %v310 = vpack.c.b16 %v202, %v200
  %v311 = vpack.c.b16 %v203, %v201
  %v312 = vpack.c.b16 %v206, %v204
  %v313 = vpack.c.b16 %v207, %v205
  %v314 = vpack.c.b16 %v210, %v208
  %v315 = vpack.c.b16 %v211, %v209
  %v316 = vpack.c.b16 %v214, %v212
  %v317 = vpack.c.b16 %v215, %v213
  %v318 = vpack.c.b16 %v218, %v216
  %v319 = vpack.c.b16 %v219, %v217
  %v320 = vpack.c.b16 %v222, %v220
  %v321 = vpack.c.b16 %v223, %v221
  %v322 = vpack.c.b16 %v226, %v224
  %v323 = vpack.c.b16 %v227, %v225
  %v324 = vpack.c.b16 %v230, %v228
  %v325 = vpack.c.b16 %v231, %v229
  %v326 = vpack.c.b16 %v234, %v232
  %v327 = vpack.c.b16 %v235, %v233
  %v328 = vpack.c.b16 %v238, %v236
  %v329 = vpack.c.b16 %v239, %v237
  %v330 = vpack.c.b16 %v242, %v240
  %v331 = vpack.c.b16 %v243, %v241
  %v332 = vpack.c.b16 %v246, %v244
  %v333 = vpack.c.b16 %v247, %v245
  %v334 = vpack.c.b16 %v250, %v248
  %v335 = vpack.c.b16 %v251, %v249
  %v336 = vpack.c.b16 %v254, %v252
  %v337 = vpack.c.b16 %v255, %v253
  %v338 = vpack.c.b16 %v258, %v256
  %v339 = vpack.c.b16 %v259, %v257
  %v340 = vpack.c.b16 %v262, %v260
  %v341 = vpack.c.b16 %v263, %v261
  %v342 = vpack.c.b16 %v266, %v264
  %v343 = vpack.c.b16 %v267, %v265
  %v344 = vpack.c.b16 %v270, %v268
  %v345 = vpack.c.b16 %v271, %v269
  %v346 = vpack.c.b16 %v274, %v272
  %v347 = vpack.c.b16 %v275, %v273
  %v348 = vpack.c.b16 %v278, %v276
  %v349 = vpack.c.b16 %v279, %v277
  %v350 = vpack.c.b16 %v282, %v280
  %v351 = vpack.c.b16 %v283, %v281
  %v352 = vpack.c.b16 %v286, %v284
  %v353 = vpack.c.b16 %v287, %v285
  %v354 = vpack.c.b16 %v290, %v288
  %v355 = vpack.c.b16 %v291, %v289
  %v412 = vunpack.c.l.b16 %v76
  %v413 = vunpack.c.l.b16 %v77
  %v414 = vunpack.c.l.b16 %v78
  %v415 = vunpack.c.l.b16 %v79
  %v416 = vunpack.c.l.b16 %v80
  %v417 = vunpack.c.l.b16 %v81
  %v418 = vunpack.c.l.b16 %v82
  %v419 = vunpack.c.l.b16 %v83
  %v420 = vunpack.c.l.b16 %v84
  %v421 = vunpack.c.l.b16 %v85
  %v422 = vunpack.c.l.b16 %v86
  %v423 = vunpack.c.l.b16 %v87
  %v424 = vunpack.c.l.b16 %v88
  %v425 = vunpack.c.l.b16 %v89
  %v426 = vunpack.c.l.b16 %v90
  %v427 = vunpack.c.l.b16 %v91
  %v428 = vunpack.c.l.b16 %v92
  %v429 = vunpack.c.l.b16 %v93
  %v430 = vunpack.c.l.b16 %v94
  %v431 = vunpack.c.l.b16 %v95
  %v432 = vunpack.c.l.b16 %v96
  %v433 = vunpack.c.l.b16 %v97
  %v434 = vunpack.c.l.b16 %v98
  %v435 = vunpack.c.l.b16 %v99
  %v436 = vpack.c.b16 %v413, %v412
  %v437 = vpack.c.b16 %v415, %v414
  %v438 = vpack.c.b16 %v417, %v416
  %v439 = vpack.c.b16 %v419, %v418
  %v440 = vpack.c.b16 %v421, %v420
  %v441 = vpack.c.b16 %v423, %v422
  %v442 = vpack.c.b16 %v425, %v424
  %v443 = vpack.c.b16 %v427, %v426
  %v444 = vpack.c.b16 %v429, %v428
  %v445 = vpack.c.b16 %v431, %v430
  %v446 = vpack.c.b16 %v433, %v432
  %v447 = vpack.c.b16 %v435, %v434
  %vm460 = vcmask 523264
  %v462 = vsel %vm460, %v293, 0
  %v465 = vsel %vm460, %v295, 0
  %v468 = vsel %vm460, %v297, 0
  %v471 = vsel %vm460, %v299, 0
  %v474 = vsel %vm460, %v301, 0
  %v477 = vsel %vm460, %v303, 0
  %v480 = vsel %vm460, %v305, 0
  %v483 = vsel %vm460, %v307, 0
  %v486 = vsel %vm460, %v309, 0
  %v489 = vsel %vm460, %v311, 0
  %v492 = vsel %vm460, %v313, 0
  %v495 = vsel %vm460, %v315, 0
  %v498 = vsel %vm460, %v317, 0
  %v501 = vsel %vm460, %v319, 0
  %v504 = vsel %vm460, %v321, 0
  %v507 = vsel %vm460, %v323, 0
  %v510 = vsel %vm460, %v325, 0
  %v513 = vsel %vm460, %v327, 0
  %v516 = vsel %vm460, %v329, 0
  %v519 = vsel %vm460, %v331, 0
  %v522 = vsel %vm460, %v333, 0
  %v525 = vsel %vm460, %v335, 0
  %v528 = vsel %vm460, %v337, 0
  %v531 = vsel %vm460, %v339, 0
  %v534 = vsel %vm460, %v341, 0
  %v537 = vsel %vm460, %v343, 0
  %v540 = vsel %vm460, %v345, 0
  %v543 = vsel %vm460, %v347, 0
  %v546 = vsel %vm460, %v349, 0
  %v549 = vsel %vm460, %v351, 0
  %v552 = vsel %vm460, %v353, 0
  %v555 = vsel %vm460, %v355, 0
  %557 = vmatprep.subr.bf16.mxu0 0
  %558 = vmatpush1.bf16.msra.mxu0 %v443
  %559 = vmatprep.subr.bf16.mxu0 0
  %560 = vmatpush1.bf16.msra.mxu0 %v442
  %561 = vmatprep.subr.bf16.mxu0 0
  %562 = vmatpush1.bf16.msra.mxu0 %v441
  %563 = vmatprep.subr.bf16.mxu0 0
  %564 = vmatpush1.bf16.msra.mxu0 %v440
  %565 = vmatprep.subr.bf16.mxu0 0
  %566 = vmatpush1.bf16.msra.mxu0 %v439
  %567 = vmatprep.subr.bf16.mxu0 0
  %568 = vmatpush1.bf16.msra.mxu0 %v438
  %569 = vmatprep.subr.bf16.mxu0 0
  %570 = vmatpush1.bf16.msra.mxu0 %v437
  %571 = vmatprep.subr.bf16.mxu0 0
  %572 = vmatpush1.bf16.msra.mxu0 %v436
  %573 = vmatprep.subr.bf16.mxu0 0
  %574 = vmatpush2.bf16.msra.mxu0 0
  %575 = vmatprep.subr.bf16.mxu0 0
  %576 = vmatpush2.bf16.msra.mxu0 0
  %577 = vmatprep.subr.bf16.mxu0 0
  %578 = vmatpush2.bf16.msra.mxu0 0
  %579 = vmatprep.subr.bf16.mxu0 0
  %580 = vmatpush2.bf16.msra.mxu0 0
  %581 = vmatprep.subr.bf16.mxu0 0
  %582 = vmatpush2.bf16.msra.mxu0 %v447
  %583 = vmatprep.subr.bf16.mxu0 0
  %584 = vmatpush2.bf16.msra.mxu0 %v446
  %585 = vmatprep.subr.bf16.mxu0 0
  %586 = vmatpush2.bf16.msra.mxu0 %v445
  %587 = vmatprep.subr.bf16.mxu0 0
  %588 = vmatpush2.bf16.msra.mxu0 %v444
  %589 = vmatprep.mubr.bf16.mxu0 %v462
  %590 = vmatmul.mubr.bf16.gmra.mxu0 %v292
  %v591 = vpop.f32.mrf.mxu0
  %v592 = vadd.f32 0.0, %v591
  %v593 = vpop.f32.mrf.mxu0
  %v594 = vpop.f32.mrf.mxu0
  %v595 = vadd.f32 0.0, %v594
  %v596 = vpop.f32.mrf.mxu0
  %597 = vmatprep.mubr.bf16.mxu0 %v465
  %598 = vmatmul.mubr.bf16.gmra.mxu0 %v294
  %v599 = vpop.f32.mrf.mxu0
  %v600 = vadd.f32 0.0, %v599
  %v601 = vpop.f32.mrf.mxu0
  %v602 = vpop.f32.mrf.mxu0
  %v603 = vadd.f32 0.0, %v602
  %v604 = vpop.f32.mrf.mxu0
  %605 = vmatprep.mubr.bf16.mxu0 %v468
  %606 = vmatmul.mubr.bf16.gmra.mxu0 %v296
  %v607 = vpop.f32.mrf.mxu0
  %v608 = vadd.f32 0.0, %v607
  %v609 = vpop.f32.mrf.mxu0
  %v610 = vpop.f32.mrf.mxu0
  %v611 = vadd.f32 0.0, %v610
  %v612 = vpop.f32.mrf.mxu0
  %613 = vmatprep.mubr.bf16.mxu0 %v471
  %614 = vmatmul.mubr.bf16.gmra.mxu0 %v298
  %v615 = vpop.f32.mrf.mxu0
  %v616 = vadd.f32 0.0, %v615
  %v617 = vpop.f32.mrf.mxu0
  %v618 = vpop.f32.mrf.mxu0
  %v619 = vadd.f32 0.0, %v618
  %v620 = vpop.f32.mrf.mxu0
  %621 = vmatprep.mubr.bf16.mxu0 %v474
  %622 = vmatmul.mubr.bf16.gmra.mxu0 %v300
  %v623 = vpop.f32.mrf.mxu0
  %v624 = vadd.f32 0.0, %v623
  %v625 = vpop.f32.mrf.mxu0
  %v626 = vpop.f32.mrf.mxu0
  %v627 = vadd.f32 0.0, %v626
  %v628 = vpop.f32.mrf.mxu0
  %629 = vmatprep.mubr.bf16.mxu0 %v477
  %630 = vmatmul.mubr.bf16.gmra.mxu0 %v302
  %v631 = vpop.f32.mrf.mxu0
  %v632 = vadd.f32 0.0, %v631
  %v633 = vpop.f32.mrf.mxu0
  %v634 = vpop.f32.mrf.mxu0
  %v635 = vadd.f32 0.0, %v634
  %v636 = vpop.f32.mrf.mxu0
  %637 = vmatprep.mubr.bf16.mxu0 %v480
  %638 = vmatmul.mubr.bf16.gmra.mxu0 %v304
  %v639 = vpop.f32.mrf.mxu0
  %v640 = vadd.f32 0.0, %v639
  %v641 = vpop.f32.mrf.mxu0
  %v642 = vpop.f32.mrf.mxu0
  %v643 = vadd.f32 0.0, %v642
  %v644 = vpop.f32.mrf.mxu0
  %645 = vmatprep.mubr.bf16.mxu0 %v483
  %646 = vmatmul.mubr.bf16.gmra.mxu0 %v306
  %v647 = vpop.f32.mrf.mxu0
  %v648 = vadd.f32 0.0, %v647
  %v649 = vpop.f32.mrf.mxu0
  %v650 = vpop.f32.mrf.mxu0
  %v651 = vadd.f32 0.0, %v650
  %v652 = vpop.f32.mrf.mxu0
  %653 = vmatprep.mubr.bf16.mxu0 %v486
  %654 = vmatmul.mubr.bf16.gmra.mxu0 %v308
  %v655 = vpop.f32.mrf.mxu0
  %v656 = vadd.f32 0.0, %v655
  %v657 = vpop.f32.mrf.mxu0
  %v658 = vpop.f32.mrf.mxu0
  %v659 = vadd.f32 0.0, %v658
  %v660 = vpop.f32.mrf.mxu0
  %661 = vmatprep.mubr.bf16.mxu0 %v489
  %662 = vmatmul.mubr.bf16.gmra.mxu0 %v310
  %v663 = vpop.f32.mrf.mxu0
  %v664 = vadd.f32 0.0, %v663
  %v665 = vpop.f32.mrf.mxu0
  %v666 = vpop.f32.mrf.mxu0
  %v667 = vadd.f32 0.0, %v666
  %v668 = vpop.f32.mrf.mxu0
  %669 = vmatprep.mubr.bf16.mxu0 %v492
  %670 = vmatmul.mubr.bf16.gmra.mxu0 %v312
  %v671 = vpop.f32.mrf.mxu0
  %v672 = vadd.f32 0.0, %v671
  %v673 = vpop.f32.mrf.mxu0
  %v674 = vpop.f32.mrf.mxu0
  %v675 = vadd.f32 0.0, %v674
  %v676 = vpop.f32.mrf.mxu0
  %677 = vmatprep.mubr.bf16.mxu0 %v495
  %678 = vmatmul.mubr.bf16.gmra.mxu0 %v314
  %v679 = vpop.f32.mrf.mxu0
  %v680 = vadd.f32 0.0, %v679
  %v681 = vpop.f32.mrf.mxu0
  %v682 = vpop.f32.mrf.mxu0
  %v683 = vadd.f32 0.0, %v682
  %v684 = vpop.f32.mrf.mxu0
  %685 = vmatprep.mubr.bf16.mxu0 %v498
  %686 = vmatmul.mubr.bf16.gmra.mxu0 %v316
  %v687 = vpop.f32.mrf.mxu0
  %v688 = vadd.f32 0.0, %v687
  %v689 = vpop.f32.mrf.mxu0
  %v690 = vpop.f32.mrf.mxu0
  %v691 = vadd.f32 0.0, %v690
  %v692 = vpop.f32.mrf.mxu0
  %693 = vmatprep.mubr.bf16.mxu0 %v501
  %694 = vmatmul.mubr.bf16.gmra.mxu0 %v318
  %v695 = vpop.f32.mrf.mxu0
  %v696 = vadd.f32 0.0, %v695
  %v697 = vpop.f32.mrf.mxu0
  %v698 = vpop.f32.mrf.mxu0
  %v699 = vadd.f32 0.0, %v698
  %v700 = vpop.f32.mrf.mxu0
  %701 = vmatprep.mubr.bf16.mxu0 %v504
  %702 = vmatmul.mubr.bf16.gmra.mxu0 %v320
  %v703 = vpop.f32.mrf.mxu0
  %v704 = vadd.f32 0.0, %v703
  %v705 = vpop.f32.mrf.mxu0
  %v706 = vpop.f32.mrf.mxu0
  %v707 = vadd.f32 0.0, %v706
  %v708 = vpop.f32.mrf.mxu0
  %709 = vmatprep.mubr.bf16.mxu0 %v507
  %710 = vmatmul.mubr.bf16.gmra.mxu0 %v322
  %v711 = vpop.f32.mrf.mxu0
  %v712 = vadd.f32 0.0, %v711
  %v713 = vpop.f32.mrf.mxu0
  %v714 = vpop.f32.mrf.mxu0
  %v715 = vadd.f32 0.0, %v714
  %v716 = vpop.f32.mrf.mxu0
  %717 = vmatprep.mubr.bf16.mxu0 %v510
  %718 = vmatmul.mubr.bf16.gmra.mxu0 %v324
  %v719 = vpop.f32.mrf.mxu0
  %v720 = vadd.f32 0.0, %v719
  %v721 = vpop.f32.mrf.mxu0
  %v722 = vpop.f32.mrf.mxu0
  %v723 = vadd.f32 0.0, %v722
  %v724 = vpop.f32.mrf.mxu0
  %725 = vmatprep.mubr.bf16.mxu0 %v513
  %726 = vmatmul.mubr.bf16.gmra.mxu0 %v326
  %v727 = vpop.f32.mrf.mxu0
  %v728 = vadd.f32 0.0, %v727
  %v729 = vpop.f32.mrf.mxu0
  %v730 = vpop.f32.mrf.mxu0
  %v731 = vadd.f32 0.0, %v730
  %v732 = vpop.f32.mrf.mxu0
  %733 = vmatprep.mubr.bf16.mxu0 %v516
  %734 = vmatmul.mubr.bf16.gmra.mxu0 %v328
  %v735 = vpop.f32.mrf.mxu0
  %v736 = vadd.f32 0.0, %v735
  %v737 = vpop.f32.mrf.mxu0
  %v738 = vpop.f32.mrf.mxu0
  %v739 = vadd.f32 0.0, %v738
  %v740 = vpop.f32.mrf.mxu0
  %741 = vmatprep.mubr.bf16.mxu0 %v519
  %742 = vmatmul.mubr.bf16.gmra.mxu0 %v330
  %v743 = vpop.f32.mrf.mxu0
  %v744 = vadd.f32 0.0, %v743
  %v745 = vpop.f32.mrf.mxu0
  %v746 = vpop.f32.mrf.mxu0
  %v747 = vadd.f32 0.0, %v746
  %v748 = vpop.f32.mrf.mxu0
  %749 = vmatprep.mubr.bf16.mxu0 %v522
  %750 = vmatmul.mubr.bf16.gmra.mxu0 %v332
  %v751 = vpop.f32.mrf.mxu0
  %v752 = vadd.f32 0.0, %v751
  %v753 = vpop.f32.mrf.mxu0
  %v754 = vpop.f32.mrf.mxu0
  %v755 = vadd.f32 0.0, %v754
  %v756 = vpop.f32.mrf.mxu0
  %757 = vmatprep.mubr.bf16.mxu0 %v525
  %758 = vmatmul.mubr.bf16.gmra.mxu0 %v334
  %v759 = vpop.f32.mrf.mxu0
  %v760 = vadd.f32 0.0, %v759
  %v761 = vpop.f32.mrf.mxu0
  %v762 = vpop.f32.mrf.mxu0
  %v763 = vadd.f32 0.0, %v762
  %v764 = vpop.f32.mrf.mxu0
  %765 = vmatprep.mubr.bf16.mxu0 %v528
  %766 = vmatmul.mubr.bf16.gmra.mxu0 %v336
  %v767 = vpop.f32.mrf.mxu0
  %v768 = vadd.f32 0.0, %v767
  %v769 = vpop.f32.mrf.mxu0
  %v770 = vpop.f32.mrf.mxu0
  %v771 = vadd.f32 0.0, %v770
  %v772 = vpop.f32.mrf.mxu0
  %773 = vmatprep.mubr.bf16.mxu0 %v531
  %774 = vmatmul.mubr.bf16.gmra.mxu0 %v338
  %v775 = vpop.f32.mrf.mxu0
  %v776 = vadd.f32 0.0, %v775
  %v777 = vpop.f32.mrf.mxu0
  %v778 = vpop.f32.mrf.mxu0
  %v779 = vadd.f32 0.0, %v778
  %v780 = vpop.f32.mrf.mxu0
  %781 = vmatprep.mubr.bf16.mxu0 %v534
  %782 = vmatmul.mubr.bf16.gmra.mxu0 %v340
  %v783 = vpop.f32.mrf.mxu0
  %v784 = vadd.f32 0.0, %v783
  %v785 = vpop.f32.mrf.mxu0
  %v786 = vpop.f32.mrf.mxu0
  %v787 = vadd.f32 0.0, %v786
  %v788 = vpop.f32.mrf.mxu0
  %789 = vmatprep.mubr.bf16.mxu0 %v537
  %790 = vmatmul.mubr.bf16.gmra.mxu0 %v342
  %v791 = vpop.f32.mrf.mxu0
  %v792 = vadd.f32 0.0, %v791
  %v793 = vpop.f32.mrf.mxu0
  %v794 = vpop.f32.mrf.mxu0
  %v795 = vadd.f32 0.0, %v794
  %v796 = vpop.f32.mrf.mxu0
  %797 = vmatprep.mubr.bf16.mxu0 %v540
  %798 = vmatmul.mubr.bf16.gmra.mxu0 %v344
  %v799 = vpop.f32.mrf.mxu0
  %v800 = vadd.f32 0.0, %v799
  %v801 = vpop.f32.mrf.mxu0
  %v802 = vpop.f32.mrf.mxu0
  %v803 = vadd.f32 0.0, %v802
  %v804 = vpop.f32.mrf.mxu0
  %805 = vmatprep.mubr.bf16.mxu0 %v543
  %806 = vmatmul.mubr.bf16.gmra.mxu0 %v346
  %v807 = vpop.f32.mrf.mxu0
  %v808 = vadd.f32 0.0, %v807
  %v809 = vpop.f32.mrf.mxu0
  %v810 = vpop.f32.mrf.mxu0
  %v811 = vadd.f32 0.0, %v810
  %v812 = vpop.f32.mrf.mxu0
  %813 = vmatprep.mubr.bf16.mxu0 %v546
  %814 = vmatmul.mubr.bf16.gmra.mxu0 %v348
  %v815 = vpop.f32.mrf.mxu0
  %v816 = vadd.f32 0.0, %v815
  %v817 = vpop.f32.mrf.mxu0
  %v818 = vpop.f32.mrf.mxu0
  %v819 = vadd.f32 0.0, %v818
  %v820 = vpop.f32.mrf.mxu0
  %821 = vmatprep.mubr.bf16.mxu0 %v549
  %822 = vmatmul.mubr.bf16.gmra.mxu0 %v350
  %v823 = vpop.f32.mrf.mxu0
  %v824 = vadd.f32 0.0, %v823
  %v825 = vpop.f32.mrf.mxu0
  %v826 = vpop.f32.mrf.mxu0
  %v827 = vadd.f32 0.0, %v826
  %v828 = vpop.f32.mrf.mxu0
  %829 = vmatprep.mubr.bf16.mxu0 %v552
  %830 = vmatmul.mubr.bf16.gmra.mxu0 %v352
  %v831 = vpop.f32.mrf.mxu0
  %v832 = vadd.f32 0.0, %v831
  %v833 = vpop.f32.mrf.mxu0
  %v834 = vpop.f32.mrf.mxu0
  %v835 = vadd.f32 0.0, %v834
  %v836 = vpop.f32.mrf.mxu0
  %837 = vmatprep.mubr.bf16.mxu0 %v555
  %838 = vmatmul.mubr.bf16.gmra.mxu0 %v354
  %v839 = vpop.f32.mrf.mxu0
  %v840 = vadd.f32 0.0, %v839
  %v841 = vpop.f32.mrf.mxu0
  %v842 = vpop.f32.mrf.mxu0
  %v843 = vadd.f32 0.0, %v842
  %v844 = vpop.f32.mrf.mxu0
  %845 = vdwg.mxu0
  %v846 = vmax.f32 %v592, 0.0
  %v847 = vmax.f32 %v595, 0.0
  %v848 = vmax.f32 %v600, 0.0
  %v849 = vmax.f32 %v603, 0.0
  %v850 = vmax.f32 %v608, 0.0
  %v851 = vmax.f32 %v611, 0.0
  %v852 = vmax.f32 %v616, 0.0
  %v853 = vmax.f32 %v619, 0.0
  %v854 = vmax.f32 %v624, 0.0
  %v855 = vmax.f32 %v627, 0.0
  %v856 = vmax.f32 %v632, 0.0
  %v857 = vmax.f32 %v635, 0.0
  %v858 = vmax.f32 %v640, 0.0
  %v859 = vmax.f32 %v643, 0.0
  %v860 = vmax.f32 %v648, 0.0
  %v861 = vmax.f32 %v651, 0.0
  %v862 = vmax.f32 %v656, 0.0
  %v863 = vmax.f32 %v659, 0.0
  %v864 = vmax.f32 %v664, 0.0
  %v865 = vmax.f32 %v667, 0.0
  %v866 = vmax.f32 %v672, 0.0
  %v867 = vmax.f32 %v675, 0.0
  %v868 = vmax.f32 %v680, 0.0
  %v869 = vmax.f32 %v683, 0.0
  %v870 = vmax.f32 %v688, 0.0
  %v871 = vmax.f32 %v691, 0.0
  %v872 = vmax.f32 %v696, 0.0
  %v873 = vmax.f32 %v699, 0.0
  %v874 = vmax.f32 %v704, 0.0
  %v875 = vmax.f32 %v707, 0.0
  %v876 = vmax.f32 %v712, 0.0
  %v877 = vmax.f32 %v715, 0.0
  %v878 = vmax.f32 %v720, 0.0
  %v879 = vmax.f32 %v723, 0.0
  %v880 = vmax.f32 %v728, 0.0
  %v881 = vmax.f32 %v731, 0.0
  %v882 = vmax.f32 %v736, 0.0
  %v883 = vmax.f32 %v739, 0.0
  %v884 = vmax.f32 %v744, 0.0
  %v885 = vmax.f32 %v747, 0.0
  %v886 = vmax.f32 %v752, 0.0
  %v887 = vmax.f32 %v755, 0.0
  %v888 = vmax.f32 %v760, 0.0
  %v889 = vmax.f32 %v763, 0.0
  %v890 = vmax.f32 %v768, 0.0
  %v891 = vmax.f32 %v771, 0.0
  %v892 = vmax.f32 %v776, 0.0
  %v893 = vmax.f32 %v779, 0.0
  %v894 = vmax.f32 %v784, 0.0
  %v895 = vmax.f32 %v787, 0.0
  %v896 = vmax.f32 %v792, 0.0
  %v897 = vmax.f32 %v795, 0.0
  %v898 = vmax.f32 %v800, 0.0
  %v899 = vmax.f32 %v803, 0.0
  %v900 = vmax.f32 %v808, 0.0
  %v901 = vmax.f32 %v811, 0.0
  %v902 = vmax.f32 %v816, 0.0
  %v903 = vmax.f32 %v819, 0.0
  %v904 = vmax.f32 %v824, 0.0
  %v905 = vmax.f32 %v827, 0.0
  %v906 = vmax.f32 %v832, 0.0
  %v907 = vmax.f32 %v835, 0.0
  %v908 = vmax.f32 %v840, 0.0
  %v909 = vmax.f32 %v843, 0.0
  %v910 = vpack.c.bf16 %v847, %v846
  %v911 = vpack.c.bf16 %v849, %v848
  %v912 = vpack.c.bf16 %v851, %v850
  %v913 = vpack.c.bf16 %v853, %v852
  %v914 = vpack.c.bf16 %v855, %v854
  %v915 = vpack.c.bf16 %v857, %v856
  %v916 = vpack.c.bf16 %v859, %v858
  %v917 = vpack.c.bf16 %v861, %v860
  %v918 = vpack.c.bf16 %v863, %v862
  %v919 = vpack.c.bf16 %v865, %v864
  %v920 = vpack.c.bf16 %v867, %v866
  %v921 = vpack.c.bf16 %v869, %v868
  %v922 = vpack.c.bf16 %v871, %v870
  %v923 = vpack.c.bf16 %v873, %v872
  %v924 = vpack.c.bf16 %v875, %v874
  %v925 = vpack.c.bf16 %v877, %v876
  %v926 = vpack.c.bf16 %v879, %v878
  %v927 = vpack.c.bf16 %v881, %v880
  %v928 = vpack.c.bf16 %v883, %v882
  %v929 = vpack.c.bf16 %v885, %v884
  %v930 = vpack.c.bf16 %v887, %v886
  %v931 = vpack.c.bf16 %v889, %v888
  %v932 = vpack.c.bf16 %v891, %v890
  %v933 = vpack.c.bf16 %v893, %v892
  %v934 = vpack.c.bf16 %v895, %v894
  %v935 = vpack.c.bf16 %v897, %v896
  %v936 = vpack.c.bf16 %v899, %v898
  %v937 = vpack.c.bf16 %v901, %v900
  %v938 = vpack.c.bf16 %v903, %v902
  %v939 = vpack.c.bf16 %v905, %v904
  %v940 = vpack.c.bf16 %v907, %v906
  %v941 = vpack.c.bf16 %v909, %v908
  %v974 = vunpack.c.l.b16 %v910
  %v975 = vunpack.c.h.b16 %v910
  %v976 = vunpack.c.l.b16 %v911
  %v977 = vunpack.c.h.b16 %v911
  %v978 = vunpack.c.l.b16 %v912
  %v979 = vunpack.c.h.b16 %v912
  %v980 = vunpack.c.l.b16 %v913
  %v981 = vunpack.c.h.b16 %v913
  %v982 = vunpack.c.l.b16 %v914
  %v983 = vunpack.c.h.b16 %v914
  %v984 = vunpack.c.l.b16 %v915
  %v985 = vunpack.c.h.b16 %v915
  %v986 = vunpack.c.l.b16 %v916
  %v987 = vunpack.c.h.b16 %v916
  %v988 = vunpack.c.l.b16 %v917
  %v989 = vunpack.c.h.b16 %v917
  %v990 = vunpack.c.l.b16 %v918
  %v991 = vunpack.c.h.b16 %v918
  %v992 = vunpack.c.l.b16 %v919
  %v993 = vunpack.c.h.b16 %v919
  %v994 = vunpack.c.l.b16 %v920
  %v995 = vunpack.c.h.b16 %v920
  %v996 = vunpack.c.l.b16 %v921
  %v997 = vunpack.c.h.b16 %v921
  %v998 = vunpack.c.l.b16 %v922
  %v999 = vunpack.c.h.b16 %v922
  %v1000 = vunpack.c.l.b16 %v923
  %v1001 = vunpack.c.h.b16 %v923
  %v1002 = vunpack.c.l.b16 %v924
  %v1003 = vunpack.c.h.b16 %v924
  %v1004 = vunpack.c.l.b16 %v925
  %v1005 = vunpack.c.h.b16 %v925
  %v1006 = vunpack.c.l.b16 %v926
  %v1007 = vunpack.c.h.b16 %v926
  %v1008 = vunpack.c.l.b16 %v927
  %v1009 = vunpack.c.h.b16 %v927
  %v1010 = vunpack.c.l.b16 %v928
  %v1011 = vunpack.c.h.b16 %v928
  %v1012 = vunpack.c.l.b16 %v929
  %v1013 = vunpack.c.h.b16 %v929
  %v1014 = vunpack.c.l.b16 %v930
  %v1015 = vunpack.c.h.b16 %v930
  %v1016 = vunpack.c.l.b16 %v931
  %v1017 = vunpack.c.h.b16 %v931
  %v1018 = vunpack.c.l.b16 %v932
  %v1019 = vunpack.c.h.b16 %v932
  %v1020 = vunpack.c.l.b16 %v933
  %v1021 = vunpack.c.h.b16 %v933
  %v1022 = vunpack.c.l.b16 %v934
  %v1023 = vunpack.c.h.b16 %v934
  %v1024 = vunpack.c.l.b16 %v935
  %v1025 = vunpack.c.h.b16 %v935
  %v1026 = vunpack.c.l.b16 %v936
  %v1027 = vunpack.c.h.b16 %v936
  %v1028 = vunpack.c.l.b16 %v937
  %v1029 = vunpack.c.h.b16 %v937
  %v1030 = vunpack.c.l.b16 %v938
  %v1031 = vunpack.c.h.b16 %v938
  %v1032 = vunpack.c.l.b16 %v939
  %v1033 = vunpack.c.h.b16 %v939
  %v1034 = vunpack.c.l.b16 %v940
  %v1035 = vunpack.c.h.b16 %v940
  %v1036 = vunpack.c.l.b16 %v941
  %v1037 = vunpack.c.h.b16 %v941
  %v1038 = vpack.c.b16 %v974, %v974
  %v1039 = vpack.c.b16 %v975, %v975
  %v1040 = vpack.c.b16 %v976, %v976
  %v1041 = vpack.c.b16 %v977, %v977
  %v1042 = vpack.c.b16 %v978, %v978
  %v1043 = vpack.c.b16 %v979, %v979
  %v1044 = vpack.c.b16 %v980, %v980
  %v1045 = vpack.c.b16 %v981, %v981
  %v1046 = vpack.c.b16 %v982, %v982
  %v1047 = vpack.c.b16 %v983, %v983
  %v1048 = vpack.c.b16 %v984, %v984
  %v1049 = vpack.c.b16 %v985, %v985
  %v1050 = vpack.c.b16 %v986, %v986
  %v1051 = vpack.c.b16 %v987, %v987
  %v1052 = vpack.c.b16 %v988, %v988
  %v1053 = vpack.c.b16 %v989, %v989
  %v1054 = vpack.c.b16 %v990, %v990
  %v1055 = vpack.c.b16 %v991, %v991
  %v1056 = vpack.c.b16 %v992, %v992
  %v1057 = vpack.c.b16 %v993, %v993
  %v1058 = vpack.c.b16 %v994, %v994
  %v1059 = vpack.c.b16 %v995, %v995
  %v1060 = vpack.c.b16 %v996, %v996
  %v1061 = vpack.c.b16 %v997, %v997
  %v1062 = vpack.c.b16 %v998, %v998
  %v1063 = vpack.c.b16 %v999, %v999
  %v1064 = vpack.c.b16 %v1000, %v1000
  %v1065 = vpack.c.b16 %v1001, %v1001
  %v1066 = vpack.c.b16 %v1002, %v1002
  %v1067 = vpack.c.b16 %v1003, %v1003
  %v1068 = vpack.c.b16 %v1004, %v1004
  %v1069 = vpack.c.b16 %v1005, %v1005
  %v1070 = vpack.c.b16 %v1006, %v1006
  %v1071 = vpack.c.b16 %v1007, %v1007
  %v1072 = vpack.c.b16 %v1008, %v1008
  %v1073 = vpack.c.b16 %v1009, %v1009
  %v1074 = vpack.c.b16 %v1010, %v1010
  %v1075 = vpack.c.b16 %v1011, %v1011
  %v1076 = vpack.c.b16 %v1012, %v1012
  %v1077 = vpack.c.b16 %v1013, %v1013
  %v1078 = vpack.c.b16 %v1014, %v1014
  %v1079 = vpack.c.b16 %v1015, %v1015
  %v1080 = vpack.c.b16 %v1016, %v1016
  %v1081 = vpack.c.b16 %v1017, %v1017
  %v1082 = vpack.c.b16 %v1018, %v1018
  %v1083 = vpack.c.b16 %v1019, %v1019
  %v1084 = vpack.c.b16 %v1020, %v1020
  %v1085 = vpack.c.b16 %v1021, %v1021
  %v1086 = vpack.c.b16 %v1022, %v1022
  %v1087 = vpack.c.b16 %v1023, %v1023
  %v1088 = vpack.c.b16 %v1024, %v1024
  %v1089 = vpack.c.b16 %v1025, %v1025
  %v1090 = vpack.c.b16 %v1026, %v1026
  %v1091 = vpack.c.b16 %v1027, %v1027
  %v1092 = vpack.c.b16 %v1028, %v1028
  %v1093 = vpack.c.b16 %v1029, %v1029
  %v1094 = vpack.c.b16 %v1030, %v1030
  %v1095 = vpack.c.b16 %v1031, %v1031
  %v1096 = vpack.c.b16 %v1032, %v1032
  %v1097 = vpack.c.b16 %v1033, %v1033
  %v1098 = vpack.c.b16 %v1034, %v1034
  %v1099 = vpack.c.b16 %v1035, %v1035
  %v1100 = vpack.c.b16 %v1036, %v1036
  %v1101 = vpack.c.b16 %v1037, %v1037
  %1166 = vst [vmem:[%s2] sm:$0xf] %v1038
  %1167 = vst [vmem:[%s2 + $0x4] sm:$0xf] %v1039
  %1168 = vst [vmem:[%s2 + $0x8] sm:$0xf] %v1040
  %1169 = vst [vmem:[%s2 + $0xc] sm:$0xf] %v1041
  %1170 = vst [vmem:[%s2 + $0x10] sm:$0xf] %v1042
  %1171 = vst [vmem:[%s2 + $0x14] sm:$0xf] %v1043
  %1172 = vst [vmem:[%s2 + $0x18] sm:$0xf] %v1044
  %1173 = vst [vmem:[%s2 + $0x1c] sm:$0xf] %v1045
  %1174 = vst [vmem:[%s2 + $0x20] sm:$0xf] %v1046
  %1175 = vst [vmem:[%s2 + $0x24] sm:$0xf] %v1047
  %1176 = vst [vmem:[%s2 + $0x28] sm:$0xf] %v1048
  %1177 = vst [vmem:[%s2 + $0x2c] sm:$0xf] %v1049
  %1178 = vst [vmem:[%s2 + $0x30] sm:$0xf] %v1050
  %1179 = vst [vmem:[%s2 + $0x34] sm:$0xf] %v1051
  %1180 = vst [vmem:[%s2 + $0x38] sm:$0xf] %v1052
  %1181 = vst [vmem:[%s2 + $0x3c] sm:$0xf] %v1053
  %1182 = vst [vmem:[%s2 + $0x40] sm:$0xf] %v1054
  %1183 = vst [vmem:[%s2 + $0x44] sm:$0xf] %v1055
  %1184 = vst [vmem:[%s2 + $0x48] sm:$0xf] %v1056
  %1185 = vst [vmem:[%s2 + $0x4c] sm:$0xf] %v1057
  %1186 = vst [vmem:[%s2 + $0x50] sm:$0xf] %v1058
  %1187 = vst [vmem:[%s2 + $0x54] sm:$0xf] %v1059
  %1188 = vst [vmem:[%s2 + $0x58] sm:$0xf] %v1060
  %1189 = vst [vmem:[%s2 + $0x5c] sm:$0xf] %v1061
  %1190 = vst [vmem:[%s2 + $0x60] sm:$0xf] %v1062
  %1191 = vst [vmem:[%s2 + $0x64] sm:$0xf] %v1063
  %1192 = vst [vmem:[%s2 + $0x68] sm:$0xf] %v1064
  %1193 = vst [vmem:[%s2 + $0x6c] sm:$0xf] %v1065
  %1194 = vst [vmem:[%s2 + $0x70] sm:$0xf] %v1066
  %1195 = vst [vmem:[%s2 + $0x74] sm:$0xf] %v1067
  %1196 = vst [vmem:[%s2 + $0x78] sm:$0xf] %v1068
  %1197 = vst [vmem:[%s2 + $0x7c] sm:$0xf] %v1069
  %1198 = vst [vmem:[%s2 + $0x80] sm:$0xf] %v1070
  %1199 = vst [vmem:[%s2 + $0x84] sm:$0xf] %v1071
  %1200 = vst [vmem:[%s2 + $0x88] sm:$0xf] %v1072
  %1201 = vst [vmem:[%s2 + $0x8c] sm:$0xf] %v1073
  %1202 = vst [vmem:[%s2 + $0x90] sm:$0xf] %v1074
  %1203 = vst [vmem:[%s2 + $0x94] sm:$0xf] %v1075
  %1204 = vst [vmem:[%s2 + $0x98] sm:$0xf] %v1076
  %1205 = vst [vmem:[%s2 + $0x9c] sm:$0xf] %v1077
  %1206 = vst [vmem:[%s2 + $0xa0] sm:$0xf] %v1078
  %1207 = vst [vmem:[%s2 + $0xa4] sm:$0xf] %v1079
  %1208 = vst [vmem:[%s2 + $0xa8] sm:$0xf] %v1080
  %1209 = vst [vmem:[%s2 + $0xac] sm:$0xf] %v1081
  %1210 = vst [vmem:[%s2 + $0xb0] sm:$0xf] %v1082
  %1211 = vst [vmem:[%s2 + $0xb4] sm:$0xf] %v1083
  %1212 = vst [vmem:[%s2 + $0xb8] sm:$0xf] %v1084
  %1213 = vst [vmem:[%s2 + $0xbc] sm:$0xf] %v1085
  %1214 = vst [vmem:[%s2 + $0xc0] sm:$0xf] %v1086
  %1215 = vst [vmem:[%s2 + $0xc4] sm:$0xf] %v1087
  %1216 = vst [vmem:[%s2 + $0xc8] sm:$0xf] %v1088
  %1217 = vst [vmem:[%s2 + $0xcc] sm:$0xf] %v1089
  %1218 = vst [vmem:[%s2 + $0xd0] sm:$0xf] %v1090
  %1219 = vst [vmem:[%s2 + $0xd4] sm:$0xf] %v1091
  %1220 = vst [vmem:[%s2 + $0xd8] sm:$0xf] %v1092
  %1221 = vst [vmem:[%s2 + $0xdc] sm:$0xf] %v1093
  %1222 = vst [vmem:[%s2 + $0xe0] sm:$0xf] %v1094
  %1223 = vst [vmem:[%s2 + $0xe4] sm:$0xf] %v1095
  %1224 = vst [vmem:[%s2 + $0xe8] sm:$0xf] %v1096
  %1225 = vst [vmem:[%s2 + $0xec] sm:$0xf] %v1097
  %1226 = vst [vmem:[%s2 + $0xf0] sm:$0xf] %v1098
  %1227 = vst [vmem:[%s2 + $0xf4] sm:$0xf] %v1099
  %1228 = vst [vmem:[%s2 + $0xf8] sm:$0xf] %v1100
  %1229 = vst [vmem:[%s2 + $0xfc] sm:$0xf] %v1101
  // Predicated region
  $region10: #{encoder_a_forward.5} parent=0 // pred_check
    _
  $region11: #{encoder_a_forward.5} parent=0 // pred_check_branch
    %1231 = sbr.rel (0) target = $region13
  $region12: #{encoder_a_forward.5} parent=0 // pred_region
    _
  $region13: #{encoder_a_forward.5} parent=0 // pred_fallthru
    _
  // Predicated region
  $region14: #{encoder_a_forward.5} parent=0 // pred_check
    _
  $region15: #{encoder_a_forward.5} parent=0 // pred_check_branch
    %1233 = sbr.rel (0) target = $region17
  $region16: #{encoder_a_forward.5} parent=0 // pred_region
    _
  $region17: #{encoder_a_forward.5} parent=0 // pred_fallthru
    _

// kernel: encoder_a_forward.6
$region0: #{encoder_a_forward.6}
  #allocation0 [shape = 'u32[]', space=smem, size = 0x4, offset = 0x4, fixed_abs, tag = 'smem constant byte address 0x4 - core index']
  #allocation1 [shape = 'u32[144,128]{1,0:T(1,128)}', space=vmem, size = 0x12000, scoped, tag = 'internal scratch']
  %s0 = inlined_call_operand.vmem [shape: bf16[512,512], index: 0, kind: input, shape index: {}]
  %s1 = inlined_call_operand.vmem [shape: bf16[512,64], index: 1, kind: input, shape index: {}]
  %s2 = inlined_call_operand.vmem [shape: f32[1,64], index: 2, kind: input, shape index: {}]
  %s3 = inlined_call_operand.vmem [shape: f32[1,64], index: 3, kind: input, shape index: {}]
  %s4 = inlined_call_operand.vmem [shape: bf16[512,64], index: 4, kind: output, shape index: {}]
  %s5 = sld [smem:[#allocation0]]
  $region26: #{encoder_a_forward.6} parent=0
    _
  %s7 = ssub.s32 1, %s5
  %s8 = scalar_select 0, %s7, %s5
  // Predicated region
  $region2: #{encoder_a_forward.6} parent=0 // pred_check
    _
  $region3: #{encoder_a_forward.6} parent=0 // pred_check_branch
    %10 = sbr.rel (0) target = $region5
  $region4: #{encoder_a_forward.6} parent=0 // pred_region
    _
  $region5: #{encoder_a_forward.6} parent=0 // pred_fallthru
    _
  // Predicated region
  $region6: #{encoder_a_forward.6} parent=0 // pred_check
    _
  $region7: #{encoder_a_forward.6} parent=0 // pred_check_branch
    %12 = sbr.rel (0) target = $region9
  $region8: #{encoder_a_forward.6} parent=0 // pred_region
    _
  $region9: #{encoder_a_forward.6} parent=0 // pred_fallthru
    _
  // Predicated region
  $region10: #{encoder_a_forward.6} parent=0 // pred_check
    _
  $region11: #{encoder_a_forward.6} parent=0 // pred_check_branch
    %14 = sbr.rel (0) target = $region13
  $region12: #{encoder_a_forward.6} parent=0 // pred_region
    _
  $region13: #{encoder_a_forward.6} parent=0 // pred_fallthru
    _
  // Predicated region
  $region14: #{encoder_a_forward.6} parent=0 // pred_check
    _
  $region15: #{encoder_a_forward.6} parent=0 // pred_check_branch
    %16 = sbr.rel (0) target = $region17
  $region16: #{encoder_a_forward.6} parent=0 // pred_region
    _
  $region17: #{encoder_a_forward.6} parent=0 // pred_fallthru
    _
  %v18 = vld [vmem:[%s0] sm:$0xff]
  %v19 = vld [vmem:[%s0 + $0x8] sm:$0xff]
  %v20 = vld [vmem:[%s0 + $0x10] sm:$0xff]
  %v21 = vld [vmem:[%s0 + $0x18] sm:$0xff]
  %v22 = vld [vmem:[%s0 + $0x20] sm:$0xff]
  %v23 = vld [vmem:[%s0 + $0x28] sm:$0xff]
  %v24 = vld [vmem:[%s0 + $0x30] sm:$0xff]
  %v25 = vld [vmem:[%s0 + $0x38] sm:$0xff]
  %v26 = vld [vmem:[%s0 + $0x40] sm:$0xff]
  %v27 = vld [vmem:[%s0 + $0x48] sm:$0xff]
  %v28 = vld [vmem:[%s0 + $0x50] sm:$0xff]
  %v29 = vld [vmem:[%s0 + $0x58] sm:$0xff]
  %v30 = vld [vmem:[%s0 + $0x60] sm:$0xff]
  %v31 = vld [vmem:[%s0 + $0x68] sm:$0xff]
  %v32 = vld [vmem:[%s0 + $0x70] sm:$0xff]
  %v33 = vld [vmem:[%s0 + $0x78] sm:$0xff]
  %v34 = vld [vmem:[%s0 + $0x80] sm:$0xff]
  %v35 = vld [vmem:[%s0 + $0x88] sm:$0xff]
  %v36 = vld [vmem:[%s0 + $0x90] sm:$0xff]
  %v37 = vld [vmem:[%s0 + $0x98] sm:$0xff]
  %v38 = vld [vmem:[%s0 + $0xa0] sm:$0xff]
  %v39 = vld [vmem:[%s0 + $0xa8] sm:$0xff]
  %v40 = vld [vmem:[%s0 + $0xb0] sm:$0xff]
  %v41 = vld [vmem:[%s0 + $0xb8] sm:$0xff]
  %v42 = vld [vmem:[%s0 + $0xc0] sm:$0xff]
  %v43 = vld [vmem:[%s0 + $0xc8] sm:$0xff]
  %v44 = vld [vmem:[%s0 + $0xd0] sm:$0xff]
  %v45 = vld [vmem:[%s0 + $0xd8] sm:$0xff]
  %v46 = vld [vmem:[%s0 + $0xe0] sm:$0xff]
  %v47 = vld [vmem:[%s0 + $0xe8] sm:$0xff]
  %v48 = vld [vmem:[%s0 + $0xf0] sm:$0xff]
  %v49 = vld [vmem:[%s0 + $0xf8] sm:$0xff]
  %v50 = vld [vmem:[%s0 + $0x100] sm:$0xff]
  %v51 = vld [vmem:[%s0 + $0x108] sm:$0xff]
  %v52 = vld [vmem:[%s0 + $0x110] sm:$0xff]
  %v53 = vld [vmem:[%s0 + $0x118] sm:$0xff]
  %v54 = vld [vmem:[%s0 + $0x120] sm:$0xff]
  %v55 = vld [vmem:[%s0 + $0x128] sm:$0xff]
  %v56 = vld [vmem:[%s0 + $0x130] sm:$0xff]
  %v57 = vld [vmem:[%s0 + $0x138] sm:$0xff]
  %v58 = vld [vmem:[%s0 + $0x140] sm:$0xff]
  %v59 = vld [vmem:[%s0 + $0x148] sm:$0xff]
  %v60 = vld [vmem:[%s0 + $0x150] sm:$0xff]
  %v61 = vld [vmem:[%s0 + $0x158] sm:$0xff]
  %v62 = vld [vmem:[%s0 + $0x160] sm:$0xff]
  %v63 = vld [vmem:[%s0 + $0x168] sm:$0xff]
  %v64 = vld [vmem:[%s0 + $0x170] sm:$0xff]
  %v65 = vld [vmem:[%s0 + $0x178] sm:$0xff]
  %v66 = vld [vmem:[%s0 + $0x180] sm:$0xff]
  %v67 = vld [vmem:[%s0 + $0x188] sm:$0xff]
  %v68 = vld [vmem:[%s0 + $0x190] sm:$0xff]
  %v69 = vld [vmem:[%s0 + $0x198] sm:$0xff]
  %v70 = vld [vmem:[%s0 + $0x1a0] sm:$0xff]
  %v71 = vld [vmem:[%s0 + $0x1a8] sm:$0xff]
  %v72 = vld [vmem:[%s0 + $0x1b0] sm:$0xff]
  %v73 = vld [vmem:[%s0 + $0x1b8] sm:$0xff]
  %v74 = vld [vmem:[%s0 + $0x1c0] sm:$0xff]
  %v75 = vld [vmem:[%s0 + $0x1c8] sm:$0xff]
  %v76 = vld [vmem:[%s0 + $0x1d0] sm:$0xff]
  %v77 = vld [vmem:[%s0 + $0x1d8] sm:$0xff]
  %v78 = vld [vmem:[%s0 + $0x1e0] sm:$0xff]
  %v79 = vld [vmem:[%s0 + $0x1e8] sm:$0xff]
  %v80 = vld [vmem:[%s0 + $0x1f0] sm:$0xff]
  %v81 = vld [vmem:[%s0 + $0x1f8] sm:$0xff]
  %v82 = vld [vmem:[%s0 + $0x200] sm:$0xff]
  %v83 = vld [vmem:[%s0 + $0x208] sm:$0xff]
  %v84 = vld [vmem:[%s0 + $0x210] sm:$0xff]
  %v85 = vld [vmem:[%s0 + $0x218] sm:$0xff]
  %v86 = vld [vmem:[%s0 + $0x220] sm:$0xff]
  %v87 = vld [vmem:[%s0 + $0x228] sm:$0xff]
  %v88 = vld [vmem:[%s0 + $0x230] sm:$0xff]
  %v89 = vld [vmem:[%s0 + $0x238] sm:$0xff]
  %v90 = vld [vmem:[%s0 + $0x240] sm:$0xff]
  %v91 = vld [vmem:[%s0 + $0x248] sm:$0xff]
  %v92 = vld [vmem:[%s0 + $0x250] sm:$0xff]
  %v93 = vld [vmem:[%s0 + $0x258] sm:$0xff]
  %v94 = vld [vmem:[%s0 + $0x260] sm:$0xff]
  %v95 = vld [vmem:[%s0 + $0x268] sm:$0xff]
  %v96 = vld [vmem:[%s0 + $0x270] sm:$0xff]
  %v97 = vld [vmem:[%s0 + $0x278] sm:$0xff]
  %v98 = vld [vmem:[%s0 + $0x280] sm:$0xff]
  %v99 = vld [vmem:[%s0 + $0x288] sm:$0xff]
  %v100 = vld [vmem:[%s0 + $0x290] sm:$0xff]
  %v101 = vld [vmem:[%s0 + $0x298] sm:$0xff]
  %v102 = vld [vmem:[%s0 + $0x2a0] sm:$0xff]
  %v103 = vld [vmem:[%s0 + $0x2a8] sm:$0xff]
  %v104 = vld [vmem:[%s0 + $0x2b0] sm:$0xff]
  %v105 = vld [vmem:[%s0 + $0x2b8] sm:$0xff]
  %v106 = vld [vmem:[%s0 + $0x2c0] sm:$0xff]
  %v107 = vld [vmem:[%s0 + $0x2c8] sm:$0xff]
  %v108 = vld [vmem:[%s0 + $0x2d0] sm:$0xff]
  %v109 = vld [vmem:[%s0 + $0x2d8] sm:$0xff]
  %v110 = vld [vmem:[%s0 + $0x2e0] sm:$0xff]
  %v111 = vld [vmem:[%s0 + $0x2e8] sm:$0xff]
  %v112 = vld [vmem:[%s0 + $0x2f0] sm:$0xff]
  %v113 = vld [vmem:[%s0 + $0x2f8] sm:$0xff]
  %v114 = vld [vmem:[%s0 + $0x300] sm:$0xff]
  %v115 = vld [vmem:[%s0 + $0x308] sm:$0xff]
  %v116 = vld [vmem:[%s0 + $0x310] sm:$0xff]
  %v117 = vld [vmem:[%s0 + $0x318] sm:$0xff]
  %v118 = vld [vmem:[%s0 + $0x320] sm:$0xff]
  %v119 = vld [vmem:[%s0 + $0x328] sm:$0xff]
  %v120 = vld [vmem:[%s0 + $0x330] sm:$0xff]
  %v121 = vld [vmem:[%s0 + $0x338] sm:$0xff]
  %v122 = vld [vmem:[%s0 + $0x340] sm:$0xff]
  %v123 = vld [vmem:[%s0 + $0x348] sm:$0xff]
  %v124 = vld [vmem:[%s0 + $0x350] sm:$0xff]
  %v125 = vld [vmem:[%s0 + $0x358] sm:$0xff]
  %v126 = vld [vmem:[%s0 + $0x360] sm:$0xff]
  %v127 = vld [vmem:[%s0 + $0x368] sm:$0xff]
  %v128 = vld [vmem:[%s0 + $0x370] sm:$0xff]
  %v129 = vld [vmem:[%s0 + $0x378] sm:$0xff]
  %v130 = vld [vmem:[%s0 + $0x380] sm:$0xff]
  %v131 = vld [vmem:[%s0 + $0x388] sm:$0xff]
  %v132 = vld [vmem:[%s0 + $0x390] sm:$0xff]
  %v133 = vld [vmem:[%s0 + $0x398] sm:$0xff]
  %v134 = vld [vmem:[%s0 + $0x3a0] sm:$0xff]
  %v135 = vld [vmem:[%s0 + $0x3a8] sm:$0xff]
  %v136 = vld [vmem:[%s0 + $0x3b0] sm:$0xff]
  %v137 = vld [vmem:[%s0 + $0x3b8] sm:$0xff]
  %v138 = vld [vmem:[%s0 + $0x3c0] sm:$0xff]
  %v139 = vld [vmem:[%s0 + $0x3c8] sm:$0xff]
  %v140 = vld [vmem:[%s0 + $0x3d0] sm:$0xff]
  %v141 = vld [vmem:[%s0 + $0x3d8] sm:$0xff]
  %v142 = vld [vmem:[%s0 + $0x3e0] sm:$0xff]
  %v143 = vld [vmem:[%s0 + $0x3e8] sm:$0xff]
  %v144 = vld [vmem:[%s0 + $0x3f0] sm:$0xff]
  %v145 = vld [vmem:[%s0 + $0x3f8] sm:$0xff]
  %v146 = vld [vmem:[%s1] sm:$0xf]
  %v147 = vld [vmem:[%s1 + $0x4] sm:$0xf]
  %v148 = vld [vmem:[%s1 + $0x8] sm:$0xf]
  %v149 = vld [vmem:[%s1 + $0xc] sm:$0xf]
  %v150 = vld [vmem:[%s1 + $0x10] sm:$0xf]
  %v151 = vld [vmem:[%s1 + $0x14] sm:$0xf]
  %v152 = vld [vmem:[%s1 + $0x18] sm:$0xf]
  %v153 = vld [vmem:[%s1 + $0x1c] sm:$0xf]
  %v154 = vld [vmem:[%s1 + $0x20] sm:$0xf]
  %v155 = vld [vmem:[%s1 + $0x24] sm:$0xf]
  %v156 = vld [vmem:[%s1 + $0x28] sm:$0xf]
  %v157 = vld [vmem:[%s1 + $0x2c] sm:$0xf]
  %v158 = vld [vmem:[%s1 + $0x30] sm:$0xf]
  %v159 = vld [vmem:[%s1 + $0x34] sm:$0xf]
  %v160 = vld [vmem:[%s1 + $0x38] sm:$0xf]
  %v161 = vld [vmem:[%s1 + $0x3c] sm:$0xf]
  %v162 = vld [vmem:[%s1 + $0x40] sm:$0xf]
  %v163 = vld [vmem:[%s1 + $0x44] sm:$0xf]
  %v164 = vld [vmem:[%s1 + $0x48] sm:$0xf]
  %v165 = vld [vmem:[%s1 + $0x4c] sm:$0xf]
  %v166 = vld [vmem:[%s1 + $0x50] sm:$0xf]
  %v167 = vld [vmem:[%s1 + $0x54] sm:$0xf]
  %v168 = vld [vmem:[%s1 + $0x58] sm:$0xf]
  %v169 = vld [vmem:[%s1 + $0x5c] sm:$0xf]
  %v170 = vld [vmem:[%s1 + $0x60] sm:$0xf]
  %v171 = vld [vmem:[%s1 + $0x64] sm:$0xf]
  %v172 = vld [vmem:[%s1 + $0x68] sm:$0xf]
  %v173 = vld [vmem:[%s1 + $0x6c] sm:$0xf]
  %v174 = vld [vmem:[%s1 + $0x70] sm:$0xf]
  %v175 = vld [vmem:[%s1 + $0x74] sm:$0xf]
  %v176 = vld [vmem:[%s1 + $0x78] sm:$0xf]
  %v177 = vld [vmem:[%s1 + $0x7c] sm:$0xf]
  %v178 = vld [vmem:[%s1 + $0x80] sm:$0xf]
  %v179 = vld [vmem:[%s1 + $0x84] sm:$0xf]
  %v180 = vld [vmem:[%s1 + $0x88] sm:$0xf]
  %v181 = vld [vmem:[%s1 + $0x8c] sm:$0xf]
  %v182 = vld [vmem:[%s1 + $0x90] sm:$0xf]
  %v183 = vld [vmem:[%s1 + $0x94] sm:$0xf]
  %v184 = vld [vmem:[%s1 + $0x98] sm:$0xf]
  %v185 = vld [vmem:[%s1 + $0x9c] sm:$0xf]
  %v186 = vld [vmem:[%s1 + $0xa0] sm:$0xf]
  %v187 = vld [vmem:[%s1 + $0xa4] sm:$0xf]
  %v188 = vld [vmem:[%s1 + $0xa8] sm:$0xf]
  %v189 = vld [vmem:[%s1 + $0xac] sm:$0xf]
  %v190 = vld [vmem:[%s1 + $0xb0] sm:$0xf]
  %v191 = vld [vmem:[%s1 + $0xb4] sm:$0xf]
  %v192 = vld [vmem:[%s1 + $0xb8] sm:$0xf]
  %v193 = vld [vmem:[%s1 + $0xbc] sm:$0xf]
  %v194 = vld [vmem:[%s1 + $0xc0] sm:$0xf]
  %v195 = vld [vmem:[%s1 + $0xc4] sm:$0xf]
  %v196 = vld [vmem:[%s1 + $0xc8] sm:$0xf]
  %v197 = vld [vmem:[%s1 + $0xcc] sm:$0xf]
  %v198 = vld [vmem:[%s1 + $0xd0] sm:$0xf]
  %v199 = vld [vmem:[%s1 + $0xd4] sm:$0xf]
  %v200 = vld [vmem:[%s1 + $0xd8] sm:$0xf]
  %v201 = vld [vmem:[%s1 + $0xdc] sm:$0xf]
  %v202 = vld [vmem:[%s1 + $0xe0] sm:$0xf]
  %v203 = vld [vmem:[%s1 + $0xe4] sm:$0xf]
  %v204 = vld [vmem:[%s1 + $0xe8] sm:$0xf]
  %v205 = vld [vmem:[%s1 + $0xec] sm:$0xf]
  %v206 = vld [vmem:[%s1 + $0xf0] sm:$0xf]
  %v207 = vld [vmem:[%s1 + $0xf4] sm:$0xf]
  %v208 = vld [vmem:[%s1 + $0xf8] sm:$0xf]
  %v209 = vld [vmem:[%s1 + $0xfc] sm:$0xf]
  %v338 = vunpack.c.l.b16 %v18
  %v339 = vunpack.c.h.b16 %v18
  %v340 = vunpack.c.l.b16 %v19
  %v341 = vunpack.c.h.b16 %v19
  %v342 = vunpack.c.l.b16 %v20
  %v343 = vunpack.c.h.b16 %v20
  %v344 = vunpack.c.l.b16 %v21
  %v345 = vunpack.c.h.b16 %v21
  %v346 = vunpack.c.l.b16 %v22
  %v347 = vunpack.c.h.b16 %v22
  %v348 = vunpack.c.l.b16 %v23
  %v349 = vunpack.c.h.b16 %v23
  %v350 = vunpack.c.l.b16 %v24
  %v351 = vunpack.c.h.b16 %v24
  %v352 = vunpack.c.l.b16 %v25
  %v353 = vunpack.c.h.b16 %v25
  %v354 = vunpack.c.l.b16 %v26
  %v355 = vunpack.c.h.b16 %v26
  %v356 = vunpack.c.l.b16 %v27
  %v357 = vunpack.c.h.b16 %v27
  %v358 = vunpack.c.l.b16 %v28
  %v359 = vunpack.c.h.b16 %v28
  %v360 = vunpack.c.l.b16 %v29
  %v361 = vunpack.c.h.b16 %v29
  %v362 = vunpack.c.l.b16 %v30
  %v363 = vunpack.c.h.b16 %v30
  %v364 = vunpack.c.l.b16 %v31
  %v365 = vunpack.c.h.b16 %v31
  %v366 = vunpack.c.l.b16 %v32
  %v367 = vunpack.c.h.b16 %v32
  %v368 = vunpack.c.l.b16 %v33
  %v369 = vunpack.c.h.b16 %v33
  %v370 = vunpack.c.l.b16 %v34
  %v371 = vunpack.c.h.b16 %v34
  %v372 = vunpack.c.l.b16 %v35
  %v373 = vunpack.c.h.b16 %v35
  %v374 = vunpack.c.l.b16 %v36
  %v375 = vunpack.c.h.b16 %v36
  %v376 = vunpack.c.l.b16 %v37
  %v377 = vunpack.c.h.b16 %v37
  %v378 = vunpack.c.l.b16 %v38
  %v379 = vunpack.c.h.b16 %v38
  %v380 = vunpack.c.l.b16 %v39
  %v381 = vunpack.c.h.b16 %v39
  %v382 = vunpack.c.l.b16 %v40
  %v383 = vunpack.c.h.b16 %v40
  %v384 = vunpack.c.l.b16 %v41
  %v385 = vunpack.c.h.b16 %v41
  %v386 = vunpack.c.l.b16 %v42
  %v387 = vunpack.c.h.b16 %v42
  %v388 = vunpack.c.l.b16 %v43
  %v389 = vunpack.c.h.b16 %v43
  %v390 = vunpack.c.l.b16 %v44
  %v391 = vunpack.c.h.b16 %v44
  %v392 = vunpack.c.l.b16 %v45
  %v393 = vunpack.c.h.b16 %v45
  %v394 = vunpack.c.l.b16 %v46
  %v395 = vunpack.c.h.b16 %v46
  %v396 = vunpack.c.l.b16 %v47
  %v397 = vunpack.c.h.b16 %v47
  %v398 = vunpack.c.l.b16 %v48
  %v399 = vunpack.c.h.b16 %v48
  %v400 = vunpack.c.l.b16 %v49
  %v401 = vunpack.c.h.b16 %v49
  %v402 = vunpack.c.l.b16 %v50
  %v403 = vunpack.c.h.b16 %v50
  %v404 = vunpack.c.l.b16 %v51
  %v405 = vunpack.c.h.b16 %v51
  %v406 = vunpack.c.l.b16 %v52
  %v407 = vunpack.c.h.b16 %v52
  %v408 = vunpack.c.l.b16 %v53
  %v409 = vunpack.c.h.b16 %v53
  %v410 = vunpack.c.l.b16 %v54
  %v411 = vunpack.c.h.b16 %v54
  %v412 = vunpack.c.l.b16 %v55
  %v413 = vunpack.c.h.b16 %v55
  %v414 = vunpack.c.l.b16 %v56
  %v415 = vunpack.c.h.b16 %v56
  %v416 = vunpack.c.l.b16 %v57
  %v417 = vunpack.c.h.b16 %v57
  %v418 = vunpack.c.l.b16 %v58
  %v419 = vunpack.c.h.b16 %v58
  %v420 = vunpack.c.l.b16 %v59
  %v421 = vunpack.c.h.b16 %v59
  %v422 = vunpack.c.l.b16 %v60
  %v423 = vunpack.c.h.b16 %v60
  %v424 = vunpack.c.l.b16 %v61
  %v425 = vunpack.c.h.b16 %v61
  %v426 = vunpack.c.l.b16 %v62
  %v427 = vunpack.c.h.b16 %v62
  %v428 = vunpack.c.l.b16 %v63
  %v429 = vunpack.c.h.b16 %v63
  %v430 = vunpack.c.l.b16 %v64
  %v431 = vunpack.c.h.b16 %v64
  %v432 = vunpack.c.l.b16 %v65
  %v433 = vunpack.c.h.b16 %v65
  %v434 = vunpack.c.l.b16 %v66
  %v435 = vunpack.c.h.b16 %v66
  %v436 = vunpack.c.l.b16 %v67
  %v437 = vunpack.c.h.b16 %v67
  %v438 = vunpack.c.l.b16 %v68
  %v439 = vunpack.c.h.b16 %v68
  %v440 = vunpack.c.l.b16 %v69
  %v441 = vunpack.c.h.b16 %v69
  %v442 = vunpack.c.l.b16 %v70
  %v443 = vunpack.c.h.b16 %v70
  %v444 = vunpack.c.l.b16 %v71
  %v445 = vunpack.c.h.b16 %v71
  %v446 = vunpack.c.l.b16 %v72
  %v447 = vunpack.c.h.b16 %v72
  %v448 = vunpack.c.l.b16 %v73
  %v449 = vunpack.c.h.b16 %v73
  %v450 = vunpack.c.l.b16 %v74
  %v451 = vunpack.c.h.b16 %v74
  %v452 = vunpack.c.l.b16 %v75
  %v453 = vunpack.c.h.b16 %v75
  %v454 = vunpack.c.l.b16 %v76
  %v455 = vunpack.c.h.b16 %v76
  %v456 = vunpack.c.l.b16 %v77
  %v457 = vunpack.c.h.b16 %v77
  %v458 = vunpack.c.l.b16 %v78
  %v459 = vunpack.c.h.b16 %v78
  %v460 = vunpack.c.l.b16 %v79
  %v461 = vunpack.c.h.b16 %v79
  %v462 = vunpack.c.l.b16 %v80
  %v463 = vunpack.c.h.b16 %v80
  %v464 = vunpack.c.l.b16 %v81
  %v465 = vunpack.c.h.b16 %v81
  %v466 = vunpack.c.l.b16 %v82
  %v467 = vunpack.c.h.b16 %v82
  %v468 = vunpack.c.l.b16 %v83
  %v469 = vunpack.c.h.b16 %v83
  %v470 = vunpack.c.l.b16 %v84
  %v471 = vunpack.c.h.b16 %v84
  %v472 = vunpack.c.l.b16 %v85
  %v473 = vunpack.c.h.b16 %v85
  %v474 = vunpack.c.l.b16 %v86
  %v475 = vunpack.c.h.b16 %v86
  %v476 = vunpack.c.l.b16 %v87
  %v477 = vunpack.c.h.b16 %v87
  %v478 = vunpack.c.l.b16 %v88
  %v479 = vunpack.c.h.b16 %v88
  %v480 = vunpack.c.l.b16 %v89
  %v481 = vunpack.c.h.b16 %v89
  %v482 = vunpack.c.l.b16 %v90
  %v483 = vunpack.c.h.b16 %v90
  %v484 = vunpack.c.l.b16 %v91
  %v485 = vunpack.c.h.b16 %v91
  %v486 = vunpack.c.l.b16 %v92
  %v487 = vunpack.c.h.b16 %v92
  %v488 = vunpack.c.l.b16 %v93
  %v489 = vunpack.c.h.b16 %v93
  %v490 = vunpack.c.l.b16 %v94
  %v491 = vunpack.c.h.b16 %v94
  %v492 = vunpack.c.l.b16 %v95
  %v493 = vunpack.c.h.b16 %v95
  %v494 = vunpack.c.l.b16 %v96
  %v495 = vunpack.c.h.b16 %v96
  %v496 = vunpack.c.l.b16 %v97
  %v497 = vunpack.c.h.b16 %v97
  %v498 = vunpack.c.l.b16 %v98
  %v499 = vunpack.c.h.b16 %v98
  %v500 = vunpack.c.l.b16 %v99
  %v501 = vunpack.c.h.b16 %v99
  %v502 = vunpack.c.l.b16 %v100
  %v503 = vunpack.c.h.b16 %v100
  %v504 = vunpack.c.l.b16 %v101
  %v505 = vunpack.c.h.b16 %v101
  %v506 = vunpack.c.l.b16 %v102
  %v507 = vunpack.c.h.b16 %v102
  %v508 = vunpack.c.l.b16 %v103
  %v509 = vunpack.c.h.b16 %v103
  %v510 = vunpack.c.l.b16 %v104
  %v511 = vunpack.c.h.b16 %v104
  %v512 = vunpack.c.l.b16 %v105
  %v513 = vunpack.c.h.b16 %v105
  %v514 = vunpack.c.l.b16 %v106
  %v515 = vunpack.c.h.b16 %v106
  %v516 = vunpack.c.l.b16 %v107
  %v517 = vunpack.c.h.b16 %v107
  %v518 = vunpack.c.l.b16 %v108
  %v519 = vunpack.c.h.b16 %v108
  %v520 = vunpack.c.l.b16 %v109
  %v521 = vunpack.c.h.b16 %v109
  %v522 = vunpack.c.l.b16 %v110
  %v523 = vunpack.c.h.b16 %v110
  %v524 = vunpack.c.l.b16 %v111
  %v525 = vunpack.c.h.b16 %v111
  %v526 = vunpack.c.l.b16 %v112
  %v527 = vunpack.c.h.b16 %v112
  %v528 = vunpack.c.l.b16 %v113
  %v529 = vunpack.c.h.b16 %v113
  %v530 = vunpack.c.l.b16 %v114
  %v531 = vunpack.c.h.b16 %v114
  %v532 = vunpack.c.l.b16 %v115
  %v533 = vunpack.c.h.b16 %v115
  %v534 = vunpack.c.l.b16 %v116
  %v535 = vunpack.c.h.b16 %v116
  %v536 = vunpack.c.l.b16 %v117
  %v537 = vunpack.c.h.b16 %v117
  %v538 = vunpack.c.l.b16 %v118
  %v539 = vunpack.c.h.b16 %v118
  %v540 = vunpack.c.l.b16 %v119
  %v541 = vunpack.c.h.b16 %v119
  %v542 = vunpack.c.l.b16 %v120
  %v543 = vunpack.c.h.b16 %v120
  %v544 = vunpack.c.l.b16 %v121
  %v545 = vunpack.c.h.b16 %v121
  %v546 = vunpack.c.l.b16 %v122
  %v547 = vunpack.c.h.b16 %v122
  %v548 = vunpack.c.l.b16 %v123
  %v549 = vunpack.c.h.b16 %v123
  %v550 = vunpack.c.l.b16 %v124
  %v551 = vunpack.c.h.b16 %v124
  %v552 = vunpack.c.l.b16 %v125
  %v553 = vunpack.c.h.b16 %v125
  %v554 = vunpack.c.l.b16 %v126
  %v555 = vunpack.c.h.b16 %v126
  %v556 = vunpack.c.l.b16 %v127
  %v557 = vunpack.c.h.b16 %v127
  %v558 = vunpack.c.l.b16 %v128
  %v559 = vunpack.c.h.b16 %v128
  %v560 = vunpack.c.l.b16 %v129
  %v561 = vunpack.c.h.b16 %v129
  %v562 = vunpack.c.l.b16 %v130
  %v563 = vunpack.c.h.b16 %v130
  %v564 = vunpack.c.l.b16 %v131
  %v565 = vunpack.c.h.b16 %v131
  %v566 = vunpack.c.l.b16 %v132
  %v567 = vunpack.c.h.b16 %v132
  %v568 = vunpack.c.l.b16 %v133
  %v569 = vunpack.c.h.b16 %v133
  %v570 = vunpack.c.l.b16 %v134
  %v571 = vunpack.c.h.b16 %v134
  %v572 = vunpack.c.l.b16 %v135
  %v573 = vunpack.c.h.b16 %v135
  %v574 = vunpack.c.l.b16 %v136
  %v575 = vunpack.c.h.b16 %v136
  %v576 = vunpack.c.l.b16 %v137
  %v577 = vunpack.c.h.b16 %v137
  %v578 = vunpack.c.l.b16 %v138
  %v579 = vunpack.c.h.b16 %v138
  %v580 = vunpack.c.l.b16 %v139
  %v581 = vunpack.c.h.b16 %v139
  %v582 = vunpack.c.l.b16 %v140
  %v583 = vunpack.c.h.b16 %v140
  %v584 = vunpack.c.l.b16 %v141
  %v585 = vunpack.c.h.b16 %v141
  %v586 = vunpack.c.l.b16 %v142
  %v587 = vunpack.c.h.b16 %v142
  %v588 = vunpack.c.l.b16 %v143
  %v589 = vunpack.c.h.b16 %v143
  %v590 = vunpack.c.l.b16 %v144
  %v591 = vunpack.c.h.b16 %v144
  %v592 = vunpack.c.l.b16 %v145
  %v593 = vunpack.c.h.b16 %v145
  %v594 = vpack.c.b16 %v342, %v338
  %v595 = vpack.c.b16 %v343, %v339
  %v596 = vpack.c.b16 %v344, %v340
  %v597 = vpack.c.b16 %v345, %v341
  %v598 = vpack.c.b16 %v350, %v346
  %v599 = vpack.c.b16 %v351, %v347
  %v600 = vpack.c.b16 %v352, %v348
  %v601 = vpack.c.b16 %v353, %v349
  %v602 = vpack.c.b16 %v358, %v354
  %v603 = vpack.c.b16 %v359, %v355
  %v604 = vpack.c.b16 %v360, %v356
  %v605 = vpack.c.b16 %v361, %v357
  %v606 = vpack.c.b16 %v366, %v362
  %v607 = vpack.c.b16 %v367, %v363
  %v608 = vpack.c.b16 %v368, %v364
  %v609 = vpack.c.b16 %v369, %v365
  %v610 = vpack.c.b16 %v374, %v370
  %v611 = vpack.c.b16 %v375, %v371
  %v612 = vpack.c.b16 %v376, %v372
  %v613 = vpack.c.b16 %v377, %v373
  %v614 = vpack.c.b16 %v382, %v378
  %v615 = vpack.c.b16 %v383, %v379
  %v616 = vpack.c.b16 %v384, %v380
  %v617 = vpack.c.b16 %v385, %v381
  %v618 = vpack.c.b16 %v390, %v386
  %v619 = vpack.c.b16 %v391, %v387
  %v620 = vpack.c.b16 %v392, %v388
  %v621 = vpack.c.b16 %v393, %v389
  %v622 = vpack.c.b16 %v398, %v394
  %v623 = vpack.c.b16 %v399, %v395
  %v624 = vpack.c.b16 %v400, %v396
  %v625 = vpack.c.b16 %v401, %v397
  %v626 = vpack.c.b16 %v406, %v402
  %v627 = vpack.c.b16 %v407, %v403
  %v628 = vpack.c.b16 %v408, %v404
  %v629 = vpack.c.b16 %v409, %v405
  %v630 = vpack.c.b16 %v414, %v410
  %v631 = vpack.c.b16 %v415, %v411
  %v632 = vpack.c.b16 %v416, %v412
  %v633 = vpack.c.b16 %v417, %v413
  %v634 = vpack.c.b16 %v422, %v418
  %v635 = vpack.c.b16 %v423, %v419
  %v636 = vpack.c.b16 %v424, %v420
  %v637 = vpack.c.b16 %v425, %v421
  %v638 = vpack.c.b16 %v430, %v426
  %v639 = vpack.c.b16 %v431, %v427
  %v640 = vpack.c.b16 %v432, %v428
  %v641 = vpack.c.b16 %v433, %v429
  %v642 = vpack.c.b16 %v438, %v434
  %v643 = vpack.c.b16 %v439, %v435
  %v644 = vpack.c.b16 %v440, %v436
  %v645 = vpack.c.b16 %v441, %v437
  %v646 = vpack.c.b16 %v446, %v442
  %v647 = vpack.c.b16 %v447, %v443
  %v648 = vpack.c.b16 %v448, %v444
  %v649 = vpack.c.b16 %v449, %v445
  %v650 = vpack.c.b16 %v454, %v450
  %v651 = vpack.c.b16 %v455, %v451
  %v652 = vpack.c.b16 %v456, %v452
  %v653 = vpack.c.b16 %v457, %v453
  %v654 = vpack.c.b16 %v462, %v458
  %v655 = vpack.c.b16 %v463, %v459
  %v656 = vpack.c.b16 %v464, %v460
  %v657 = vpack.c.b16 %v465, %v461
  %v658 = vpack.c.b16 %v470, %v466
  %v659 = vpack.c.b16 %v471, %v467
  %v660 = vpack.c.b16 %v472, %v468
  %v661 = vpack.c.b16 %v473, %v469
  %v662 = vpack.c.b16 %v478, %v474
  %v663 = vpack.c.b16 %v479, %v475
  %v664 = vpack.c.b16 %v480, %v476
  %v665 = vpack.c.b16 %v481, %v477
  %v666 = vpack.c.b16 %v486, %v482
  %v667 = vpack.c.b16 %v487, %v483
  %v668 = vpack.c.b16 %v488, %v484
  %v669 = vpack.c.b16 %v489, %v485
  %v670 = vpack.c.b16 %v494, %v490
  %v671 = vpack.c.b16 %v495, %v491
  %v672 = vpack.c.b16 %v496, %v492
  %v673 = vpack.c.b16 %v497, %v493
  %v674 = vpack.c.b16 %v502, %v498
  %v675 = vpack.c.b16 %v503, %v499
  %v676 = vpack.c.b16 %v504, %v500
  %v677 = vpack.c.b16 %v505, %v501
  %v678 = vpack.c.b16 %v510, %v506
  %v679 = vpack.c.b16 %v511, %v507
  %v680 = vpack.c.b16 %v512, %v508
  %v681 = vpack.c.b16 %v513, %v509
  %v682 = vpack.c.b16 %v518, %v514
  %v683 = vpack.c.b16 %v519, %v515
  %v684 = vpack.c.b16 %v520, %v516
  %v685 = vpack.c.b16 %v521, %v517
  %v686 = vpack.c.b16 %v526, %v522
  %v687 = vpack.c.b16 %v527, %v523
  %v688 = vpack.c.b16 %v528, %v524
  %v689 = vpack.c.b16 %v529, %v525
  %v690 = vpack.c.b16 %v534, %v530
  %v691 = vpack.c.b16 %v535, %v531
  %v692 = vpack.c.b16 %v536, %v532
  %v693 = vpack.c.b16 %v537, %v533
  %v694 = vpack.c.b16 %v542, %v538
  %v695 = vpack.c.b16 %v543, %v539
  %v696 = vpack.c.b16 %v544, %v540
  %v697 = vpack.c.b16 %v545, %v541
  %v698 = vpack.c.b16 %v550, %v546
  %v699 = vpack.c.b16 %v551, %v547
  %v700 = vpack.c.b16 %v552, %v548
  %v701 = vpack.c.b16 %v553, %v549
  %v702 = vpack.c.b16 %v558, %v554
  %v703 = vpack.c.b16 %v559, %v555
  %v704 = vpack.c.b16 %v560, %v556
  %v705 = vpack.c.b16 %v561, %v557
  %v706 = vpack.c.b16 %v566, %v562
  %v707 = vpack.c.b16 %v567, %v563
  %v708 = vpack.c.b16 %v568, %v564
  %v709 = vpack.c.b16 %v569, %v565
  %v710 = vpack.c.b16 %v574, %v570
  %v711 = vpack.c.b16 %v575, %v571
  %v712 = vpack.c.b16 %v576, %v572
  %v713 = vpack.c.b16 %v577, %v573
  %v714 = vpack.c.b16 %v582, %v578
  %v715 = vpack.c.b16 %v583, %v579
  %v716 = vpack.c.b16 %v584, %v580
  %v717 = vpack.c.b16 %v585, %v581
  %v718 = vpack.c.b16 %v590, %v586
  %v719 = vpack.c.b16 %v591, %v587
  %v720 = vpack.c.b16 %v592, %v588
  %v721 = vpack.c.b16 %v593, %v589
  %v914 = vunpack.c.l.b16 %v146
  %v915 = vunpack.c.l.b16 %v147
  %v916 = vunpack.c.l.b16 %v148
  %v917 = vunpack.c.l.b16 %v149
  %v918 = vunpack.c.l.b16 %v150
  %v919 = vunpack.c.l.b16 %v151
  %v920 = vunpack.c.l.b16 %v152
  %v921 = vunpack.c.l.b16 %v153
  %v922 = vunpack.c.l.b16 %v154
  %v923 = vunpack.c.l.b16 %v155
  %v924 = vunpack.c.l.b16 %v156
  %v925 = vunpack.c.l.b16 %v157
  %v926 = vunpack.c.l.b16 %v158
  %v927 = vunpack.c.l.b16 %v159
  %v928 = vunpack.c.l.b16 %v160
  %v929 = vunpack.c.l.b16 %v161
  %v930 = vunpack.c.l.b16 %v162
  %v931 = vunpack.c.l.b16 %v163
  %v932 = vunpack.c.l.b16 %v164
  %v933 = vunpack.c.l.b16 %v165
  %v934 = vunpack.c.l.b16 %v166
  %v935 = vunpack.c.l.b16 %v167
  %v936 = vunpack.c.l.b16 %v168
  %v937 = vunpack.c.l.b16 %v169
  %v938 = vunpack.c.l.b16 %v170
  %v939 = vunpack.c.l.b16 %v171
  %v940 = vunpack.c.l.b16 %v172
  %v941 = vunpack.c.l.b16 %v173
  %v942 = vunpack.c.l.b16 %v174
  %v943 = vunpack.c.l.b16 %v175
  %v944 = vunpack.c.l.b16 %v176
  %v945 = vunpack.c.l.b16 %v177
  %v946 = vunpack.c.l.b16 %v178
  %v947 = vunpack.c.l.b16 %v179
  %v948 = vunpack.c.l.b16 %v180
  %v949 = vunpack.c.l.b16 %v181
  %v950 = vunpack.c.l.b16 %v182
  %v951 = vunpack.c.l.b16 %v183
  %v952 = vunpack.c.l.b16 %v184
  %v953 = vunpack.c.l.b16 %v185
  %v954 = vunpack.c.l.b16 %v186
  %v955 = vunpack.c.l.b16 %v187
  %v956 = vunpack.c.l.b16 %v188
  %v957 = vunpack.c.l.b16 %v189
  %v958 = vunpack.c.l.b16 %v190
  %v959 = vunpack.c.l.b16 %v191
  %v960 = vunpack.c.l.b16 %v192
  %v961 = vunpack.c.l.b16 %v193
  %v962 = vunpack.c.l.b16 %v194
  %v963 = vunpack.c.l.b16 %v195
  %v964 = vunpack.c.l.b16 %v196
  %v965 = vunpack.c.l.b16 %v197
  %v966 = vunpack.c.l.b16 %v198
  %v967 = vunpack.c.l.b16 %v199
  %v968 = vunpack.c.l.b16 %v200
  %v969 = vunpack.c.l.b16 %v201
  %v970 = vunpack.c.l.b16 %v202
  %v971 = vunpack.c.l.b16 %v203
  %v972 = vunpack.c.l.b16 %v204
  %v973 = vunpack.c.l.b16 %v205
  %v974 = vunpack.c.l.b16 %v206
  %v975 = vunpack.c.l.b16 %v207
  %v976 = vunpack.c.l.b16 %v208
  %v977 = vunpack.c.l.b16 %v209
  %v978 = vpack.c.b16 %v915, %v914
  %v979 = vpack.c.b16 %v917, %v916
  %v980 = vpack.c.b16 %v919, %v918
  %v981 = vpack.c.b16 %v921, %v920
  %v982 = vpack.c.b16 %v923, %v922
  %v983 = vpack.c.b16 %v925, %v924
  %v984 = vpack.c.b16 %v927, %v926
  %v985 = vpack.c.b16 %v929, %v928
  %v986 = vpack.c.b16 %v931, %v930
  %v987 = vpack.c.b16 %v933, %v932
  %v988 = vpack.c.b16 %v935, %v934
  %v989 = vpack.c.b16 %v937, %v936
  %v990 = vpack.c.b16 %v939, %v938
  %v991 = vpack.c.b16 %v941, %v940
  %v992 = vpack.c.b16 %v943, %v942
  %v993 = vpack.c.b16 %v945, %v944
  %v994 = vpack.c.b16 %v947, %v946
  %v995 = vpack.c.b16 %v949, %v948
  %v996 = vpack.c.b16 %v951, %v950
  %v997 = vpack.c.b16 %v953, %v952
  %v998 = vpack.c.b16 %v955, %v954
  %v999 = vpack.c.b16 %v957, %v956
  %v1000 = vpack.c.b16 %v959, %v958
  %v1001 = vpack.c.b16 %v961, %v960
  %v1002 = vpack.c.b16 %v963, %v962
  %v1003 = vpack.c.b16 %v965, %v964
  %v1004 = vpack.c.b16 %v967, %v966
  %v1005 = vpack.c.b16 %v969, %v968
  %v1006 = vpack.c.b16 %v971, %v970
  %v1007 = vpack.c.b16 %v973, %v972
  %v1008 = vpack.c.b16 %v975, %v974
  %v1009 = vpack.c.b16 %v977, %v976
  %1042 = vmatprep.subr.bf16.mxu0 0
  %1043 = vmatpush1.bf16.msra.mxu0 %v985
  %1044 = vmatprep.subr.bf16.mxu0 0
  %1045 = vmatpush1.bf16.msra.mxu0 %v984
  %1046 = vmatprep.subr.bf16.mxu0 0
  %1047 = vmatpush1.bf16.msra.mxu0 %v983
  %1048 = vmatprep.subr.bf16.mxu0 0
  %1049 = vmatpush1.bf16.msra.mxu0 %v982
  %1050 = vmatprep.subr.bf16.mxu0 0
  %1051 = vmatpush1.bf16.msra.mxu0 %v981
  %1052 = vmatprep.subr.bf16.mxu0 0
  %1053 = vmatpush1.bf16.msra.mxu0 %v980
  %1054 = vmatprep.subr.bf16.mxu0 0
  %1055 = vmatpush1.bf16.msra.mxu0 %v979
  %1056 = vmatprep.subr.bf16.mxu0 0
  %1057 = vmatpush1.bf16.msra.mxu0 %v978
  %1058 = vmatprep.subr.bf16.mxu0 0
  %1059 = vmatpush2.bf16.msra.mxu0 %v993
  %1060 = vmatprep.subr.bf16.mxu0 0
  %1061 = vmatpush2.bf16.msra.mxu0 %v992
  %1062 = vmatprep.subr.bf16.mxu0 0
  %1063 = vmatpush2.bf16.msra.mxu0 %v991
  %1064 = vmatprep.subr.bf16.mxu0 0
  %1065 = vmatpush2.bf16.msra.mxu0 %v990
  %1066 = vmatprep.subr.bf16.mxu0 0
  %1067 = vmatpush2.bf16.msra.mxu0 %v989
  %1068 = vmatprep.subr.bf16.mxu0 0
  %1069 = vmatpush2.bf16.msra.mxu0 %v988
  %1070 = vmatprep.subr.bf16.mxu0 0
  %1071 = vmatpush2.bf16.msra.mxu0 %v987
  %1072 = vmatprep.subr.bf16.mxu0 0
  %1073 = vmatpush2.bf16.msra.mxu0 %v986
  %1074 = vmatprep.mubr.bf16.mxu0 %v595
  %1075 = vmatmul.mubr.bf16.gmra.mxu0 %v594
  %v1076 = vpop.f32.mrf.mxu0
  %v1077 = vadd.f32 0.0, %v1076
  %v1078 = vpop.f32.mrf.mxu0
  %v1079 = vpop.f32.mrf.mxu0
  %v1080 = vadd.f32 0.0, %v1079
  %v1081 = vpop.f32.mrf.mxu0
  %1082 = vmatprep.mubr.bf16.mxu0 %v599
  %1083 = vmatmul.mubr.bf16.gmra.mxu0 %v598
  %v1084 = vpop.f32.mrf.mxu0
  %v1085 = vadd.f32 0.0, %v1084
  %v1086 = vpop.f32.mrf.mxu0
  %v1087 = vpop.f32.mrf.mxu0
  %v1088 = vadd.f32 0.0, %v1087
  %v1089 = vpop.f32.mrf.mxu0
  %1090 = vmatprep.mubr.bf16.mxu0 %v603
  %1091 = vmatmul.mubr.bf16.gmra.mxu0 %v602
  %v1092 = vpop.f32.mrf.mxu0
  %v1093 = vadd.f32 0.0, %v1092
  %v1094 = vpop.f32.mrf.mxu0
  %v1095 = vpop.f32.mrf.mxu0
  %v1096 = vadd.f32 0.0, %v1095
  %v1097 = vpop.f32.mrf.mxu0
  %1098 = vmatprep.mubr.bf16.mxu0 %v607
  %1099 = vmatmul.mubr.bf16.gmra.mxu0 %v606
  %v1100 = vpop.f32.mrf.mxu0
  %v1101 = vadd.f32 0.0, %v1100
  %v1102 = vpop.f32.mrf.mxu0
  %v1103 = vpop.f32.mrf.mxu0
  %v1104 = vadd.f32 0.0, %v1103
  %v1105 = vpop.f32.mrf.mxu0
  %1106 = vmatprep.mubr.bf16.mxu0 %v611
  %1107 = vmatmul.mubr.bf16.gmra.mxu0 %v610
  %v1108 = vpop.f32.mrf.mxu0
  %v1109 = vadd.f32 0.0, %v1108
  %v1110 = vpop.f32.mrf.mxu0
  %v1111 = vpop.f32.mrf.mxu0
  %v1112 = vadd.f32 0.0, %v1111
  %v1113 = vpop.f32.mrf.mxu0
  %1114 = vmatprep.mubr.bf16.mxu0 %v615
  %1115 = vmatmul.mubr.bf16.gmra.mxu0 %v614
  %v1116 = vpop.f32.mrf.mxu0
  %v1117 = vadd.f32 0.0, %v1116
  %v1118 = vpop.f32.mrf.mxu0
  %v1119 = vpop.f32.mrf.mxu0
  %v1120 = vadd.f32 0.0, %v1119
  %v1121 = vpop.f32.mrf.mxu0
  %1122 = vmatprep.mubr.bf16.mxu0 %v619
  %1123 = vmatmul.mubr.bf16.gmra.mxu0 %v618
  %v1124 = vpop.f32.mrf.mxu0
  %v1125 = vadd.f32 0.0, %v1124
  %v1126 = vpop.f32.mrf.mxu0
  %v1127 = vpop.f32.mrf.mxu0
  %v1128 = vadd.f32 0.0, %v1127
  %v1129 = vpop.f32.mrf.mxu0
  %1130 = vmatprep.mubr.bf16.mxu0 %v623
  %1131 = vmatmul.mubr.bf16.gmra.mxu0 %v622
  %v1132 = vpop.f32.mrf.mxu0
  %v1133 = vadd.f32 0.0, %v1132
  %v1134 = vpop.f32.mrf.mxu0
  %v1135 = vpop.f32.mrf.mxu0
  %v1136 = vadd.f32 0.0, %v1135
  %v1137 = vpop.f32.mrf.mxu0
  %1138 = vmatprep.mubr.bf16.mxu0 %v627
  %1139 = vmatmul.mubr.bf16.gmra.mxu0 %v626
  %v1140 = vpop.f32.mrf.mxu0
  %v1141 = vadd.f32 0.0, %v1140
  %v1142 = vpop.f32.mrf.mxu0
  %v1143 = vpop.f32.mrf.mxu0
  %v1144 = vadd.f32 0.0, %v1143
  %v1145 = vpop.f32.mrf.mxu0
  %1146 = vmatprep.mubr.bf16.mxu0 %v631
  %1147 = vmatmul.mubr.bf16.gmra.mxu0 %v630
  %v1148 = vpop.f32.mrf.mxu0
  %v1149 = vadd.f32 0.0, %v1148
  %v1150 = vpop.f32.mrf.mxu0
  %v1151 = vpop.f32.mrf.mxu0
  %v1152 = vadd.f32 0.0, %v1151
  %v1153 = vpop.f32.mrf.mxu0
  %1154 = vmatprep.mubr.bf16.mxu0 %v635
  %1155 = vmatmul.mubr.bf16.gmra.mxu0 %v634
  %v1156 = vpop.f32.mrf.mxu0
  %v1157 = vadd.f32 0.0, %v1156
  %v1158 = vpop.f32.mrf.mxu0
  %v1159 = vpop.f32.mrf.mxu0
  %v1160 = vadd.f32 0.0, %v1159
  %v1161 = vpop.f32.mrf.mxu0
  %1162 = vmatprep.mubr.bf16.mxu0 %v639
  %1163 = vmatmul.mubr.bf16.gmra.mxu0 %v638
  %v1164 = vpop.f32.mrf.mxu0
  %v1165 = vadd.f32 0.0, %v1164
  %v1166 = vpop.f32.mrf.mxu0
  %v1167 = vpop.f32.mrf.mxu0
  %v1168 = vadd.f32 0.0, %v1167
  %v1169 = vpop.f32.mrf.mxu0
  %1170 = vmatprep.mubr.bf16.mxu0 %v643
  %1171 = vmatmul.mubr.bf16.gmra.mxu0 %v642
  %v1172 = vpop.f32.mrf.mxu0
  %v1173 = vadd.f32 0.0, %v1172
  %v1174 = vpop.f32.mrf.mxu0
  %v1175 = vpop.f32.mrf.mxu0
  %v1176 = vadd.f32 0.0, %v1175
  %v1177 = vpop.f32.mrf.mxu0
  %1178 = vmatprep.mubr.bf16.mxu0 %v647
  %1179 = vmatmul.mubr.bf16.gmra.mxu0 %v646
  %v1180 = vpop.f32.mrf.mxu0
  %v1181 = vadd.f32 0.0, %v1180
  %v1182 = vpop.f32.mrf.mxu0
  %v1183 = vpop.f32.mrf.mxu0
  %v1184 = vadd.f32 0.0, %v1183
  %v1185 = vpop.f32.mrf.mxu0
  %1186 = vmatprep.mubr.bf16.mxu0 %v651
  %1187 = vmatmul.mubr.bf16.gmra.mxu0 %v650
  %v1188 = vpop.f32.mrf.mxu0
  %v1189 = vadd.f32 0.0, %v1188
  %v1190 = vpop.f32.mrf.mxu0
  %v1191 = vpop.f32.mrf.mxu0
  %v1192 = vadd.f32 0.0, %v1191
  %v1193 = vpop.f32.mrf.mxu0
  %1194 = vmatprep.mubr.bf16.mxu0 %v655
  %1195 = vmatmul.mubr.bf16.gmra.mxu0 %v654
  %v1196 = vpop.f32.mrf.mxu0
  %v1197 = vadd.f32 0.0, %v1196
  %v1198 = vpop.f32.mrf.mxu0
  %v1199 = vpop.f32.mrf.mxu0
  %v1200 = vadd.f32 0.0, %v1199
  %v1201 = vpop.f32.mrf.mxu0
  %1202 = vmatprep.mubr.bf16.mxu0 %v659
  %1203 = vmatmul.mubr.bf16.gmra.mxu0 %v658
  %v1204 = vpop.f32.mrf.mxu0
  %v1205 = vadd.f32 0.0, %v1204
  %v1206 = vpop.f32.mrf.mxu0
  %v1207 = vpop.f32.mrf.mxu0
  %v1208 = vadd.f32 0.0, %v1207
  %v1209 = vpop.f32.mrf.mxu0
  %1210 = vmatprep.mubr.bf16.mxu0 %v663
  %1211 = vmatmul.mubr.bf16.gmra.mxu0 %v662
  %v1212 = vpop.f32.mrf.mxu0
  %v1213 = vadd.f32 0.0, %v1212
  %v1214 = vpop.f32.mrf.mxu0
  %v1215 = vpop.f32.mrf.mxu0
  %v1216 = vadd.f32 0.0, %v1215
  %v1217 = vpop.f32.mrf.mxu0
  %1218 = vmatprep.mubr.bf16.mxu0 %v667
  %1219 = vmatmul.mubr.bf16.gmra.mxu0 %v666
  %v1220 = vpop.f32.mrf.mxu0
  %v1221 = vadd.f32 0.0, %v1220
  %v1222 = vpop.f32.mrf.mxu0
  %v1223 = vpop.f32.mrf.mxu0
  %v1224 = vadd.f32 0.0, %v1223
  %v1225 = vpop.f32.mrf.mxu0
  %1226 = vmatprep.mubr.bf16.mxu0 %v671
  %1227 = vmatmul.mubr.bf16.gmra.mxu0 %v670
  %v1228 = vpop.f32.mrf.mxu0
  %v1229 = vadd.f32 0.0, %v1228
  %v1230 = vpop.f32.mrf.mxu0
  %v1231 = vpop.f32.mrf.mxu0
  %v1232 = vadd.f32 0.0, %v1231
  %v1233 = vpop.f32.mrf.mxu0
  %1234 = vmatprep.mubr.bf16.mxu0 %v675
  %1235 = vmatmul.mubr.bf16.gmra.mxu0 %v674
  %v1236 = vpop.f32.mrf.mxu0
  %v1237 = vadd.f32 0.0, %v1236
  %v1238 = vpop.f32.mrf.mxu0
  %v1239 = vpop.f32.mrf.mxu0
  %v1240 = vadd.f32 0.0, %v1239
  %v1241 = vpop.f32.mrf.mxu0
  %1242 = vmatprep.mubr.bf16.mxu0 %v679
  %1243 = vmatmul.mubr.bf16.gmra.mxu0 %v678
  %v1244 = vpop.f32.mrf.mxu0
  %v1245 = vadd.f32 0.0, %v1244
  %v1246 = vpop.f32.mrf.mxu0
  %v1247 = vpop.f32.mrf.mxu0
  %v1248 = vadd.f32 0.0, %v1247
  %v1249 = vpop.f32.mrf.mxu0
  %1250 = vmatprep.mubr.bf16.mxu0 %v683
  %1251 = vmatmul.mubr.bf16.gmra.mxu0 %v682
  %v1252 = vpop.f32.mrf.mxu0
  %v1253 = vadd.f32 0.0, %v1252
  %v1254 = vpop.f32.mrf.mxu0
  %v1255 = vpop.f32.mrf.mxu0
  %v1256 = vadd.f32 0.0, %v1255
  %v1257 = vpop.f32.mrf.mxu0
  %1258 = vmatprep.mubr.bf16.mxu0 %v687
  %1259 = vmatmul.mubr.bf16.gmra.mxu0 %v686
  %v1260 = vpop.f32.mrf.mxu0
  %v1261 = vadd.f32 0.0, %v1260
  %v1262 = vpop.f32.mrf.mxu0
  %v1263 = vpop.f32.mrf.mxu0
  %v1264 = vadd.f32 0.0, %v1263
  %v1265 = vpop.f32.mrf.mxu0
  %1266 = vmatprep.mubr.bf16.mxu0 %v691
  %1267 = vmatmul.mubr.bf16.gmra.mxu0 %v690
  %v1268 = vpop.f32.mrf.mxu0
  %v1269 = vadd.f32 0.0, %v1268
  %v1270 = vpop.f32.mrf.mxu0
  %v1271 = vpop.f32.mrf.mxu0
  %v1272 = vadd.f32 0.0, %v1271
  %v1273 = vpop.f32.mrf.mxu0
  %1274 = vmatprep.mubr.bf16.mxu0 %v695
  %1275 = vmatmul.mubr.bf16.gmra.mxu0 %v694
  %v1276 = vpop.f32.mrf.mxu0
  %v1277 = vadd.f32 0.0, %v1276
  %v1278 = vpop.f32.mrf.mxu0
  %v1279 = vpop.f32.mrf.mxu0
  %v1280 = vadd.f32 0.0, %v1279
  %v1281 = vpop.f32.mrf.mxu0
  %1282 = vmatprep.mubr.bf16.mxu0 %v699
  %1283 = vmatmul.mubr.bf16.gmra.mxu0 %v698
  %v1284 = vpop.f32.mrf.mxu0
  %v1285 = vadd.f32 0.0, %v1284
  %v1286 = vpop.f32.mrf.mxu0
  %v1287 = vpop.f32.mrf.mxu0
  %v1288 = vadd.f32 0.0, %v1287
  %v1289 = vpop.f32.mrf.mxu0
  %1290 = vmatprep.mubr.bf16.mxu0 %v703
  %1291 = vmatmul.mubr.bf16.gmra.mxu0 %v702
  %v1292 = vpop.f32.mrf.mxu0
  %v1293 = vadd.f32 0.0, %v1292
  %v1294 = vpop.f32.mrf.mxu0
  %v1295 = vpop.f32.mrf.mxu0
  %v1296 = vadd.f32 0.0, %v1295
  %v1297 = vpop.f32.mrf.mxu0
  %1298 = vmatprep.mubr.bf16.mxu0 %v707
  %1299 = vmatmul.mubr.bf16.gmra.mxu0 %v706
  %v1300 = vpop.f32.mrf.mxu0
  %v1301 = vadd.f32 0.0, %v1300
  %v1302 = vpop.f32.mrf.mxu0
  %v1303 = vpop.f32.mrf.mxu0
  %v1304 = vadd.f32 0.0, %v1303
  %v1305 = vpop.f32.mrf.mxu0
  %1306 = vmatprep.mubr.bf16.mxu0 %v711
  %1307 = vmatmul.mubr.bf16.gmra.mxu0 %v710
  %v1308 = vpop.f32.mrf.mxu0
  %v1309 = vadd.f32 0.0, %v1308
  %v1310 = vpop.f32.mrf.mxu0
  %v1311 = vpop.f32.mrf.mxu0
  %v1312 = vadd.f32 0.0, %v1311
  %v1313 = vpop.f32.mrf.mxu0
  %1314 = vmatprep.mubr.bf16.mxu0 %v715
  %1315 = vmatmul.mubr.bf16.gmra.mxu0 %v714
  %v1316 = vpop.f32.mrf.mxu0
  %v1317 = vadd.f32 0.0, %v1316
  %v1318 = vpop.f32.mrf.mxu0
  %v1319 = vpop.f32.mrf.mxu0
  %v1320 = vadd.f32 0.0, %v1319
  %v1321 = vpop.f32.mrf.mxu0
  %1322 = vmatprep.mubr.bf16.mxu0 %v719
  %1323 = vmatmul.mubr.bf16.gmra.mxu0 %v718
  %v1324 = vpop.f32.mrf.mxu0
  %v1325 = vadd.f32 0.0, %v1324
  %v1326 = vpop.f32.mrf.mxu0
  %v1327 = vpop.f32.mrf.mxu0
  %v1328 = vadd.f32 0.0, %v1327
  %v1329 = vpop.f32.mrf.mxu0
  %1330 = vdwg.mxu0
  %1331 = vmatprep.subr.bf16.mxu0 0
  %1332 = vmatpush1.bf16.msra.mxu0 %v1001
  %1333 = vmatprep.subr.bf16.mxu0 0
  %1334 = vmatpush1.bf16.msra.mxu0 %v1000
  %1335 = vmatprep.subr.bf16.mxu0 0
  %1336 = vmatpush1.bf16.msra.mxu0 %v999
  %1337 = vmatprep.subr.bf16.mxu0 0
  %1338 = vmatpush1.bf16.msra.mxu0 %v998
  %1339 = vmatprep.subr.bf16.mxu0 0
  %1340 = vmatpush1.bf16.msra.mxu0 %v997
  %1341 = vmatprep.subr.bf16.mxu0 0
  %1342 = vmatpush1.bf16.msra.mxu0 %v996
  %1343 = vmatprep.subr.bf16.mxu0 0
  %1344 = vmatpush1.bf16.msra.mxu0 %v995
  %1345 = vmatprep.subr.bf16.mxu0 0
  %1346 = vmatpush1.bf16.msra.mxu0 %v994
  %1347 = vmatprep.subr.bf16.mxu0 0
  %1348 = vmatpush2.bf16.msra.mxu0 %v1009
  %1349 = vmatprep.subr.bf16.mxu0 0
  %1350 = vmatpush2.bf16.msra.mxu0 %v1008
  %1351 = vmatprep.subr.bf16.mxu0 0
  %1352 = vmatpush2.bf16.msra.mxu0 %v1007
  %1353 = vmatprep.subr.bf16.mxu0 0
  %1354 = vmatpush2.bf16.msra.mxu0 %v1006
  %1355 = vmatprep.subr.bf16.mxu0 0
  %1356 = vmatpush2.bf16.msra.mxu0 %v1005
  %1357 = vmatprep.subr.bf16.mxu0 0
  %1358 = vmatpush2.bf16.msra.mxu0 %v1004
  %1359 = vmatprep.subr.bf16.mxu0 0
  %1360 = vmatpush2.bf16.msra.mxu0 %v1003
  %1361 = vmatprep.subr.bf16.mxu0 0
  %1362 = vmatpush2.bf16.msra.mxu0 %v1002
  %1363 = vmatprep.mubr.bf16.mxu0 %v597
  %1364 = vmatmul.mubr.bf16.gmra.mxu0 %v596
  %v1365 = vpop.f32.mrf.mxu0
  %v1366 = vadd.f32 %v1077, %v1365
  %v1367 = vpop.f32.mrf.mxu0
  %v1368 = vpop.f32.mrf.mxu0
  %v1369 = vadd.f32 %v1080, %v1368
  %v1370 = vpop.f32.mrf.mxu0
  %1371 = vmatprep.mubr.bf16.mxu0 %v601
  %1372 = vmatmul.mubr.bf16.gmra.mxu0 %v600
  %v1373 = vpop.f32.mrf.mxu0
  %v1374 = vadd.f32 %v1085, %v1373
  %v1375 = vpop.f32.mrf.mxu0
  %v1376 = vpop.f32.mrf.mxu0
  %v1377 = vadd.f32 %v1088, %v1376
  %v1378 = vpop.f32.mrf.mxu0
  %1379 = vmatprep.mubr.bf16.mxu0 %v605
  %1380 = vmatmul.mubr.bf16.gmra.mxu0 %v604
  %v1381 = vpop.f32.mrf.mxu0
  %v1382 = vadd.f32 %v1093, %v1381
  %v1383 = vpop.f32.mrf.mxu0
  %v1384 = vpop.f32.mrf.mxu0
  %v1385 = vadd.f32 %v1096, %v1384
  %v1386 = vpop.f32.mrf.mxu0
  %1387 = vmatprep.mubr.bf16.mxu0 %v609
  %1388 = vmatmul.mubr.bf16.gmra.mxu0 %v608
  %v1389 = vpop.f32.mrf.mxu0
  %v1390 = vadd.f32 %v1101, %v1389
  %v1391 = vpop.f32.mrf.mxu0
  %v1392 = vpop.f32.mrf.mxu0
  %v1393 = vadd.f32 %v1104, %v1392
  %v1394 = vpop.f32.mrf.mxu0
  %1395 = vmatprep.mubr.bf16.mxu0 %v613
  %1396 = vmatmul.mubr.bf16.gmra.mxu0 %v612
  %v1397 = vpop.f32.mrf.mxu0
  %v1398 = vadd.f32 %v1109, %v1397
  %v1399 = vpop.f32.mrf.mxu0
  %v1400 = vpop.f32.mrf.mxu0
  %v1401 = vadd.f32 %v1112, %v1400
  %v1402 = vpop.f32.mrf.mxu0
  %1403 = vmatprep.mubr.bf16.mxu0 %v617
  %1404 = vmatmul.mubr.bf16.gmra.mxu0 %v616
  %v1405 = vpop.f32.mrf.mxu0
  %v1406 = vadd.f32 %v1117, %v1405
  %v1407 = vpop.f32.mrf.mxu0
  %v1408 = vpop.f32.mrf.mxu0
  %v1409 = vadd.f32 %v1120, %v1408
  %v1410 = vpop.f32.mrf.mxu0
  %1411 = vmatprep.mubr.bf16.mxu0 %v621
  %1412 = vmatmul.mubr.bf16.gmra.mxu0 %v620
  %v1413 = vpop.f32.mrf.mxu0
  %v1414 = vadd.f32 %v1125, %v1413
  %v1415 = vpop.f32.mrf.mxu0
  %v1416 = vpop.f32.mrf.mxu0
  %v1417 = vadd.f32 %v1128, %v1416
  %v1418 = vpop.f32.mrf.mxu0
  %1419 = vmatprep.mubr.bf16.mxu0 %v625
  %1420 = vmatmul.mubr.bf16.gmra.mxu0 %v624
  %v1421 = vpop.f32.mrf.mxu0
  %v1422 = vadd.f32 %v1133, %v1421
  %v1423 = vpop.f32.mrf.mxu0
  %v1424 = vpop.f32.mrf.mxu0
  %v1425 = vadd.f32 %v1136, %v1424
  %v1426 = vpop.f32.mrf.mxu0
  %1427 = vmatprep.mubr.bf16.mxu0 %v629
  %1428 = vmatmul.mubr.bf16.gmra.mxu0 %v628
  %v1429 = vpop.f32.mrf.mxu0
  %v1430 = vadd.f32 %v1141, %v1429
  %v1431 = vpop.f32.mrf.mxu0
  %v1432 = vpop.f32.mrf.mxu0
  %v1433 = vadd.f32 %v1144, %v1432
  %v1434 = vpop.f32.mrf.mxu0
  %1435 = vmatprep.mubr.bf16.mxu0 %v633
  %1436 = vmatmul.mubr.bf16.gmra.mxu0 %v632
  %v1437 = vpop.f32.mrf.mxu0
  %v1438 = vadd.f32 %v1149, %v1437
  %v1439 = vpop.f32.mrf.mxu0
  %v1440 = vpop.f32.mrf.mxu0
  %v1441 = vadd.f32 %v1152, %v1440
  %v1442 = vpop.f32.mrf.mxu0
  %1443 = vmatprep.mubr.bf16.mxu0 %v637
  %1444 = vmatmul.mubr.bf16.gmra.mxu0 %v636
  %v1445 = vpop.f32.mrf.mxu0
  %v1446 = vadd.f32 %v1157, %v1445
  %v1447 = vpop.f32.mrf.mxu0
  %v1448 = vpop.f32.mrf.mxu0
  %v1449 = vadd.f32 %v1160, %v1448
  %v1450 = vpop.f32.mrf.mxu0
  %1451 = vmatprep.mubr.bf16.mxu0 %v641
  %1452 = vmatmul.mubr.bf16.gmra.mxu0 %v640
  %v1453 = vpop.f32.mrf.mxu0
  %v1454 = vadd.f32 %v1165, %v1453
  %v1455 = vpop.f32.mrf.mxu0
  %v1456 = vpop.f32.mrf.mxu0
  %v1457 = vadd.f32 %v1168, %v1456
  %v1458 = vpop.f32.mrf.mxu0
  %1459 = vmatprep.mubr.bf16.mxu0 %v645
  %1460 = vmatmul.mubr.bf16.gmra.mxu0 %v644
  %v1461 = vpop.f32.mrf.mxu0
  %v1462 = vadd.f32 %v1173, %v1461
  %v1463 = vpop.f32.mrf.mxu0
  %v1464 = vpop.f32.mrf.mxu0
  %v1465 = vadd.f32 %v1176, %v1464
  %v1466 = vpop.f32.mrf.mxu0
  %1467 = vmatprep.mubr.bf16.mxu0 %v649
  %1468 = vmatmul.mubr.bf16.gmra.mxu0 %v648
  %v1469 = vpop.f32.mrf.mxu0
  %v1470 = vadd.f32 %v1181, %v1469
  %v1471 = vpop.f32.mrf.mxu0
  %v1472 = vpop.f32.mrf.mxu0
  %v1473 = vadd.f32 %v1184, %v1472
  %v1474 = vpop.f32.mrf.mxu0
  %1475 = vmatprep.mubr.bf16.mxu0 %v653
  %1476 = vmatmul.mubr.bf16.gmra.mxu0 %v652
  %v1477 = vpop.f32.mrf.mxu0
  %v1478 = vadd.f32 %v1189, %v1477
  %v1479 = vpop.f32.mrf.mxu0
  %v1480 = vpop.f32.mrf.mxu0
  %v1481 = vadd.f32 %v1192, %v1480
  %v1482 = vpop.f32.mrf.mxu0
  %1483 = vmatprep.mubr.bf16.mxu0 %v657
  %1484 = vmatmul.mubr.bf16.gmra.mxu0 %v656
  %v1485 = vpop.f32.mrf.mxu0
  %v1486 = vadd.f32 %v1197, %v1485
  %v1487 = vpop.f32.mrf.mxu0
  %v1488 = vpop.f32.mrf.mxu0
  %v1489 = vadd.f32 %v1200, %v1488
  %v1490 = vpop.f32.mrf.mxu0
  %1491 = vmatprep.mubr.bf16.mxu0 %v661
  %1492 = vmatmul.mubr.bf16.gmra.mxu0 %v660
  %v1493 = vpop.f32.mrf.mxu0
  %v1494 = vadd.f32 %v1205, %v1493
  %v1495 = vpop.f32.mrf.mxu0
  %v1496 = vpop.f32.mrf.mxu0
  %v1497 = vadd.f32 %v1208, %v1496
  %v1498 = vpop.f32.mrf.mxu0
  %1499 = vmatprep.mubr.bf16.mxu0 %v665
  %1500 = vmatmul.mubr.bf16.gmra.mxu0 %v664
  %v1501 = vpop.f32.mrf.mxu0
  %v1502 = vadd.f32 %v1213, %v1501
  %v1503 = vpop.f32.mrf.mxu0
  %v1504 = vpop.f32.mrf.mxu0
  %v1505 = vadd.f32 %v1216, %v1504
  %v1506 = vpop.f32.mrf.mxu0
  %1507 = vmatprep.mubr.bf16.mxu0 %v669
  %1508 = vmatmul.mubr.bf16.gmra.mxu0 %v668
  %v1509 = vpop.f32.mrf.mxu0
  %v1510 = vadd.f32 %v1221, %v1509
  %v1511 = vpop.f32.mrf.mxu0
  %v1512 = vpop.f32.mrf.mxu0
  %v1513 = vadd.f32 %v1224, %v1512
  %v1514 = vpop.f32.mrf.mxu0
  %1515 = vmatprep.mubr.bf16.mxu0 %v673
  %1516 = vmatmul.mubr.bf16.gmra.mxu0 %v672
  %v1517 = vpop.f32.mrf.mxu0
  %v1518 = vadd.f32 %v1229, %v1517
  %v1519 = vpop.f32.mrf.mxu0
  %v1520 = vpop.f32.mrf.mxu0
  %v1521 = vadd.f32 %v1232, %v1520
  %v1522 = vpop.f32.mrf.mxu0
  %1523 = vmatprep.mubr.bf16.mxu0 %v677
  %1524 = vmatmul.mubr.bf16.gmra.mxu0 %v676
  %v1525 = vpop.f32.mrf.mxu0
  %v1526 = vadd.f32 %v1237, %v1525
  %v1527 = vpop.f32.mrf.mxu0
  %v1528 = vpop.f32.mrf.mxu0
  %v1529 = vadd.f32 %v1240, %v1528
  %v1530 = vpop.f32.mrf.mxu0
  %1531 = vmatprep.mubr.bf16.mxu0 %v681
  %1532 = vmatmul.mubr.bf16.gmra.mxu0 %v680
  %v1533 = vpop.f32.mrf.mxu0
  %v1534 = vadd.f32 %v1245, %v1533
  %v1535 = vpop.f32.mrf.mxu0
  %v1536 = vpop.f32.mrf.mxu0
  %v1537 = vadd.f32 %v1248, %v1536
  %v1538 = vpop.f32.mrf.mxu0
  %1539 = vmatprep.mubr.bf16.mxu0 %v685
  %1540 = vmatmul.mubr.bf16.gmra.mxu0 %v684
  %v1541 = vpop.f32.mrf.mxu0
  %v1542 = vadd.f32 %v1253, %v1541
  %v1543 = vpop.f32.mrf.mxu0
  %v1544 = vpop.f32.mrf.mxu0
  %v1545 = vadd.f32 %v1256, %v1544
  %v1546 = vpop.f32.mrf.mxu0
  %1547 = vmatprep.mubr.bf16.mxu0 %v689
  %1548 = vmatmul.mubr.bf16.gmra.mxu0 %v688
  %v1549 = vpop.f32.mrf.mxu0
  %v1550 = vadd.f32 %v1261, %v1549
  %v1551 = vpop.f32.mrf.mxu0
  %v1552 = vpop.f32.mrf.mxu0
  %v1553 = vadd.f32 %v1264, %v1552
  %v1554 = vpop.f32.mrf.mxu0
  %1555 = vmatprep.mubr.bf16.mxu0 %v693
  %1556 = vmatmul.mubr.bf16.gmra.mxu0 %v692
  %v1557 = vpop.f32.mrf.mxu0
  %v1558 = vadd.f32 %v1269, %v1557
  %v1559 = vpop.f32.mrf.mxu0
  %v1560 = vpop.f32.mrf.mxu0
  %v1561 = vadd.f32 %v1272, %v1560
  %v1562 = vpop.f32.mrf.mxu0
  %1563 = vmatprep.mubr.bf16.mxu0 %v697
  %1564 = vmatmul.mubr.bf16.gmra.mxu0 %v696
  %v1565 = vpop.f32.mrf.mxu0
  %v1566 = vadd.f32 %v1277, %v1565
  %v1567 = vpop.f32.mrf.mxu0
  %v1568 = vpop.f32.mrf.mxu0
  %v1569 = vadd.f32 %v1280, %v1568
  %v1570 = vpop.f32.mrf.mxu0
  %1571 = vmatprep.mubr.bf16.mxu0 %v701
  %1572 = vmatmul.mubr.bf16.gmra.mxu0 %v700
  %v1573 = vpop.f32.mrf.mxu0
  %v1574 = vadd.f32 %v1285, %v1573
  %v1575 = vpop.f32.mrf.mxu0
  %v1576 = vpop.f32.mrf.mxu0
  %v1577 = vadd.f32 %v1288, %v1576
  %v1578 = vpop.f32.mrf.mxu0
  %1579 = vmatprep.mubr.bf16.mxu0 %v705
  %1580 = vmatmul.mubr.bf16.gmra.mxu0 %v704
  %v1581 = vpop.f32.mrf.mxu0
  %v1582 = vadd.f32 %v1293, %v1581
  %v1583 = vpop.f32.mrf.mxu0
  %v1584 = vpop.f32.mrf.mxu0
  %v1585 = vadd.f32 %v1296, %v1584
  %v1586 = vpop.f32.mrf.mxu0
  %1587 = vmatprep.mubr.bf16.mxu0 %v709
  %1588 = vmatmul.mubr.bf16.gmra.mxu0 %v708
  %v1589 = vpop.f32.mrf.mxu0
  %v1590 = vadd.f32 %v1301, %v1589
  %v1591 = vpop.f32.mrf.mxu0
  %v1592 = vpop.f32.mrf.mxu0
  %v1593 = vadd.f32 %v1304, %v1592
  %v1594 = vpop.f32.mrf.mxu0
  %1595 = vmatprep.mubr.bf16.mxu0 %v713
  %1596 = vmatmul.mubr.bf16.gmra.mxu0 %v712
  %v1597 = vpop.f32.mrf.mxu0
  %v1598 = vadd.f32 %v1309, %v1597
  %v1599 = vpop.f32.mrf.mxu0
  %v1600 = vpop.f32.mrf.mxu0
  %v1601 = vadd.f32 %v1312, %v1600
  %v1602 = vpop.f32.mrf.mxu0
  %1603 = vmatprep.mubr.bf16.mxu0 %v717
  %1604 = vmatmul.mubr.bf16.gmra.mxu0 %v716
  %v1605 = vpop.f32.mrf.mxu0
  %v1606 = vadd.f32 %v1317, %v1605
  %v1607 = vpop.f32.mrf.mxu0
  %v1608 = vpop.f32.mrf.mxu0
  %v1609 = vadd.f32 %v1320, %v1608
  %v1610 = vpop.f32.mrf.mxu0
  %1611 = vmatprep.mubr.bf16.mxu0 %v721
  %1612 = vmatmul.mubr.bf16.gmra.mxu0 %v720
  %v1613 = vpop.f32.mrf.mxu0
  %v1614 = vadd.f32 %v1325, %v1613
  %v1615 = vpop.f32.mrf.mxu0
  %v1616 = vpop.f32.mrf.mxu0
  %v1617 = vadd.f32 %v1328, %v1616
  %v1618 = vpop.f32.mrf.mxu0
  %1619 = vdwg.mxu0
  %vm1620 = vcmask 523264
  %v1621 = vsel %vm1620, %v1366, 0.0
  %v1622 = vsel %vm1620, %v1369, 0.0
  %v1623 = vadd.f32 %v1621, %v1622
  %v1624 = vsel %vm1620, %v1374, 0.0
  %v1625 = vadd.f32 %v1623, %v1624
  %v1626 = vsel %vm1620, %v1377, 0.0
  %v1627 = vadd.f32 %v1625, %v1626
  %v1628 = vsel %vm1620, %v1382, 0.0
  %v1629 = vadd.f32 %v1627, %v1628
  %v1630 = vsel %vm1620, %v1385, 0.0
  %v1631 = vadd.f32 %v1629, %v1630
  %v1632 = vsel %vm1620, %v1390, 0.0
  %v1633 = vadd.f32 %v1631, %v1632
  %v1634 = vsel %vm1620, %v1393, 0.0
  %v1635 = vadd.f32 %v1633, %v1634
  %v1636 = vsel %vm1620, %v1398, 0.0
  %v1637 = vadd.f32 %v1635, %v1636
  %v1638 = vsel %vm1620, %v1401, 0.0
  %v1639 = vadd.f32 %v1637, %v1638
  %v1640 = vsel %vm1620, %v1406, 0.0
  %v1641 = vadd.f32 %v1639, %v1640
  %v1642 = vsel %vm1620, %v1409, 0.0
  %v1643 = vadd.f32 %v1641, %v1642
  %v1644 = vsel %vm1620, %v1414, 0.0
  %v1645 = vadd.f32 %v1643, %v1644
  %v1646 = vsel %vm1620, %v1417, 0.0
  %v1647 = vadd.f32 %v1645, %v1646
  %v1648 = vsel %vm1620, %v1422, 0.0
  %v1649 = vadd.f32 %v1647, %v1648
  %v1650 = vsel %vm1620, %v1425, 0.0
  %v1651 = vadd.f32 %v1649, %v1650
  %v1652 = vsel %vm1620, %v1430, 0.0
  %v1653 = vadd.f32 %v1651, %v1652
  %v1654 = vsel %vm1620, %v1433, 0.0
  %v1655 = vadd.f32 %v1653, %v1654
  %v1656 = vsel %vm1620, %v1438, 0.0
  %v1657 = vadd.f32 %v1655, %v1656
  %v1658 = vsel %vm1620, %v1441, 0.0
  %v1659 = vadd.f32 %v1657, %v1658
  %v1660 = vsel %vm1620, %v1446, 0.0
  %v1661 = vadd.f32 %v1659, %v1660
  %v1662 = vsel %vm1620, %v1449, 0.0
  %v1663 = vadd.f32 %v1661, %v1662
  %v1664 = vsel %vm1620, %v1454, 0.0
  %v1665 = vadd.f32 %v1663, %v1664
  %v1666 = vsel %vm1620, %v1457, 0.0
  %v1667 = vadd.f32 %v1665, %v1666
  %v1668 = vsel %vm1620, %v1462, 0.0
  %v1669 = vadd.f32 %v1667, %v1668
  %v1670 = vsel %vm1620, %v1465, 0.0
  %v1671 = vadd.f32 %v1669, %v1670
  %v1672 = vsel %vm1620, %v1470, 0.0
  %v1673 = vadd.f32 %v1671, %v1672
  %v1674 = vsel %vm1620, %v1473, 0.0
  %v1675 = vadd.f32 %v1673, %v1674
  %v1676 = vsel %vm1620, %v1478, 0.0
  %v1677 = vadd.f32 %v1675, %v1676
  %v1678 = vsel %vm1620, %v1481, 0.0
  %v1679 = vadd.f32 %v1677, %v1678
  %v1680 = vsel %vm1620, %v1486, 0.0
  %v1681 = vadd.f32 %v1679, %v1680
  %v1682 = vsel %vm1620, %v1489, 0.0
  %v1683 = vadd.f32 %v1681, %v1682
  %v1684 = vsel %vm1620, %v1494, 0.0
  %v1685 = vadd.f32 %v1683, %v1684
  %v1686 = vsel %vm1620, %v1497, 0.0
  %v1687 = vadd.f32 %v1685, %v1686
  %v1688 = vsel %vm1620, %v1502, 0.0
  %v1689 = vadd.f32 %v1687, %v1688
  %v1690 = vsel %vm1620, %v1505, 0.0
  %v1691 = vadd.f32 %v1689, %v1690
  %v1692 = vsel %vm1620, %v1510, 0.0
  %v1693 = vadd.f32 %v1691, %v1692
  %v1694 = vsel %vm1620, %v1513, 0.0
  %v1695 = vadd.f32 %v1693, %v1694
  %v1696 = vsel %vm1620, %v1518, 0.0
  %v1697 = vadd.f32 %v1695, %v1696
  %v1698 = vsel %vm1620, %v1521, 0.0
  %v1699 = vadd.f32 %v1697, %v1698
  %v1700 = vsel %vm1620, %v1526, 0.0
  %v1701 = vadd.f32 %v1699, %v1700
  %v1702 = vsel %vm1620, %v1529, 0.0
  %v1703 = vadd.f32 %v1701, %v1702
  %v1704 = vsel %vm1620, %v1534, 0.0
  %v1705 = vadd.f32 %v1703, %v1704
  %v1706 = vsel %vm1620, %v1537, 0.0
  %v1707 = vadd.f32 %v1705, %v1706
  %v1708 = vsel %vm1620, %v1542, 0.0
  %v1709 = vadd.f32 %v1707, %v1708
  %v1710 = vsel %vm1620, %v1545, 0.0
  %v1711 = vadd.f32 %v1709, %v1710
  %v1712 = vsel %vm1620, %v1550, 0.0
  %v1713 = vadd.f32 %v1711, %v1712
  %v1714 = vsel %vm1620, %v1553, 0.0
  %v1715 = vadd.f32 %v1713, %v1714
  %v1716 = vsel %vm1620, %v1558, 0.0
  %v1717 = vadd.f32 %v1715, %v1716
  %v1718 = vsel %vm1620, %v1561, 0.0
  %v1719 = vadd.f32 %v1717, %v1718
  %v1720 = vsel %vm1620, %v1566, 0.0
  %v1721 = vadd.f32 %v1719, %v1720
  %v1722 = vsel %vm1620, %v1569, 0.0
  %v1723 = vadd.f32 %v1721, %v1722
  %v1724 = vsel %vm1620, %v1574, 0.0
  %v1725 = vadd.f32 %v1723, %v1724
  %v1726 = vsel %vm1620, %v1577, 0.0
  %v1727 = vadd.f32 %v1725, %v1726
  %v1728 = vsel %vm1620, %v1582, 0.0
  %v1729 = vadd.f32 %v1727, %v1728
  %v1730 = vsel %vm1620, %v1585, 0.0
  %v1731 = vadd.f32 %v1729, %v1730
  %v1732 = vsel %vm1620, %v1590, 0.0
  %v1733 = vadd.f32 %v1731, %v1732
  %v1734 = vsel %vm1620, %v1593, 0.0
  %v1735 = vadd.f32 %v1733, %v1734
  %v1736 = vsel %vm1620, %v1598, 0.0
  %v1737 = vadd.f32 %v1735, %v1736
  %v1738 = vsel %vm1620, %v1601, 0.0
  %v1739 = vadd.f32 %v1737, %v1738
  %v1740 = vsel %vm1620, %v1606, 0.0
  %v1741 = vadd.f32 %v1739, %v1740
  %v1742 = vsel %vm1620, %v1609, 0.0
  %v1743 = vadd.f32 %v1741, %v1742
  %v1744 = vsel %vm1620, %v1614, 0.0
  %v1745 = vadd.f32 %v1743, %v1744
  %v1746 = vsel %vm1620, %v1617, 0.0
  %v1747 = vadd.f32 %v1745, %v1746
  %v1748 = vrot.slane %v1747, 4
  %v1749 = vadd.f32 %v1747, %v1748
  %v1750 = vrot.slane %v1749, 2
  %v1751 = vadd.f32 %v1749, %v1750
  %v1752 = vrot.slane %v1751, 1
  %v1753 = vadd.f32 %v1751, %v1752
  %v1754 = vmul.f32 %v1753, 0.001953125
  %v1755 = vsub.f32 %v1366, %v1754
  %v1756 = vsub.f32 %v1369, %v1754
  %v1757 = vsub.f32 %v1374, %v1754
  %v1758 = vsub.f32 %v1377, %v1754
  %v1759 = vsub.f32 %v1382, %v1754
  %v1760 = vsub.f32 %v1385, %v1754
  %v1761 = vsub.f32 %v1390, %v1754
  %v1762 = vsub.f32 %v1393, %v1754
  %v1763 = vsub.f32 %v1398, %v1754
  %v1764 = vsub.f32 %v1401, %v1754
  %v1765 = vsub.f32 %v1406, %v1754
  %v1766 = vsub.f32 %v1409, %v1754
  %v1767 = vsub.f32 %v1414, %v1754
  %v1768 = vsub.f32 %v1417, %v1754
  %v1769 = vsub.f32 %v1422, %v1754
  %v1770 = vsub.f32 %v1425, %v1754
  %v1771 = vsub.f32 %v1430, %v1754
  %v1772 = vsub.f32 %v1433, %v1754
  %v1773 = vsub.f32 %v1438, %v1754
  %v1774 = vsub.f32 %v1441, %v1754
  %v1775 = vsub.f32 %v1446, %v1754
  %v1776 = vsub.f32 %v1449, %v1754
  %v1777 = vsub.f32 %v1454, %v1754
  %v1778 = vsub.f32 %v1457, %v1754
  %v1779 = vsub.f32 %v1462, %v1754
  %v1780 = vsub.f32 %v1465, %v1754
  %v1781 = vsub.f32 %v1470, %v1754
  %v1782 = vsub.f32 %v1473, %v1754
  %v1783 = vsub.f32 %v1478, %v1754
  %v1784 = vsub.f32 %v1481, %v1754
  %v1785 = vsub.f32 %v1486, %v1754
  %v1786 = vsub.f32 %v1489, %v1754
  %v1787 = vsub.f32 %v1494, %v1754
  %v1788 = vsub.f32 %v1497, %v1754
  %v1789 = vsub.f32 %v1502, %v1754
  %v1790 = vsub.f32 %v1505, %v1754
  %v1791 = vsub.f32 %v1510, %v1754
  %v1792 = vsub.f32 %v1513, %v1754
  %v1793 = vsub.f32 %v1518, %v1754
  %v1794 = vsub.f32 %v1521, %v1754
  %v1795 = vsub.f32 %v1526, %v1754
  %v1796 = vsub.f32 %v1529, %v1754
  %v1797 = vsub.f32 %v1534, %v1754
  %v1798 = vsub.f32 %v1537, %v1754
  %v1799 = vsub.f32 %v1542, %v1754
  %v1800 = vsub.f32 %v1545, %v1754
  %v1801 = vsub.f32 %v1550, %v1754
  %v1802 = vsub.f32 %v1553, %v1754
  %v1803 = vsub.f32 %v1558, %v1754
  %v1804 = vsub.f32 %v1561, %v1754
  %v1805 = vsub.f32 %v1566, %v1754
  %v1806 = vsub.f32 %v1569, %v1754
  %v1807 = vsub.f32 %v1574, %v1754
  %v1808 = vsub.f32 %v1577, %v1754
  %v1809 = vsub.f32 %v1582, %v1754
  %v1810 = vsub.f32 %v1585, %v1754
  %v1811 = vsub.f32 %v1590, %v1754
  %v1812 = vsub.f32 %v1593, %v1754
  %v1813 = vsub.f32 %v1598, %v1754
  %v1814 = vsub.f32 %v1601, %v1754
  %v1815 = vsub.f32 %v1606, %v1754
  %v1816 = vsub.f32 %v1609, %v1754
  %v1817 = vsub.f32 %v1614, %v1754
  %v1818 = vsub.f32 %v1617, %v1754
  %v1819 = vmul.f32 %v1755, %v1755
  %v1820 = vmul.f32 %v1756, %v1756
  %v1821 = vmul.f32 %v1757, %v1757
  %v1822 = vmul.f32 %v1758, %v1758
  %v1823 = vmul.f32 %v1759, %v1759
  %v1824 = vmul.f32 %v1760, %v1760
  %v1825 = vmul.f32 %v1761, %v1761
  %v1826 = vmul.f32 %v1762, %v1762
  %v1827 = vmul.f32 %v1763, %v1763
  %v1828 = vmul.f32 %v1764, %v1764
  %v1829 = vmul.f32 %v1765, %v1765
  %v1830 = vmul.f32 %v1766, %v1766
  %v1831 = vmul.f32 %v1767, %v1767
  %v1832 = vmul.f32 %v1768, %v1768
  %v1833 = vmul.f32 %v1769, %v1769
  %v1834 = vmul.f32 %v1770, %v1770
  %v1835 = vmul.f32 %v1771, %v1771
  %v1836 = vmul.f32 %v1772, %v1772
  %v1837 = vmul.f32 %v1773, %v1773
  %v1838 = vmul.f32 %v1774, %v1774
  %v1839 = vmul.f32 %v1775, %v1775
  %v1840 = vmul.f32 %v1776, %v1776
  %v1841 = vmul.f32 %v1777, %v1777
  %v1842 = vmul.f32 %v1778, %v1778
  %v1843 = vmul.f32 %v1779, %v1779
  %v1844 = vmul.f32 %v1780, %v1780
  %v1845 = vmul.f32 %v1781, %v1781
  %v1846 = vmul.f32 %v1782, %v1782
  %v1847 = vmul.f32 %v1783, %v1783
  %v1848 = vmul.f32 %v1784, %v1784
  %v1849 = vmul.f32 %v1785, %v1785
  %v1850 = vmul.f32 %v1786, %v1786
  %v1851 = vmul.f32 %v1787, %v1787
  %v1852 = vmul.f32 %v1788, %v1788
  %v1853 = vmul.f32 %v1789, %v1789
  %v1854 = vmul.f32 %v1790, %v1790
  %v1855 = vmul.f32 %v1791, %v1791
  %v1856 = vmul.f32 %v1792, %v1792
  %v1857 = vmul.f32 %v1793, %v1793
  %v1858 = vmul.f32 %v1794, %v1794
  %v1859 = vmul.f32 %v1795, %v1795
  %v1860 = vmul.f32 %v1796, %v1796
  %v1861 = vmul.f32 %v1797, %v1797
  %v1862 = vmul.f32 %v1798, %v1798
  %v1863 = vmul.f32 %v1799, %v1799
  %v1864 = vmul.f32 %v1800, %v1800
  %v1865 = vmul.f32 %v1801, %v1801
  %v1866 = vmul.f32 %v1802, %v1802
  %v1867 = vmul.f32 %v1803, %v1803
  %v1868 = vmul.f32 %v1804, %v1804
  %v1869 = vmul.f32 %v1805, %v1805
  %v1870 = vmul.f32 %v1806, %v1806
  %v1871 = vmul.f32 %v1807, %v1807
  %v1872 = vmul.f32 %v1808, %v1808
  %v1873 = vmul.f32 %v1809, %v1809
  %v1874 = vmul.f32 %v1810, %v1810
  %v1875 = vmul.f32 %v1811, %v1811
  %v1876 = vmul.f32 %v1812, %v1812
  %v1877 = vmul.f32 %v1813, %v1813
  %v1878 = vmul.f32 %v1814, %v1814
  %v1879 = vmul.f32 %v1815, %v1815
  %v1880 = vmul.f32 %v1816, %v1816
  %v1881 = vmul.f32 %v1817, %v1817
  %v1882 = vmul.f32 %v1818, %v1818
  %v1883 = vsel %vm1620, %v1819, 0.0
  %v1884 = vsel %vm1620, %v1820, 0.0
  %v1885 = vadd.f32 %v1883, %v1884
  %v1886 = vsel %vm1620, %v1821, 0.0
  %v1887 = vadd.f32 %v1885, %v1886
  %v1888 = vsel %vm1620, %v1822, 0.0
  %v1889 = vadd.f32 %v1887, %v1888
  %v1890 = vsel %vm1620, %v1823, 0.0
  %v1891 = vadd.f32 %v1889, %v1890
  %v1892 = vsel %vm1620, %v1824, 0.0
  %v1893 = vadd.f32 %v1891, %v1892
  %v1894 = vsel %vm1620, %v1825, 0.0
  %v1895 = vadd.f32 %v1893, %v1894
  %v1896 = vsel %vm1620, %v1826, 0.0
  %v1897 = vadd.f32 %v1895, %v1896
  %v1898 = vsel %vm1620, %v1827, 0.0
  %v1899 = vadd.f32 %v1897, %v1898
  %v1900 = vsel %vm1620, %v1828, 0.0
  %v1901 = vadd.f32 %v1899, %v1900
  %v1902 = vsel %vm1620, %v1829, 0.0
  %v1903 = vadd.f32 %v1901, %v1902
  %v1904 = vsel %vm1620, %v1830, 0.0
  %v1905 = vadd.f32 %v1903, %v1904
  %v1906 = vsel %vm1620, %v1831, 0.0
  %v1907 = vadd.f32 %v1905, %v1906
  %v1908 = vsel %vm1620, %v1832, 0.0
  %v1909 = vadd.f32 %v1907, %v1908
  %v1910 = vsel %vm1620, %v1833, 0.0
  %v1911 = vadd.f32 %v1909, %v1910
  %v1912 = vsel %vm1620, %v1834, 0.0
  %v1913 = vadd.f32 %v1911, %v1912
  %v1914 = vsel %vm1620, %v1835, 0.0
  %v1915 = vadd.f32 %v1913, %v1914
  %v1916 = vsel %vm1620, %v1836, 0.0
  %v1917 = vadd.f32 %v1915, %v1916
  %v1918 = vsel %vm1620, %v1837, 0.0
  %v1919 = vadd.f32 %v1917, %v1918
  %v1920 = vsel %vm1620, %v1838, 0.0
  %v1921 = vadd.f32 %v1919, %v1920
  %v1922 = vsel %vm1620, %v1839, 0.0
  %v1923 = vadd.f32 %v1921, %v1922
  %v1924 = vsel %vm1620, %v1840, 0.0
  %v1925 = vadd.f32 %v1923, %v1924
  %v1926 = vsel %vm1620, %v1841, 0.0
  %v1927 = vadd.f32 %v1925, %v1926
  %v1928 = vsel %vm1620, %v1842, 0.0
  %v1929 = vadd.f32 %v1927, %v1928
  %v1930 = vsel %vm1620, %v1843, 0.0
  %v1931 = vadd.f32 %v1929, %v1930
  %v1932 = vsel %vm1620, %v1844, 0.0
  %v1933 = vadd.f32 %v1931, %v1932
  %v1934 = vsel %vm1620, %v1845, 0.0
  %v1935 = vadd.f32 %v1933, %v1934
  %v1936 = vsel %vm1620, %v1846, 0.0
  %v1937 = vadd.f32 %v1935, %v1936
  %v1938 = vsel %vm1620, %v1847, 0.0
  %v1939 = vadd.f32 %v1937, %v1938
  %v1940 = vsel %vm1620, %v1848, 0.0
  %v1941 = vadd.f32 %v1939, %v1940
  %v1942 = vsel %vm1620, %v1849, 0.0
  %v1943 = vadd.f32 %v1941, %v1942
  %v1944 = vsel %vm1620, %v1850, 0.0
  %v1945 = vadd.f32 %v1943, %v1944
  %v1946 = vsel %vm1620, %v1851, 0.0
  %v1947 = vadd.f32 %v1945, %v1946
  %v1948 = vsel %vm1620, %v1852, 0.0
  %v1949 = vadd.f32 %v1947, %v1948
  %v1950 = vsel %vm1620, %v1853, 0.0
  %v1951 = vadd.f32 %v1949, %v1950
  %v1952 = vsel %vm1620, %v1854, 0.0
  %v1953 = vadd.f32 %v1951, %v1952
  %v1954 = vsel %vm1620, %v1855, 0.0
  %v1955 = vadd.f32 %v1953, %v1954
  %v1956 = vsel %vm1620, %v1856, 0.0
  %v1957 = vadd.f32 %v1955, %v1956
  %v1958 = vsel %vm1620, %v1857, 0.0
  %v1959 = vadd.f32 %v1957, %v1958
  %v1960 = vsel %vm1620, %v1858, 0.0
  %v1961 = vadd.f32 %v1959, %v1960
  %v1962 = vsel %vm1620, %v1859, 0.0
  %v1963 = vadd.f32 %v1961, %v1962
  %v1964 = vsel %vm1620, %v1860, 0.0
  %v1965 = vadd.f32 %v1963, %v1964
  %v1966 = vsel %vm1620, %v1861, 0.0
  %v1967 = vadd.f32 %v1965, %v1966
  %v1968 = vsel %vm1620, %v1862, 0.0
  %v1969 = vadd.f32 %v1967, %v1968
  %v1970 = vsel %vm1620, %v1863, 0.0
  %v1971 = vadd.f32 %v1969, %v1970
  %v1972 = vsel %vm1620, %v1864, 0.0
  %v1973 = vadd.f32 %v1971, %v1972
  %v1974 = vsel %vm1620, %v1865, 0.0
  %v1975 = vadd.f32 %v1973, %v1974
  %v1976 = vsel %vm1620, %v1866, 0.0
  %v1977 = vadd.f32 %v1975, %v1976
  %v1978 = vsel %vm1620, %v1867, 0.0
  %v1979 = vadd.f32 %v1977, %v1978
  %v1980 = vsel %vm1620, %v1868, 0.0
  %v1981 = vadd.f32 %v1979, %v1980
  %v1982 = vsel %vm1620, %v1869, 0.0
  %v1983 = vadd.f32 %v1981, %v1982
  %v1984 = vsel %vm1620, %v1870, 0.0
  %v1985 = vadd.f32 %v1983, %v1984
  %v1986 = vsel %vm1620, %v1871, 0.0
  %v1987 = vadd.f32 %v1985, %v1986
  %v1988 = vsel %vm1620, %v1872, 0.0
  %v1989 = vadd.f32 %v1987, %v1988
  %v1990 = vsel %vm1620, %v1873, 0.0
  %v1991 = vadd.f32 %v1989, %v1990
  %v1992 = vsel %vm1620, %v1874, 0.0
  %v1993 = vadd.f32 %v1991, %v1992
  %v1994 = vsel %vm1620, %v1875, 0.0
  %v1995 = vadd.f32 %v1993, %v1994
  %v1996 = vsel %vm1620, %v1876, 0.0
  %v1997 = vadd.f32 %v1995, %v1996
  %v1998 = vsel %vm1620, %v1877, 0.0
  %v1999 = vadd.f32 %v1997, %v1998
  %v2000 = vsel %vm1620, %v1878, 0.0
  %v2001 = vadd.f32 %v1999, %v2000
  %v2002 = vsel %vm1620, %v1879, 0.0
  %v2003 = vadd.f32 %v2001, %v2002
  %v2004 = vsel %vm1620, %v1880, 0.0
  %v2005 = vadd.f32 %v2003, %v2004
  %v2006 = vsel %vm1620, %v1881, 0.0
  %v2007 = vadd.f32 %v2005, %v2006
  %v2008 = vsel %vm1620, %v1882, 0.0
  %v2009 = vadd.f32 %v2007, %v2008
  %v2010 = vrot.slane %v2009, 4
  %v2011 = vadd.f32 %v2009, %v2010
  %v2012 = vrot.slane %v2011, 2
  %v2013 = vadd.f32 %v2011, %v2012
  %v2014 = vrot.slane %v2013, 1
  %v2015 = vadd.f32 %v2013, %v2014
  %v2016 = vmul.f32 %v2015, 0.001953125
  %v2017 = vld [vmem:[%s2] sm:$0x1]
  %v2018 = vadd.f32 %v2016, 1e-05
  %v2019 = vrsqrt.pop %v2018
  %v2020 = vmul.f32 %v2017, %v2019
  %v2022 = vlaneseq
  %v2023 = vshrl.u32 %v2022, 7
  %v2024 = vsub.s32 0, %v2023
  %v2025 = vrot.slane %v2020, %v2024
  %v2027 = vmul.f32 %v1755, %v2025
  %v2028 = vmul.f32 %v1756, %v2025
  %v2029 = vmul.f32 %v1757, %v2025
  %v2030 = vmul.f32 %v1758, %v2025
  %v2031 = vmul.f32 %v1759, %v2025
  %v2032 = vmul.f32 %v1760, %v2025
  %v2033 = vmul.f32 %v1761, %v2025
  %v2034 = vmul.f32 %v1762, %v2025
  %v2035 = vmul.f32 %v1763, %v2025
  %v2036 = vmul.f32 %v1764, %v2025
  %v2037 = vmul.f32 %v1765, %v2025
  %v2038 = vmul.f32 %v1766, %v2025
  %v2039 = vmul.f32 %v1767, %v2025
  %v2040 = vmul.f32 %v1768, %v2025
  %v2041 = vmul.f32 %v1769, %v2025
  %v2042 = vmul.f32 %v1770, %v2025
  %v2043 = vmul.f32 %v1771, %v2025
  %v2044 = vmul.f32 %v1772, %v2025
  %v2045 = vmul.f32 %v1773, %v2025
  %v2046 = vmul.f32 %v1774, %v2025
  %v2047 = vmul.f32 %v1775, %v2025
  %v2048 = vmul.f32 %v1776, %v2025
  %v2049 = vmul.f32 %v1777, %v2025
  %v2050 = vmul.f32 %v1778, %v2025
  %v2051 = vmul.f32 %v1779, %v2025
  %v2052 = vmul.f32 %v1780, %v2025
  %v2053 = vmul.f32 %v1781, %v2025
  %v2054 = vmul.f32 %v1782, %v2025
  %v2055 = vmul.f32 %v1783, %v2025
  %v2056 = vmul.f32 %v1784, %v2025
  %v2057 = vmul.f32 %v1785, %v2025
  %v2058 = vmul.f32 %v1786, %v2025
  %v2059 = vmul.f32 %v1787, %v2025
  %v2060 = vmul.f32 %v1788, %v2025
  %v2061 = vmul.f32 %v1789, %v2025
  %v2062 = vmul.f32 %v1790, %v2025
  %v2063 = vmul.f32 %v1791, %v2025
  %v2064 = vmul.f32 %v1792, %v2025
  %v2065 = vmul.f32 %v1793, %v2025
  %v2066 = vmul.f32 %v1794, %v2025
  %v2067 = vmul.f32 %v1795, %v2025
  %v2068 = vmul.f32 %v1796, %v2025
  %v2069 = vmul.f32 %v1797, %v2025
  %v2070 = vmul.f32 %v1798, %v2025
  %v2071 = vmul.f32 %v1799, %v2025
  %v2072 = vmul.f32 %v1800, %v2025
  %v2073 = vmul.f32 %v1801, %v2025
  %v2074 = vmul.f32 %v1802, %v2025
  %v2075 = vmul.f32 %v1803, %v2025
  %v2076 = vmul.f32 %v1804, %v2025
  %v2077 = vmul.f32 %v1805, %v2025
  %v2078 = vmul.f32 %v1806, %v2025
  %v2079 = vmul.f32 %v1807, %v2025
  %v2080 = vmul.f32 %v1808, %v2025
  %v2081 = vmul.f32 %v1809, %v2025
  %v2082 = vmul.f32 %v1810, %v2025
  %v2083 = vmul.f32 %v1811, %v2025
  %v2084 = vmul.f32 %v1812, %v2025
  %v2085 = vmul.f32 %v1813, %v2025
  %v2086 = vmul.f32 %v1814, %v2025
  %v2087 = vmul.f32 %v1815, %v2025
  %v2088 = vmul.f32 %v1816, %v2025
  %v2089 = vmul.f32 %v1817, %v2025
  %v2090 = vmul.f32 %v1818, %v2025
  %v2091 = vld [vmem:[%s3] sm:$0x1]
  %v2093 = vlaneseq
  %v2094 = vshrl.u32 %v2093, 7
  %v2095 = vsub.s32 0, %v2094
  %v2096 = vrot.slane %v2091, %v2095
  %v2098 = vadd.f32 %v2027, %v2096
  %v2099 = vadd.f32 %v2028, %v2096
  %v2100 = vadd.f32 %v2029, %v2096
  %v2101 = vadd.f32 %v2030, %v2096
  %v2102 = vadd.f32 %v2031, %v2096
  %v2103 = vadd.f32 %v2032, %v2096
  %v2104 = vadd.f32 %v2033, %v2096
  %v2105 = vadd.f32 %v2034, %v2096
  %v2106 = vadd.f32 %v2035, %v2096
  %v2107 = vadd.f32 %v2036, %v2096
  %v2108 = vadd.f32 %v2037, %v2096
  %v2109 = vadd.f32 %v2038, %v2096
  %v2110 = vadd.f32 %v2039, %v2096
  %v2111 = vadd.f32 %v2040, %v2096
  %v2112 = vadd.f32 %v2041, %v2096
  %v2113 = vadd.f32 %v2042, %v2096
  %v2114 = vadd.f32 %v2043, %v2096
  %v2115 = vadd.f32 %v2044, %v2096
  %v2116 = vadd.f32 %v2045, %v2096
  %v2117 = vadd.f32 %v2046, %v2096
  %v2118 = vadd.f32 %v2047, %v2096
  %v2119 = vadd.f32 %v2048, %v2096
  %v2120 = vadd.f32 %v2049, %v2096
  %v2121 = vadd.f32 %v2050, %v2096
  %v2122 = vadd.f32 %v2051, %v2096
  %v2123 = vadd.f32 %v2052, %v2096
  %v2124 = vadd.f32 %v2053, %v2096
  %v2125 = vadd.f32 %v2054, %v2096
  %v2126 = vadd.f32 %v2055, %v2096
  %v2127 = vadd.f32 %v2056, %v2096
  %v2128 = vadd.f32 %v2057, %v2096
  %v2129 = vadd.f32 %v2058, %v2096
  %v2130 = vadd.f32 %v2059, %v2096
  %v2131 = vadd.f32 %v2060, %v2096
  %v2132 = vadd.f32 %v2061, %v2096
  %v2133 = vadd.f32 %v2062, %v2096
  %v2134 = vadd.f32 %v2063, %v2096
  %v2135 = vadd.f32 %v2064, %v2096
  %v2136 = vadd.f32 %v2065, %v2096
  %v2137 = vadd.f32 %v2066, %v2096
  %v2138 = vadd.f32 %v2067, %v2096
  %v2139 = vadd.f32 %v2068, %v2096
  %v2140 = vadd.f32 %v2069, %v2096
  %v2141 = vadd.f32 %v2070, %v2096
  %v2142 = vadd.f32 %v2071, %v2096
  %v2143 = vadd.f32 %v2072, %v2096
  %v2144 = vadd.f32 %v2073, %v2096
  %v2145 = vadd.f32 %v2074, %v2096
  %v2146 = vadd.f32 %v2075, %v2096
  %v2147 = vadd.f32 %v2076, %v2096
  %v2148 = vadd.f32 %v2077, %v2096
  %v2149 = vadd.f32 %v2078, %v2096
  %v2150 = vadd.f32 %v2079, %v2096
  %v2151 = vadd.f32 %v2080, %v2096
  %v2152 = vadd.f32 %v2081, %v2096
  %v2153 = vadd.f32 %v2082, %v2096
  %v2154 = vadd.f32 %v2083, %v2096
  %v2155 = vadd.f32 %v2084, %v2096
  %v2156 = vadd.f32 %v2085, %v2096
  %v2157 = vadd.f32 %v2086, %v2096
  %v2158 = vadd.f32 %v2087, %v2096
  %v2159 = vadd.f32 %v2088, %v2096
  %v2160 = vadd.f32 %v2089, %v2096
  %v2161 = vadd.f32 %v2090, %v2096
  %v2162 = vmax.f32 %v2098, 0.0
  %v2163 = vmax.f32 %v2099, 0.0
  %v2164 = vmax.f32 %v2100, 0.0
  %v2165 = vmax.f32 %v2101, 0.0
  %v2166 = vmax.f32 %v2102, 0.0
  %v2167 = vmax.f32 %v2103, 0.0
  %v2168 = vmax.f32 %v2104, 0.0
  %v2169 = vmax.f32 %v2105, 0.0
  %v2170 = vmax.f32 %v2106, 0.0
  %v2171 = vmax.f32 %v2107, 0.0
  %v2172 = vmax.f32 %v2108, 0.0
  %v2173 = vmax.f32 %v2109, 0.0
  %v2174 = vmax.f32 %v2110, 0.0
  %v2175 = vmax.f32 %v2111, 0.0
  %v2176 = vmax.f32 %v2112, 0.0
  %v2177 = vmax.f32 %v2113, 0.0
  %v2178 = vmax.f32 %v2114, 0.0
  %v2179 = vmax.f32 %v2115, 0.0
  %v2180 = vmax.f32 %v2116, 0.0
  %v2181 = vmax.f32 %v2117, 0.0
  %v2182 = vmax.f32 %v2118, 0.0
  %v2183 = vmax.f32 %v2119, 0.0
  %v2184 = vmax.f32 %v2120, 0.0
  %v2185 = vmax.f32 %v2121, 0.0
  %v2186 = vmax.f32 %v2122, 0.0
  %v2187 = vmax.f32 %v2123, 0.0
  %v2188 = vmax.f32 %v2124, 0.0
  %v2189 = vmax.f32 %v2125, 0.0
  %v2190 = vmax.f32 %v2126, 0.0
  %v2191 = vmax.f32 %v2127, 0.0
  %v2192 = vmax.f32 %v2128, 0.0
  %v2193 = vmax.f32 %v2129, 0.0
  %v2194 = vmax.f32 %v2130, 0.0
  %v2195 = vmax.f32 %v2131, 0.0
  %v2196 = vmax.f32 %v2132, 0.0
  %v2197 = vmax.f32 %v2133, 0.0
  %v2198 = vmax.f32 %v2134, 0.0
  %v2199 = vmax.f32 %v2135, 0.0
  %v2200 = vmax.f32 %v2136, 0.0
  %v2201 = vmax.f32 %v2137, 0.0
  %v2202 = vmax.f32 %v2138, 0.0
  %v2203 = vmax.f32 %v2139, 0.0
  %v2204 = vmax.f32 %v2140, 0.0
  %v2205 = vmax.f32 %v2141, 0.0
  %v2206 = vmax.f32 %v2142, 0.0
  %v2207 = vmax.f32 %v2143, 0.0
  %v2208 = vmax.f32 %v2144, 0.0
  %v2209 = vmax.f32 %v2145, 0.0
  %v2210 = vmax.f32 %v2146, 0.0
  %v2211 = vmax.f32 %v2147, 0.0
  %v2212 = vmax.f32 %v2148, 0.0
  %v2213 = vmax.f32 %v2149, 0.0
  %v2214 = vmax.f32 %v2150, 0.0
  %v2215 = vmax.f32 %v2151, 0.0
  %v2216 = vmax.f32 %v2152, 0.0
  %v2217 = vmax.f32 %v2153, 0.0
  %v2218 = vmax.f32 %v2154, 0.0
  %v2219 = vmax.f32 %v2155, 0.0
  %v2220 = vmax.f32 %v2156, 0.0
  %v2221 = vmax.f32 %v2157, 0.0
  %v2222 = vmax.f32 %v2158, 0.0
  %v2223 = vmax.f32 %v2159, 0.0
  %v2224 = vmax.f32 %v2160, 0.0
  %v2225 = vmax.f32 %v2161, 0.0
  %v2226 = vpack.c.bf16 %v2163, %v2162
  %v2227 = vpack.c.bf16 %v2165, %v2164
  %v2228 = vpack.c.bf16 %v2167, %v2166
  %v2229 = vpack.c.bf16 %v2169, %v2168
  %v2230 = vpack.c.bf16 %v2171, %v2170
  %v2231 = vpack.c.bf16 %v2173, %v2172
  %v2232 = vpack.c.bf16 %v2175, %v2174
  %v2233 = vpack.c.bf16 %v2177, %v2176
  %v2234 = vpack.c.bf16 %v2179, %v2178
  %v2235 = vpack.c.bf16 %v2181, %v2180
  %v2236 = vpack.c.bf16 %v2183, %v2182
  %v2237 = vpack.c.bf16 %v2185, %v2184
  %v2238 = vpack.c.bf16 %v2187, %v2186
  %v2239 = vpack.c.bf16 %v2189, %v2188
  %v2240 = vpack.c.bf16 %v2191, %v2190
  %v2241 = vpack.c.bf16 %v2193, %v2192
  %v2242 = vpack.c.bf16 %v2195, %v2194
  %v2243 = vpack.c.bf16 %v2197, %v2196
  %v2244 = vpack.c.bf16 %v2199, %v2198
  %v2245 = vpack.c.bf16 %v2201, %v2200
  %v2246 = vpack.c.bf16 %v2203, %v2202
  %v2247 = vpack.c.bf16 %v2205, %v2204
  %v2248 = vpack.c.bf16 %v2207, %v2206
  %v2249 = vpack.c.bf16 %v2209, %v2208
  %v2250 = vpack.c.bf16 %v2211, %v2210
  %v2251 = vpack.c.bf16 %v2213, %v2212
  %v2252 = vpack.c.bf16 %v2215, %v2214
  %v2253 = vpack.c.bf16 %v2217, %v2216
  %v2254 = vpack.c.bf16 %v2219, %v2218
  %v2255 = vpack.c.bf16 %v2221, %v2220
  %v2256 = vpack.c.bf16 %v2223, %v2222
  %v2257 = vpack.c.bf16 %v2225, %v2224
  %v2290 = vunpack.c.l.b16 %v2226
  %v2291 = vunpack.c.h.b16 %v2226
  %v2292 = vunpack.c.l.b16 %v2227
  %v2293 = vunpack.c.h.b16 %v2227
  %v2294 = vunpack.c.l.b16 %v2228
  %v2295 = vunpack.c.h.b16 %v2228
  %v2296 = vunpack.c.l.b16 %v2229
  %v2297 = vunpack.c.h.b16 %v2229
  %v2298 = vunpack.c.l.b16 %v2230
  %v2299 = vunpack.c.h.b16 %v2230
  %v2300 = vunpack.c.l.b16 %v2231
  %v2301 = vunpack.c.h.b16 %v2231
  %v2302 = vunpack.c.l.b16 %v2232
  %v2303 = vunpack.c.h.b16 %v2232
  %v2304 = vunpack.c.l.b16 %v2233
  %v2305 = vunpack.c.h.b16 %v2233
  %v2306 = vunpack.c.l.b16 %v2234
  %v2307 = vunpack.c.h.b16 %v2234
  %v2308 = vunpack.c.l.b16 %v2235
  %v2309 = vunpack.c.h.b16 %v2235
  %v2310 = vunpack.c.l.b16 %v2236
  %v2311 = vunpack.c.h.b16 %v2236
  %v2312 = vunpack.c.l.b16 %v2237
  %v2313 = vunpack.c.h.b16 %v2237
  %v2314 = vunpack.c.l.b16 %v2238
  %v2315 = vunpack.c.h.b16 %v2238
  %v2316 = vunpack.c.l.b16 %v2239
  %v2317 = vunpack.c.h.b16 %v2239
  %v2318 = vunpack.c.l.b16 %v2240
  %v2319 = vunpack.c.h.b16 %v2240
  %v2320 = vunpack.c.l.b16 %v2241
  %v2321 = vunpack.c.h.b16 %v2241
  %v2322 = vunpack.c.l.b16 %v2242
  %v2323 = vunpack.c.h.b16 %v2242
  %v2324 = vunpack.c.l.b16 %v2243
  %v2325 = vunpack.c.h.b16 %v2243
  %v2326 = vunpack.c.l.b16 %v2244
  %v2327 = vunpack.c.h.b16 %v2244
  %v2328 = vunpack.c.l.b16 %v2245
  %v2329 = vunpack.c.h.b16 %v2245
  %v2330 = vunpack.c.l.b16 %v2246
  %v2331 = vunpack.c.h.b16 %v2246
  %v2332 = vunpack.c.l.b16 %v2247
  %v2333 = vunpack.c.h.b16 %v2247
  %v2334 = vunpack.c.l.b16 %v2248
  %v2335 = vunpack.c.h.b16 %v2248
  %v2336 = vunpack.c.l.b16 %v2249
  %v2337 = vunpack.c.h.b16 %v2249
  %v2338 = vunpack.c.l.b16 %v2250
  %v2339 = vunpack.c.h.b16 %v2250
  %v2340 = vunpack.c.l.b16 %v2251
  %v2341 = vunpack.c.h.b16 %v2251
  %v2342 = vunpack.c.l.b16 %v2252
  %v2343 = vunpack.c.h.b16 %v2252
  %v2344 = vunpack.c.l.b16 %v2253
  %v2345 = vunpack.c.h.b16 %v2253
  %v2346 = vunpack.c.l.b16 %v2254
  %v2347 = vunpack.c.h.b16 %v2254
  %v2348 = vunpack.c.l.b16 %v2255
  %v2349 = vunpack.c.h.b16 %v2255
  %v2350 = vunpack.c.l.b16 %v2256
  %v2351 = vunpack.c.h.b16 %v2256
  %v2352 = vunpack.c.l.b16 %v2257
  %v2353 = vunpack.c.h.b16 %v2257
  %v2354 = vpack.c.b16 %v2290, %v2290
  %v2355 = vpack.c.b16 %v2291, %v2291
  %v2356 = vpack.c.b16 %v2292, %v2292
  %v2357 = vpack.c.b16 %v2293, %v2293
  %v2358 = vpack.c.b16 %v2294, %v2294
  %v2359 = vpack.c.b16 %v2295, %v2295
  %v2360 = vpack.c.b16 %v2296, %v2296
  %v2361 = vpack.c.b16 %v2297, %v2297
  %v2362 = vpack.c.b16 %v2298, %v2298
  %v2363 = vpack.c.b16 %v2299, %v2299
  %v2364 = vpack.c.b16 %v2300, %v2300
  %v2365 = vpack.c.b16 %v2301, %v2301
  %v2366 = vpack.c.b16 %v2302, %v2302
  %v2367 = vpack.c.b16 %v2303, %v2303
  %v2368 = vpack.c.b16 %v2304, %v2304
  %v2369 = vpack.c.b16 %v2305, %v2305
  %v2370 = vpack.c.b16 %v2306, %v2306
  %v2371 = vpack.c.b16 %v2307, %v2307
  %v2372 = vpack.c.b16 %v2308, %v2308
  %v2373 = vpack.c.b16 %v2309, %v2309
  %v2374 = vpack.c.b16 %v2310, %v2310
  %v2375 = vpack.c.b16 %v2311, %v2311
  %v2376 = vpack.c.b16 %v2312, %v2312
  %v2377 = vpack.c.b16 %v2313, %v2313
  %v2378 = vpack.c.b16 %v2314, %v2314
  %v2379 = vpack.c.b16 %v2315, %v2315
  %v2380 = vpack.c.b16 %v2316, %v2316
  %v2381 = vpack.c.b16 %v2317, %v2317
  %v2382 = vpack.c.b16 %v2318, %v2318
  %v2383 = vpack.c.b16 %v2319, %v2319
  %v2384 = vpack.c.b16 %v2320, %v2320
  %v2385 = vpack.c.b16 %v2321, %v2321
  %v2386 = vpack.c.b16 %v2322, %v2322
  %v2387 = vpack.c.b16 %v2323, %v2323
  %v2388 = vpack.c.b16 %v2324, %v2324
  %v2389 = vpack.c.b16 %v2325, %v2325
  %v2390 = vpack.c.b16 %v2326, %v2326
  %v2391 = vpack.c.b16 %v2327, %v2327
  %v2392 = vpack.c.b16 %v2328, %v2328
  %v2393 = vpack.c.b16 %v2329, %v2329
  %v2394 = vpack.c.b16 %v2330, %v2330
  %v2395 = vpack.c.b16 %v2331, %v2331
  %v2396 = vpack.c.b16 %v2332, %v2332
  %v2397 = vpack.c.b16 %v2333, %v2333
  %v2398 = vpack.c.b16 %v2334, %v2334
  %v2399 = vpack.c.b16 %v2335, %v2335
  %v2400 = vpack.c.b16 %v2336, %v2336
  %v2401 = vpack.c.b16 %v2337, %v2337
  %v2402 = vpack.c.b16 %v2338, %v2338
  %v2403 = vpack.c.b16 %v2339, %v2339
  %v2404 = vpack.c.b16 %v2340, %v2340
  %v2405 = vpack.c.b16 %v2341, %v2341
  %v2406 = vpack.c.b16 %v2342, %v2342
  %v2407 = vpack.c.b16 %v2343, %v2343
  %v2408 = vpack.c.b16 %v2344, %v2344
  %v2409 = vpack.c.b16 %v2345, %v2345
  %v2410 = vpack.c.b16 %v2346, %v2346
  %v2411 = vpack.c.b16 %v2347, %v2347
  %v2412 = vpack.c.b16 %v2348, %v2348
  %v2413 = vpack.c.b16 %v2349, %v2349
  %v2414 = vpack.c.b16 %v2350, %v2350
  %v2415 = vpack.c.b16 %v2351, %v2351
  %v2416 = vpack.c.b16 %v2352, %v2352
  %v2417 = vpack.c.b16 %v2353, %v2353
  %vm2482 = vcmask 519168
  %2483 = vst.msk [vmem:[%s4] sm:$0xf] %vm2482, %v2354
  %2484 = vst.msk [vmem:[%s4 + $0x4] sm:$0xf] %vm2482, %v2355
  %2485 = vst.msk [vmem:[%s4 + $0x8] sm:$0xf] %vm2482, %v2356
  %2486 = vst.msk [vmem:[%s4 + $0xc] sm:$0xf] %vm2482, %v2357
  %2487 = vst.msk [vmem:[%s4 + $0x10] sm:$0xf] %vm2482, %v2358
  %2488 = vst.msk [vmem:[%s4 + $0x14] sm:$0xf] %vm2482, %v2359
  %2489 = vst.msk [vmem:[%s4 + $0x18] sm:$0xf] %vm2482, %v2360
  %2490 = vst.msk [vmem:[%s4 + $0x1c] sm:$0xf] %vm2482, %v2361
  %2491 = vst.msk [vmem:[%s4 + $0x20] sm:$0xf] %vm2482, %v2362
  %2492 = vst.msk [vmem:[%s4 + $0x24] sm:$0xf] %vm2482, %v2363
  %2493 = vst.msk [vmem:[%s4 + $0x28] sm:$0xf] %vm2482, %v2364
  %2494 = vst.msk [vmem:[%s4 + $0x2c] sm:$0xf] %vm2482, %v2365
  %2495 = vst.msk [vmem:[%s4 + $0x30] sm:$0xf] %vm2482, %v2366
  %2496 = vst.msk [vmem:[%s4 + $0x34] sm:$0xf] %vm2482, %v2367
  %2497 = vst.msk [vmem:[%s4 + $0x38] sm:$0xf] %vm2482, %v2368
  %2498 = vst.msk [vmem:[%s4 + $0x3c] sm:$0xf] %vm2482, %v2369
  %2499 = vst.msk [vmem:[%s4 + $0x40] sm:$0xf] %vm2482, %v2370
  %2500 = vst.msk [vmem:[%s4 + $0x44] sm:$0xf] %vm2482, %v2371
  %2501 = vst.msk [vmem:[%s4 + $0x48] sm:$0xf] %vm2482, %v2372
  %2502 = vst.msk [vmem:[%s4 + $0x4c] sm:$0xf] %vm2482, %v2373
  %2503 = vst.msk [vmem:[%s4 + $0x50] sm:$0xf] %vm2482, %v2374
  %2504 = vst.msk [vmem:[%s4 + $0x54] sm:$0xf] %vm2482, %v2375
  %2505 = vst.msk [vmem:[%s4 + $0x58] sm:$0xf] %vm2482, %v2376
  %2506 = vst.msk [vmem:[%s4 + $0x5c] sm:$0xf] %vm2482, %v2377
  %2507 = vst.msk [vmem:[%s4 + $0x60] sm:$0xf] %vm2482, %v2378
  %2508 = vst.msk [vmem:[%s4 + $0x64] sm:$0xf] %vm2482, %v2379
  %2509 = vst.msk [vmem:[%s4 + $0x68] sm:$0xf] %vm2482, %v2380
  %2510 = vst.msk [vmem:[%s4 + $0x6c] sm:$0xf] %vm2482, %v2381
  %2511 = vst.msk [vmem:[%s4 + $0x70] sm:$0xf] %vm2482, %v2382
  %2512 = vst.msk [vmem:[%s4 + $0x74] sm:$0xf] %vm2482, %v2383
  %2513 = vst.msk [vmem:[%s4 + $0x78] sm:$0xf] %vm2482, %v2384
  %2514 = vst.msk [vmem:[%s4 + $0x7c] sm:$0xf] %vm2482, %v2385
  %2515 = vst.msk [vmem:[%s4 + $0x80] sm:$0xf] %vm2482, %v2386
  %2516 = vst.msk [vmem:[%s4 + $0x84] sm:$0xf] %vm2482, %v2387
  %2517 = vst.msk [vmem:[%s4 + $0x88] sm:$0xf] %vm2482, %v2388
  %2518 = vst.msk [vmem:[%s4 + $0x8c] sm:$0xf] %vm2482, %v2389
  %2519 = vst.msk [vmem:[%s4 + $0x90] sm:$0xf] %vm2482, %v2390
  %2520 = vst.msk [vmem:[%s4 + $0x94] sm:$0xf] %vm2482, %v2391
  %2521 = vst.msk [vmem:[%s4 + $0x98] sm:$0xf] %vm2482, %v2392
  %2522 = vst.msk [vmem:[%s4 + $0x9c] sm:$0xf] %vm2482, %v2393
  %2523 = vst.msk [vmem:[%s4 + $0xa0] sm:$0xf] %vm2482, %v2394
  %2524 = vst.msk [vmem:[%s4 + $0xa4] sm:$0xf] %vm2482, %v2395
  %2525 = vst.msk [vmem:[%s4 + $0xa8] sm:$0xf] %vm2482, %v2396
  %2526 = vst.msk [vmem:[%s4 + $0xac] sm:$0xf] %vm2482, %v2397
  %2527 = vst.msk [vmem:[%s4 + $0xb0] sm:$0xf] %vm2482, %v2398
  %2528 = vst.msk [vmem:[%s4 + $0xb4] sm:$0xf] %vm2482, %v2399
  %2529 = vst.msk [vmem:[%s4 + $0xb8] sm:$0xf] %vm2482, %v2400
  %2530 = vst.msk [vmem:[%s4 + $0xbc] sm:$0xf] %vm2482, %v2401
  %2531 = vst.msk [vmem:[%s4 + $0xc0] sm:$0xf] %vm2482, %v2402
  %2532 = vst.msk [vmem:[%s4 + $0xc4] sm:$0xf] %vm2482, %v2403
  %2533 = vst.msk [vmem:[%s4 + $0xc8] sm:$0xf] %vm2482, %v2404
  %2534 = vst.msk [vmem:[%s4 + $0xcc] sm:$0xf] %vm2482, %v2405
  %2535 = vst.msk [vmem:[%s4 + $0xd0] sm:$0xf] %vm2482, %v2406
  %2536 = vst.msk [vmem:[%s4 + $0xd4] sm:$0xf] %vm2482, %v2407
  %2537 = vst.msk [vmem:[%s4 + $0xd8] sm:$0xf] %vm2482, %v2408
  %2538 = vst.msk [vmem:[%s4 + $0xdc] sm:$0xf] %vm2482, %v2409
  %2539 = vst.msk [vmem:[%s4 + $0xe0] sm:$0xf] %vm2482, %v2410
  %2540 = vst.msk [vmem:[%s4 + $0xe4] sm:$0xf] %vm2482, %v2411
  %2541 = vst.msk [vmem:[%s4 + $0xe8] sm:$0xf] %vm2482, %v2412
  %2542 = vst.msk [vmem:[%s4 + $0xec] sm:$0xf] %vm2482, %v2413
  %2543 = vst.msk [vmem:[%s4 + $0xf0] sm:$0xf] %vm2482, %v2414
  %2544 = vst.msk [vmem:[%s4 + $0xf4] sm:$0xf] %vm2482, %v2415
  %2545 = vst.msk [vmem:[%s4 + $0xf8] sm:$0xf] %vm2482, %v2416
  %2546 = vst.msk [vmem:[%s4 + $0xfc] sm:$0xf] %vm2482, %v2417
  // Predicated region
  $region18: #{encoder_a_forward.6} parent=0 // pred_check
    _
  $region19: #{encoder_a_forward.6} parent=0 // pred_check_branch
    %2548 = sbr.rel (0) target = $region21
  $region20: #{encoder_a_forward.6} parent=0 // pred_region
    _
  $region21: #{encoder_a_forward.6} parent=0 // pred_fallthru
    _
  // Predicated region
  $region22: #{encoder_a_forward.6} parent=0 // pred_check
    _
  $region23: #{encoder_a_forward.6} parent=0 // pred_check_branch
    %2550 = sbr.rel (0) target = $region25
  $region24: #{encoder_a_forward.6} parent=0 // pred_region
    _
  $region25: #{encoder_a_forward.6} parent=0 // pred_fallthru
    _

// kernel: encoder_a_forward.7
$region0: #{encoder_a_forward.7}
  #allocation0 [shape = 'u32[]', space=smem, size = 0x4, offset = 0x4, fixed_abs, tag = 'smem constant byte address 0x4 - core index']
  #allocation1 [shape = 'u32[144,128]{1,0:T(1,128)}', space=vmem, size = 0x12000, scoped, tag = 'internal scratch']
  %s0 = inlined_call_operand.vmem [shape: bf16[128,1024], index: 0, kind: input, shape index: {}]
  %s1 = inlined_call_operand.vmem [shape: bf16[1024,128], index: 1, kind: input, shape index: {}]
  %s2 = inlined_call_operand.vmem [shape: f32[1,128], index: 2, kind: input, shape index: {}]
  %s3 = inlined_call_operand.vmem [shape: f32[1,128], index: 3, kind: input, shape index: {}]
  %s4 = inlined_call_operand.vmem [shape: bf16[128,128], index: 4, kind: output, shape index: {}]
  %s5 = sld [smem:[#allocation0]]
  $region26: #{encoder_a_forward.7} parent=0
    _
  %s7 = ssub.s32 1, %s5
  %s8 = scalar_select 0, %s7, %s5
  // Predicated region
  $region2: #{encoder_a_forward.7} parent=0 // pred_check
    _
  $region3: #{encoder_a_forward.7} parent=0 // pred_check_branch
    %10 = sbr.rel (0) target = $region5
  $region4: #{encoder_a_forward.7} parent=0 // pred_region
    _
  $region5: #{encoder_a_forward.7} parent=0 // pred_fallthru
    _
  // Predicated region
  $region6: #{encoder_a_forward.7} parent=0 // pred_check
    _
  $region7: #{encoder_a_forward.7} parent=0 // pred_check_branch
    %12 = sbr.rel (0) target = $region9
  $region8: #{encoder_a_forward.7} parent=0 // pred_region
    _
  $region9: #{encoder_a_forward.7} parent=0 // pred_fallthru
    _
  // Predicated region
  $region10: #{encoder_a_forward.7} parent=0 // pred_check
    _
  $region11: #{encoder_a_forward.7} parent=0 // pred_check_branch
    %14 = sbr.rel (0) target = $region13
  $region12: #{encoder_a_forward.7} parent=0 // pred_region
    _
  $region13: #{encoder_a_forward.7} parent=0 // pred_fallthru
    _
  // Predicated region
  $region14: #{encoder_a_forward.7} parent=0 // pred_check
    _
  $region15: #{encoder_a_forward.7} parent=0 // pred_check_branch
    %16 = sbr.rel (0) target = $region17
  $region16: #{encoder_a_forward.7} parent=0 // pred_region
    _
  $region17: #{encoder_a_forward.7} parent=0 // pred_fallthru
    _
  %v18 = vld [vmem:[%s0] sm:$0xff]
  %v19 = vld [vmem:[%s0 + $0x8] sm:$0xff]
  %v20 = vld [vmem:[%s0 + $0x10] sm:$0xff]
  %v21 = vld [vmem:[%s0 + $0x18] sm:$0xff]
  %v22 = vld [vmem:[%s0 + $0x20] sm:$0xff]
  %v23 = vld [vmem:[%s0 + $0x28] sm:$0xff]
  %v24 = vld [vmem:[%s0 + $0x30] sm:$0xff]
  %v25 = vld [vmem:[%s0 + $0x38] sm:$0xff]
  %v26 = vld [vmem:[%s0 + $0x40] sm:$0xff]
  %v27 = vld [vmem:[%s0 + $0x48] sm:$0xff]
  %v28 = vld [vmem:[%s0 + $0x50] sm:$0xff]
  %v29 = vld [vmem:[%s0 + $0x58] sm:$0xff]
  %v30 = vld [vmem:[%s0 + $0x60] sm:$0xff]
  %v31 = vld [vmem:[%s0 + $0x68] sm:$0xff]
  %v32 = vld [vmem:[%s0 + $0x70] sm:$0xff]
  %v33 = vld [vmem:[%s0 + $0x78] sm:$0xff]
  %v34 = vld [vmem:[%s0 + $0x80] sm:$0xff]
  %v35 = vld [vmem:[%s0 + $0x88] sm:$0xff]
  %v36 = vld [vmem:[%s0 + $0x90] sm:$0xff]
  %v37 = vld [vmem:[%s0 + $0x98] sm:$0xff]
  %v38 = vld [vmem:[%s0 + $0xa0] sm:$0xff]
  %v39 = vld [vmem:[%s0 + $0xa8] sm:$0xff]
  %v40 = vld [vmem:[%s0 + $0xb0] sm:$0xff]
  %v41 = vld [vmem:[%s0 + $0xb8] sm:$0xff]
  %v42 = vld [vmem:[%s0 + $0xc0] sm:$0xff]
  %v43 = vld [vmem:[%s0 + $0xc8] sm:$0xff]
  %v44 = vld [vmem:[%s0 + $0xd0] sm:$0xff]
  %v45 = vld [vmem:[%s0 + $0xd8] sm:$0xff]
  %v46 = vld [vmem:[%s0 + $0xe0] sm:$0xff]
  %v47 = vld [vmem:[%s0 + $0xe8] sm:$0xff]
  %v48 = vld [vmem:[%s0 + $0xf0] sm:$0xff]
  %v49 = vld [vmem:[%s0 + $0xf8] sm:$0xff]
  %v50 = vld [vmem:[%s0 + $0x100] sm:$0xff]
  %v51 = vld [vmem:[%s0 + $0x108] sm:$0xff]
  %v52 = vld [vmem:[%s0 + $0x110] sm:$0xff]
  %v53 = vld [vmem:[%s0 + $0x118] sm:$0xff]
  %v54 = vld [vmem:[%s0 + $0x120] sm:$0xff]
  %v55 = vld [vmem:[%s0 + $0x128] sm:$0xff]
  %v56 = vld [vmem:[%s0 + $0x130] sm:$0xff]
  %v57 = vld [vmem:[%s0 + $0x138] sm:$0xff]
  %v58 = vld [vmem:[%s0 + $0x140] sm:$0xff]
  %v59 = vld [vmem:[%s0 + $0x148] sm:$0xff]
  %v60 = vld [vmem:[%s0 + $0x150] sm:$0xff]
  %v61 = vld [vmem:[%s0 + $0x158] sm:$0xff]
  %v62 = vld [vmem:[%s0 + $0x160] sm:$0xff]
  %v63 = vld [vmem:[%s0 + $0x168] sm:$0xff]
  %v64 = vld [vmem:[%s0 + $0x170] sm:$0xff]
  %v65 = vld [vmem:[%s0 + $0x178] sm:$0xff]
  %v66 = vld [vmem:[%s0 + $0x180] sm:$0xff]
  %v67 = vld [vmem:[%s0 + $0x188] sm:$0xff]
  %v68 = vld [vmem:[%s0 + $0x190] sm:$0xff]
  %v69 = vld [vmem:[%s0 + $0x198] sm:$0xff]
  %v70 = vld [vmem:[%s0 + $0x1a0] sm:$0xff]
  %v71 = vld [vmem:[%s0 + $0x1a8] sm:$0xff]
  %v72 = vld [vmem:[%s0 + $0x1b0] sm:$0xff]
  %v73 = vld [vmem:[%s0 + $0x1b8] sm:$0xff]
  %v74 = vld [vmem:[%s0 + $0x1c0] sm:$0xff]
  %v75 = vld [vmem:[%s0 + $0x1c8] sm:$0xff]
  %v76 = vld [vmem:[%s0 + $0x1d0] sm:$0xff]
  %v77 = vld [vmem:[%s0 + $0x1d8] sm:$0xff]
  %v78 = vld [vmem:[%s0 + $0x1e0] sm:$0xff]
  %v79 = vld [vmem:[%s0 + $0x1e8] sm:$0xff]
  %v80 = vld [vmem:[%s0 + $0x1f0] sm:$0xff]
  %v81 = vld [vmem:[%s0 + $0x1f8] sm:$0xff]
  %v82 = vld [vmem:[%s1] sm:$0xf]
  %v83 = vld [vmem:[%s1 + $0x4] sm:$0xf]
  %v84 = vld [vmem:[%s1 + $0x8] sm:$0xf]
  %v85 = vld [vmem:[%s1 + $0xc] sm:$0xf]
  %v86 = vld [vmem:[%s1 + $0x10] sm:$0xf]
  %v87 = vld [vmem:[%s1 + $0x14] sm:$0xf]
  %v88 = vld [vmem:[%s1 + $0x18] sm:$0xf]
  %v89 = vld [vmem:[%s1 + $0x1c] sm:$0xf]
  %v90 = vld [vmem:[%s1 + $0x20] sm:$0xf]
  %v91 = vld [vmem:[%s1 + $0x24] sm:$0xf]
  %v92 = vld [vmem:[%s1 + $0x28] sm:$0xf]
  %v93 = vld [vmem:[%s1 + $0x2c] sm:$0xf]
  %v94 = vld [vmem:[%s1 + $0x30] sm:$0xf]
  %v95 = vld [vmem:[%s1 + $0x34] sm:$0xf]
  %v96 = vld [vmem:[%s1 + $0x38] sm:$0xf]
  %v97 = vld [vmem:[%s1 + $0x3c] sm:$0xf]
  %v98 = vld [vmem:[%s1 + $0x40] sm:$0xf]
  %v99 = vld [vmem:[%s1 + $0x44] sm:$0xf]
  %v100 = vld [vmem:[%s1 + $0x48] sm:$0xf]
  %v101 = vld [vmem:[%s1 + $0x4c] sm:$0xf]
  %v102 = vld [vmem:[%s1 + $0x50] sm:$0xf]
  %v103 = vld [vmem:[%s1 + $0x54] sm:$0xf]
  %v104 = vld [vmem:[%s1 + $0x58] sm:$0xf]
  %v105 = vld [vmem:[%s1 + $0x5c] sm:$0xf]
  %v106 = vld [vmem:[%s1 + $0x60] sm:$0xf]
  %v107 = vld [vmem:[%s1 + $0x64] sm:$0xf]
  %v108 = vld [vmem:[%s1 + $0x68] sm:$0xf]
  %v109 = vld [vmem:[%s1 + $0x6c] sm:$0xf]
  %v110 = vld [vmem:[%s1 + $0x70] sm:$0xf]
  %v111 = vld [vmem:[%s1 + $0x74] sm:$0xf]
  %v112 = vld [vmem:[%s1 + $0x78] sm:$0xf]
  %v113 = vld [vmem:[%s1 + $0x7c] sm:$0xf]
  %v114 = vld [vmem:[%s1 + $0x80] sm:$0xf]
  %v115 = vld [vmem:[%s1 + $0x84] sm:$0xf]
  %v116 = vld [vmem:[%s1 + $0x88] sm:$0xf]
  %v117 = vld [vmem:[%s1 + $0x8c] sm:$0xf]
  %v118 = vld [vmem:[%s1 + $0x90] sm:$0xf]
  %v119 = vld [vmem:[%s1 + $0x94] sm:$0xf]
  %v120 = vld [vmem:[%s1 + $0x98] sm:$0xf]
  %v121 = vld [vmem:[%s1 + $0x9c] sm:$0xf]
  %v122 = vld [vmem:[%s1 + $0xa0] sm:$0xf]
  %v123 = vld [vmem:[%s1 + $0xa4] sm:$0xf]
  %v124 = vld [vmem:[%s1 + $0xa8] sm:$0xf]
  %v125 = vld [vmem:[%s1 + $0xac] sm:$0xf]
  %v126 = vld [vmem:[%s1 + $0xb0] sm:$0xf]
  %v127 = vld [vmem:[%s1 + $0xb4] sm:$0xf]
  %v128 = vld [vmem:[%s1 + $0xb8] sm:$0xf]
  %v129 = vld [vmem:[%s1 + $0xbc] sm:$0xf]
  %v130 = vld [vmem:[%s1 + $0xc0] sm:$0xf]
  %v131 = vld [vmem:[%s1 + $0xc4] sm:$0xf]
  %v132 = vld [vmem:[%s1 + $0xc8] sm:$0xf]
  %v133 = vld [vmem:[%s1 + $0xcc] sm:$0xf]
  %v134 = vld [vmem:[%s1 + $0xd0] sm:$0xf]
  %v135 = vld [vmem:[%s1 + $0xd4] sm:$0xf]
  %v136 = vld [vmem:[%s1 + $0xd8] sm:$0xf]
  %v137 = vld [vmem:[%s1 + $0xdc] sm:$0xf]
  %v138 = vld [vmem:[%s1 + $0xe0] sm:$0xf]
  %v139 = vld [vmem:[%s1 + $0xe4] sm:$0xf]
  %v140 = vld [vmem:[%s1 + $0xe8] sm:$0xf]
  %v141 = vld [vmem:[%s1 + $0xec] sm:$0xf]
  %v142 = vld [vmem:[%s1 + $0xf0] sm:$0xf]
  %v143 = vld [vmem:[%s1 + $0xf4] sm:$0xf]
  %v144 = vld [vmem:[%s1 + $0xf8] sm:$0xf]
  %v145 = vld [vmem:[%s1 + $0xfc] sm:$0xf]
  %v146 = vld [vmem:[%s1 + $0x100] sm:$0xf]
  %v147 = vld [vmem:[%s1 + $0x104] sm:$0xf]
  %v148 = vld [vmem:[%s1 + $0x108] sm:$0xf]
  %v149 = vld [vmem:[%s1 + $0x10c] sm:$0xf]
  %v150 = vld [vmem:[%s1 + $0x110] sm:$0xf]
  %v151 = vld [vmem:[%s1 + $0x114] sm:$0xf]
  %v152 = vld [vmem:[%s1 + $0x118] sm:$0xf]
  %v153 = vld [vmem:[%s1 + $0x11c] sm:$0xf]
  %v154 = vld [vmem:[%s1 + $0x120] sm:$0xf]
  %v155 = vld [vmem:[%s1 + $0x124] sm:$0xf]
  %v156 = vld [vmem:[%s1 + $0x128] sm:$0xf]
  %v157 = vld [vmem:[%s1 + $0x12c] sm:$0xf]
  %v158 = vld [vmem:[%s1 + $0x130] sm:$0xf]
  %v159 = vld [vmem:[%s1 + $0x134] sm:$0xf]
  %v160 = vld [vmem:[%s1 + $0x138] sm:$0xf]
  %v161 = vld [vmem:[%s1 + $0x13c] sm:$0xf]
  %v162 = vld [vmem:[%s1 + $0x140] sm:$0xf]
  %v163 = vld [vmem:[%s1 + $0x144] sm:$0xf]
  %v164 = vld [vmem:[%s1 + $0x148] sm:$0xf]
  %v165 = vld [vmem:[%s1 + $0x14c] sm:$0xf]
  %v166 = vld [vmem:[%s1 + $0x150] sm:$0xf]
  %v167 = vld [vmem:[%s1 + $0x154] sm:$0xf]
  %v168 = vld [vmem:[%s1 + $0x158] sm:$0xf]
  %v169 = vld [vmem:[%s1 + $0x15c] sm:$0xf]
  %v170 = vld [vmem:[%s1 + $0x160] sm:$0xf]
  %v171 = vld [vmem:[%s1 + $0x164] sm:$0xf]
  %v172 = vld [vmem:[%s1 + $0x168] sm:$0xf]
  %v173 = vld [vmem:[%s1 + $0x16c] sm:$0xf]
  %v174 = vld [vmem:[%s1 + $0x170] sm:$0xf]
  %v175 = vld [vmem:[%s1 + $0x174] sm:$0xf]
  %v176 = vld [vmem:[%s1 + $0x178] sm:$0xf]
  %v177 = vld [vmem:[%s1 + $0x17c] sm:$0xf]
  %v178 = vld [vmem:[%s1 + $0x180] sm:$0xf]
  %v179 = vld [vmem:[%s1 + $0x184] sm:$0xf]
  %v180 = vld [vmem:[%s1 + $0x188] sm:$0xf]
  %v181 = vld [vmem:[%s1 + $0x18c] sm:$0xf]
  %v182 = vld [vmem:[%s1 + $0x190] sm:$0xf]
  %v183 = vld [vmem:[%s1 + $0x194] sm:$0xf]
  %v184 = vld [vmem:[%s1 + $0x198] sm:$0xf]
  %v185 = vld [vmem:[%s1 + $0x19c] sm:$0xf]
  %v186 = vld [vmem:[%s1 + $0x1a0] sm:$0xf]
  %v187 = vld [vmem:[%s1 + $0x1a4] sm:$0xf]
  %v188 = vld [vmem:[%s1 + $0x1a8] sm:$0xf]
  %v189 = vld [vmem:[%s1 + $0x1ac] sm:$0xf]
  %v190 = vld [vmem:[%s1 + $0x1b0] sm:$0xf]
  %v191 = vld [vmem:[%s1 + $0x1b4] sm:$0xf]
  %v192 = vld [vmem:[%s1 + $0x1b8] sm:$0xf]
  %v193 = vld [vmem:[%s1 + $0x1bc] sm:$0xf]
  %v194 = vld [vmem:[%s1 + $0x1c0] sm:$0xf]
  %v195 = vld [vmem:[%s1 + $0x1c4] sm:$0xf]
  %v196 = vld [vmem:[%s1 + $0x1c8] sm:$0xf]
  %v197 = vld [vmem:[%s1 + $0x1cc] sm:$0xf]
  %v198 = vld [vmem:[%s1 + $0x1d0] sm:$0xf]
  %v199 = vld [vmem:[%s1 + $0x1d4] sm:$0xf]
  %v200 = vld [vmem:[%s1 + $0x1d8] sm:$0xf]
  %v201 = vld [vmem:[%s1 + $0x1dc] sm:$0xf]
  %v202 = vld [vmem:[%s1 + $0x1e0] sm:$0xf]
  %v203 = vld [vmem:[%s1 + $0x1e4] sm:$0xf]
  %v204 = vld [vmem:[%s1 + $0x1e8] sm:$0xf]
  %v205 = vld [vmem:[%s1 + $0x1ec] sm:$0xf]
  %v206 = vld [vmem:[%s1 + $0x1f0] sm:$0xf]
  %v207 = vld [vmem:[%s1 + $0x1f4] sm:$0xf]
  %v208 = vld [vmem:[%s1 + $0x1f8] sm:$0xf]
  %v209 = vld [vmem:[%s1 + $0x1fc] sm:$0xf]
  %v274 = vunpack.c.l.b16 %v18
  %v275 = vunpack.c.h.b16 %v18
  %v276 = vunpack.c.l.b16 %v19
  %v277 = vunpack.c.h.b16 %v19
  %v278 = vunpack.c.l.b16 %v20
  %v279 = vunpack.c.h.b16 %v20
  %v280 = vunpack.c.l.b16 %v21
  %v281 = vunpack.c.h.b16 %v21
  %v282 = vunpack.c.l.b16 %v22
  %v283 = vunpack.c.h.b16 %v22
  %v284 = vunpack.c.l.b16 %v23
  %v285 = vunpack.c.h.b16 %v23
  %v286 = vunpack.c.l.b16 %v24
  %v287 = vunpack.c.h.b16 %v24
  %v288 = vunpack.c.l.b16 %v25
  %v289 = vunpack.c.h.b16 %v25
  %v290 = vunpack.c.l.b16 %v26
  %v291 = vunpack.c.h.b16 %v26
  %v292 = vunpack.c.l.b16 %v27
  %v293 = vunpack.c.h.b16 %v27
  %v294 = vunpack.c.l.b16 %v28
  %v295 = vunpack.c.h.b16 %v28
  %v296 = vunpack.c.l.b16 %v29
  %v297 = vunpack.c.h.b16 %v29
  %v298 = vunpack.c.l.b16 %v30
  %v299 = vunpack.c.h.b16 %v30
  %v300 = vunpack.c.l.b16 %v31
  %v301 = vunpack.c.h.b16 %v31
  %v302 = vunpack.c.l.b16 %v32
  %v303 = vunpack.c.h.b16 %v32
  %v304 = vunpack.c.l.b16 %v33
  %v305 = vunpack.c.h.b16 %v33
  %v306 = vunpack.c.l.b16 %v34
  %v307 = vunpack.c.h.b16 %v34
  %v308 = vunpack.c.l.b16 %v35
  %v309 = vunpack.c.h.b16 %v35
  %v310 = vunpack.c.l.b16 %v36
  %v311 = vunpack.c.h.b16 %v36
  %v312 = vunpack.c.l.b16 %v37
  %v313 = vunpack.c.h.b16 %v37
  %v314 = vunpack.c.l.b16 %v38
  %v315 = vunpack.c.h.b16 %v38
  %v316 = vunpack.c.l.b16 %v39
  %v317 = vunpack.c.h.b16 %v39
  %v318 = vunpack.c.l.b16 %v40
  %v319 = vunpack.c.h.b16 %v40
  %v320 = vunpack.c.l.b16 %v41
  %v321 = vunpack.c.h.b16 %v41
  %v322 = vunpack.c.l.b16 %v42
  %v323 = vunpack.c.h.b16 %v42
  %v324 = vunpack.c.l.b16 %v43
  %v325 = vunpack.c.h.b16 %v43
  %v326 = vunpack.c.l.b16 %v44
  %v327 = vunpack.c.h.b16 %v44
  %v328 = vunpack.c.l.b16 %v45
  %v329 = vunpack.c.h.b16 %v45
  %v330 = vunpack.c.l.b16 %v46
  %v331 = vunpack.c.h.b16 %v46
  %v332 = vunpack.c.l.b16 %v47
  %v333 = vunpack.c.h.b16 %v47
  %v334 = vunpack.c.l.b16 %v48
  %v335 = vunpack.c.h.b16 %v48
  %v336 = vunpack.c.l.b16 %v49
  %v337 = vunpack.c.h.b16 %v49
  %v338 = vunpack.c.l.b16 %v50
  %v339 = vunpack.c.h.b16 %v50
  %v340 = vunpack.c.l.b16 %v51
  %v341 = vunpack.c.h.b16 %v51
  %v342 = vunpack.c.l.b16 %v52
  %v343 = vunpack.c.h.b16 %v52
  %v344 = vunpack.c.l.b16 %v53
  %v345 = vunpack.c.h.b16 %v53
  %v346 = vunpack.c.l.b16 %v54
  %v347 = vunpack.c.h.b16 %v54
  %v348 = vunpack.c.l.b16 %v55
  %v349 = vunpack.c.h.b16 %v55
  %v350 = vunpack.c.l.b16 %v56
  %v351 = vunpack.c.h.b16 %v56
  %v352 = vunpack.c.l.b16 %v57
  %v353 = vunpack.c.h.b16 %v57
  %v354 = vunpack.c.l.b16 %v58
  %v355 = vunpack.c.h.b16 %v58
  %v356 = vunpack.c.l.b16 %v59
  %v357 = vunpack.c.h.b16 %v59
  %v358 = vunpack.c.l.b16 %v60
  %v359 = vunpack.c.h.b16 %v60
  %v360 = vunpack.c.l.b16 %v61
  %v361 = vunpack.c.h.b16 %v61
  %v362 = vunpack.c.l.b16 %v62
  %v363 = vunpack.c.h.b16 %v62
  %v364 = vunpack.c.l.b16 %v63
  %v365 = vunpack.c.h.b16 %v63
  %v366 = vunpack.c.l.b16 %v64
  %v367 = vunpack.c.h.b16 %v64
  %v368 = vunpack.c.l.b16 %v65
  %v369 = vunpack.c.h.b16 %v65
  %v370 = vunpack.c.l.b16 %v66
  %v371 = vunpack.c.h.b16 %v66
  %v372 = vunpack.c.l.b16 %v67
  %v373 = vunpack.c.h.b16 %v67
  %v374 = vunpack.c.l.b16 %v68
  %v375 = vunpack.c.h.b16 %v68
  %v376 = vunpack.c.l.b16 %v69
  %v377 = vunpack.c.h.b16 %v69
  %v378 = vunpack.c.l.b16 %v70
  %v379 = vunpack.c.h.b16 %v70
  %v380 = vunpack.c.l.b16 %v71
  %v381 = vunpack.c.h.b16 %v71
  %v382 = vunpack.c.l.b16 %v72
  %v383 = vunpack.c.h.b16 %v72
  %v384 = vunpack.c.l.b16 %v73
  %v385 = vunpack.c.h.b16 %v73
  %v386 = vunpack.c.l.b16 %v74
  %v387 = vunpack.c.h.b16 %v74
  %v388 = vunpack.c.l.b16 %v75
  %v389 = vunpack.c.h.b16 %v75
  %v390 = vunpack.c.l.b16 %v76
  %v391 = vunpack.c.h.b16 %v76
  %v392 = vunpack.c.l.b16 %v77
  %v393 = vunpack.c.h.b16 %v77
  %v394 = vunpack.c.l.b16 %v78
  %v395 = vunpack.c.h.b16 %v78
  %v396 = vunpack.c.l.b16 %v79
  %v397 = vunpack.c.h.b16 %v79
  %v398 = vunpack.c.l.b16 %v80
  %v399 = vunpack.c.h.b16 %v80
  %v400 = vunpack.c.l.b16 %v81
  %v401 = vunpack.c.h.b16 %v81
  %v402 = vpack.c.b16 %v282, %v274
  %v403 = vpack.c.b16 %v283, %v275
  %v404 = vpack.c.b16 %v284, %v276
  %v405 = vpack.c.b16 %v285, %v277
  %v406 = vpack.c.b16 %v286, %v278
  %v407 = vpack.c.b16 %v287, %v279
  %v408 = vpack.c.b16 %v288, %v280
  %v409 = vpack.c.b16 %v289, %v281
  %v410 = vpack.c.b16 %v298, %v290
  %v411 = vpack.c.b16 %v299, %v291
  %v412 = vpack.c.b16 %v300, %v292
  %v413 = vpack.c.b16 %v301, %v293
  %v414 = vpack.c.b16 %v302, %v294
  %v415 = vpack.c.b16 %v303, %v295
  %v416 = vpack.c.b16 %v304, %v296
  %v417 = vpack.c.b16 %v305, %v297
  %v418 = vpack.c.b16 %v314, %v306
  %v419 = vpack.c.b16 %v315, %v307
  %v420 = vpack.c.b16 %v316, %v308
  %v421 = vpack.c.b16 %v317, %v309
  %v422 = vpack.c.b16 %v318, %v310
  %v423 = vpack.c.b16 %v319, %v311
  %v424 = vpack.c.b16 %v320, %v312
  %v425 = vpack.c.b16 %v321, %v313
  %v426 = vpack.c.b16 %v330, %v322
  %v427 = vpack.c.b16 %v331, %v323
  %v428 = vpack.c.b16 %v332, %v324
  %v429 = vpack.c.b16 %v333, %v325
  %v430 = vpack.c.b16 %v334, %v326
  %v431 = vpack.c.b16 %v335, %v327
  %v432 = vpack.c.b16 %v336, %v328
  %v433 = vpack.c.b16 %v337, %v329
  %v434 = vpack.c.b16 %v346, %v338
  %v435 = vpack.c.b16 %v347, %v339
  %v436 = vpack.c.b16 %v348, %v340
  %v437 = vpack.c.b16 %v349, %v341
  %v438 = vpack.c.b16 %v350, %v342
  %v439 = vpack.c.b16 %v351, %v343
  %v440 = vpack.c.b16 %v352, %v344
  %v441 = vpack.c.b16 %v353, %v345
  %v442 = vpack.c.b16 %v362, %v354
  %v443 = vpack.c.b16 %v363, %v355
  %v444 = vpack.c.b16 %v364, %v356
  %v445 = vpack.c.b16 %v365, %v357
  %v446 = vpack.c.b16 %v366, %v358
  %v447 = vpack.c.b16 %v367, %v359
  %v448 = vpack.c.b16 %v368, %v360
  %v449 = vpack.c.b16 %v369, %v361
  %v450 = vpack.c.b16 %v378, %v370
  %v451 = vpack.c.b16 %v379, %v371
  %v452 = vpack.c.b16 %v380, %v372
  %v453 = vpack.c.b16 %v381, %v373
  %v454 = vpack.c.b16 %v382, %v374
  %v455 = vpack.c.b16 %v383, %v375
  %v456 = vpack.c.b16 %v384, %v376
  %v457 = vpack.c.b16 %v385, %v377
  %v458 = vpack.c.b16 %v394, %v386
  %v459 = vpack.c.b16 %v395, %v387
  %v460 = vpack.c.b16 %v396, %v388
  %v461 = vpack.c.b16 %v397, %v389
  %v462 = vpack.c.b16 %v398, %v390
  %v463 = vpack.c.b16 %v399, %v391
  %v464 = vpack.c.b16 %v400, %v392
  %v465 = vpack.c.b16 %v401, %v393
  %v658 = vunpack.c.l.b16 %v82
  %v659 = vunpack.c.l.b16 %v83
  %v660 = vunpack.c.l.b16 %v84
  %v661 = vunpack.c.l.b16 %v85
  %v662 = vunpack.c.l.b16 %v86
  %v663 = vunpack.c.l.b16 %v87
  %v664 = vunpack.c.l.b16 %v88
  %v665 = vunpack.c.l.b16 %v89
  %v666 = vunpack.c.l.b16 %v90
  %v667 = vunpack.c.l.b16 %v91
  %v668 = vunpack.c.l.b16 %v92
  %v669 = vunpack.c.l.b16 %v93
  %v670 = vunpack.c.l.b16 %v94
  %v671 = vunpack.c.l.b16 %v95
  %v672 = vunpack.c.l.b16 %v96
  %v673 = vunpack.c.l.b16 %v97
  %v674 = vunpack.c.l.b16 %v98
  %v675 = vunpack.c.l.b16 %v99
  %v676 = vunpack.c.l.b16 %v100
  %v677 = vunpack.c.l.b16 %v101
  %v678 = vunpack.c.l.b16 %v102
  %v679 = vunpack.c.l.b16 %v103
  %v680 = vunpack.c.l.b16 %v104
  %v681 = vunpack.c.l.b16 %v105
  %v682 = vunpack.c.l.b16 %v106
  %v683 = vunpack.c.l.b16 %v107
  %v684 = vunpack.c.l.b16 %v108
  %v685 = vunpack.c.l.b16 %v109
  %v686 = vunpack.c.l.b16 %v110
  %v687 = vunpack.c.l.b16 %v111
  %v688 = vunpack.c.l.b16 %v112
  %v689 = vunpack.c.l.b16 %v113
  %v690 = vunpack.c.l.b16 %v114
  %v691 = vunpack.c.l.b16 %v115
  %v692 = vunpack.c.l.b16 %v116
  %v693 = vunpack.c.l.b16 %v117
  %v694 = vunpack.c.l.b16 %v118
  %v695 = vunpack.c.l.b16 %v119
  %v696 = vunpack.c.l.b16 %v120
  %v697 = vunpack.c.l.b16 %v121
  %v698 = vunpack.c.l.b16 %v122
  %v699 = vunpack.c.l.b16 %v123
  %v700 = vunpack.c.l.b16 %v124
  %v701 = vunpack.c.l.b16 %v125
  %v702 = vunpack.c.l.b16 %v126
  %v703 = vunpack.c.l.b16 %v127
  %v704 = vunpack.c.l.b16 %v128
  %v705 = vunpack.c.l.b16 %v129
  %v706 = vunpack.c.l.b16 %v130
  %v707 = vunpack.c.l.b16 %v131
  %v708 = vunpack.c.l.b16 %v132
  %v709 = vunpack.c.l.b16 %v133
  %v710 = vunpack.c.l.b16 %v134
  %v711 = vunpack.c.l.b16 %v135
  %v712 = vunpack.c.l.b16 %v136
  %v713 = vunpack.c.l.b16 %v137
  %v714 = vunpack.c.l.b16 %v138
  %v715 = vunpack.c.l.b16 %v139
  %v716 = vunpack.c.l.b16 %v140
  %v717 = vunpack.c.l.b16 %v141
  %v718 = vunpack.c.l.b16 %v142
  %v719 = vunpack.c.l.b16 %v143
  %v720 = vunpack.c.l.b16 %v144
  %v721 = vunpack.c.l.b16 %v145
  %v722 = vunpack.c.l.b16 %v146
  %v723 = vunpack.c.l.b16 %v147
  %v724 = vunpack.c.l.b16 %v148
  %v725 = vunpack.c.l.b16 %v149
  %v726 = vunpack.c.l.b16 %v150
  %v727 = vunpack.c.l.b16 %v151
  %v728 = vunpack.c.l.b16 %v152
  %v729 = vunpack.c.l.b16 %v153
  %v730 = vunpack.c.l.b16 %v154
  %v731 = vunpack.c.l.b16 %v155
  %v732 = vunpack.c.l.b16 %v156
  %v733 = vunpack.c.l.b16 %v157
  %v734 = vunpack.c.l.b16 %v158
  %v735 = vunpack.c.l.b16 %v159
  %v736 = vunpack.c.l.b16 %v160
  %v737 = vunpack.c.l.b16 %v161
  %v738 = vunpack.c.l.b16 %v162
  %v739 = vunpack.c.l.b16 %v163
  %v740 = vunpack.c.l.b16 %v164
  %v741 = vunpack.c.l.b16 %v165
  %v742 = vunpack.c.l.b16 %v166
  %v743 = vunpack.c.l.b16 %v167
  %v744 = vunpack.c.l.b16 %v168
  %v745 = vunpack.c.l.b16 %v169
  %v746 = vunpack.c.l.b16 %v170
  %v747 = vunpack.c.l.b16 %v171
  %v748 = vunpack.c.l.b16 %v172
  %v749 = vunpack.c.l.b16 %v173
  %v750 = vunpack.c.l.b16 %v174
  %v751 = vunpack.c.l.b16 %v175
  %v752 = vunpack.c.l.b16 %v176
  %v753 = vunpack.c.l.b16 %v177
  %v754 = vunpack.c.l.b16 %v178
  %v755 = vunpack.c.l.b16 %v179
  %v756 = vunpack.c.l.b16 %v180
  %v757 = vunpack.c.l.b16 %v181
  %v758 = vunpack.c.l.b16 %v182
  %v759 = vunpack.c.l.b16 %v183
  %v760 = vunpack.c.l.b16 %v184
  %v761 = vunpack.c.l.b16 %v185
  %v762 = vunpack.c.l.b16 %v186
  %v763 = vunpack.c.l.b16 %v187
  %v764 = vunpack.c.l.b16 %v188
  %v765 = vunpack.c.l.b16 %v189
  %v766 = vunpack.c.l.b16 %v190
  %v767 = vunpack.c.l.b16 %v191
  %v768 = vunpack.c.l.b16 %v192
  %v769 = vunpack.c.l.b16 %v193
  %v770 = vunpack.c.l.b16 %v194
  %v771 = vunpack.c.l.b16 %v195
  %v772 = vunpack.c.l.b16 %v196
  %v773 = vunpack.c.l.b16 %v197
  %v774 = vunpack.c.l.b16 %v198
  %v775 = vunpack.c.l.b16 %v199
  %v776 = vunpack.c.l.b16 %v200
  %v777 = vunpack.c.l.b16 %v201
  %v778 = vunpack.c.l.b16 %v202
  %v779 = vunpack.c.l.b16 %v203
  %v780 = vunpack.c.l.b16 %v204
  %v781 = vunpack.c.l.b16 %v205
  %v782 = vunpack.c.l.b16 %v206
  %v783 = vunpack.c.l.b16 %v207
  %v784 = vunpack.c.l.b16 %v208
  %v785 = vunpack.c.l.b16 %v209
  %v786 = vpack.c.b16 %v659, %v658
  %v787 = vpack.c.b16 %v661, %v660
  %v788 = vpack.c.b16 %v663, %v662
  %v789 = vpack.c.b16 %v665, %v664
  %v790 = vpack.c.b16 %v667, %v666
  %v791 = vpack.c.b16 %v669, %v668
  %v792 = vpack.c.b16 %v671, %v670
  %v793 = vpack.c.b16 %v673, %v672
  %v794 = vpack.c.b16 %v675, %v674
  %v795 = vpack.c.b16 %v677, %v676
  %v796 = vpack.c.b16 %v679, %v678
  %v797 = vpack.c.b16 %v681, %v680
  %v798 = vpack.c.b16 %v683, %v682
  %v799 = vpack.c.b16 %v685, %v684
  %v800 = vpack.c.b16 %v687, %v686
  %v801 = vpack.c.b16 %v689, %v688
  %v802 = vpack.c.b16 %v691, %v690
  %v803 = vpack.c.b16 %v693, %v692
  %v804 = vpack.c.b16 %v695, %v694
  %v805 = vpack.c.b16 %v697, %v696
  %v806 = vpack.c.b16 %v699, %v698
  %v807 = vpack.c.b16 %v701, %v700
  %v808 = vpack.c.b16 %v703, %v702
  %v809 = vpack.c.b16 %v705, %v704
  %v810 = vpack.c.b16 %v707, %v706
  %v811 = vpack.c.b16 %v709, %v708
  %v812 = vpack.c.b16 %v711, %v710
  %v813 = vpack.c.b16 %v713, %v712
  %v814 = vpack.c.b16 %v715, %v714
  %v815 = vpack.c.b16 %v717, %v716
  %v816 = vpack.c.b16 %v719, %v718
  %v817 = vpack.c.b16 %v721, %v720
  %v818 = vpack.c.b16 %v723, %v722
  %v819 = vpack.c.b16 %v725, %v724
  %v820 = vpack.c.b16 %v727, %v726
  %v821 = vpack.c.b16 %v729, %v728
  %v822 = vpack.c.b16 %v731, %v730
  %v823 = vpack.c.b16 %v733, %v732
  %v824 = vpack.c.b16 %v735, %v734
  %v825 = vpack.c.b16 %v737, %v736
  %v826 = vpack.c.b16 %v739, %v738
  %v827 = vpack.c.b16 %v741, %v740
  %v828 = vpack.c.b16 %v743, %v742
  %v829 = vpack.c.b16 %v745, %v744
  %v830 = vpack.c.b16 %v747, %v746
  %v831 = vpack.c.b16 %v749, %v748
  %v832 = vpack.c.b16 %v751, %v750
  %v833 = vpack.c.b16 %v753, %v752
  %v834 = vpack.c.b16 %v755, %v754
  %v835 = vpack.c.b16 %v757, %v756
  %v836 = vpack.c.b16 %v759, %v758
  %v837 = vpack.c.b16 %v761, %v760
  %v838 = vpack.c.b16 %v763, %v762
  %v839 = vpack.c.b16 %v765, %v764
  %v840 = vpack.c.b16 %v767, %v766
  %v841 = vpack.c.b16 %v769, %v768
  %v842 = vpack.c.b16 %v771, %v770
  %v843 = vpack.c.b16 %v773, %v772
  %v844 = vpack.c.b16 %v775, %v774
  %v845 = vpack.c.b16 %v777, %v776
  %v846 = vpack.c.b16 %v779, %v778
  %v847 = vpack.c.b16 %v781, %v780
  %v848 = vpack.c.b16 %v783, %v782
  %v849 = vpack.c.b16 %v785, %v784
  %914 = vmatprep.subr.bf16.mxu0 0
  %915 = vmatpush1.bf16.msra.mxu0 %v793
  %916 = vmatprep.subr.bf16.mxu0 0
  %917 = vmatpush1.bf16.msra.mxu0 %v792
  %918 = vmatprep.subr.bf16.mxu0 0
  %919 = vmatpush1.bf16.msra.mxu0 %v791
  %920 = vmatprep.subr.bf16.mxu0 0
  %921 = vmatpush1.bf16.msra.mxu0 %v790
  %922 = vmatprep.subr.bf16.mxu0 0
  %923 = vmatpush1.bf16.msra.mxu0 %v789
  %924 = vmatprep.subr.bf16.mxu0 0
  %925 = vmatpush1.bf16.msra.mxu0 %v788
  %926 = vmatprep.subr.bf16.mxu0 0
  %927 = vmatpush1.bf16.msra.mxu0 %v787
  %928 = vmatprep.subr.bf16.mxu0 0
  %929 = vmatpush1.bf16.msra.mxu0 %v786
  %930 = vmatprep.subr.bf16.mxu0 0
  %931 = vmatpush2.bf16.msra.mxu0 %v801
  %932 = vmatprep.subr.bf16.mxu0 0
  %933 = vmatpush2.bf16.msra.mxu0 %v800
  %934 = vmatprep.subr.bf16.mxu0 0
  %935 = vmatpush2.bf16.msra.mxu0 %v799
  %936 = vmatprep.subr.bf16.mxu0 0
  %937 = vmatpush2.bf16.msra.mxu0 %v798
  %938 = vmatprep.subr.bf16.mxu0 0
  %939 = vmatpush2.bf16.msra.mxu0 %v797
  %940 = vmatprep.subr.bf16.mxu0 0
  %941 = vmatpush2.bf16.msra.mxu0 %v796
  %942 = vmatprep.subr.bf16.mxu0 0
  %943 = vmatpush2.bf16.msra.mxu0 %v795
  %944 = vmatprep.subr.bf16.mxu0 0
  %945 = vmatpush2.bf16.msra.mxu0 %v794
  %946 = vmatprep.mubr.bf16.mxu0 %v403
  %947 = vmatmul.mubr.bf16.gmra.mxu0 %v402
  %v948 = vpop.f32.mrf.mxu0
  %v949 = vadd.f32 0.0, %v948
  %v950 = vpop.f32.mrf.mxu0
  %v951 = vpop.f32.mrf.mxu0
  %v952 = vadd.f32 0.0, %v951
  %v953 = vpop.f32.mrf.mxu0
  %954 = vmatprep.mubr.bf16.mxu0 %v411
  %955 = vmatmul.mubr.bf16.gmra.mxu0 %v410
  %v956 = vpop.f32.mrf.mxu0
  %v957 = vadd.f32 0.0, %v956
  %v958 = vpop.f32.mrf.mxu0
  %v959 = vpop.f32.mrf.mxu0
  %v960 = vadd.f32 0.0, %v959
  %v961 = vpop.f32.mrf.mxu0
  %962 = vmatprep.mubr.bf16.mxu0 %v419
  %963 = vmatmul.mubr.bf16.gmra.mxu0 %v418
  %v964 = vpop.f32.mrf.mxu0
  %v965 = vadd.f32 0.0, %v964
  %v966 = vpop.f32.mrf.mxu0
  %v967 = vpop.f32.mrf.mxu0
  %v968 = vadd.f32 0.0, %v967
  %v969 = vpop.f32.mrf.mxu0
  %970 = vmatprep.mubr.bf16.mxu0 %v427
  %971 = vmatmul.mubr.bf16.gmra.mxu0 %v426
  %v972 = vpop.f32.mrf.mxu0
  %v973 = vadd.f32 0.0, %v972
  %v974 = vpop.f32.mrf.mxu0
  %v975 = vpop.f32.mrf.mxu0
  %v976 = vadd.f32 0.0, %v975
  %v977 = vpop.f32.mrf.mxu0
  %978 = vmatprep.mubr.bf16.mxu0 %v435
  %979 = vmatmul.mubr.bf16.gmra.mxu0 %v434
  %v980 = vpop.f32.mrf.mxu0
  %v981 = vadd.f32 0.0, %v980
  %v982 = vpop.f32.mrf.mxu0
  %v983 = vpop.f32.mrf.mxu0
  %v984 = vadd.f32 0.0, %v983
  %v985 = vpop.f32.mrf.mxu0
  %986 = vmatprep.mubr.bf16.mxu0 %v443
  %987 = vmatmul.mubr.bf16.gmra.mxu0 %v442
  %v988 = vpop.f32.mrf.mxu0
  %v989 = vadd.f32 0.0, %v988
  %v990 = vpop.f32.mrf.mxu0
  %v991 = vpop.f32.mrf.mxu0
  %v992 = vadd.f32 0.0, %v991
  %v993 = vpop.f32.mrf.mxu0
  %994 = vmatprep.mubr.bf16.mxu0 %v451
  %995 = vmatmul.mubr.bf16.gmra.mxu0 %v450
  %v996 = vpop.f32.mrf.mxu0
  %v997 = vadd.f32 0.0, %v996
  %v998 = vpop.f32.mrf.mxu0
  %v999 = vpop.f32.mrf.mxu0
  %v1000 = vadd.f32 0.0, %v999
  %v1001 = vpop.f32.mrf.mxu0
  %1002 = vmatprep.mubr.bf16.mxu0 %v459
  %1003 = vmatmul.mubr.bf16.gmra.mxu0 %v458
  %v1004 = vpop.f32.mrf.mxu0
  %v1005 = vadd.f32 0.0, %v1004
  %v1006 = vpop.f32.mrf.mxu0
  %v1007 = vpop.f32.mrf.mxu0
  %v1008 = vadd.f32 0.0, %v1007
  %v1009 = vpop.f32.mrf.mxu0
  %1010 = vdwg.mxu0
  %1011 = vmatprep.subr.bf16.mxu0 0
  %1012 = vmatpush1.bf16.msra.mxu0 %v809
  %1013 = vmatprep.subr.bf16.mxu0 0
  %1014 = vmatpush1.bf16.msra.mxu0 %v808
  %1015 = vmatprep.subr.bf16.mxu0 0
  %1016 = vmatpush1.bf16.msra.mxu0 %v807
  %1017 = vmatprep.subr.bf16.mxu0 0
  %1018 = vmatpush1.bf16.msra.mxu0 %v806
  %1019 = vmatprep.subr.bf16.mxu0 0
  %1020 = vmatpush1.bf16.msra.mxu0 %v805
  %1021 = vmatprep.subr.bf16.mxu0 0
  %1022 = vmatpush1.bf16.msra.mxu0 %v804
  %1023 = vmatprep.subr.bf16.mxu0 0
  %1024 = vmatpush1.bf16.msra.mxu0 %v803
  %1025 = vmatprep.subr.bf16.mxu0 0
  %1026 = vmatpush1.bf16.msra.mxu0 %v802
  %1027 = vmatprep.subr.bf16.mxu0 0
  %1028 = vmatpush2.bf16.msra.mxu0 %v817
  %1029 = vmatprep.subr.bf16.mxu0 0
  %1030 = vmatpush2.bf16.msra.mxu0 %v816
  %1031 = vmatprep.subr.bf16.mxu0 0
  %1032 = vmatpush2.bf16.msra.mxu0 %v815
  %1033 = vmatprep.subr.bf16.mxu0 0
  %1034 = vmatpush2.bf16.msra.mxu0 %v814
  %1035 = vmatprep.subr.bf16.mxu0 0
  %1036 = vmatpush2.bf16.msra.mxu0 %v813
  %1037 = vmatprep.subr.bf16.mxu0 0
  %1038 = vmatpush2.bf16.msra.mxu0 %v812
  %1039 = vmatprep.subr.bf16.mxu0 0
  %1040 = vmatpush2.bf16.msra.mxu0 %v811
  %1041 = vmatprep.subr.bf16.mxu0 0
  %1042 = vmatpush2.bf16.msra.mxu0 %v810
  %1043 = vmatprep.mubr.bf16.mxu0 %v405
  %1044 = vmatmul.mubr.bf16.gmra.mxu0 %v404
  %v1045 = vpop.f32.mrf.mxu0
  %v1046 = vadd.f32 %v949, %v1045
  %v1047 = vpop.f32.mrf.mxu0
  %v1048 = vpop.f32.mrf.mxu0
  %v1049 = vadd.f32 %v952, %v1048
  %v1050 = vpop.f32.mrf.mxu0
  %1051 = vmatprep.mubr.bf16.mxu0 %v413
  %1052 = vmatmul.mubr.bf16.gmra.mxu0 %v412
  %v1053 = vpop.f32.mrf.mxu0
  %v1054 = vadd.f32 %v957, %v1053
  %v1055 = vpop.f32.mrf.mxu0
  %v1056 = vpop.f32.mrf.mxu0
  %v1057 = vadd.f32 %v960, %v1056
  %v1058 = vpop.f32.mrf.mxu0
  %1059 = vmatprep.mubr.bf16.mxu0 %v421
  %1060 = vmatmul.mubr.bf16.gmra.mxu0 %v420
  %v1061 = vpop.f32.mrf.mxu0
  %v1062 = vadd.f32 %v965, %v1061
  %v1063 = vpop.f32.mrf.mxu0
  %v1064 = vpop.f32.mrf.mxu0
  %v1065 = vadd.f32 %v968, %v1064
  %v1066 = vpop.f32.mrf.mxu0
  %1067 = vmatprep.mubr.bf16.mxu0 %v429
  %1068 = vmatmul.mubr.bf16.gmra.mxu0 %v428
  %v1069 = vpop.f32.mrf.mxu0
  %v1070 = vadd.f32 %v973, %v1069
  %v1071 = vpop.f32.mrf.mxu0
  %v1072 = vpop.f32.mrf.mxu0
  %v1073 = vadd.f32 %v976, %v1072
  %v1074 = vpop.f32.mrf.mxu0
  %1075 = vmatprep.mubr.bf16.mxu0 %v437
  %1076 = vmatmul.mubr.bf16.gmra.mxu0 %v436
  %v1077 = vpop.f32.mrf.mxu0
  %v1078 = vadd.f32 %v981, %v1077
  %v1079 = vpop.f32.mrf.mxu0
  %v1080 = vpop.f32.mrf.mxu0
  %v1081 = vadd.f32 %v984, %v1080
  %v1082 = vpop.f32.mrf.mxu0
  %1083 = vmatprep.mubr.bf16.mxu0 %v445
  %1084 = vmatmul.mubr.bf16.gmra.mxu0 %v444
  %v1085 = vpop.f32.mrf.mxu0
  %v1086 = vadd.f32 %v989, %v1085
  %v1087 = vpop.f32.mrf.mxu0
  %v1088 = vpop.f32.mrf.mxu0
  %v1089 = vadd.f32 %v992, %v1088
  %v1090 = vpop.f32.mrf.mxu0
  %1091 = vmatprep.mubr.bf16.mxu0 %v453
  %1092 = vmatmul.mubr.bf16.gmra.mxu0 %v452
  %v1093 = vpop.f32.mrf.mxu0
  %v1094 = vadd.f32 %v997, %v1093
  %v1095 = vpop.f32.mrf.mxu0
  %v1096 = vpop.f32.mrf.mxu0
  %v1097 = vadd.f32 %v1000, %v1096
  %v1098 = vpop.f32.mrf.mxu0
  %1099 = vmatprep.mubr.bf16.mxu0 %v461
  %1100 = vmatmul.mubr.bf16.gmra.mxu0 %v460
  %v1101 = vpop.f32.mrf.mxu0
  %v1102 = vadd.f32 %v1005, %v1101
  %v1103 = vpop.f32.mrf.mxu0
  %v1104 = vpop.f32.mrf.mxu0
  %v1105 = vadd.f32 %v1008, %v1104
  %v1106 = vpop.f32.mrf.mxu0
  %1107 = vdwg.mxu0
  %1108 = vmatprep.subr.bf16.mxu0 0
  %1109 = vmatpush1.bf16.msra.mxu0 %v825
  %1110 = vmatprep.subr.bf16.mxu0 0
  %1111 = vmatpush1.bf16.msra.mxu0 %v824
  %1112 = vmatprep.subr.bf16.mxu0 0
  %1113 = vmatpush1.bf16.msra.mxu0 %v823
  %1114 = vmatprep.subr.bf16.mxu0 0
  %1115 = vmatpush1.bf16.msra.mxu0 %v822
  %1116 = vmatprep.subr.bf16.mxu0 0
  %1117 = vmatpush1.bf16.msra.mxu0 %v821
  %1118 = vmatprep.subr.bf16.mxu0 0
  %1119 = vmatpush1.bf16.msra.mxu0 %v820
  %1120 = vmatprep.subr.bf16.mxu0 0
  %1121 = vmatpush1.bf16.msra.mxu0 %v819
  %1122 = vmatprep.subr.bf16.mxu0 0
  %1123 = vmatpush1.bf16.msra.mxu0 %v818
  %1124 = vmatprep.subr.bf16.mxu0 0
  %1125 = vmatpush2.bf16.msra.mxu0 %v833
  %1126 = vmatprep.subr.bf16.mxu0 0
  %1127 = vmatpush2.bf16.msra.mxu0 %v832
  %1128 = vmatprep.subr.bf16.mxu0 0
  %1129 = vmatpush2.bf16.msra.mxu0 %v831
  %1130 = vmatprep.subr.bf16.mxu0 0
  %1131 = vmatpush2.bf16.msra.mxu0 %v830
  %1132 = vmatprep.subr.bf16.mxu0 0
  %1133 = vmatpush2.bf16.msra.mxu0 %v829
  %1134 = vmatprep.subr.bf16.mxu0 0
  %1135 = vmatpush2.bf16.msra.mxu0 %v828
  %1136 = vmatprep.subr.bf16.mxu0 0
  %1137 = vmatpush2.bf16.msra.mxu0 %v827
  %1138 = vmatprep.subr.bf16.mxu0 0
  %1139 = vmatpush2.bf16.msra.mxu0 %v826
  %1140 = vmatprep.mubr.bf16.mxu0 %v407
  %1141 = vmatmul.mubr.bf16.gmra.mxu0 %v406
  %v1142 = vpop.f32.mrf.mxu0
  %v1143 = vadd.f32 %v1046, %v1142
  %v1144 = vpop.f32.mrf.mxu0
  %v1145 = vpop.f32.mrf.mxu0
  %v1146 = vadd.f32 %v1049, %v1145
  %v1147 = vpop.f32.mrf.mxu0
  %1148 = vmatprep.mubr.bf16.mxu0 %v415
  %1149 = vmatmul.mubr.bf16.gmra.mxu0 %v414
  %v1150 = vpop.f32.mrf.mxu0
  %v1151 = vadd.f32 %v1054, %v1150
  %v1152 = vpop.f32.mrf.mxu0
  %v1153 = vpop.f32.mrf.mxu0
  %v1154 = vadd.f32 %v1057, %v1153
  %v1155 = vpop.f32.mrf.mxu0
  %1156 = vmatprep.mubr.bf16.mxu0 %v423
  %1157 = vmatmul.mubr.bf16.gmra.mxu0 %v422
  %v1158 = vpop.f32.mrf.mxu0
  %v1159 = vadd.f32 %v1062, %v1158
  %v1160 = vpop.f32.mrf.mxu0
  %v1161 = vpop.f32.mrf.mxu0
  %v1162 = vadd.f32 %v1065, %v1161
  %v1163 = vpop.f32.mrf.mxu0
  %1164 = vmatprep.mubr.bf16.mxu0 %v431
  %1165 = vmatmul.mubr.bf16.gmra.mxu0 %v430
  %v1166 = vpop.f32.mrf.mxu0
  %v1167 = vadd.f32 %v1070, %v1166
  %v1168 = vpop.f32.mrf.mxu0
  %v1169 = vpop.f32.mrf.mxu0
  %v1170 = vadd.f32 %v1073, %v1169
  %v1171 = vpop.f32.mrf.mxu0
  %1172 = vmatprep.mubr.bf16.mxu0 %v439
  %1173 = vmatmul.mubr.bf16.gmra.mxu0 %v438
  %v1174 = vpop.f32.mrf.mxu0
  %v1175 = vadd.f32 %v1078, %v1174
  %v1176 = vpop.f32.mrf.mxu0
  %v1177 = vpop.f32.mrf.mxu0
  %v1178 = vadd.f32 %v1081, %v1177
  %v1179 = vpop.f32.mrf.mxu0
  %1180 = vmatprep.mubr.bf16.mxu0 %v447
  %1181 = vmatmul.mubr.bf16.gmra.mxu0 %v446
  %v1182 = vpop.f32.mrf.mxu0
  %v1183 = vadd.f32 %v1086, %v1182
  %v1184 = vpop.f32.mrf.mxu0
  %v1185 = vpop.f32.mrf.mxu0
  %v1186 = vadd.f32 %v1089, %v1185
  %v1187 = vpop.f32.mrf.mxu0
  %1188 = vmatprep.mubr.bf16.mxu0 %v455
  %1189 = vmatmul.mubr.bf16.gmra.mxu0 %v454
  %v1190 = vpop.f32.mrf.mxu0
  %v1191 = vadd.f32 %v1094, %v1190
  %v1192 = vpop.f32.mrf.mxu0
  %v1193 = vpop.f32.mrf.mxu0
  %v1194 = vadd.f32 %v1097, %v1193
  %v1195 = vpop.f32.mrf.mxu0
  %1196 = vmatprep.mubr.bf16.mxu0 %v463
  %1197 = vmatmul.mubr.bf16.gmra.mxu0 %v462
  %v1198 = vpop.f32.mrf.mxu0
  %v1199 = vadd.f32 %v1102, %v1198
  %v1200 = vpop.f32.mrf.mxu0
  %v1201 = vpop.f32.mrf.mxu0
  %v1202 = vadd.f32 %v1105, %v1201
  %v1203 = vpop.f32.mrf.mxu0
  %1204 = vdwg.mxu0
  %1205 = vmatprep.subr.bf16.mxu0 0
  %1206 = vmatpush1.bf16.msra.mxu0 %v841
  %1207 = vmatprep.subr.bf16.mxu0 0
  %1208 = vmatpush1.bf16.msra.mxu0 %v840
  %1209 = vmatprep.subr.bf16.mxu0 0
  %1210 = vmatpush1.bf16.msra.mxu0 %v839
  %1211 = vmatprep.subr.bf16.mxu0 0
  %1212 = vmatpush1.bf16.msra.mxu0 %v838
  %1213 = vmatprep.subr.bf16.mxu0 0
  %1214 = vmatpush1.bf16.msra.mxu0 %v837
  %1215 = vmatprep.subr.bf16.mxu0 0
  %1216 = vmatpush1.bf16.msra.mxu0 %v836
  %1217 = vmatprep.subr.bf16.mxu0 0
  %1218 = vmatpush1.bf16.msra.mxu0 %v835
  %1219 = vmatprep.subr.bf16.mxu0 0
  %1220 = vmatpush1.bf16.msra.mxu0 %v834
  %1221 = vmatprep.subr.bf16.mxu0 0
  %1222 = vmatpush2.bf16.msra.mxu0 %v849
  %1223 = vmatprep.subr.bf16.mxu0 0
  %1224 = vmatpush2.bf16.msra.mxu0 %v848
  %1225 = vmatprep.subr.bf16.mxu0 0
  %1226 = vmatpush2.bf16.msra.mxu0 %v847
  %1227 = vmatprep.subr.bf16.mxu0 0
  %1228 = vmatpush2.bf16.msra.mxu0 %v846
  %1229 = vmatprep.subr.bf16.mxu0 0
  %1230 = vmatpush2.bf16.msra.mxu0 %v845
  %1231 = vmatprep.subr.bf16.mxu0 0
  %1232 = vmatpush2.bf16.msra.mxu0 %v844
  %1233 = vmatprep.subr.bf16.mxu0 0
  %1234 = vmatpush2.bf16.msra.mxu0 %v843
  %1235 = vmatprep.subr.bf16.mxu0 0
  %1236 = vmatpush2.bf16.msra.mxu0 %v842
  %1237 = vmatprep.mubr.bf16.mxu0 %v409
  %1238 = vmatmul.mubr.bf16.gmra.mxu0 %v408
  %v1239 = vpop.f32.mrf.mxu0
  %v1240 = vadd.f32 %v1143, %v1239
  %v1241 = vpop.f32.mrf.mxu0
  %v1242 = vpop.f32.mrf.mxu0
  %v1243 = vadd.f32 %v1146, %v1242
  %v1244 = vpop.f32.mrf.mxu0
  %1245 = vmatprep.mubr.bf16.mxu0 %v417
  %1246 = vmatmul.mubr.bf16.gmra.mxu0 %v416
  %v1247 = vpop.f32.mrf.mxu0
  %v1248 = vadd.f32 %v1151, %v1247
  %v1249 = vpop.f32.mrf.mxu0
  %v1250 = vpop.f32.mrf.mxu0
  %v1251 = vadd.f32 %v1154, %v1250
  %v1252 = vpop.f32.mrf.mxu0
  %1253 = vmatprep.mubr.bf16.mxu0 %v425
  %1254 = vmatmul.mubr.bf16.gmra.mxu0 %v424
  %v1255 = vpop.f32.mrf.mxu0
  %v1256 = vadd.f32 %v1159, %v1255
  %v1257 = vpop.f32.mrf.mxu0
  %v1258 = vpop.f32.mrf.mxu0
  %v1259 = vadd.f32 %v1162, %v1258
  %v1260 = vpop.f32.mrf.mxu0
  %1261 = vmatprep.mubr.bf16.mxu0 %v433
  %1262 = vmatmul.mubr.bf16.gmra.mxu0 %v432
  %v1263 = vpop.f32.mrf.mxu0
  %v1264 = vadd.f32 %v1167, %v1263
  %v1265 = vpop.f32.mrf.mxu0
  %v1266 = vpop.f32.mrf.mxu0
  %v1267 = vadd.f32 %v1170, %v1266
  %v1268 = vpop.f32.mrf.mxu0
  %1269 = vmatprep.mubr.bf16.mxu0 %v441
  %1270 = vmatmul.mubr.bf16.gmra.mxu0 %v440
  %v1271 = vpop.f32.mrf.mxu0
  %v1272 = vadd.f32 %v1175, %v1271
  %v1273 = vpop.f32.mrf.mxu0
  %v1274 = vpop.f32.mrf.mxu0
  %v1275 = vadd.f32 %v1178, %v1274
  %v1276 = vpop.f32.mrf.mxu0
  %1277 = vmatprep.mubr.bf16.mxu0 %v449
  %1278 = vmatmul.mubr.bf16.gmra.mxu0 %v448
  %v1279 = vpop.f32.mrf.mxu0
  %v1280 = vadd.f32 %v1183, %v1279
  %v1281 = vpop.f32.mrf.mxu0
  %v1282 = vpop.f32.mrf.mxu0
  %v1283 = vadd.f32 %v1186, %v1282
  %v1284 = vpop.f32.mrf.mxu0
  %1285 = vmatprep.mubr.bf16.mxu0 %v457
  %1286 = vmatmul.mubr.bf16.gmra.mxu0 %v456
  %v1287 = vpop.f32.mrf.mxu0
  %v1288 = vadd.f32 %v1191, %v1287
  %v1289 = vpop.f32.mrf.mxu0
  %v1290 = vpop.f32.mrf.mxu0
  %v1291 = vadd.f32 %v1194, %v1290
  %v1292 = vpop.f32.mrf.mxu0
  %1293 = vmatprep.mubr.bf16.mxu0 %v465
  %1294 = vmatmul.mubr.bf16.gmra.mxu0 %v464
  %v1295 = vpop.f32.mrf.mxu0
  %v1296 = vadd.f32 %v1199, %v1295
  %v1297 = vpop.f32.mrf.mxu0
  %v1298 = vpop.f32.mrf.mxu0
  %v1299 = vadd.f32 %v1202, %v1298
  %v1300 = vpop.f32.mrf.mxu0
  %1301 = vdwg.mxu0
  %v1302 = vadd.f32 %v1240, %v1243
  %v1303 = vadd.f32 %v1302, %v1248
  %v1304 = vadd.f32 %v1303, %v1251
  %v1305 = vadd.f32 %v1304, %v1256
  %v1306 = vadd.f32 %v1305, %v1259
  %v1307 = vadd.f32 %v1306, %v1264
  %v1308 = vadd.f32 %v1307, %v1267
  %v1309 = vadd.f32 %v1308, %v1272
  %v1310 = vadd.f32 %v1309, %v1275
  %v1311 = vadd.f32 %v1310, %v1280
  %v1312 = vadd.f32 %v1311, %v1283
  %v1313 = vadd.f32 %v1312, %v1288
  %v1314 = vadd.f32 %v1313, %v1291
  %v1315 = vadd.f32 %v1314, %v1296
  %v1316 = vadd.f32 %v1315, %v1299
  %v1317 = vrot.slane %v1316, 4
  %v1318 = vadd.f32 %v1316, %v1317
  %v1319 = vrot.slane %v1318, 2
  %v1320 = vadd.f32 %v1318, %v1319
  %v1321 = vrot.slane %v1320, 1
  %v1322 = vadd.f32 %v1320, %v1321
  %v1323 = vmul.f32 %v1322, 0.0078125
  %v1324 = vsub.f32 %v1240, %v1323
  %v1325 = vsub.f32 %v1243, %v1323
  %v1326 = vsub.f32 %v1248, %v1323
  %v1327 = vsub.f32 %v1251, %v1323
  %v1328 = vsub.f32 %v1256, %v1323
  %v1329 = vsub.f32 %v1259, %v1323
  %v1330 = vsub.f32 %v1264, %v1323
  %v1331 = vsub.f32 %v1267, %v1323
  %v1332 = vsub.f32 %v1272, %v1323
  %v1333 = vsub.f32 %v1275, %v1323
  %v1334 = vsub.f32 %v1280, %v1323
  %v1335 = vsub.f32 %v1283, %v1323
  %v1336 = vsub.f32 %v1288, %v1323
  %v1337 = vsub.f32 %v1291, %v1323
  %v1338 = vsub.f32 %v1296, %v1323
  %v1339 = vsub.f32 %v1299, %v1323
  %v1340 = vmul.f32 %v1324, %v1324
  %v1341 = vmul.f32 %v1325, %v1325
  %v1342 = vmul.f32 %v1326, %v1326
  %v1343 = vmul.f32 %v1327, %v1327
  %v1344 = vmul.f32 %v1328, %v1328
  %v1345 = vmul.f32 %v1329, %v1329
  %v1346 = vmul.f32 %v1330, %v1330
  %v1347 = vmul.f32 %v1331, %v1331
  %v1348 = vmul.f32 %v1332, %v1332
  %v1349 = vmul.f32 %v1333, %v1333
  %v1350 = vmul.f32 %v1334, %v1334
  %v1351 = vmul.f32 %v1335, %v1335
  %v1352 = vmul.f32 %v1336, %v1336
  %v1353 = vmul.f32 %v1337, %v1337
  %v1354 = vmul.f32 %v1338, %v1338
  %v1355 = vmul.f32 %v1339, %v1339
  %v1356 = vadd.f32 %v1340, %v1341
  %v1357 = vadd.f32 %v1356, %v1342
  %v1358 = vadd.f32 %v1357, %v1343
  %v1359 = vadd.f32 %v1358, %v1344
  %v1360 = vadd.f32 %v1359, %v1345
  %v1361 = vadd.f32 %v1360, %v1346
  %v1362 = vadd.f32 %v1361, %v1347
  %v1363 = vadd.f32 %v1362, %v1348
  %v1364 = vadd.f32 %v1363, %v1349
  %v1365 = vadd.f32 %v1364, %v1350
  %v1366 = vadd.f32 %v1365, %v1351
  %v1367 = vadd.f32 %v1366, %v1352
  %v1368 = vadd.f32 %v1367, %v1353
  %v1369 = vadd.f32 %v1368, %v1354
  %v1370 = vadd.f32 %v1369, %v1355
  %v1371 = vrot.slane %v1370, 4
  %v1372 = vadd.f32 %v1370, %v1371
  %v1373 = vrot.slane %v1372, 2
  %v1374 = vadd.f32 %v1372, %v1373
  %v1375 = vrot.slane %v1374, 1
  %v1376 = vadd.f32 %v1374, %v1375
  %v1377 = vmul.f32 %v1376, 0.0078125
  %v1378 = vld [vmem:[%s2] sm:$0x1]
  %v1379 = vadd.f32 %v1377, 1e-05
  %v1380 = vrsqrt.pop %v1379
  %v1381 = vmul.f32 %v1378, %v1380
  %v1383 = vlaneseq
  %v1384 = vshrl.u32 %v1383, 7
  %v1385 = vsub.s32 0, %v1384
  %v1386 = vrot.slane %v1381, %v1385
  %v1388 = vmul.f32 %v1324, %v1386
  %v1389 = vmul.f32 %v1325, %v1386
  %v1390 = vmul.f32 %v1326, %v1386
  %v1391 = vmul.f32 %v1327, %v1386
  %v1392 = vmul.f32 %v1328, %v1386
  %v1393 = vmul.f32 %v1329, %v1386
  %v1394 = vmul.f32 %v1330, %v1386
  %v1395 = vmul.f32 %v1331, %v1386
  %v1396 = vmul.f32 %v1332, %v1386
  %v1397 = vmul.f32 %v1333, %v1386
  %v1398 = vmul.f32 %v1334, %v1386
  %v1399 = vmul.f32 %v1335, %v1386
  %v1400 = vmul.f32 %v1336, %v1386
  %v1401 = vmul.f32 %v1337, %v1386
  %v1402 = vmul.f32 %v1338, %v1386
  %v1403 = vmul.f32 %v1339, %v1386
  %v1404 = vld [vmem:[%s3] sm:$0x1]
  %v1406 = vlaneseq
  %v1407 = vshrl.u32 %v1406, 7
  %v1408 = vsub.s32 0, %v1407
  %v1409 = vrot.slane %v1404, %v1408
  %v1411 = vadd.f32 %v1388, %v1409
  %v1412 = vadd.f32 %v1389, %v1409
  %v1413 = vadd.f32 %v1390, %v1409
  %v1414 = vadd.f32 %v1391, %v1409
  %v1415 = vadd.f32 %v1392, %v1409
  %v1416 = vadd.f32 %v1393, %v1409
  %v1417 = vadd.f32 %v1394, %v1409
  %v1418 = vadd.f32 %v1395, %v1409
  %v1419 = vadd.f32 %v1396, %v1409
  %v1420 = vadd.f32 %v1397, %v1409
  %v1421 = vadd.f32 %v1398, %v1409
  %v1422 = vadd.f32 %v1399, %v1409
  %v1423 = vadd.f32 %v1400, %v1409
  %v1424 = vadd.f32 %v1401, %v1409
  %v1425 = vadd.f32 %v1402, %v1409
  %v1426 = vadd.f32 %v1403, %v1409
  %v1427 = vmax.f32 %v1411, 0.0
  %v1428 = vmax.f32 %v1412, 0.0
  %v1429 = vmax.f32 %v1413, 0.0
  %v1430 = vmax.f32 %v1414, 0.0
  %v1431 = vmax.f32 %v1415, 0.0
  %v1432 = vmax.f32 %v1416, 0.0
  %v1433 = vmax.f32 %v1417, 0.0
  %v1434 = vmax.f32 %v1418, 0.0
  %v1435 = vmax.f32 %v1419, 0.0
  %v1436 = vmax.f32 %v1420, 0.0
  %v1437 = vmax.f32 %v1421, 0.0
  %v1438 = vmax.f32 %v1422, 0.0
  %v1439 = vmax.f32 %v1423, 0.0
  %v1440 = vmax.f32 %v1424, 0.0
  %v1441 = vmax.f32 %v1425, 0.0
  %v1442 = vmax.f32 %v1426, 0.0
  %v1443 = vpack.c.bf16 %v1428, %v1427
  %v1444 = vpack.c.bf16 %v1430, %v1429
  %v1445 = vpack.c.bf16 %v1432, %v1431
  %v1446 = vpack.c.bf16 %v1434, %v1433
  %v1447 = vpack.c.bf16 %v1436, %v1435
  %v1448 = vpack.c.bf16 %v1438, %v1437
  %v1449 = vpack.c.bf16 %v1440, %v1439
  %v1450 = vpack.c.bf16 %v1442, %v1441
  %v1459 = vunpack.c.l.b16 %v1443
  %v1460 = vunpack.c.h.b16 %v1443
  %v1461 = vunpack.c.l.b16 %v1444
  %v1462 = vunpack.c.h.b16 %v1444
  %v1463 = vunpack.c.l.b16 %v1445
  %v1464 = vunpack.c.h.b16 %v1445
  %v1465 = vunpack.c.l.b16 %v1446
  %v1466 = vunpack.c.h.b16 %v1446
  %v1467 = vunpack.c.l.b16 %v1447
  %v1468 = vunpack.c.h.b16 %v1447
  %v1469 = vunpack.c.l.b16 %v1448
  %v1470 = vunpack.c.h.b16 %v1448
  %v1471 = vunpack.c.l.b16 %v1449
  %v1472 = vunpack.c.h.b16 %v1449
  %v1473 = vunpack.c.l.b16 %v1450
  %v1474 = vunpack.c.h.b16 %v1450
  %v1475 = vpack.c.b16 %v1459, %v1459
  %v1476 = vpack.c.b16 %v1460, %v1460
  %v1477 = vpack.c.b16 %v1461, %v1461
  %v1478 = vpack.c.b16 %v1462, %v1462
  %v1479 = vpack.c.b16 %v1463, %v1463
  %v1480 = vpack.c.b16 %v1464, %v1464
  %v1481 = vpack.c.b16 %v1465, %v1465
  %v1482 = vpack.c.b16 %v1466, %v1466
  %v1483 = vpack.c.b16 %v1467, %v1467
  %v1484 = vpack.c.b16 %v1468, %v1468
  %v1485 = vpack.c.b16 %v1469, %v1469
  %v1486 = vpack.c.b16 %v1470, %v1470
  %v1487 = vpack.c.b16 %v1471, %v1471
  %v1488 = vpack.c.b16 %v1472, %v1472
  %v1489 = vpack.c.b16 %v1473, %v1473
  %v1490 = vpack.c.b16 %v1474, %v1474
  %1507 = vst [vmem:[%s4] sm:$0xf] %v1475
  %1508 = vst [vmem:[%s4 + $0x4] sm:$0xf] %v1476
  %1509 = vst [vmem:[%s4 + $0x8] sm:$0xf] %v1477
  %1510 = vst [vmem:[%s4 + $0xc] sm:$0xf] %v1478
  %1511 = vst [vmem:[%s4 + $0x10] sm:$0xf] %v1479
  %1512 = vst [vmem:[%s4 + $0x14] sm:$0xf] %v1480
  %1513 = vst [vmem:[%s4 + $0x18] sm:$0xf] %v1481
  %1514 = vst [vmem:[%s4 + $0x1c] sm:$0xf] %v1482
  %1515 = vst [vmem:[%s4 + $0x20] sm:$0xf] %v1483
  %1516 = vst [vmem:[%s4 + $0x24] sm:$0xf] %v1484
  %1517 = vst [vmem:[%s4 + $0x28] sm:$0xf] %v1485
  %1518 = vst [vmem:[%s4 + $0x2c] sm:$0xf] %v1486
  %1519 = vst [vmem:[%s4 + $0x30] sm:$0xf] %v1487
  %1520 = vst [vmem:[%s4 + $0x34] sm:$0xf] %v1488
  %1521 = vst [vmem:[%s4 + $0x38] sm:$0xf] %v1489
  %1522 = vst [vmem:[%s4 + $0x3c] sm:$0xf] %v1490
  // Predicated region
  $region18: #{encoder_a_forward.7} parent=0 // pred_check
    _
  $region19: #{encoder_a_forward.7} parent=0 // pred_check_branch
    %1524 = sbr.rel (0) target = $region21
  $region20: #{encoder_a_forward.7} parent=0 // pred_region
    _
  $region21: #{encoder_a_forward.7} parent=0 // pred_fallthru
    _
  // Predicated region
  $region22: #{encoder_a_forward.7} parent=0 // pred_check
    _
  $region23: #{encoder_a_forward.7} parent=0 // pred_check_branch
    %1526 = sbr.rel (0) target = $region25
  $region24: #{encoder_a_forward.7} parent=0 // pred_region
    _
  $region25: #{encoder_a_forward.7} parent=0 // pred_fallthru
    _

// kernel: encoder_a_forward.8
$region0: #{encoder_a_forward.8}
  #allocation0 [shape = 'u32[]', space=smem, size = 0x4, offset = 0x4, fixed_abs, tag = 'smem constant byte address 0x4 - core index']
  #allocation1 [shape = 'u32[144,128]{1,0:T(1,128)}', space=vmem, size = 0x12000, scoped, tag = 'internal scratch']
  %s0 = inlined_call_operand.vmem [shape: bf16[50,2048], index: 0, kind: input, shape index: {}]
  %s1 = inlined_call_operand.vmem [shape: bf16[2048,256], index: 1, kind: input, shape index: {}]
  %s2 = inlined_call_operand.vmem [shape: f32[1,256], index: 2, kind: input, shape index: {}]
  %s3 = inlined_call_operand.vmem [shape: f32[1,256], index: 3, kind: input, shape index: {}]
  %s4 = inlined_call_operand.vmem [shape: bf16[50,256], index: 4, kind: output, shape index: {}]
  %s5 = sld [smem:[#allocation0]]
  $region26: #{encoder_a_forward.8} parent=0
    _
  %s7 = ssub.s32 1, %s5
  %s8 = scalar_select 0, %s7, %s5
  // Predicated region
  $region2: #{encoder_a_forward.8} parent=0 // pred_check
    _
  $region3: #{encoder_a_forward.8} parent=0 // pred_check_branch
    %10 = sbr.rel (0) target = $region5
  $region4: #{encoder_a_forward.8} parent=0 // pred_region
    _
  $region5: #{encoder_a_forward.8} parent=0 // pred_fallthru
    _
  // Predicated region
  $region6: #{encoder_a_forward.8} parent=0 // pred_check
    _
  $region7: #{encoder_a_forward.8} parent=0 // pred_check_branch
    %12 = sbr.rel (0) target = $region9
  $region8: #{encoder_a_forward.8} parent=0 // pred_region
    _
  $region9: #{encoder_a_forward.8} parent=0 // pred_fallthru
    _
  // Predicated region
  $region10: #{encoder_a_forward.8} parent=0 // pred_check
    _
  $region11: #{encoder_a_forward.8} parent=0 // pred_check_branch
    %14 = sbr.rel (0) target = $region13
  $region12: #{encoder_a_forward.8} parent=0 // pred_region
    _
  $region13: #{encoder_a_forward.8} parent=0 // pred_fallthru
    _
  // Predicated region
  $region14: #{encoder_a_forward.8} parent=0 // pred_check
    _
  $region15: #{encoder_a_forward.8} parent=0 // pred_check_branch
    %16 = sbr.rel (0) target = $region17
  $region16: #{encoder_a_forward.8} parent=0 // pred_region
    _
  $region17: #{encoder_a_forward.8} parent=0 // pred_fallthru
    _
  %v17 = vld [vmem:[%s0] sm:$0xff]
  %v18 = vld [vmem:[%s0 + $0x8] sm:$0xff]
  %v19 = vld [vmem:[%s0 + $0x10] sm:$0xff]
  %v20 = vld [vmem:[%s0 + $0x18] sm:$0xff]
  %v21 = vld [vmem:[%s0 + $0x20] sm:$0xff]
  %v22 = vld [vmem:[%s0 + $0x28] sm:$0xff]
  %v23 = vld [vmem:[%s0 + $0x30] sm:$0xff]
  %v24 = vld [vmem:[%s0 + $0x38] sm:$0xff]
  %v25 = vld [vmem:[%s0 + $0x40] sm:$0xff]
  %v26 = vld [vmem:[%s0 + $0x48] sm:$0xff]
  %v27 = vld [vmem:[%s0 + $0x50] sm:$0xff]
  %v28 = vld [vmem:[%s0 + $0x58] sm:$0xff]
  %v29 = vld [vmem:[%s0 + $0x60] sm:$0xff]
  %v30 = vld [vmem:[%s0 + $0x68] sm:$0xff]
  %v31 = vld [vmem:[%s0 + $0x70] sm:$0xff]
  %v32 = vld [vmem:[%s0 + $0x78] sm:$0xff]
  %v33 = vld [vmem:[%s0 + $0x80] sm:$0xff]
  %v34 = vld [vmem:[%s0 + $0x88] sm:$0xff]
  %v35 = vld [vmem:[%s0 + $0x90] sm:$0xff]
  %v36 = vld [vmem:[%s0 + $0x98] sm:$0xff]
  %v37 = vld [vmem:[%s0 + $0xa0] sm:$0xff]
  %v38 = vld [vmem:[%s0 + $0xa8] sm:$0xff]
  %v39 = vld [vmem:[%s0 + $0xb0] sm:$0xff]
  %v40 = vld [vmem:[%s0 + $0xb8] sm:$0xff]
  %v41 = vld [vmem:[%s0 + $0xc0] sm:$0xff]
  %v42 = vld [vmem:[%s0 + $0xc8] sm:$0xff]
  %v43 = vld [vmem:[%s0 + $0xd0] sm:$0xff]
  %v44 = vld [vmem:[%s0 + $0xd8] sm:$0xff]
  %v45 = vld [vmem:[%s0 + $0xe0] sm:$0xff]
  %v46 = vld [vmem:[%s0 + $0xe8] sm:$0xff]
  %v47 = vld [vmem:[%s0 + $0xf0] sm:$0xff]
  %v48 = vld [vmem:[%s0 + $0xf8] sm:$0xff]
  %v49 = vld [vmem:[%s0 + $0x100] sm:$0xff]
  %v50 = vld [vmem:[%s0 + $0x108] sm:$0xff]
  %v51 = vld [vmem:[%s0 + $0x110] sm:$0xff]
  %v52 = vld [vmem:[%s0 + $0x118] sm:$0xff]
  %v53 = vld [vmem:[%s0 + $0x120] sm:$0xff]
  %v54 = vld [vmem:[%s0 + $0x128] sm:$0xff]
  %v55 = vld [vmem:[%s0 + $0x130] sm:$0xff]
  %v56 = vld [vmem:[%s0 + $0x138] sm:$0xff]
  %v57 = vld [vmem:[%s0 + $0x140] sm:$0xff]
  %v58 = vld [vmem:[%s0 + $0x148] sm:$0xff]
  %v59 = vld [vmem:[%s0 + $0x150] sm:$0xff]
  %v60 = vld [vmem:[%s0 + $0x158] sm:$0xff]
  %v61 = vld [vmem:[%s0 + $0x160] sm:$0xff]
  %v62 = vld [vmem:[%s0 + $0x168] sm:$0xff]
  %v63 = vld [vmem:[%s0 + $0x170] sm:$0xff]
  %v64 = vld [vmem:[%s0 + $0x178] sm:$0xff]
  %v65 = vld [vmem:[%s0 + $0x180] sm:$0x11]
  %v66 = vld [vmem:[%s0 + $0x188] sm:$0x11]
  %v67 = vld [vmem:[%s0 + $0x190] sm:$0x11]
  %v68 = vld [vmem:[%s0 + $0x198] sm:$0x11]
  %v69 = vld [vmem:[%s0 + $0x1a0] sm:$0x11]
  %v70 = vld [vmem:[%s0 + $0x1a8] sm:$0x11]
  %v71 = vld [vmem:[%s0 + $0x1b0] sm:$0x11]
  %v72 = vld [vmem:[%s0 + $0x1b8] sm:$0x11]
  %v73 = vld [vmem:[%s1] sm:$0xff]
  %v74 = vld [vmem:[%s1 + $0x8] sm:$0xff]
  %v75 = vld [vmem:[%s1 + $0x10] sm:$0xff]
  %v76 = vld [vmem:[%s1 + $0x18] sm:$0xff]
  %v77 = vld [vmem:[%s1 + $0x20] sm:$0xff]
  %v78 = vld [vmem:[%s1 + $0x28] sm:$0xff]
  %v79 = vld [vmem:[%s1 + $0x30] sm:$0xff]
  %v80 = vld [vmem:[%s1 + $0x38] sm:$0xff]
  %v81 = vld [vmem:[%s1 + $0x40] sm:$0xff]
  %v82 = vld [vmem:[%s1 + $0x48] sm:$0xff]
  %v83 = vld [vmem:[%s1 + $0x50] sm:$0xff]
  %v84 = vld [vmem:[%s1 + $0x58] sm:$0xff]
  %v85 = vld [vmem:[%s1 + $0x60] sm:$0xff]
  %v86 = vld [vmem:[%s1 + $0x68] sm:$0xff]
  %v87 = vld [vmem:[%s1 + $0x70] sm:$0xff]
  %v88 = vld [vmem:[%s1 + $0x78] sm:$0xff]
  %v89 = vld [vmem:[%s1 + $0x80] sm:$0xff]
  %v90 = vld [vmem:[%s1 + $0x88] sm:$0xff]
  %v91 = vld [vmem:[%s1 + $0x90] sm:$0xff]
  %v92 = vld [vmem:[%s1 + $0x98] sm:$0xff]
  %v93 = vld [vmem:[%s1 + $0xa0] sm:$0xff]
  %v94 = vld [vmem:[%s1 + $0xa8] sm:$0xff]
  %v95 = vld [vmem:[%s1 + $0xb0] sm:$0xff]
  %v96 = vld [vmem:[%s1 + $0xb8] sm:$0xff]
  %v97 = vld [vmem:[%s1 + $0xc0] sm:$0xff]
  %v98 = vld [vmem:[%s1 + $0xc8] sm:$0xff]
  %v99 = vld [vmem:[%s1 + $0xd0] sm:$0xff]
  %v100 = vld [vmem:[%s1 + $0xd8] sm:$0xff]
  %v101 = vld [vmem:[%s1 + $0xe0] sm:$0xff]
  %v102 = vld [vmem:[%s1 + $0xe8] sm:$0xff]
  %v103 = vld [vmem:[%s1 + $0xf0] sm:$0xff]
  %v104 = vld [vmem:[%s1 + $0xf8] sm:$0xff]
  %v105 = vld [vmem:[%s1 + $0x100] sm:$0xff]
  %v106 = vld [vmem:[%s1 + $0x108] sm:$0xff]
  %v107 = vld [vmem:[%s1 + $0x110] sm:$0xff]
  %v108 = vld [vmem:[%s1 + $0x118] sm:$0xff]
  %v109 = vld [vmem:[%s1 + $0x120] sm:$0xff]
  %v110 = vld [vmem:[%s1 + $0x128] sm:$0xff]
  %v111 = vld [vmem:[%s1 + $0x130] sm:$0xff]
  %v112 = vld [vmem:[%s1 + $0x138] sm:$0xff]
  %v113 = vld [vmem:[%s1 + $0x140] sm:$0xff]
  %v114 = vld [vmem:[%s1 + $0x148] sm:$0xff]
  %v115 = vld [vmem:[%s1 + $0x150] sm:$0xff]
  %v116 = vld [vmem:[%s1 + $0x158] sm:$0xff]
  %v117 = vld [vmem:[%s1 + $0x160] sm:$0xff]
  %v118 = vld [vmem:[%s1 + $0x168] sm:$0xff]
  %v119 = vld [vmem:[%s1 + $0x170] sm:$0xff]
  %v120 = vld [vmem:[%s1 + $0x178] sm:$0xff]
  %v121 = vld [vmem:[%s1 + $0x180] sm:$0xff]
  %v122 = vld [vmem:[%s1 + $0x188] sm:$0xff]
  %v123 = vld [vmem:[%s1 + $0x190] sm:$0xff]
  %v124 = vld [vmem:[%s1 + $0x198] sm:$0xff]
  %v125 = vld [vmem:[%s1 + $0x1a0] sm:$0xff]
  %v126 = vld [vmem:[%s1 + $0x1a8] sm:$0xff]
  %v127 = vld [vmem:[%s1 + $0x1b0] sm:$0xff]
  %v128 = vld [vmem:[%s1 + $0x1b8] sm:$0xff]
  %v129 = vld [vmem:[%s1 + $0x1c0] sm:$0xff]
  %v130 = vld [vmem:[%s1 + $0x1c8] sm:$0xff]
  %v131 = vld [vmem:[%s1 + $0x1d0] sm:$0xff]
  %v132 = vld [vmem:[%s1 + $0x1d8] sm:$0xff]
  %v133 = vld [vmem:[%s1 + $0x1e0] sm:$0xff]
  %v134 = vld [vmem:[%s1 + $0x1e8] sm:$0xff]
  %v135 = vld [vmem:[%s1 + $0x1f0] sm:$0xff]
  %v136 = vld [vmem:[%s1 + $0x1f8] sm:$0xff]
  %v137 = vld [vmem:[%s1 + $0x200] sm:$0xff]
  %v138 = vld [vmem:[%s1 + $0x208] sm:$0xff]
  %v139 = vld [vmem:[%s1 + $0x210] sm:$0xff]
  %v140 = vld [vmem:[%s1 + $0x218] sm:$0xff]
  %v141 = vld [vmem:[%s1 + $0x220] sm:$0xff]
  %v142 = vld [vmem:[%s1 + $0x228] sm:$0xff]
  %v143 = vld [vmem:[%s1 + $0x230] sm:$0xff]
  %v144 = vld [vmem:[%s1 + $0x238] sm:$0xff]
  %v145 = vld [vmem:[%s1 + $0x240] sm:$0xff]
  %v146 = vld [vmem:[%s1 + $0x248] sm:$0xff]
  %v147 = vld [vmem:[%s1 + $0x250] sm:$0xff]
  %v148 = vld [vmem:[%s1 + $0x258] sm:$0xff]
  %v149 = vld [vmem:[%s1 + $0x260] sm:$0xff]
  %v150 = vld [vmem:[%s1 + $0x268] sm:$0xff]
  %v151 = vld [vmem:[%s1 + $0x270] sm:$0xff]
  %v152 = vld [vmem:[%s1 + $0x278] sm:$0xff]
  %v153 = vld [vmem:[%s1 + $0x280] sm:$0xff]
  %v154 = vld [vmem:[%s1 + $0x288] sm:$0xff]
  %v155 = vld [vmem:[%s1 + $0x290] sm:$0xff]
  %v156 = vld [vmem:[%s1 + $0x298] sm:$0xff]
  %v157 = vld [vmem:[%s1 + $0x2a0] sm:$0xff]
  %v158 = vld [vmem:[%s1 + $0x2a8] sm:$0xff]
  %v159 = vld [vmem:[%s1 + $0x2b0] sm:$0xff]
  %v160 = vld [vmem:[%s1 + $0x2b8] sm:$0xff]
  %v161 = vld [vmem:[%s1 + $0x2c0] sm:$0xff]
  %v162 = vld [vmem:[%s1 + $0x2c8] sm:$0xff]
  %v163 = vld [vmem:[%s1 + $0x2d0] sm:$0xff]
  %v164 = vld [vmem:[%s1 + $0x2d8] sm:$0xff]
  %v165 = vld [vmem:[%s1 + $0x2e0] sm:$0xff]
  %v166 = vld [vmem:[%s1 + $0x2e8] sm:$0xff]
  %v167 = vld [vmem:[%s1 + $0x2f0] sm:$0xff]
  %v168 = vld [vmem:[%s1 + $0x2f8] sm:$0xff]
  %v169 = vld [vmem:[%s1 + $0x300] sm:$0xff]
  %v170 = vld [vmem:[%s1 + $0x308] sm:$0xff]
  %v171 = vld [vmem:[%s1 + $0x310] sm:$0xff]
  %v172 = vld [vmem:[%s1 + $0x318] sm:$0xff]
  %v173 = vld [vmem:[%s1 + $0x320] sm:$0xff]
  %v174 = vld [vmem:[%s1 + $0x328] sm:$0xff]
  %v175 = vld [vmem:[%s1 + $0x330] sm:$0xff]
  %v176 = vld [vmem:[%s1 + $0x338] sm:$0xff]
  %v177 = vld [vmem:[%s1 + $0x340] sm:$0xff]
  %v178 = vld [vmem:[%s1 + $0x348] sm:$0xff]
  %v179 = vld [vmem:[%s1 + $0x350] sm:$0xff]
  %v180 = vld [vmem:[%s1 + $0x358] sm:$0xff]
  %v181 = vld [vmem:[%s1 + $0x360] sm:$0xff]
  %v182 = vld [vmem:[%s1 + $0x368] sm:$0xff]
  %v183 = vld [vmem:[%s1 + $0x370] sm:$0xff]
  %v184 = vld [vmem:[%s1 + $0x378] sm:$0xff]
  %v185 = vld [vmem:[%s1 + $0x380] sm:$0xff]
  %v186 = vld [vmem:[%s1 + $0x388] sm:$0xff]
  %v187 = vld [vmem:[%s1 + $0x390] sm:$0xff]
  %v188 = vld [vmem:[%s1 + $0x398] sm:$0xff]
  %v189 = vld [vmem:[%s1 + $0x3a0] sm:$0xff]
  %v190 = vld [vmem:[%s1 + $0x3a8] sm:$0xff]
  %v191 = vld [vmem:[%s1 + $0x3b0] sm:$0xff]
  %v192 = vld [vmem:[%s1 + $0x3b8] sm:$0xff]
  %v193 = vld [vmem:[%s1 + $0x3c0] sm:$0xff]
  %v194 = vld [vmem:[%s1 + $0x3c8] sm:$0xff]
  %v195 = vld [vmem:[%s1 + $0x3d0] sm:$0xff]
  %v196 = vld [vmem:[%s1 + $0x3d8] sm:$0xff]
  %v197 = vld [vmem:[%s1 + $0x3e0] sm:$0xff]
  %v198 = vld [vmem:[%s1 + $0x3e8] sm:$0xff]
  %v199 = vld [vmem:[%s1 + $0x3f0] sm:$0xff]
  %v200 = vld [vmem:[%s1 + $0x3f8] sm:$0xff]
  %v201 = vld [vmem:[%s1 + $0x400] sm:$0xff]
  %v202 = vld [vmem:[%s1 + $0x408] sm:$0xff]
  %v203 = vld [vmem:[%s1 + $0x410] sm:$0xff]
  %v204 = vld [vmem:[%s1 + $0x418] sm:$0xff]
  %v205 = vld [vmem:[%s1 + $0x420] sm:$0xff]
  %v206 = vld [vmem:[%s1 + $0x428] sm:$0xff]
  %v207 = vld [vmem:[%s1 + $0x430] sm:$0xff]
  %v208 = vld [vmem:[%s1 + $0x438] sm:$0xff]
  %v209 = vld [vmem:[%s1 + $0x440] sm:$0xff]
  %v210 = vld [vmem:[%s1 + $0x448] sm:$0xff]
  %v211 = vld [vmem:[%s1 + $0x450] sm:$0xff]
  %v212 = vld [vmem:[%s1 + $0x458] sm:$0xff]
  %v213 = vld [vmem:[%s1 + $0x460] sm:$0xff]
  %v214 = vld [vmem:[%s1 + $0x468] sm:$0xff]
  %v215 = vld [vmem:[%s1 + $0x470] sm:$0xff]
  %v216 = vld [vmem:[%s1 + $0x478] sm:$0xff]
  %v217 = vld [vmem:[%s1 + $0x480] sm:$0xff]
  %v218 = vld [vmem:[%s1 + $0x488] sm:$0xff]
  %v219 = vld [vmem:[%s1 + $0x490] sm:$0xff]
  %v220 = vld [vmem:[%s1 + $0x498] sm:$0xff]
  %v221 = vld [vmem:[%s1 + $0x4a0] sm:$0xff]
  %v222 = vld [vmem:[%s1 + $0x4a8] sm:$0xff]
  %v223 = vld [vmem:[%s1 + $0x4b0] sm:$0xff]
  %v224 = vld [vmem:[%s1 + $0x4b8] sm:$0xff]
  %v225 = vld [vmem:[%s1 + $0x4c0] sm:$0xff]
  %v226 = vld [vmem:[%s1 + $0x4c8] sm:$0xff]
  %v227 = vld [vmem:[%s1 + $0x4d0] sm:$0xff]
  %v228 = vld [vmem:[%s1 + $0x4d8] sm:$0xff]
  %v229 = vld [vmem:[%s1 + $0x4e0] sm:$0xff]
  %v230 = vld [vmem:[%s1 + $0x4e8] sm:$0xff]
  %v231 = vld [vmem:[%s1 + $0x4f0] sm:$0xff]
  %v232 = vld [vmem:[%s1 + $0x4f8] sm:$0xff]
  %v233 = vld [vmem:[%s1 + $0x500] sm:$0xff]
  %v234 = vld [vmem:[%s1 + $0x508] sm:$0xff]
  %v235 = vld [vmem:[%s1 + $0x510] sm:$0xff]
  %v236 = vld [vmem:[%s1 + $0x518] sm:$0xff]
  %v237 = vld [vmem:[%s1 + $0x520] sm:$0xff]
  %v238 = vld [vmem:[%s1 + $0x528] sm:$0xff]
  %v239 = vld [vmem:[%s1 + $0x530] sm:$0xff]
  %v240 = vld [vmem:[%s1 + $0x538] sm:$0xff]
  %v241 = vld [vmem:[%s1 + $0x540] sm:$0xff]
  %v242 = vld [vmem:[%s1 + $0x548] sm:$0xff]
  %v243 = vld [vmem:[%s1 + $0x550] sm:$0xff]
  %v244 = vld [vmem:[%s1 + $0x558] sm:$0xff]
  %v245 = vld [vmem:[%s1 + $0x560] sm:$0xff]
  %v246 = vld [vmem:[%s1 + $0x568] sm:$0xff]
  %v247 = vld [vmem:[%s1 + $0x570] sm:$0xff]
  %v248 = vld [vmem:[%s1 + $0x578] sm:$0xff]
  %v249 = vld [vmem:[%s1 + $0x580] sm:$0xff]
  %v250 = vld [vmem:[%s1 + $0x588] sm:$0xff]
  %v251 = vld [vmem:[%s1 + $0x590] sm:$0xff]
  %v252 = vld [vmem:[%s1 + $0x598] sm:$0xff]
  %v253 = vld [vmem:[%s1 + $0x5a0] sm:$0xff]
  %v254 = vld [vmem:[%s1 + $0x5a8] sm:$0xff]
  %v255 = vld [vmem:[%s1 + $0x5b0] sm:$0xff]
  %v256 = vld [vmem:[%s1 + $0x5b8] sm:$0xff]
  %v257 = vld [vmem:[%s1 + $0x5c0] sm:$0xff]
  %v258 = vld [vmem:[%s1 + $0x5c8] sm:$0xff]
  %v259 = vld [vmem:[%s1 + $0x5d0] sm:$0xff]
  %v260 = vld [vmem:[%s1 + $0x5d8] sm:$0xff]
  %v261 = vld [vmem:[%s1 + $0x5e0] sm:$0xff]
  %v262 = vld [vmem:[%s1 + $0x5e8] sm:$0xff]
  %v263 = vld [vmem:[%s1 + $0x5f0] sm:$0xff]
  %v264 = vld [vmem:[%s1 + $0x5f8] sm:$0xff]
  %v265 = vld [vmem:[%s1 + $0x600] sm:$0xff]
  %v266 = vld [vmem:[%s1 + $0x608] sm:$0xff]
  %v267 = vld [vmem:[%s1 + $0x610] sm:$0xff]
  %v268 = vld [vmem:[%s1 + $0x618] sm:$0xff]
  %v269 = vld [vmem:[%s1 + $0x620] sm:$0xff]
  %v270 = vld [vmem:[%s1 + $0x628] sm:$0xff]
  %v271 = vld [vmem:[%s1 + $0x630] sm:$0xff]
  %v272 = vld [vmem:[%s1 + $0x638] sm:$0xff]
  %v273 = vld [vmem:[%s1 + $0x640] sm:$0xff]
  %v274 = vld [vmem:[%s1 + $0x648] sm:$0xff]
  %v275 = vld [vmem:[%s1 + $0x650] sm:$0xff]
  %v276 = vld [vmem:[%s1 + $0x658] sm:$0xff]
  %v277 = vld [vmem:[%s1 + $0x660] sm:$0xff]
  %v278 = vld [vmem:[%s1 + $0x668] sm:$0xff]
  %v279 = vld [vmem:[%s1 + $0x670] sm:$0xff]
  %v280 = vld [vmem:[%s1 + $0x678] sm:$0xff]
  %v281 = vld [vmem:[%s1 + $0x680] sm:$0xff]
  %v282 = vld [vmem:[%s1 + $0x688] sm:$0xff]
  %v283 = vld [vmem:[%s1 + $0x690] sm:$0xff]
  %v284 = vld [vmem:[%s1 + $0x698] sm:$0xff]
  %v285 = vld [vmem:[%s1 + $0x6a0] sm:$0xff]
  %v286 = vld [vmem:[%s1 + $0x6a8] sm:$0xff]
  %v287 = vld [vmem:[%s1 + $0x6b0] sm:$0xff]
  %v288 = vld [vmem:[%s1 + $0x6b8] sm:$0xff]
  %v289 = vld [vmem:[%s1 + $0x6c0] sm:$0xff]
  %v290 = vld [vmem:[%s1 + $0x6c8] sm:$0xff]
  %v291 = vld [vmem:[%s1 + $0x6d0] sm:$0xff]
  %v292 = vld [vmem:[%s1 + $0x6d8] sm:$0xff]
  %v293 = vld [vmem:[%s1 + $0x6e0] sm:$0xff]
  %v294 = vld [vmem:[%s1 + $0x6e8] sm:$0xff]
  %v295 = vld [vmem:[%s1 + $0x6f0] sm:$0xff]
  %v296 = vld [vmem:[%s1 + $0x6f8] sm:$0xff]
  %v297 = vld [vmem:[%s1 + $0x700] sm:$0xff]
  %v298 = vld [vmem:[%s1 + $0x708] sm:$0xff]
  %v299 = vld [vmem:[%s1 + $0x710] sm:$0xff]
  %v300 = vld [vmem:[%s1 + $0x718] sm:$0xff]
  %v301 = vld [vmem:[%s1 + $0x720] sm:$0xff]
  %v302 = vld [vmem:[%s1 + $0x728] sm:$0xff]
  %v303 = vld [vmem:[%s1 + $0x730] sm:$0xff]
  %v304 = vld [vmem:[%s1 + $0x738] sm:$0xff]
  %v305 = vld [vmem:[%s1 + $0x740] sm:$0xff]
  %v306 = vld [vmem:[%s1 + $0x748] sm:$0xff]
  %v307 = vld [vmem:[%s1 + $0x750] sm:$0xff]
  %v308 = vld [vmem:[%s1 + $0x758] sm:$0xff]
  %v309 = vld [vmem:[%s1 + $0x760] sm:$0xff]
  %v310 = vld [vmem:[%s1 + $0x768] sm:$0xff]
  %v311 = vld [vmem:[%s1 + $0x770] sm:$0xff]
  %v312 = vld [vmem:[%s1 + $0x778] sm:$0xff]
  %v313 = vld [vmem:[%s1 + $0x780] sm:$0xff]
  %v314 = vld [vmem:[%s1 + $0x788] sm:$0xff]
  %v315 = vld [vmem:[%s1 + $0x790] sm:$0xff]
  %v316 = vld [vmem:[%s1 + $0x798] sm:$0xff]
  %v317 = vld [vmem:[%s1 + $0x7a0] sm:$0xff]
  %v318 = vld [vmem:[%s1 + $0x7a8] sm:$0xff]
  %v319 = vld [vmem:[%s1 + $0x7b0] sm:$0xff]
  %v320 = vld [vmem:[%s1 + $0x7b8] sm:$0xff]
  %v321 = vld [vmem:[%s1 + $0x7c0] sm:$0xff]
  %v322 = vld [vmem:[%s1 + $0x7c8] sm:$0xff]
  %v323 = vld [vmem:[%s1 + $0x7d0] sm:$0xff]
  %v324 = vld [vmem:[%s1 + $0x7d8] sm:$0xff]
  %v325 = vld [vmem:[%s1 + $0x7e0] sm:$0xff]
  %v326 = vld [vmem:[%s1 + $0x7e8] sm:$0xff]
  %v327 = vld [vmem:[%s1 + $0x7f0] sm:$0xff]
  %v328 = vld [vmem:[%s1 + $0x7f8] sm:$0xff]
  %v385 = vunpack.c.l.b16 %v17
  %v386 = vunpack.c.h.b16 %v17
  %v387 = vunpack.c.l.b16 %v18
  %v388 = vunpack.c.h.b16 %v18
  %v389 = vunpack.c.l.b16 %v19
  %v390 = vunpack.c.h.b16 %v19
  %v391 = vunpack.c.l.b16 %v20
  %v392 = vunpack.c.h.b16 %v20
  %v393 = vunpack.c.l.b16 %v21
  %v394 = vunpack.c.h.b16 %v21
  %v395 = vunpack.c.l.b16 %v22
  %v396 = vunpack.c.h.b16 %v22
  %v397 = vunpack.c.l.b16 %v23
  %v398 = vunpack.c.h.b16 %v23
  %v399 = vunpack.c.l.b16 %v24
  %v400 = vunpack.c.h.b16 %v24
  %v401 = vunpack.c.l.b16 %v25
  %v402 = vunpack.c.h.b16 %v25
  %v403 = vunpack.c.l.b16 %v26
  %v404 = vunpack.c.h.b16 %v26
  %v405 = vunpack.c.l.b16 %v27
  %v406 = vunpack.c.h.b16 %v27
  %v407 = vunpack.c.l.b16 %v28
  %v408 = vunpack.c.h.b16 %v28
  %v409 = vunpack.c.l.b16 %v29
  %v410 = vunpack.c.h.b16 %v29
  %v411 = vunpack.c.l.b16 %v30
  %v412 = vunpack.c.h.b16 %v30
  %v413 = vunpack.c.l.b16 %v31
  %v414 = vunpack.c.h.b16 %v31
  %v415 = vunpack.c.l.b16 %v32
  %v416 = vunpack.c.h.b16 %v32
  %v417 = vunpack.c.l.b16 %v33
  %v418 = vunpack.c.h.b16 %v33
  %v419 = vunpack.c.l.b16 %v34
  %v420 = vunpack.c.h.b16 %v34
  %v421 = vunpack.c.l.b16 %v35
  %v422 = vunpack.c.h.b16 %v35
  %v423 = vunpack.c.l.b16 %v36
  %v424 = vunpack.c.h.b16 %v36
  %v425 = vunpack.c.l.b16 %v37
  %v426 = vunpack.c.h.b16 %v37
  %v427 = vunpack.c.l.b16 %v38
  %v428 = vunpack.c.h.b16 %v38
  %v429 = vunpack.c.l.b16 %v39
  %v430 = vunpack.c.h.b16 %v39
  %v431 = vunpack.c.l.b16 %v40
  %v432 = vunpack.c.h.b16 %v40
  %v433 = vunpack.c.l.b16 %v41
  %v434 = vunpack.c.h.b16 %v41
  %v435 = vunpack.c.l.b16 %v42
  %v436 = vunpack.c.h.b16 %v42
  %v437 = vunpack.c.l.b16 %v43
  %v438 = vunpack.c.h.b16 %v43
  %v439 = vunpack.c.l.b16 %v44
  %v440 = vunpack.c.h.b16 %v44
  %v441 = vunpack.c.l.b16 %v45
  %v442 = vunpack.c.h.b16 %v45
  %v443 = vunpack.c.l.b16 %v46
  %v444 = vunpack.c.h.b16 %v46
  %v445 = vunpack.c.l.b16 %v47
  %v446 = vunpack.c.h.b16 %v47
  %v447 = vunpack.c.l.b16 %v48
  %v448 = vunpack.c.h.b16 %v48
  %v449 = vunpack.c.l.b16 %v49
  %v450 = vunpack.c.h.b16 %v49
  %v451 = vunpack.c.l.b16 %v50
  %v452 = vunpack.c.h.b16 %v50
  %v453 = vunpack.c.l.b16 %v51
  %v454 = vunpack.c.h.b16 %v51
  %v455 = vunpack.c.l.b16 %v52
  %v456 = vunpack.c.h.b16 %v52
  %v457 = vunpack.c.l.b16 %v53
  %v458 = vunpack.c.h.b16 %v53
  %v459 = vunpack.c.l.b16 %v54
  %v460 = vunpack.c.h.b16 %v54
  %v461 = vunpack.c.l.b16 %v55
  %v462 = vunpack.c.h.b16 %v55
  %v463 = vunpack.c.l.b16 %v56
  %v464 = vunpack.c.h.b16 %v56
  %v465 = vunpack.c.l.b16 %v57
  %v466 = vunpack.c.h.b16 %v57
  %v467 = vunpack.c.l.b16 %v58
  %v468 = vunpack.c.h.b16 %v58
  %v469 = vunpack.c.l.b16 %v59
  %v470 = vunpack.c.h.b16 %v59
  %v471 = vunpack.c.l.b16 %v60
  %v472 = vunpack.c.h.b16 %v60
  %v473 = vunpack.c.l.b16 %v61
  %v474 = vunpack.c.h.b16 %v61
  %v475 = vunpack.c.l.b16 %v62
  %v476 = vunpack.c.h.b16 %v62
  %v477 = vunpack.c.l.b16 %v63
  %v478 = vunpack.c.h.b16 %v63
  %v479 = vunpack.c.l.b16 %v64
  %v480 = vunpack.c.h.b16 %v64
  %v481 = vunpack.c.l.b16 %v65
  %v482 = vunpack.c.h.b16 %v65
  %v483 = vunpack.c.l.b16 %v66
  %v484 = vunpack.c.h.b16 %v66
  %v485 = vunpack.c.l.b16 %v67
  %v486 = vunpack.c.h.b16 %v67
  %v487 = vunpack.c.l.b16 %v68
  %v488 = vunpack.c.h.b16 %v68
  %v489 = vunpack.c.l.b16 %v69
  %v490 = vunpack.c.h.b16 %v69
  %v491 = vunpack.c.l.b16 %v70
  %v492 = vunpack.c.h.b16 %v70
  %v493 = vunpack.c.l.b16 %v71
  %v494 = vunpack.c.h.b16 %v71
  %v495 = vunpack.c.l.b16 %v72
  %v496 = vunpack.c.h.b16 %v72
  %v497 = vpack.c.b16 %v401, %v385
  %v498 = vpack.c.b16 %v402, %v386
  %v499 = vpack.c.b16 %v403, %v387
  %v500 = vpack.c.b16 %v404, %v388
  %v501 = vpack.c.b16 %v405, %v389
  %v502 = vpack.c.b16 %v406, %v390
  %v503 = vpack.c.b16 %v407, %v391
  %v504 = vpack.c.b16 %v408, %v392
  %v505 = vpack.c.b16 %v409, %v393
  %v506 = vpack.c.b16 %v410, %v394
  %v507 = vpack.c.b16 %v411, %v395
  %v508 = vpack.c.b16 %v412, %v396
  %v509 = vpack.c.b16 %v413, %v397
  %v510 = vpack.c.b16 %v414, %v398
  %v511 = vpack.c.b16 %v415, %v399
  %v512 = vpack.c.b16 %v416, %v400
  %v513 = vpack.c.b16 %v433, %v417
  %v514 = vpack.c.b16 %v434, %v418
  %v515 = vpack.c.b16 %v435, %v419
  %v516 = vpack.c.b16 %v436, %v420
  %v517 = vpack.c.b16 %v437, %v421
  %v518 = vpack.c.b16 %v438, %v422
  %v519 = vpack.c.b16 %v439, %v423
  %v520 = vpack.c.b16 %v440, %v424
  %v521 = vpack.c.b16 %v441, %v425
  %v522 = vpack.c.b16 %v442, %v426
  %v523 = vpack.c.b16 %v443, %v427
  %v524 = vpack.c.b16 %v444, %v428
  %v525 = vpack.c.b16 %v445, %v429
  %v526 = vpack.c.b16 %v446, %v430
  %v527 = vpack.c.b16 %v447, %v431
  %v528 = vpack.c.b16 %v448, %v432
  %v529 = vpack.c.b16 %v465, %v449
  %v530 = vpack.c.b16 %v466, %v450
  %v531 = vpack.c.b16 %v467, %v451
  %v532 = vpack.c.b16 %v468, %v452
  %v533 = vpack.c.b16 %v469, %v453
  %v534 = vpack.c.b16 %v470, %v454
  %v535 = vpack.c.b16 %v471, %v455
  %v536 = vpack.c.b16 %v472, %v456
  %v537 = vpack.c.b16 %v473, %v457
  %v538 = vpack.c.b16 %v474, %v458
  %v539 = vpack.c.b16 %v475, %v459
  %v540 = vpack.c.b16 %v476, %v460
  %v541 = vpack.c.b16 %v477, %v461
  %v542 = vpack.c.b16 %v478, %v462
  %v543 = vpack.c.b16 %v479, %v463
  %v544 = vpack.c.b16 %v480, %v464
  %v545 = vpack.c.b16 %v481, %v481
  %v546 = vpack.c.b16 %v482, %v482
  %v547 = vpack.c.b16 %v483, %v483
  %v548 = vpack.c.b16 %v484, %v484
  %v549 = vpack.c.b16 %v485, %v485
  %v550 = vpack.c.b16 %v486, %v486
  %v551 = vpack.c.b16 %v487, %v487
  %v552 = vpack.c.b16 %v488, %v488
  %v553 = vpack.c.b16 %v489, %v489
  %v554 = vpack.c.b16 %v490, %v490
  %v555 = vpack.c.b16 %v491, %v491
  %v556 = vpack.c.b16 %v492, %v492
  %v557 = vpack.c.b16 %v493, %v493
  %v558 = vpack.c.b16 %v494, %v494
  %v559 = vpack.c.b16 %v495, %v495
  %v560 = vpack.c.b16 %v496, %v496
  %v881 = vunpack.c.l.b16 %v73
  %v882 = vunpack.c.h.b16 %v73
  %v883 = vunpack.c.l.b16 %v74
  %v884 = vunpack.c.h.b16 %v74
  %v885 = vunpack.c.l.b16 %v75
  %v886 = vunpack.c.h.b16 %v75
  %v887 = vunpack.c.l.b16 %v76
  %v888 = vunpack.c.h.b16 %v76
  %v889 = vunpack.c.l.b16 %v77
  %v890 = vunpack.c.h.b16 %v77
  %v891 = vunpack.c.l.b16 %v78
  %v892 = vunpack.c.h.b16 %v78
  %v893 = vunpack.c.l.b16 %v79
  %v894 = vunpack.c.h.b16 %v79
  %v895 = vunpack.c.l.b16 %v80
  %v896 = vunpack.c.h.b16 %v80
  %v897 = vunpack.c.l.b16 %v81
  %v898 = vunpack.c.h.b16 %v81
  %v899 = vunpack.c.l.b16 %v82
  %v900 = vunpack.c.h.b16 %v82
  %v901 = vunpack.c.l.b16 %v83
  %v902 = vunpack.c.h.b16 %v83
  %v903 = vunpack.c.l.b16 %v84
  %v904 = vunpack.c.h.b16 %v84
  %v905 = vunpack.c.l.b16 %v85
  %v906 = vunpack.c.h.b16 %v85
  %v907 = vunpack.c.l.b16 %v86
  %v908 = vunpack.c.h.b16 %v86
  %v909 = vunpack.c.l.b16 %v87
  %v910 = vunpack.c.h.b16 %v87
  %v911 = vunpack.c.l.b16 %v88
  %v912 = vunpack.c.h.b16 %v88
  %v913 = vunpack.c.l.b16 %v89
  %v914 = vunpack.c.h.b16 %v89
  %v915 = vunpack.c.l.b16 %v90
  %v916 = vunpack.c.h.b16 %v90
  %v917 = vunpack.c.l.b16 %v91
  %v918 = vunpack.c.h.b16 %v91
  %v919 = vunpack.c.l.b16 %v92
  %v920 = vunpack.c.h.b16 %v92
  %v921 = vunpack.c.l.b16 %v93
  %v922 = vunpack.c.h.b16 %v93
  %v923 = vunpack.c.l.b16 %v94
  %v924 = vunpack.c.h.b16 %v94
  %v925 = vunpack.c.l.b16 %v95
  %v926 = vunpack.c.h.b16 %v95
  %v927 = vunpack.c.l.b16 %v96
  %v928 = vunpack.c.h.b16 %v96
  %v929 = vunpack.c.l.b16 %v97
  %v930 = vunpack.c.h.b16 %v97
  %v931 = vunpack.c.l.b16 %v98
  %v932 = vunpack.c.h.b16 %v98
  %v933 = vunpack.c.l.b16 %v99
  %v934 = vunpack.c.h.b16 %v99
  %v935 = vunpack.c.l.b16 %v100
  %v936 = vunpack.c.h.b16 %v100
  %v937 = vunpack.c.l.b16 %v101
  %v938 = vunpack.c.h.b16 %v101
  %v939 = vunpack.c.l.b16 %v102
  %v940 = vunpack.c.h.b16 %v102
  %v941 = vunpack.c.l.b16 %v103
  %v942 = vunpack.c.h.b16 %v103
  %v943 = vunpack.c.l.b16 %v104
  %v944 = vunpack.c.h.b16 %v104
  %v945 = vunpack.c.l.b16 %v105
  %v946 = vunpack.c.h.b16 %v105
  %v947 = vunpack.c.l.b16 %v106
  %v948 = vunpack.c.h.b16 %v106
  %v949 = vunpack.c.l.b16 %v107
  %v950 = vunpack.c.h.b16 %v107
  %v951 = vunpack.c.l.b16 %v108
  %v952 = vunpack.c.h.b16 %v108
  %v953 = vunpack.c.l.b16 %v109
  %v954 = vunpack.c.h.b16 %v109
  %v955 = vunpack.c.l.b16 %v110
  %v956 = vunpack.c.h.b16 %v110
  %v957 = vunpack.c.l.b16 %v111
  %v958 = vunpack.c.h.b16 %v111
  %v959 = vunpack.c.l.b16 %v112
  %v960 = vunpack.c.h.b16 %v112
  %v961 = vunpack.c.l.b16 %v113
  %v962 = vunpack.c.h.b16 %v113
  %v963 = vunpack.c.l.b16 %v114
  %v964 = vunpack.c.h.b16 %v114
  %v965 = vunpack.c.l.b16 %v115
  %v966 = vunpack.c.h.b16 %v115
  %v967 = vunpack.c.l.b16 %v116
  %v968 = vunpack.c.h.b16 %v116
  %v969 = vunpack.c.l.b16 %v117
  %v970 = vunpack.c.h.b16 %v117
  %v971 = vunpack.c.l.b16 %v118
  %v972 = vunpack.c.h.b16 %v118
  %v973 = vunpack.c.l.b16 %v119
  %v974 = vunpack.c.h.b16 %v119
  %v975 = vunpack.c.l.b16 %v120
  %v976 = vunpack.c.h.b16 %v120
  %v977 = vunpack.c.l.b16 %v121
  %v978 = vunpack.c.h.b16 %v121
  %v979 = vunpack.c.l.b16 %v122
  %v980 = vunpack.c.h.b16 %v122
  %v981 = vunpack.c.l.b16 %v123
  %v982 = vunpack.c.h.b16 %v123
  %v983 = vunpack.c.l.b16 %v124
  %v984 = vunpack.c.h.b16 %v124
  %v985 = vunpack.c.l.b16 %v125
  %v986 = vunpack.c.h.b16 %v125
  %v987 = vunpack.c.l.b16 %v126
  %v988 = vunpack.c.h.b16 %v126
  %v989 = vunpack.c.l.b16 %v127
  %v990 = vunpack.c.h.b16 %v127
  %v991 = vunpack.c.l.b16 %v128
  %v992 = vunpack.c.h.b16 %v128
  %v993 = vunpack.c.l.b16 %v129
  %v994 = vunpack.c.h.b16 %v129
  %v995 = vunpack.c.l.b16 %v130
  %v996 = vunpack.c.h.b16 %v130
  %v997 = vunpack.c.l.b16 %v131
  %v998 = vunpack.c.h.b16 %v131
  %v999 = vunpack.c.l.b16 %v132
  %v1000 = vunpack.c.h.b16 %v132
  %v1001 = vunpack.c.l.b16 %v133
  %v1002 = vunpack.c.h.b16 %v133
  %v1003 = vunpack.c.l.b16 %v134
  %v1004 = vunpack.c.h.b16 %v134
  %v1005 = vunpack.c.l.b16 %v135
  %v1006 = vunpack.c.h.b16 %v135
  %v1007 = vunpack.c.l.b16 %v136
  %v1008 = vunpack.c.h.b16 %v136
  %v1009 = vunpack.c.l.b16 %v137
  %v1010 = vunpack.c.h.b16 %v137
  %v1011 = vunpack.c.l.b16 %v138
  %v1012 = vunpack.c.h.b16 %v138
  %v1013 = vunpack.c.l.b16 %v139
  %v1014 = vunpack.c.h.b16 %v139
  %v1015 = vunpack.c.l.b16 %v140
  %v1016 = vunpack.c.h.b16 %v140
  %v1017 = vunpack.c.l.b16 %v141
  %v1018 = vunpack.c.h.b16 %v141
  %v1019 = vunpack.c.l.b16 %v142
  %v1020 = vunpack.c.h.b16 %v142
  %v1021 = vunpack.c.l.b16 %v143
  %v1022 = vunpack.c.h.b16 %v143
  %v1023 = vunpack.c.l.b16 %v144
  %v1024 = vunpack.c.h.b16 %v144
  %v1025 = vunpack.c.l.b16 %v145
  %v1026 = vunpack.c.h.b16 %v145
  %v1027 = vunpack.c.l.b16 %v146
  %v1028 = vunpack.c.h.b16 %v146
  %v1029 = vunpack.c.l.b16 %v147
  %v1030 = vunpack.c.h.b16 %v147
  %v1031 = vunpack.c.l.b16 %v148
  %v1032 = vunpack.c.h.b16 %v148
  %v1033 = vunpack.c.l.b16 %v149
  %v1034 = vunpack.c.h.b16 %v149
  %v1035 = vunpack.c.l.b16 %v150
  %v1036 = vunpack.c.h.b16 %v150
  %v1037 = vunpack.c.l.b16 %v151
  %v1038 = vunpack.c.h.b16 %v151
  %v1039 = vunpack.c.l.b16 %v152
  %v1040 = vunpack.c.h.b16 %v152
  %v1041 = vunpack.c.l.b16 %v153
  %v1042 = vunpack.c.h.b16 %v153
  %v1043 = vunpack.c.l.b16 %v154
  %v1044 = vunpack.c.h.b16 %v154
  %v1045 = vunpack.c.l.b16 %v155
  %v1046 = vunpack.c.h.b16 %v155
  %v1047 = vunpack.c.l.b16 %v156
  %v1048 = vunpack.c.h.b16 %v156
  %v1049 = vunpack.c.l.b16 %v157
  %v1050 = vunpack.c.h.b16 %v157
  %v1051 = vunpack.c.l.b16 %v158
  %v1052 = vunpack.c.h.b16 %v158
  %v1053 = vunpack.c.l.b16 %v159
  %v1054 = vunpack.c.h.b16 %v159
  %v1055 = vunpack.c.l.b16 %v160
  %v1056 = vunpack.c.h.b16 %v160
  %v1057 = vunpack.c.l.b16 %v161
  %v1058 = vunpack.c.h.b16 %v161
  %v1059 = vunpack.c.l.b16 %v162
  %v1060 = vunpack.c.h.b16 %v162
  %v1061 = vunpack.c.l.b16 %v163
  %v1062 = vunpack.c.h.b16 %v163
  %v1063 = vunpack.c.l.b16 %v164
  %v1064 = vunpack.c.h.b16 %v164
  %v1065 = vunpack.c.l.b16 %v165
  %v1066 = vunpack.c.h.b16 %v165
  %v1067 = vunpack.c.l.b16 %v166
  %v1068 = vunpack.c.h.b16 %v166
  %v1069 = vunpack.c.l.b16 %v167
  %v1070 = vunpack.c.h.b16 %v167
  %v1071 = vunpack.c.l.b16 %v168
  %v1072 = vunpack.c.h.b16 %v168
  %v1073 = vunpack.c.l.b16 %v169
  %v1074 = vunpack.c.h.b16 %v169
  %v1075 = vunpack.c.l.b16 %v170
  %v1076 = vunpack.c.h.b16 %v170
  %v1077 = vunpack.c.l.b16 %v171
  %v1078 = vunpack.c.h.b16 %v171
  %v1079 = vunpack.c.l.b16 %v172
  %v1080 = vunpack.c.h.b16 %v172
  %v1081 = vunpack.c.l.b16 %v173
  %v1082 = vunpack.c.h.b16 %v173
  %v1083 = vunpack.c.l.b16 %v174
  %v1084 = vunpack.c.h.b16 %v174
  %v1085 = vunpack.c.l.b16 %v175
  %v1086 = vunpack.c.h.b16 %v175
  %v1087 = vunpack.c.l.b16 %v176
  %v1088 = vunpack.c.h.b16 %v176
  %v1089 = vunpack.c.l.b16 %v177
  %v1090 = vunpack.c.h.b16 %v177
  %v1091 = vunpack.c.l.b16 %v178
  %v1092 = vunpack.c.h.b16 %v178
  %v1093 = vunpack.c.l.b16 %v179
  %v1094 = vunpack.c.h.b16 %v179
  %v1095 = vunpack.c.l.b16 %v180
  %v1096 = vunpack.c.h.b16 %v180
  %v1097 = vunpack.c.l.b16 %v181
  %v1098 = vunpack.c.h.b16 %v181
  %v1099 = vunpack.c.l.b16 %v182
  %v1100 = vunpack.c.h.b16 %v182
  %v1101 = vunpack.c.l.b16 %v183
  %v1102 = vunpack.c.h.b16 %v183
  %v1103 = vunpack.c.l.b16 %v184
  %v1104 = vunpack.c.h.b16 %v184
  %v1105 = vunpack.c.l.b16 %v185
  %v1106 = vunpack.c.h.b16 %v185
  %v1107 = vunpack.c.l.b16 %v186
  %v1108 = vunpack.c.h.b16 %v186
  %v1109 = vunpack.c.l.b16 %v187
  %v1110 = vunpack.c.h.b16 %v187
  %v1111 = vunpack.c.l.b16 %v188
  %v1112 = vunpack.c.h.b16 %v188
  %v1113 = vunpack.c.l.b16 %v189
  %v1114 = vunpack.c.h.b16 %v189
  %v1115 = vunpack.c.l.b16 %v190
  %v1116 = vunpack.c.h.b16 %v190
  %v1117 = vunpack.c.l.b16 %v191
  %v1118 = vunpack.c.h.b16 %v191
  %v1119 = vunpack.c.l.b16 %v192
  %v1120 = vunpack.c.h.b16 %v192
  %v1121 = vunpack.c.l.b16 %v193
  %v1122 = vunpack.c.h.b16 %v193
  %v1123 = vunpack.c.l.b16 %v194
  %v1124 = vunpack.c.h.b16 %v194
  %v1125 = vunpack.c.l.b16 %v195
  %v1126 = vunpack.c.h.b16 %v195
  %v1127 = vunpack.c.l.b16 %v196
  %v1128 = vunpack.c.h.b16 %v196
  %v1129 = vunpack.c.l.b16 %v197
  %v1130 = vunpack.c.h.b16 %v197
  %v1131 = vunpack.c.l.b16 %v198
  %v1132 = vunpack.c.h.b16 %v198
  %v1133 = vunpack.c.l.b16 %v199
  %v1134 = vunpack.c.h.b16 %v199
  %v1135 = vunpack.c.l.b16 %v200
  %v1136 = vunpack.c.h.b16 %v200
  %v1137 = vunpack.c.l.b16 %v201
  %v1138 = vunpack.c.h.b16 %v201
  %v1139 = vunpack.c.l.b16 %v202
  %v1140 = vunpack.c.h.b16 %v202
  %v1141 = vunpack.c.l.b16 %v203
  %v1142 = vunpack.c.h.b16 %v203
  %v1143 = vunpack.c.l.b16 %v204
  %v1144 = vunpack.c.h.b16 %v204
  %v1145 = vunpack.c.l.b16 %v205
  %v1146 = vunpack.c.h.b16 %v205
  %v1147 = vunpack.c.l.b16 %v206
  %v1148 = vunpack.c.h.b16 %v206
  %v1149 = vunpack.c.l.b16 %v207
  %v1150 = vunpack.c.h.b16 %v207
  %v1151 = vunpack.c.l.b16 %v208
  %v1152 = vunpack.c.h.b16 %v208
  %v1153 = vunpack.c.l.b16 %v209
  %v1154 = vunpack.c.h.b16 %v209
  %v1155 = vunpack.c.l.b16 %v210
  %v1156 = vunpack.c.h.b16 %v210
  %v1157 = vunpack.c.l.b16 %v211
  %v1158 = vunpack.c.h.b16 %v211
  %v1159 = vunpack.c.l.b16 %v212
  %v1160 = vunpack.c.h.b16 %v212
  %v1161 = vunpack.c.l.b16 %v213
  %v1162 = vunpack.c.h.b16 %v213
  %v1163 = vunpack.c.l.b16 %v214
  %v1164 = vunpack.c.h.b16 %v214
  %v1165 = vunpack.c.l.b16 %v215
  %v1166 = vunpack.c.h.b16 %v215
  %v1167 = vunpack.c.l.b16 %v216
  %v1168 = vunpack.c.h.b16 %v216
  %v1169 = vunpack.c.l.b16 %v217
  %v1170 = vunpack.c.h.b16 %v217
  %v1171 = vunpack.c.l.b16 %v218
  %v1172 = vunpack.c.h.b16 %v218
  %v1173 = vunpack.c.l.b16 %v219
  %v1174 = vunpack.c.h.b16 %v219
  %v1175 = vunpack.c.l.b16 %v220
  %v1176 = vunpack.c.h.b16 %v220
  %v1177 = vunpack.c.l.b16 %v221
  %v1178 = vunpack.c.h.b16 %v221
  %v1179 = vunpack.c.l.b16 %v222
  %v1180 = vunpack.c.h.b16 %v222
  %v1181 = vunpack.c.l.b16 %v223
  %v1182 = vunpack.c.h.b16 %v223
  %v1183 = vunpack.c.l.b16 %v224
  %v1184 = vunpack.c.h.b16 %v224
  %v1185 = vunpack.c.l.b16 %v225
  %v1186 = vunpack.c.h.b16 %v225
  %v1187 = vunpack.c.l.b16 %v226
  %v1188 = vunpack.c.h.b16 %v226
  %v1189 = vunpack.c.l.b16 %v227
  %v1190 = vunpack.c.h.b16 %v227
  %v1191 = vunpack.c.l.b16 %v228
  %v1192 = vunpack.c.h.b16 %v228
  %v1193 = vunpack.c.l.b16 %v229
  %v1194 = vunpack.c.h.b16 %v229
  %v1195 = vunpack.c.l.b16 %v230
  %v1196 = vunpack.c.h.b16 %v230
  %v1197 = vunpack.c.l.b16 %v231
  %v1198 = vunpack.c.h.b16 %v231
  %v1199 = vunpack.c.l.b16 %v232
  %v1200 = vunpack.c.h.b16 %v232
  %v1201 = vunpack.c.l.b16 %v233
  %v1202 = vunpack.c.h.b16 %v233
  %v1203 = vunpack.c.l.b16 %v234
  %v1204 = vunpack.c.h.b16 %v234
  %v1205 = vunpack.c.l.b16 %v235
  %v1206 = vunpack.c.h.b16 %v235
  %v1207 = vunpack.c.l.b16 %v236
  %v1208 = vunpack.c.h.b16 %v236
  %v1209 = vunpack.c.l.b16 %v237
  %v1210 = vunpack.c.h.b16 %v237
  %v1211 = vunpack.c.l.b16 %v238
  %v1212 = vunpack.c.h.b16 %v238
  %v1213 = vunpack.c.l.b16 %v239
  %v1214 = vunpack.c.h.b16 %v239
  %v1215 = vunpack.c.l.b16 %v240
  %v1216 = vunpack.c.h.b16 %v240
  %v1217 = vunpack.c.l.b16 %v241
  %v1218 = vunpack.c.h.b16 %v241
  %v1219 = vunpack.c.l.b16 %v242
  %v1220 = vunpack.c.h.b16 %v242
  %v1221 = vunpack.c.l.b16 %v243
  %v1222 = vunpack.c.h.b16 %v243
  %v1223 = vunpack.c.l.b16 %v244
  %v1224 = vunpack.c.h.b16 %v244
  %v1225 = vunpack.c.l.b16 %v245
  %v1226 = vunpack.c.h.b16 %v245
  %v1227 = vunpack.c.l.b16 %v246
  %v1228 = vunpack.c.h.b16 %v246
  %v1229 = vunpack.c.l.b16 %v247
  %v1230 = vunpack.c.h.b16 %v247
  %v1231 = vunpack.c.l.b16 %v248
  %v1232 = vunpack.c.h.b16 %v248
  %v1233 = vunpack.c.l.b16 %v249
  %v1234 = vunpack.c.h.b16 %v249
  %v1235 = vunpack.c.l.b16 %v250
  %v1236 = vunpack.c.h.b16 %v250
  %v1237 = vunpack.c.l.b16 %v251
  %v1238 = vunpack.c.h.b16 %v251
  %v1239 = vunpack.c.l.b16 %v252
  %v1240 = vunpack.c.h.b16 %v252
  %v1241 = vunpack.c.l.b16 %v253
  %v1242 = vunpack.c.h.b16 %v253
  %v1243 = vunpack.c.l.b16 %v254
  %v1244 = vunpack.c.h.b16 %v254
  %v1245 = vunpack.c.l.b16 %v255
  %v1246 = vunpack.c.h.b16 %v255
  %v1247 = vunpack.c.l.b16 %v256
  %v1248 = vunpack.c.h.b16 %v256
  %v1249 = vunpack.c.l.b16 %v257
  %v1250 = vunpack.c.h.b16 %v257
  %v1251 = vunpack.c.l.b16 %v258
  %v1252 = vunpack.c.h.b16 %v258
  %v1253 = vunpack.c.l.b16 %v259
  %v1254 = vunpack.c.h.b16 %v259
  %v1255 = vunpack.c.l.b16 %v260
  %v1256 = vunpack.c.h.b16 %v260
  %v1257 = vunpack.c.l.b16 %v261
  %v1258 = vunpack.c.h.b16 %v261
  %v1259 = vunpack.c.l.b16 %v262
  %v1260 = vunpack.c.h.b16 %v262
  %v1261 = vunpack.c.l.b16 %v263
  %v1262 = vunpack.c.h.b16 %v263
  %v1263 = vunpack.c.l.b16 %v264
  %v1264 = vunpack.c.h.b16 %v264
  %v1265 = vunpack.c.l.b16 %v265
  %v1266 = vunpack.c.h.b16 %v265
  %v1267 = vunpack.c.l.b16 %v266
  %v1268 = vunpack.c.h.b16 %v266
  %v1269 = vunpack.c.l.b16 %v267
  %v1270 = vunpack.c.h.b16 %v267
  %v1271 = vunpack.c.l.b16 %v268
  %v1272 = vunpack.c.h.b16 %v268
  %v1273 = vunpack.c.l.b16 %v269
  %v1274 = vunpack.c.h.b16 %v269
  %v1275 = vunpack.c.l.b16 %v270
  %v1276 = vunpack.c.h.b16 %v270
  %v1277 = vunpack.c.l.b16 %v271
  %v1278 = vunpack.c.h.b16 %v271
  %v1279 = vunpack.c.l.b16 %v272
  %v1280 = vunpack.c.h.b16 %v272
  %v1281 = vunpack.c.l.b16 %v273
  %v1282 = vunpack.c.h.b16 %v273
  %v1283 = vunpack.c.l.b16 %v274
  %v1284 = vunpack.c.h.b16 %v274
  %v1285 = vunpack.c.l.b16 %v275
  %v1286 = vunpack.c.h.b16 %v275
  %v1287 = vunpack.c.l.b16 %v276
  %v1288 = vunpack.c.h.b16 %v276
  %v1289 = vunpack.c.l.b16 %v277
  %v1290 = vunpack.c.h.b16 %v277
  %v1291 = vunpack.c.l.b16 %v278
  %v1292 = vunpack.c.h.b16 %v278
  %v1293 = vunpack.c.l.b16 %v279
  %v1294 = vunpack.c.h.b16 %v279
  %v1295 = vunpack.c.l.b16 %v280
  %v1296 = vunpack.c.h.b16 %v280
  %v1297 = vunpack.c.l.b16 %v281
  %v1298 = vunpack.c.h.b16 %v281
  %v1299 = vunpack.c.l.b16 %v282
  %v1300 = vunpack.c.h.b16 %v282
  %v1301 = vunpack.c.l.b16 %v283
  %v1302 = vunpack.c.h.b16 %v283
  %v1303 = vunpack.c.l.b16 %v284
  %v1304 = vunpack.c.h.b16 %v284
  %v1305 = vunpack.c.l.b16 %v285
  %v1306 = vunpack.c.h.b16 %v285
  %v1307 = vunpack.c.l.b16 %v286
  %v1308 = vunpack.c.h.b16 %v286
  %v1309 = vunpack.c.l.b16 %v287
  %v1310 = vunpack.c.h.b16 %v287
  %v1311 = vunpack.c.l.b16 %v288
  %v1312 = vunpack.c.h.b16 %v288
  %v1313 = vunpack.c.l.b16 %v289
  %v1314 = vunpack.c.h.b16 %v289
  %v1315 = vunpack.c.l.b16 %v290
  %v1316 = vunpack.c.h.b16 %v290
  %v1317 = vunpack.c.l.b16 %v291
  %v1318 = vunpack.c.h.b16 %v291
  %v1319 = vunpack.c.l.b16 %v292
  %v1320 = vunpack.c.h.b16 %v292
  %v1321 = vunpack.c.l.b16 %v293
  %v1322 = vunpack.c.h.b16 %v293
  %v1323 = vunpack.c.l.b16 %v294
  %v1324 = vunpack.c.h.b16 %v294
  %v1325 = vunpack.c.l.b16 %v295
  %v1326 = vunpack.c.h.b16 %v295
  %v1327 = vunpack.c.l.b16 %v296
  %v1328 = vunpack.c.h.b16 %v296
  %v1329 = vunpack.c.l.b16 %v297
  %v1330 = vunpack.c.h.b16 %v297
  %v1331 = vunpack.c.l.b16 %v298
  %v1332 = vunpack.c.h.b16 %v298
  %v1333 = vunpack.c.l.b16 %v299
  %v1334 = vunpack.c.h.b16 %v299
  %v1335 = vunpack.c.l.b16 %v300
  %v1336 = vunpack.c.h.b16 %v300
  %v1337 = vunpack.c.l.b16 %v301
  %v1338 = vunpack.c.h.b16 %v301
  %v1339 = vunpack.c.l.b16 %v302
  %v1340 = vunpack.c.h.b16 %v302
  %v1341 = vunpack.c.l.b16 %v303
  %v1342 = vunpack.c.h.b16 %v303
  %v1343 = vunpack.c.l.b16 %v304
  %v1344 = vunpack.c.h.b16 %v304
  %v1345 = vunpack.c.l.b16 %v305
  %v1346 = vunpack.c.h.b16 %v305
  %v1347 = vunpack.c.l.b16 %v306
  %v1348 = vunpack.c.h.b16 %v306
  %v1349 = vunpack.c.l.b16 %v307
  %v1350 = vunpack.c.h.b16 %v307
  %v1351 = vunpack.c.l.b16 %v308
  %v1352 = vunpack.c.h.b16 %v308
  %v1353 = vunpack.c.l.b16 %v309
  %v1354 = vunpack.c.h.b16 %v309
  %v1355 = vunpack.c.l.b16 %v310
  %v1356 = vunpack.c.h.b16 %v310
  %v1357 = vunpack.c.l.b16 %v311
  %v1358 = vunpack.c.h.b16 %v311
  %v1359 = vunpack.c.l.b16 %v312
  %v1360 = vunpack.c.h.b16 %v312
  %v1361 = vunpack.c.l.b16 %v313
  %v1362 = vunpack.c.h.b16 %v313
  %v1363 = vunpack.c.l.b16 %v314
  %v1364 = vunpack.c.h.b16 %v314
  %v1365 = vunpack.c.l.b16 %v315
  %v1366 = vunpack.c.h.b16 %v315
  %v1367 = vunpack.c.l.b16 %v316
  %v1368 = vunpack.c.h.b16 %v316
  %v1369 = vunpack.c.l.b16 %v317
  %v1370 = vunpack.c.h.b16 %v317
  %v1371 = vunpack.c.l.b16 %v318
  %v1372 = vunpack.c.h.b16 %v318
  %v1373 = vunpack.c.l.b16 %v319
  %v1374 = vunpack.c.h.b16 %v319
  %v1375 = vunpack.c.l.b16 %v320
  %v1376 = vunpack.c.h.b16 %v320
  %v1377 = vunpack.c.l.b16 %v321
  %v1378 = vunpack.c.h.b16 %v321
  %v1379 = vunpack.c.l.b16 %v322
  %v1380 = vunpack.c.h.b16 %v322
  %v1381 = vunpack.c.l.b16 %v323
  %v1382 = vunpack.c.h.b16 %v323
  %v1383 = vunpack.c.l.b16 %v324
  %v1384 = vunpack.c.h.b16 %v324
  %v1385 = vunpack.c.l.b16 %v325
  %v1386 = vunpack.c.h.b16 %v325
  %v1387 = vunpack.c.l.b16 %v326
  %v1388 = vunpack.c.h.b16 %v326
  %v1389 = vunpack.c.l.b16 %v327
  %v1390 = vunpack.c.h.b16 %v327
  %v1391 = vunpack.c.l.b16 %v328
  %v1392 = vunpack.c.h.b16 %v328
  %v1393 = vpack.c.b16 %v883, %v881
  %v1394 = vpack.c.b16 %v884, %v882
  %v1395 = vpack.c.b16 %v887, %v885
  %v1396 = vpack.c.b16 %v888, %v886
  %v1397 = vpack.c.b16 %v891, %v889
  %v1398 = vpack.c.b16 %v892, %v890
  %v1399 = vpack.c.b16 %v895, %v893
  %v1400 = vpack.c.b16 %v896, %v894
  %v1401 = vpack.c.b16 %v899, %v897
  %v1402 = vpack.c.b16 %v900, %v898
  %v1403 = vpack.c.b16 %v903, %v901
  %v1404 = vpack.c.b16 %v904, %v902
  %v1405 = vpack.c.b16 %v907, %v905
  %v1406 = vpack.c.b16 %v908, %v906
  %v1407 = vpack.c.b16 %v911, %v909
  %v1408 = vpack.c.b16 %v912, %v910
  %v1409 = vpack.c.b16 %v915, %v913
  %v1410 = vpack.c.b16 %v916, %v914
  %v1411 = vpack.c.b16 %v919, %v917
  %v1412 = vpack.c.b16 %v920, %v918
  %v1413 = vpack.c.b16 %v923, %v921
  %v1414 = vpack.c.b16 %v924, %v922
  %v1415 = vpack.c.b16 %v927, %v925
  %v1416 = vpack.c.b16 %v928, %v926
  %v1417 = vpack.c.b16 %v931, %v929
  %v1418 = vpack.c.b16 %v932, %v930
  %v1419 = vpack.c.b16 %v935, %v933
  %v1420 = vpack.c.b16 %v936, %v934
  %v1421 = vpack.c.b16 %v939, %v937
  %v1422 = vpack.c.b16 %v940, %v938
  %v1423 = vpack.c.b16 %v943, %v941
  %v1424 = vpack.c.b16 %v944, %v942
  %v1425 = vpack.c.b16 %v947, %v945
  %v1426 = vpack.c.b16 %v948, %v946
  %v1427 = vpack.c.b16 %v951, %v949
  %v1428 = vpack.c.b16 %v952, %v950
  %v1429 = vpack.c.b16 %v955, %v953
  %v1430 = vpack.c.b16 %v956, %v954
  %v1431 = vpack.c.b16 %v959, %v957
  %v1432 = vpack.c.b16 %v960, %v958
  %v1433 = vpack.c.b16 %v963, %v961
  %v1434 = vpack.c.b16 %v964, %v962
  %v1435 = vpack.c.b16 %v967, %v965
  %v1436 = vpack.c.b16 %v968, %v966
  %v1437 = vpack.c.b16 %v971, %v969
  %v1438 = vpack.c.b16 %v972, %v970
  %v1439 = vpack.c.b16 %v975, %v973
  %v1440 = vpack.c.b16 %v976, %v974
  %v1441 = vpack.c.b16 %v979, %v977
  %v1442 = vpack.c.b16 %v980, %v978
  %v1443 = vpack.c.b16 %v983, %v981
  %v1444 = vpack.c.b16 %v984, %v982
  %v1445 = vpack.c.b16 %v987, %v985
  %v1446 = vpack.c.b16 %v988, %v986
  %v1447 = vpack.c.b16 %v991, %v989
  %v1448 = vpack.c.b16 %v992, %v990
  %v1449 = vpack.c.b16 %v995, %v993
  %v1450 = vpack.c.b16 %v996, %v994
  %v1451 = vpack.c.b16 %v999, %v997
  %v1452 = vpack.c.b16 %v1000, %v998
  %v1453 = vpack.c.b16 %v1003, %v1001
  %v1454 = vpack.c.b16 %v1004, %v1002
  %v1455 = vpack.c.b16 %v1007, %v1005
  %v1456 = vpack.c.b16 %v1008, %v1006
  %v1457 = vpack.c.b16 %v1011, %v1009
  %v1458 = vpack.c.b16 %v1012, %v1010
  %v1459 = vpack.c.b16 %v1015, %v1013
  %v1460 = vpack.c.b16 %v1016, %v1014
  %v1461 = vpack.c.b16 %v1019, %v1017
  %v1462 = vpack.c.b16 %v1020, %v1018
  %v1463 = vpack.c.b16 %v1023, %v1021
  %v1464 = vpack.c.b16 %v1024, %v1022
  %v1465 = vpack.c.b16 %v1027, %v1025
  %v1466 = vpack.c.b16 %v1028, %v1026
  %v1467 = vpack.c.b16 %v1031, %v1029
  %v1468 = vpack.c.b16 %v1032, %v1030
  %v1469 = vpack.c.b16 %v1035, %v1033
  %v1470 = vpack.c.b16 %v1036, %v1034
  %v1471 = vpack.c.b16 %v1039, %v1037
  %v1472 = vpack.c.b16 %v1040, %v1038
  %v1473 = vpack.c.b16 %v1043, %v1041
  %v1474 = vpack.c.b16 %v1044, %v1042
  %v1475 = vpack.c.b16 %v1047, %v1045
  %v1476 = vpack.c.b16 %v1048, %v1046
  %v1477 = vpack.c.b16 %v1051, %v1049
  %v1478 = vpack.c.b16 %v1052, %v1050
  %v1479 = vpack.c.b16 %v1055, %v1053
  %v1480 = vpack.c.b16 %v1056, %v1054
  %v1481 = vpack.c.b16 %v1059, %v1057
  %v1482 = vpack.c.b16 %v1060, %v1058
  %v1483 = vpack.c.b16 %v1063, %v1061
  %v1484 = vpack.c.b16 %v1064, %v1062
  %v1485 = vpack.c.b16 %v1067, %v1065
  %v1486 = vpack.c.b16 %v1068, %v1066
  %v1487 = vpack.c.b16 %v1071, %v1069
  %v1488 = vpack.c.b16 %v1072, %v1070
  %v1489 = vpack.c.b16 %v1075, %v1073
  %v1490 = vpack.c.b16 %v1076, %v1074
  %v1491 = vpack.c.b16 %v1079, %v1077
  %v1492 = vpack.c.b16 %v1080, %v1078
  %v1493 = vpack.c.b16 %v1083, %v1081
  %v1494 = vpack.c.b16 %v1084, %v1082
  %v1495 = vpack.c.b16 %v1087, %v1085
  %v1496 = vpack.c.b16 %v1088, %v1086
  %v1497 = vpack.c.b16 %v1091, %v1089
  %v1498 = vpack.c.b16 %v1092, %v1090
  %v1499 = vpack.c.b16 %v1095, %v1093
  %v1500 = vpack.c.b16 %v1096, %v1094
  %v1501 = vpack.c.b16 %v1099, %v1097
  %v1502 = vpack.c.b16 %v1100, %v1098
  %v1503 = vpack.c.b16 %v1103, %v1101
  %v1504 = vpack.c.b16 %v1104, %v1102
  %v1505 = vpack.c.b16 %v1107, %v1105
  %v1506 = vpack.c.b16 %v1108, %v1106
  %v1507 = vpack.c.b16 %v1111, %v1109
  %v1508 = vpack.c.b16 %v1112, %v1110
  %v1509 = vpack.c.b16 %v1115, %v1113
  %v1510 = vpack.c.b16 %v1116, %v1114
  %v1511 = vpack.c.b16 %v1119, %v1117
  %v1512 = vpack.c.b16 %v1120, %v1118
  %v1513 = vpack.c.b16 %v1123, %v1121
  %v1514 = vpack.c.b16 %v1124, %v1122
  %v1515 = vpack.c.b16 %v1127, %v1125
  %v1516 = vpack.c.b16 %v1128, %v1126
  %v1517 = vpack.c.b16 %v1131, %v1129
  %v1518 = vpack.c.b16 %v1132, %v1130
  %v1519 = vpack.c.b16 %v1135, %v1133
  %v1520 = vpack.c.b16 %v1136, %v1134
  %v1521 = vpack.c.b16 %v1139, %v1137
  %v1522 = vpack.c.b16 %v1140, %v1138
  %v1523 = vpack.c.b16 %v1143, %v1141
  %v1524 = vpack.c.b16 %v1144, %v1142
  %v1525 = vpack.c.b16 %v1147, %v1145
  %v1526 = vpack.c.b16 %v1148, %v1146
  %v1527 = vpack.c.b16 %v1151, %v1149
  %v1528 = vpack.c.b16 %v1152, %v1150
  %v1529 = vpack.c.b16 %v1155, %v1153
  %v1530 = vpack.c.b16 %v1156, %v1154
  %v1531 = vpack.c.b16 %v1159, %v1157
  %v1532 = vpack.c.b16 %v1160, %v1158
  %v1533 = vpack.c.b16 %v1163, %v1161
  %v1534 = vpack.c.b16 %v1164, %v1162
  %v1535 = vpack.c.b16 %v1167, %v1165
  %v1536 = vpack.c.b16 %v1168, %v1166
  %v1537 = vpack.c.b16 %v1171, %v1169
  %v1538 = vpack.c.b16 %v1172, %v1170
  %v1539 = vpack.c.b16 %v1175, %v1173
  %v1540 = vpack.c.b16 %v1176, %v1174
  %v1541 = vpack.c.b16 %v1179, %v1177
  %v1542 = vpack.c.b16 %v1180, %v1178
  %v1543 = vpack.c.b16 %v1183, %v1181
  %v1544 = vpack.c.b16 %v1184, %v1182
  %v1545 = vpack.c.b16 %v1187, %v1185
  %v1546 = vpack.c.b16 %v1188, %v1186
  %v1547 = vpack.c.b16 %v1191, %v1189
  %v1548 = vpack.c.b16 %v1192, %v1190
  %v1549 = vpack.c.b16 %v1195, %v1193
  %v1550 = vpack.c.b16 %v1196, %v1194
  %v1551 = vpack.c.b16 %v1199, %v1197
  %v1552 = vpack.c.b16 %v1200, %v1198
  %v1553 = vpack.c.b16 %v1203, %v1201
  %v1554 = vpack.c.b16 %v1204, %v1202
  %v1555 = vpack.c.b16 %v1207, %v1205
  %v1556 = vpack.c.b16 %v1208, %v1206
  %v1557 = vpack.c.b16 %v1211, %v1209
  %v1558 = vpack.c.b16 %v1212, %v1210
  %v1559 = vpack.c.b16 %v1215, %v1213
  %v1560 = vpack.c.b16 %v1216, %v1214
  %v1561 = vpack.c.b16 %v1219, %v1217
  %v1562 = vpack.c.b16 %v1220, %v1218
  %v1563 = vpack.c.b16 %v1223, %v1221
  %v1564 = vpack.c.b16 %v1224, %v1222
  %v1565 = vpack.c.b16 %v1227, %v1225
  %v1566 = vpack.c.b16 %v1228, %v1226
  %v1567 = vpack.c.b16 %v1231, %v1229
  %v1568 = vpack.c.b16 %v1232, %v1230
  %v1569 = vpack.c.b16 %v1235, %v1233
  %v1570 = vpack.c.b16 %v1236, %v1234
  %v1571 = vpack.c.b16 %v1239, %v1237
  %v1572 = vpack.c.b16 %v1240, %v1238
  %v1573 = vpack.c.b16 %v1243, %v1241
  %v1574 = vpack.c.b16 %v1244, %v1242
  %v1575 = vpack.c.b16 %v1247, %v1245
  %v1576 = vpack.c.b16 %v1248, %v1246
  %v1577 = vpack.c.b16 %v1251, %v1249
  %v1578 = vpack.c.b16 %v1252, %v1250
  %v1579 = vpack.c.b16 %v1255, %v1253
  %v1580 = vpack.c.b16 %v1256, %v1254
  %v1581 = vpack.c.b16 %v1259, %v1257
  %v1582 = vpack.c.b16 %v1260, %v1258
  %v1583 = vpack.c.b16 %v1263, %v1261
  %v1584 = vpack.c.b16 %v1264, %v1262
  %v1585 = vpack.c.b16 %v1267, %v1265
  %v1586 = vpack.c.b16 %v1268, %v1266
  %v1587 = vpack.c.b16 %v1271, %v1269
  %v1588 = vpack.c.b16 %v1272, %v1270
  %v1589 = vpack.c.b16 %v1275, %v1273
  %v1590 = vpack.c.b16 %v1276, %v1274
  %v1591 = vpack.c.b16 %v1279, %v1277
  %v1592 = vpack.c.b16 %v1280, %v1278
  %v1593 = vpack.c.b16 %v1283, %v1281
  %v1594 = vpack.c.b16 %v1284, %v1282
  %v1595 = vpack.c.b16 %v1287, %v1285
  %v1596 = vpack.c.b16 %v1288, %v1286
  %v1597 = vpack.c.b16 %v1291, %v1289
  %v1598 = vpack.c.b16 %v1292, %v1290
  %v1599 = vpack.c.b16 %v1295, %v1293
  %v1600 = vpack.c.b16 %v1296, %v1294
  %v1601 = vpack.c.b16 %v1299, %v1297
  %v1602 = vpack.c.b16 %v1300, %v1298
  %v1603 = vpack.c.b16 %v1303, %v1301
  %v1604 = vpack.c.b16 %v1304, %v1302
  %v1605 = vpack.c.b16 %v1307, %v1305
  %v1606 = vpack.c.b16 %v1308, %v1306
  %v1607 = vpack.c.b16 %v1311, %v1309
  %v1608 = vpack.c.b16 %v1312, %v1310
  %v1609 = vpack.c.b16 %v1315, %v1313
  %v1610 = vpack.c.b16 %v1316, %v1314
  %v1611 = vpack.c.b16 %v1319, %v1317
  %v1612 = vpack.c.b16 %v1320, %v1318
  %v1613 = vpack.c.b16 %v1323, %v1321
  %v1614 = vpack.c.b16 %v1324, %v1322
  %v1615 = vpack.c.b16 %v1327, %v1325
  %v1616 = vpack.c.b16 %v1328, %v1326
  %v1617 = vpack.c.b16 %v1331, %v1329
  %v1618 = vpack.c.b16 %v1332, %v1330
  %v1619 = vpack.c.b16 %v1335, %v1333
  %v1620 = vpack.c.b16 %v1336, %v1334
  %v1621 = vpack.c.b16 %v1339, %v1337
  %v1622 = vpack.c.b16 %v1340, %v1338
  %v1623 = vpack.c.b16 %v1343, %v1341
  %v1624 = vpack.c.b16 %v1344, %v1342
  %v1625 = vpack.c.b16 %v1347, %v1345
  %v1626 = vpack.c.b16 %v1348, %v1346
  %v1627 = vpack.c.b16 %v1351, %v1349
  %v1628 = vpack.c.b16 %v1352, %v1350
  %v1629 = vpack.c.b16 %v1355, %v1353
  %v1630 = vpack.c.b16 %v1356, %v1354
  %v1631 = vpack.c.b16 %v1359, %v1357
  %v1632 = vpack.c.b16 %v1360, %v1358
  %v1633 = vpack.c.b16 %v1363, %v1361
  %v1634 = vpack.c.b16 %v1364, %v1362
  %v1635 = vpack.c.b16 %v1367, %v1365
  %v1636 = vpack.c.b16 %v1368, %v1366
  %v1637 = vpack.c.b16 %v1371, %v1369
  %v1638 = vpack.c.b16 %v1372, %v1370
  %v1639 = vpack.c.b16 %v1375, %v1373
  %v1640 = vpack.c.b16 %v1376, %v1374
  %v1641 = vpack.c.b16 %v1379, %v1377
  %v1642 = vpack.c.b16 %v1380, %v1378
  %v1643 = vpack.c.b16 %v1383, %v1381
  %v1644 = vpack.c.b16 %v1384, %v1382
  %v1645 = vpack.c.b16 %v1387, %v1385
  %v1646 = vpack.c.b16 %v1388, %v1386
  %v1647 = vpack.c.b16 %v1391, %v1389
  %v1648 = vpack.c.b16 %v1392, %v1390
  %1905 = vmatprep.subr.bf16.mxu0 %v1408
  %1906 = vmatpush1.bf16.msra.mxu0 %v1407
  %1907 = vmatprep.subr.bf16.mxu0 %v1406
  %1908 = vmatpush1.bf16.msra.mxu0 %v1405
  %1909 = vmatprep.subr.bf16.mxu0 %v1404
  %1910 = vmatpush1.bf16.msra.mxu0 %v1403
  %1911 = vmatprep.subr.bf16.mxu0 %v1402
  %1912 = vmatpush1.bf16.msra.mxu0 %v1401
  %1913 = vmatprep.subr.bf16.mxu0 %v1400
  %1914 = vmatpush1.bf16.msra.mxu0 %v1399
  %1915 = vmatprep.subr.bf16.mxu0 %v1398
  %1916 = vmatpush1.bf16.msra.mxu0 %v1397
  %1917 = vmatprep.subr.bf16.mxu0 %v1396
  %1918 = vmatpush1.bf16.msra.mxu0 %v1395
  %1919 = vmatprep.subr.bf16.mxu0 %v1394
  %1920 = vmatpush1.bf16.msra.mxu0 %v1393
  %1921 = vmatprep.subr.bf16.mxu0 %v1424
  %1922 = vmatpush2.bf16.msra.mxu0 %v1423
  %1923 = vmatprep.subr.bf16.mxu0 %v1422
  %1924 = vmatpush2.bf16.msra.mxu0 %v1421
  %1925 = vmatprep.subr.bf16.mxu0 %v1420
  %1926 = vmatpush2.bf16.msra.mxu0 %v1419
  %1927 = vmatprep.subr.bf16.mxu0 %v1418
  %1928 = vmatpush2.bf16.msra.mxu0 %v1417
  %1929 = vmatprep.subr.bf16.mxu0 %v1416
  %1930 = vmatpush2.bf16.msra.mxu0 %v1415
  %1931 = vmatprep.subr.bf16.mxu0 %v1414
  %1932 = vmatpush2.bf16.msra.mxu0 %v1413
  %1933 = vmatprep.subr.bf16.mxu0 %v1412
  %1934 = vmatpush2.bf16.msra.mxu0 %v1411
  %1935 = vmatprep.subr.bf16.mxu0 %v1410
  %1936 = vmatpush2.bf16.msra.mxu0 %v1409
  %1937 = vmatprep.mubr.bf16.mxu0 %v498
  %1938 = vmatmul.mubr.bf16.gmra.mxu0 %v497
  %v1939 = vpop.f32.mrf.mxu0
  %v1940 = vadd.f32 0.0, %v1939
  %v1941 = vpop.f32.mrf.mxu0
  %v1942 = vadd.f32 0.0, %v1941
  %v1943 = vpop.f32.mrf.mxu0
  %v1944 = vadd.f32 0.0, %v1943
  %v1945 = vpop.f32.mrf.mxu0
  %v1946 = vadd.f32 0.0, %v1945
  %1947 = vmatprep.mubr.bf16.mxu0 %v514
  %1948 = vmatmul.mubr.bf16.gmra.mxu0 %v513
  %v1949 = vpop.f32.mrf.mxu0
  %v1950 = vadd.f32 0.0, %v1949
  %v1951 = vpop.f32.mrf.mxu0
  %v1952 = vadd.f32 0.0, %v1951
  %v1953 = vpop.f32.mrf.mxu0
  %v1954 = vadd.f32 0.0, %v1953
  %v1955 = vpop.f32.mrf.mxu0
  %v1956 = vadd.f32 0.0, %v1955
  %1957 = vmatprep.mubr.bf16.mxu0 %v530
  %1958 = vmatmul.mubr.bf16.gmra.mxu0 %v529
  %v1959 = vpop.f32.mrf.mxu0
  %v1960 = vadd.f32 0.0, %v1959
  %v1961 = vpop.f32.mrf.mxu0
  %v1962 = vadd.f32 0.0, %v1961
  %v1963 = vpop.f32.mrf.mxu0
  %v1964 = vadd.f32 0.0, %v1963
  %v1965 = vpop.f32.mrf.mxu0
  %v1966 = vadd.f32 0.0, %v1965
  %1967 = vmatprep.mubr.bf16.mxu0 %v546
  %1968 = vmatmul.mubr.bf16.gmra.mxu0 %v545
  %v1969 = vpop.f32.mrf.mxu0
  %v1970 = vadd.f32 0.0, %v1969
  %v1971 = vpop.f32.mrf.mxu0
  %v1972 = vadd.f32 0.0, %v1971
  %v1973 = vpop.f32.mrf.mxu0
  %v1974 = vpop.f32.mrf.mxu0
  %1975 = vdwg.mxu0
  %1976 = vmatprep.subr.bf16.mxu0 %v1440
  %1977 = vmatpush1.bf16.msra.mxu0 %v1439
  %1978 = vmatprep.subr.bf16.mxu0 %v1438
  %1979 = vmatpush1.bf16.msra.mxu0 %v1437
  %1980 = vmatprep.subr.bf16.mxu0 %v1436
  %1981 = vmatpush1.bf16.msra.mxu0 %v1435
  %1982 = vmatprep.subr.bf16.mxu0 %v1434
  %1983 = vmatpush1.bf16.msra.mxu0 %v1433
  %1984 = vmatprep.subr.bf16.mxu0 %v1432
  %1985 = vmatpush1.bf16.msra.mxu0 %v1431
  %1986 = vmatprep.subr.bf16.mxu0 %v1430
  %1987 = vmatpush1.bf16.msra.mxu0 %v1429
  %1988 = vmatprep.subr.bf16.mxu0 %v1428
  %1989 = vmatpush1.bf16.msra.mxu0 %v1427
  %1990 = vmatprep.subr.bf16.mxu0 %v1426
  %1991 = vmatpush1.bf16.msra.mxu0 %v1425
  %1992 = vmatprep.subr.bf16.mxu0 %v1456
  %1993 = vmatpush2.bf16.msra.mxu0 %v1455
  %1994 = vmatprep.subr.bf16.mxu0 %v1454
  %1995 = vmatpush2.bf16.msra.mxu0 %v1453
  %1996 = vmatprep.subr.bf16.mxu0 %v1452
  %1997 = vmatpush2.bf16.msra.mxu0 %v1451
  %1998 = vmatprep.subr.bf16.mxu0 %v1450
  %1999 = vmatpush2.bf16.msra.mxu0 %v1449
  %2000 = vmatprep.subr.bf16.mxu0 %v1448
  %2001 = vmatpush2.bf16.msra.mxu0 %v1447
  %2002 = vmatprep.subr.bf16.mxu0 %v1446
  %2003 = vmatpush2.bf16.msra.mxu0 %v1445
  %2004 = vmatprep.subr.bf16.mxu0 %v1444
  %2005 = vmatpush2.bf16.msra.mxu0 %v1443
  %2006 = vmatprep.subr.bf16.mxu0 %v1442
  %2007 = vmatpush2.bf16.msra.mxu0 %v1441
  %2008 = vmatprep.mubr.bf16.mxu0 %v500
  %2009 = vmatmul.mubr.bf16.gmra.mxu0 %v499
  %v2010 = vpop.f32.mrf.mxu0
  %v2011 = vadd.f32 %v1940, %v2010
  %v2012 = vpop.f32.mrf.mxu0
  %v2013 = vadd.f32 %v1942, %v2012
  %v2014 = vpop.f32.mrf.mxu0
  %v2015 = vadd.f32 %v1944, %v2014
  %v2016 = vpop.f32.mrf.mxu0
  %v2017 = vadd.f32 %v1946, %v2016
  %2018 = vmatprep.mubr.bf16.mxu0 %v516
  %2019 = vmatmul.mubr.bf16.gmra.mxu0 %v515
  %v2020 = vpop.f32.mrf.mxu0
  %v2021 = vadd.f32 %v1950, %v2020
  %v2022 = vpop.f32.mrf.mxu0
  %v2023 = vadd.f32 %v1952, %v2022
  %v2024 = vpop.f32.mrf.mxu0
  %v2025 = vadd.f32 %v1954, %v2024
  %v2026 = vpop.f32.mrf.mxu0
  %v2027 = vadd.f32 %v1956, %v2026
  %2028 = vmatprep.mubr.bf16.mxu0 %v532
  %2029 = vmatmul.mubr.bf16.gmra.mxu0 %v531
  %v2030 = vpop.f32.mrf.mxu0
  %v2031 = vadd.f32 %v1960, %v2030
  %v2032 = vpop.f32.mrf.mxu0
  %v2033 = vadd.f32 %v1962, %v2032
  %v2034 = vpop.f32.mrf.mxu0
  %v2035 = vadd.f32 %v1964, %v2034
  %v2036 = vpop.f32.mrf.mxu0
  %v2037 = vadd.f32 %v1966, %v2036
  %2038 = vmatprep.mubr.bf16.mxu0 %v548
  %2039 = vmatmul.mubr.bf16.gmra.mxu0 %v547
  %v2040 = vpop.f32.mrf.mxu0
  %v2041 = vadd.f32 %v1970, %v2040
  %v2042 = vpop.f32.mrf.mxu0
  %v2043 = vadd.f32 %v1972, %v2042
  %v2044 = vpop.f32.mrf.mxu0
  %v2045 = vpop.f32.mrf.mxu0
  %2046 = vdwg.mxu0
  %2047 = vmatprep.subr.bf16.mxu0 %v1472
  %2048 = vmatpush1.bf16.msra.mxu0 %v1471
  %2049 = vmatprep.subr.bf16.mxu0 %v1470
  %2050 = vmatpush1.bf16.msra.mxu0 %v1469
  %2051 = vmatprep.subr.bf16.mxu0 %v1468
  %2052 = vmatpush1.bf16.msra.mxu0 %v1467
  %2053 = vmatprep.subr.bf16.mxu0 %v1466
  %2054 = vmatpush1.bf16.msra.mxu0 %v1465
  %2055 = vmatprep.subr.bf16.mxu0 %v1464
  %2056 = vmatpush1.bf16.msra.mxu0 %v1463
  %2057 = vmatprep.subr.bf16.mxu0 %v1462
  %2058 = vmatpush1.bf16.msra.mxu0 %v1461
  %2059 = vmatprep.subr.bf16.mxu0 %v1460
  %2060 = vmatpush1.bf16.msra.mxu0 %v1459
  %2061 = vmatprep.subr.bf16.mxu0 %v1458
  %2062 = vmatpush1.bf16.msra.mxu0 %v1457
  %2063 = vmatprep.subr.bf16.mxu0 %v1488
  %2064 = vmatpush2.bf16.msra.mxu0 %v1487
  %2065 = vmatprep.subr.bf16.mxu0 %v1486
  %2066 = vmatpush2.bf16.msra.mxu0 %v1485
  %2067 = vmatprep.subr.bf16.mxu0 %v1484
  %2068 = vmatpush2.bf16.msra.mxu0 %v1483
  %2069 = vmatprep.subr.bf16.mxu0 %v1482
  %2070 = vmatpush2.bf16.msra.mxu0 %v1481
  %2071 = vmatprep.subr.bf16.mxu0 %v1480
  %2072 = vmatpush2.bf16.msra.mxu0 %v1479
  %2073 = vmatprep.subr.bf16.mxu0 %v1478
  %2074 = vmatpush2.bf16.msra.mxu0 %v1477
  %2075 = vmatprep.subr.bf16.mxu0 %v1476
  %2076 = vmatpush2.bf16.msra.mxu0 %v1475
  %2077 = vmatprep.subr.bf16.mxu0 %v1474
  %2078 = vmatpush2.bf16.msra.mxu0 %v1473
  %2079 = vmatprep.mubr.bf16.mxu0 %v502
  %2080 = vmatmul.mubr.bf16.gmra.mxu0 %v501
  %v2081 = vpop.f32.mrf.mxu0
  %v2082 = vadd.f32 %v2011, %v2081
  %v2083 = vpop.f32.mrf.mxu0
  %v2084 = vadd.f32 %v2013, %v2083
  %v2085 = vpop.f32.mrf.mxu0
  %v2086 = vadd.f32 %v2015, %v2085
  %v2087 = vpop.f32.mrf.mxu0
  %v2088 = vadd.f32 %v2017, %v2087
  %2089 = vmatprep.mubr.bf16.mxu0 %v518
  %2090 = vmatmul.mubr.bf16.gmra.mxu0 %v517
  %v2091 = vpop.f32.mrf.mxu0
  %v2092 = vadd.f32 %v2021, %v2091
  %v2093 = vpop.f32.mrf.mxu0
  %v2094 = vadd.f32 %v2023, %v2093
  %v2095 = vpop.f32.mrf.mxu0
  %v2096 = vadd.f32 %v2025, %v2095
  %v2097 = vpop.f32.mrf.mxu0
  %v2098 = vadd.f32 %v2027, %v2097
  %2099 = vmatprep.mubr.bf16.mxu0 %v534
  %2100 = vmatmul.mubr.bf16.gmra.mxu0 %v533
  %v2101 = vpop.f32.mrf.mxu0
  %v2102 = vadd.f32 %v2031, %v2101
  %v2103 = vpop.f32.mrf.mxu0
  %v2104 = vadd.f32 %v2033, %v2103
  %v2105 = vpop.f32.mrf.mxu0
  %v2106 = vadd.f32 %v2035, %v2105
  %v2107 = vpop.f32.mrf.mxu0
  %v2108 = vadd.f32 %v2037, %v2107
  %2109 = vmatprep.mubr.bf16.mxu0 %v550
  %2110 = vmatmul.mubr.bf16.gmra.mxu0 %v549
  %v2111 = vpop.f32.mrf.mxu0
  %v2112 = vadd.f32 %v2041, %v2111
  %v2113 = vpop.f32.mrf.mxu0
  %v2114 = vadd.f32 %v2043, %v2113
  %v2115 = vpop.f32.mrf.mxu0
  %v2116 = vpop.f32.mrf.mxu0
  %2117 = vdwg.mxu0
  %2118 = vmatprep.subr.bf16.mxu0 %v1504
  %2119 = vmatpush1.bf16.msra.mxu0 %v1503
  %2120 = vmatprep.subr.bf16.mxu0 %v1502
  %2121 = vmatpush1.bf16.msra.mxu0 %v1501
  %2122 = vmatprep.subr.bf16.mxu0 %v1500
  %2123 = vmatpush1.bf16.msra.mxu0 %v1499
  %2124 = vmatprep.subr.bf16.mxu0 %v1498
  %2125 = vmatpush1.bf16.msra.mxu0 %v1497
  %2126 = vmatprep.subr.bf16.mxu0 %v1496
  %2127 = vmatpush1.bf16.msra.mxu0 %v1495
  %2128 = vmatprep.subr.bf16.mxu0 %v1494
  %2129 = vmatpush1.bf16.msra.mxu0 %v1493
  %2130 = vmatprep.subr.bf16.mxu0 %v1492
  %2131 = vmatpush1.bf16.msra.mxu0 %v1491
  %2132 = vmatprep.subr.bf16.mxu0 %v1490
  %2133 = vmatpush1.bf16.msra.mxu0 %v1489
  %2134 = vmatprep.subr.bf16.mxu0 %v1520
  %2135 = vmatpush2.bf16.msra.mxu0 %v1519
  %2136 = vmatprep.subr.bf16.mxu0 %v1518
  %2137 = vmatpush2.bf16.msra.mxu0 %v1517
  %2138 = vmatprep.subr.bf16.mxu0 %v1516
  %2139 = vmatpush2.bf16.msra.mxu0 %v1515
  %2140 = vmatprep.subr.bf16.mxu0 %v1514
  %2141 = vmatpush2.bf16.msra.mxu0 %v1513
  %2142 = vmatprep.subr.bf16.mxu0 %v1512
  %2143 = vmatpush2.bf16.msra.mxu0 %v1511
  %2144 = vmatprep.subr.bf16.mxu0 %v1510
  %2145 = vmatpush2.bf16.msra.mxu0 %v1509
  %2146 = vmatprep.subr.bf16.mxu0 %v1508
  %2147 = vmatpush2.bf16.msra.mxu0 %v1507
  %2148 = vmatprep.subr.bf16.mxu0 %v1506
  %2149 = vmatpush2.bf16.msra.mxu0 %v1505
  %2150 = vmatprep.mubr.bf16.mxu0 %v504
  %2151 = vmatmul.mubr.bf16.gmra.mxu0 %v503
  %v2152 = vpop.f32.mrf.mxu0
  %v2153 = vadd.f32 %v2082, %v2152
  %v2154 = vpop.f32.mrf.mxu0
  %v2155 = vadd.f32 %v2084, %v2154
  %v2156 = vpop.f32.mrf.mxu0
  %v2157 = vadd.f32 %v2086, %v2156
  %v2158 = vpop.f32.mrf.mxu0
  %v2159 = vadd.f32 %v2088, %v2158
  %2160 = vmatprep.mubr.bf16.mxu0 %v520
  %2161 = vmatmul.mubr.bf16.gmra.mxu0 %v519
  %v2162 = vpop.f32.mrf.mxu0
  %v2163 = vadd.f32 %v2092, %v2162
  %v2164 = vpop.f32.mrf.mxu0
  %v2165 = vadd.f32 %v2094, %v2164
  %v2166 = vpop.f32.mrf.mxu0
  %v2167 = vadd.f32 %v2096, %v2166
  %v2168 = vpop.f32.mrf.mxu0
  %v2169 = vadd.f32 %v2098, %v2168
  %2170 = vmatprep.mubr.bf16.mxu0 %v536
  %2171 = vmatmul.mubr.bf16.gmra.mxu0 %v535
  %v2172 = vpop.f32.mrf.mxu0
  %v2173 = vadd.f32 %v2102, %v2172
  %v2174 = vpop.f32.mrf.mxu0
  %v2175 = vadd.f32 %v2104, %v2174
  %v2176 = vpop.f32.mrf.mxu0
  %v2177 = vadd.f32 %v2106, %v2176
  %v2178 = vpop.f32.mrf.mxu0
  %v2179 = vadd.f32 %v2108, %v2178
  %2180 = vmatprep.mubr.bf16.mxu0 %v552
  %2181 = vmatmul.mubr.bf16.gmra.mxu0 %v551
  %v2182 = vpop.f32.mrf.mxu0
  %v2183 = vadd.f32 %v2112, %v2182
  %v2184 = vpop.f32.mrf.mxu0
  %v2185 = vadd.f32 %v2114, %v2184
  %v2186 = vpop.f32.mrf.mxu0
  %v2187 = vpop.f32.mrf.mxu0
  %2188 = vdwg.mxu0
  %2189 = vmatprep.subr.bf16.mxu0 %v1536
  %2190 = vmatpush1.bf16.msra.mxu0 %v1535
  %2191 = vmatprep.subr.bf16.mxu0 %v1534
  %2192 = vmatpush1.bf16.msra.mxu0 %v1533
  %2193 = vmatprep.subr.bf16.mxu0 %v1532
  %2194 = vmatpush1.bf16.msra.mxu0 %v1531
  %2195 = vmatprep.subr.bf16.mxu0 %v1530
  %2196 = vmatpush1.bf16.msra.mxu0 %v1529
  %2197 = vmatprep.subr.bf16.mxu0 %v1528
  %2198 = vmatpush1.bf16.msra.mxu0 %v1527
  %2199 = vmatprep.subr.bf16.mxu0 %v1526
  %2200 = vmatpush1.bf16.msra.mxu0 %v1525
  %2201 = vmatprep.subr.bf16.mxu0 %v1524
  %2202 = vmatpush1.bf16.msra.mxu0 %v1523
  %2203 = vmatprep.subr.bf16.mxu0 %v1522
  %2204 = vmatpush1.bf16.msra.mxu0 %v1521
  %2205 = vmatprep.subr.bf16.mxu0 %v1552
  %2206 = vmatpush2.bf16.msra.mxu0 %v1551
  %2207 = vmatprep.subr.bf16.mxu0 %v1550
  %2208 = vmatpush2.bf16.msra.mxu0 %v1549
  %2209 = vmatprep.subr.bf16.mxu0 %v1548
  %2210 = vmatpush2.bf16.msra.mxu0 %v1547
  %2211 = vmatprep.subr.bf16.mxu0 %v1546
  %2212 = vmatpush2.bf16.msra.mxu0 %v1545
  %2213 = vmatprep.subr.bf16.mxu0 %v1544
  %2214 = vmatpush2.bf16.msra.mxu0 %v1543
  %2215 = vmatprep.subr.bf16.mxu0 %v1542
  %2216 = vmatpush2.bf16.msra.mxu0 %v1541
  %2217 = vmatprep.subr.bf16.mxu0 %v1540
  %2218 = vmatpush2.bf16.msra.mxu0 %v1539
  %2219 = vmatprep.subr.bf16.mxu0 %v1538
  %2220 = vmatpush2.bf16.msra.mxu0 %v1537
  %2221 = vmatprep.mubr.bf16.mxu0 %v506
  %2222 = vmatmul.mubr.bf16.gmra.mxu0 %v505
  %v2223 = vpop.f32.mrf.mxu0
  %v2224 = vadd.f32 %v2153, %v2223
  %v2225 = vpop.f32.mrf.mxu0
  %v2226 = vadd.f32 %v2155, %v2225
  %v2227 = vpop.f32.mrf.mxu0
  %v2228 = vadd.f32 %v2157, %v2227
  %v2229 = vpop.f32.mrf.mxu0
  %v2230 = vadd.f32 %v2159, %v2229
  %2231 = vmatprep.mubr.bf16.mxu0 %v522
  %2232 = vmatmul.mubr.bf16.gmra.mxu0 %v521
  %v2233 = vpop.f32.mrf.mxu0
  %v2234 = vadd.f32 %v2163, %v2233
  %v2235 = vpop.f32.mrf.mxu0
  %v2236 = vadd.f32 %v2165, %v2235
  %v2237 = vpop.f32.mrf.mxu0
  %v2238 = vadd.f32 %v2167, %v2237
  %v2239 = vpop.f32.mrf.mxu0
  %v2240 = vadd.f32 %v2169, %v2239
  %2241 = vmatprep.mubr.bf16.mxu0 %v538
  %2242 = vmatmul.mubr.bf16.gmra.mxu0 %v537
  %v2243 = vpop.f32.mrf.mxu0
  %v2244 = vadd.f32 %v2173, %v2243
  %v2245 = vpop.f32.mrf.mxu0
  %v2246 = vadd.f32 %v2175, %v2245
  %v2247 = vpop.f32.mrf.mxu0
  %v2248 = vadd.f32 %v2177, %v2247
  %v2249 = vpop.f32.mrf.mxu0
  %v2250 = vadd.f32 %v2179, %v2249
  %2251 = vmatprep.mubr.bf16.mxu0 %v554
  %2252 = vmatmul.mubr.bf16.gmra.mxu0 %v553
  %v2253 = vpop.f32.mrf.mxu0
  %v2254 = vadd.f32 %v2183, %v2253
  %v2255 = vpop.f32.mrf.mxu0
  %v2256 = vadd.f32 %v2185, %v2255
  %v2257 = vpop.f32.mrf.mxu0
  %v2258 = vpop.f32.mrf.mxu0
  %2259 = vdwg.mxu0
  %2260 = vmatprep.subr.bf16.mxu0 %v1568
  %2261 = vmatpush1.bf16.msra.mxu0 %v1567
  %2262 = vmatprep.subr.bf16.mxu0 %v1566
  %2263 = vmatpush1.bf16.msra.mxu0 %v1565
  %2264 = vmatprep.subr.bf16.mxu0 %v1564
  %2265 = vmatpush1.bf16.msra.mxu0 %v1563
  %2266 = vmatprep.subr.bf16.mxu0 %v1562
  %2267 = vmatpush1.bf16.msra.mxu0 %v1561
  %2268 = vmatprep.subr.bf16.mxu0 %v1560
  %2269 = vmatpush1.bf16.msra.mxu0 %v1559
  %2270 = vmatprep.subr.bf16.mxu0 %v1558
  %2271 = vmatpush1.bf16.msra.mxu0 %v1557
  %2272 = vmatprep.subr.bf16.mxu0 %v1556
  %2273 = vmatpush1.bf16.msra.mxu0 %v1555
  %2274 = vmatprep.subr.bf16.mxu0 %v1554
  %2275 = vmatpush1.bf16.msra.mxu0 %v1553
  %2276 = vmatprep.subr.bf16.mxu0 %v1584
  %2277 = vmatpush2.bf16.msra.mxu0 %v1583
  %2278 = vmatprep.subr.bf16.mxu0 %v1582
  %2279 = vmatpush2.bf16.msra.mxu0 %v1581
  %2280 = vmatprep.subr.bf16.mxu0 %v1580
  %2281 = vmatpush2.bf16.msra.mxu0 %v1579
  %2282 = vmatprep.subr.bf16.mxu0 %v1578
  %2283 = vmatpush2.bf16.msra.mxu0 %v1577
  %2284 = vmatprep.subr.bf16.mxu0 %v1576
  %2285 = vmatpush2.bf16.msra.mxu0 %v1575
  %2286 = vmatprep.subr.bf16.mxu0 %v1574
  %2287 = vmatpush2.bf16.msra.mxu0 %v1573
  %2288 = vmatprep.subr.bf16.mxu0 %v1572
  %2289 = vmatpush2.bf16.msra.mxu0 %v1571
  %2290 = vmatprep.subr.bf16.mxu0 %v1570
  %2291 = vmatpush2.bf16.msra.mxu0 %v1569
  %2292 = vmatprep.mubr.bf16.mxu0 %v508
  %2293 = vmatmul.mubr.bf16.gmra.mxu0 %v507
  %v2294 = vpop.f32.mrf.mxu0
  %v2295 = vadd.f32 %v2224, %v2294
  %v2296 = vpop.f32.mrf.mxu0
  %v2297 = vadd.f32 %v2226, %v2296
  %v2298 = vpop.f32.mrf.mxu0
  %v2299 = vadd.f32 %v2228, %v2298
  %v2300 = vpop.f32.mrf.mxu0
  %v2301 = vadd.f32 %v2230, %v2300
  %2302 = vmatprep.mubr.bf16.mxu0 %v524
  %2303 = vmatmul.mubr.bf16.gmra.mxu0 %v523
  %v2304 = vpop.f32.mrf.mxu0
  %v2305 = vadd.f32 %v2234, %v2304
  %v2306 = vpop.f32.mrf.mxu0
  %v2307 = vadd.f32 %v2236, %v2306
  %v2308 = vpop.f32.mrf.mxu0
  %v2309 = vadd.f32 %v2238, %v2308
  %v2310 = vpop.f32.mrf.mxu0
  %v2311 = vadd.f32 %v2240, %v2310
  %2312 = vmatprep.mubr.bf16.mxu0 %v540
  %2313 = vmatmul.mubr.bf16.gmra.mxu0 %v539
  %v2314 = vpop.f32.mrf.mxu0
  %v2315 = vadd.f32 %v2244, %v2314
  %v2316 = vpop.f32.mrf.mxu0
  %v2317 = vadd.f32 %v2246, %v2316
  %v2318 = vpop.f32.mrf.mxu0
  %v2319 = vadd.f32 %v2248, %v2318
  %v2320 = vpop.f32.mrf.mxu0
  %v2321 = vadd.f32 %v2250, %v2320
  %2322 = vmatprep.mubr.bf16.mxu0 %v556
  %2323 = vmatmul.mubr.bf16.gmra.mxu0 %v555
  %v2324 = vpop.f32.mrf.mxu0
  %v2325 = vadd.f32 %v2254, %v2324
  %v2326 = vpop.f32.mrf.mxu0
  %v2327 = vadd.f32 %v2256, %v2326
  %v2328 = vpop.f32.mrf.mxu0
  %v2329 = vpop.f32.mrf.mxu0
  %2330 = vdwg.mxu0
  %2331 = vmatprep.subr.bf16.mxu0 %v1600
  %2332 = vmatpush1.bf16.msra.mxu0 %v1599
  %2333 = vmatprep.subr.bf16.mxu0 %v1598
  %2334 = vmatpush1.bf16.msra.mxu0 %v1597
  %2335 = vmatprep.subr.bf16.mxu0 %v1596
  %2336 = vmatpush1.bf16.msra.mxu0 %v1595
  %2337 = vmatprep.subr.bf16.mxu0 %v1594
  %2338 = vmatpush1.bf16.msra.mxu0 %v1593
  %2339 = vmatprep.subr.bf16.mxu0 %v1592
  %2340 = vmatpush1.bf16.msra.mxu0 %v1591
  %2341 = vmatprep.subr.bf16.mxu0 %v1590
  %2342 = vmatpush1.bf16.msra.mxu0 %v1589
  %2343 = vmatprep.subr.bf16.mxu0 %v1588
  %2344 = vmatpush1.bf16.msra.mxu0 %v1587
  %2345 = vmatprep.subr.bf16.mxu0 %v1586
  %2346 = vmatpush1.bf16.msra.mxu0 %v1585
  %2347 = vmatprep.subr.bf16.mxu0 %v1616
  %2348 = vmatpush2.bf16.msra.mxu0 %v1615
  %2349 = vmatprep.subr.bf16.mxu0 %v1614
  %2350 = vmatpush2.bf16.msra.mxu0 %v1613
  %2351 = vmatprep.subr.bf16.mxu0 %v1612
  %2352 = vmatpush2.bf16.msra.mxu0 %v1611
  %2353 = vmatprep.subr.bf16.mxu0 %v1610
  %2354 = vmatpush2.bf16.msra.mxu0 %v1609
  %2355 = vmatprep.subr.bf16.mxu0 %v1608
  %2356 = vmatpush2.bf16.msra.mxu0 %v1607
  %2357 = vmatprep.subr.bf16.mxu0 %v1606
  %2358 = vmatpush2.bf16.msra.mxu0 %v1605
  %2359 = vmatprep.subr.bf16.mxu0 %v1604
  %2360 = vmatpush2.bf16.msra.mxu0 %v1603
  %2361 = vmatprep.subr.bf16.mxu0 %v1602
  %2362 = vmatpush2.bf16.msra.mxu0 %v1601
  %2363 = vmatprep.mubr.bf16.mxu0 %v510
  %2364 = vmatmul.mubr.bf16.gmra.mxu0 %v509
  %v2365 = vpop.f32.mrf.mxu0
  %v2366 = vadd.f32 %v2295, %v2365
  %v2367 = vpop.f32.mrf.mxu0
  %v2368 = vadd.f32 %v2297, %v2367
  %v2369 = vpop.f32.mrf.mxu0
  %v2370 = vadd.f32 %v2299, %v2369
  %v2371 = vpop.f32.mrf.mxu0
  %v2372 = vadd.f32 %v2301, %v2371
  %2373 = vmatprep.mubr.bf16.mxu0 %v526
  %2374 = vmatmul.mubr.bf16.gmra.mxu0 %v525
  %v2375 = vpop.f32.mrf.mxu0
  %v2376 = vadd.f32 %v2305, %v2375
  %v2377 = vpop.f32.mrf.mxu0
  %v2378 = vadd.f32 %v2307, %v2377
  %v2379 = vpop.f32.mrf.mxu0
  %v2380 = vadd.f32 %v2309, %v2379
  %v2381 = vpop.f32.mrf.mxu0
  %v2382 = vadd.f32 %v2311, %v2381
  %2383 = vmatprep.mubr.bf16.mxu0 %v542
  %2384 = vmatmul.mubr.bf16.gmra.mxu0 %v541
  %v2385 = vpop.f32.mrf.mxu0
  %v2386 = vadd.f32 %v2315, %v2385
  %v2387 = vpop.f32.mrf.mxu0
  %v2388 = vadd.f32 %v2317, %v2387
  %v2389 = vpop.f32.mrf.mxu0
  %v2390 = vadd.f32 %v2319, %v2389
  %v2391 = vpop.f32.mrf.mxu0
  %v2392 = vadd.f32 %v2321, %v2391
  %2393 = vmatprep.mubr.bf16.mxu0 %v558
  %2394 = vmatmul.mubr.bf16.gmra.mxu0 %v557
  %v2395 = vpop.f32.mrf.mxu0
  %v2396 = vadd.f32 %v2325, %v2395
  %v2397 = vpop.f32.mrf.mxu0
  %v2398 = vadd.f32 %v2327, %v2397
  %v2399 = vpop.f32.mrf.mxu0
  %v2400 = vpop.f32.mrf.mxu0
  %2401 = vdwg.mxu0
  %2402 = vmatprep.subr.bf16.mxu0 %v1632
  %2403 = vmatpush1.bf16.msra.mxu0 %v1631
  %2404 = vmatprep.subr.bf16.mxu0 %v1630
  %2405 = vmatpush1.bf16.msra.mxu0 %v1629
  %2406 = vmatprep.subr.bf16.mxu0 %v1628
  %2407 = vmatpush1.bf16.msra.mxu0 %v1627
  %2408 = vmatprep.subr.bf16.mxu0 %v1626
  %2409 = vmatpush1.bf16.msra.mxu0 %v1625
  %2410 = vmatprep.subr.bf16.mxu0 %v1624
  %2411 = vmatpush1.bf16.msra.mxu0 %v1623
  %2412 = vmatprep.subr.bf16.mxu0 %v1622
  %2413 = vmatpush1.bf16.msra.mxu0 %v1621
  %2414 = vmatprep.subr.bf16.mxu0 %v1620
  %2415 = vmatpush1.bf16.msra.mxu0 %v1619
  %2416 = vmatprep.subr.bf16.mxu0 %v1618
  %2417 = vmatpush1.bf16.msra.mxu0 %v1617
  %2418 = vmatprep.subr.bf16.mxu0 %v1648
  %2419 = vmatpush2.bf16.msra.mxu0 %v1647
  %2420 = vmatprep.subr.bf16.mxu0 %v1646
  %2421 = vmatpush2.bf16.msra.mxu0 %v1645
  %2422 = vmatprep.subr.bf16.mxu0 %v1644
  %2423 = vmatpush2.bf16.msra.mxu0 %v1643
  %2424 = vmatprep.subr.bf16.mxu0 %v1642
  %2425 = vmatpush2.bf16.msra.mxu0 %v1641
  %2426 = vmatprep.subr.bf16.mxu0 %v1640
  %2427 = vmatpush2.bf16.msra.mxu0 %v1639
  %2428 = vmatprep.subr.bf16.mxu0 %v1638
  %2429 = vmatpush2.bf16.msra.mxu0 %v1637
  %2430 = vmatprep.subr.bf16.mxu0 %v1636
  %2431 = vmatpush2.bf16.msra.mxu0 %v1635
  %2432 = vmatprep.subr.bf16.mxu0 %v1634
  %2433 = vmatpush2.bf16.msra.mxu0 %v1633
  %2434 = vmatprep.mubr.bf16.mxu0 %v512
  %2435 = vmatmul.mubr.bf16.gmra.mxu0 %v511
  %v2436 = vpop.f32.mrf.mxu0
  %v2437 = vadd.f32 %v2366, %v2436
  %v2438 = vpop.f32.mrf.mxu0
  %v2439 = vadd.f32 %v2368, %v2438
  %v2440 = vpop.f32.mrf.mxu0
  %v2441 = vadd.f32 %v2370, %v2440
  %v2442 = vpop.f32.mrf.mxu0
  %v2443 = vadd.f32 %v2372, %v2442
  %2444 = vmatprep.mubr.bf16.mxu0 %v528
  %2445 = vmatmul.mubr.bf16.gmra.mxu0 %v527
  %v2446 = vpop.f32.mrf.mxu0
  %v2447 = vadd.f32 %v2376, %v2446
  %v2448 = vpop.f32.mrf.mxu0
  %v2449 = vadd.f32 %v2378, %v2448
  %v2450 = vpop.f32.mrf.mxu0
  %v2451 = vadd.f32 %v2380, %v2450
  %v2452 = vpop.f32.mrf.mxu0
  %v2453 = vadd.f32 %v2382, %v2452
  %2454 = vmatprep.mubr.bf16.mxu0 %v544
  %2455 = vmatmul.mubr.bf16.gmra.mxu0 %v543
  %v2456 = vpop.f32.mrf.mxu0
  %v2457 = vadd.f32 %v2386, %v2456
  %v2458 = vpop.f32.mrf.mxu0
  %v2459 = vadd.f32 %v2388, %v2458
  %v2460 = vpop.f32.mrf.mxu0
  %v2461 = vadd.f32 %v2390, %v2460
  %v2462 = vpop.f32.mrf.mxu0
  %v2463 = vadd.f32 %v2392, %v2462
  %2464 = vmatprep.mubr.bf16.mxu0 %v560
  %2465 = vmatmul.mubr.bf16.gmra.mxu0 %v559
  %v2466 = vpop.f32.mrf.mxu0
  %v2467 = vadd.f32 %v2396, %v2466
  %v2468 = vpop.f32.mrf.mxu0
  %v2469 = vadd.f32 %v2398, %v2468
  %v2470 = vpop.f32.mrf.mxu0
  %v2471 = vpop.f32.mrf.mxu0
  %2472 = vdwg.mxu0
  %v2473 = vadd.f32 %v2437, %v2441
  %v2474 = vadd.f32 %v2473, %v2447
  %v2475 = vadd.f32 %v2474, %v2451
  %v2476 = vadd.f32 %v2475, %v2457
  %v2477 = vadd.f32 %v2476, %v2461
  %vm2478 = vcmask 1041408
  %v2479 = vsel %vm2478, %v2467, 0.0
  %v2480 = vadd.f32 %v2477, %v2479
  %v2481 = vrot.slane %v2480, 4
  %v2482 = vadd.f32 %v2480, %v2481
  %v2483 = vrot.slane %v2482, 2
  %v2484 = vadd.f32 %v2482, %v2483
  %v2485 = vrot.slane %v2484, 1
  %v2486 = vadd.f32 %v2484, %v2485
  %v2487 = vadd.f32 %v2439, %v2443
  %v2488 = vadd.f32 %v2487, %v2449
  %v2489 = vadd.f32 %v2488, %v2453
  %v2490 = vadd.f32 %v2489, %v2459
  %v2491 = vadd.f32 %v2490, %v2463
  %v2492 = vsel %vm2478, %v2469, 0.0
  %v2493 = vadd.f32 %v2491, %v2492
  %v2494 = vrot.slane %v2493, 4
  %v2495 = vadd.f32 %v2493, %v2494
  %v2496 = vrot.slane %v2495, 2
  %v2497 = vadd.f32 %v2495, %v2496
  %v2498 = vrot.slane %v2497, 1
  %v2499 = vadd.f32 %v2497, %v2498
  %v2500 = vmul.f32 %v2486, 0.02
  %v2501 = vmul.f32 %v2499, 0.02
  %v2502 = vsub.f32 %v2437, %v2500
  %v2503 = vsub.f32 %v2439, %v2501
  %v2504 = vsub.f32 %v2441, %v2500
  %v2505 = vsub.f32 %v2443, %v2501
  %v2506 = vsub.f32 %v2447, %v2500
  %v2507 = vsub.f32 %v2449, %v2501
  %v2508 = vsub.f32 %v2451, %v2500
  %v2509 = vsub.f32 %v2453, %v2501
  %v2510 = vsub.f32 %v2457, %v2500
  %v2511 = vsub.f32 %v2459, %v2501
  %v2512 = vsub.f32 %v2461, %v2500
  %v2513 = vsub.f32 %v2463, %v2501
  %v2514 = vsub.f32 %v2467, %v2500
  %v2515 = vsub.f32 %v2469, %v2501
  %v2516 = vmul.f32 %v2502, %v2502
  %v2517 = vmul.f32 %v2503, %v2503
  %v2518 = vmul.f32 %v2504, %v2504
  %v2519 = vmul.f32 %v2505, %v2505
  %v2520 = vmul.f32 %v2506, %v2506
  %v2521 = vmul.f32 %v2507, %v2507
  %v2522 = vmul.f32 %v2508, %v2508
  %v2523 = vmul.f32 %v2509, %v2509
  %v2524 = vmul.f32 %v2510, %v2510
  %v2525 = vmul.f32 %v2511, %v2511
  %v2526 = vmul.f32 %v2512, %v2512
  %v2527 = vmul.f32 %v2513, %v2513
  %v2528 = vmul.f32 %v2514, %v2514
  %v2529 = vmul.f32 %v2515, %v2515
  %v2530 = vadd.f32 %v2516, %v2518
  %v2531 = vadd.f32 %v2530, %v2520
  %v2532 = vadd.f32 %v2531, %v2522
  %v2533 = vadd.f32 %v2532, %v2524
  %v2534 = vadd.f32 %v2533, %v2526
  %v2535 = vsel %vm2478, %v2528, 0.0
  %v2536 = vadd.f32 %v2534, %v2535
  %v2537 = vrot.slane %v2536, 4
  %v2538 = vadd.f32 %v2536, %v2537
  %v2539 = vrot.slane %v2538, 2
  %v2540 = vadd.f32 %v2538, %v2539
  %v2541 = vrot.slane %v2540, 1
  %v2542 = vadd.f32 %v2540, %v2541
  %v2543 = vadd.f32 %v2517, %v2519
  %v2544 = vadd.f32 %v2543, %v2521
  %v2545 = vadd.f32 %v2544, %v2523
  %v2546 = vadd.f32 %v2545, %v2525
  %v2547 = vadd.f32 %v2546, %v2527
  %v2548 = vsel %vm2478, %v2529, 0.0
  %v2549 = vadd.f32 %v2547, %v2548
  %v2550 = vrot.slane %v2549, 4
  %v2551 = vadd.f32 %v2549, %v2550
  %v2552 = vrot.slane %v2551, 2
  %v2553 = vadd.f32 %v2551, %v2552
  %v2554 = vrot.slane %v2553, 1
  %v2555 = vadd.f32 %v2553, %v2554
  %v2556 = vmul.f32 %v2542, 0.02
  %v2557 = vmul.f32 %v2555, 0.02
  %v2558 = vld [vmem:[%s2] sm:$0x3]
  %v2559 = vadd.f32 %v2556, 1e-05
  %v2560 = vadd.f32 %v2557, 1e-05
  %v2561 = vrsqrt.pop %v2559
  %v2562 = vrsqrt.pop %v2560
  %v2565 = vcombine.low %v2561, %v2562
  %v2567 = vunpack.c.l.s4 1966171168
  %v2568 = vunpack.c.0.s8 %v2567
  %v2569 = vlaneseq
  %v2570 = vshrl.u32 %v2569, 7
  %v2571 = vsub.s32 %v2568, %v2570
  %v2572 = vrot.slane %v2565, %v2571
  %v2574 = vunpack.c.l.s4 1966171168
  %v2575 = vunpack.c.0.s8 %v2574
  %v2576 = vlaneseq
  %v2577 = vshrl.u32 %v2576, 7
  %v2578 = vsub.s32 %v2575, %v2577
  %v2579 = vrot.slane %v2572, %v2578
  %v2581 = vmul.f32 %v2558, %v2579
  %v2583 = vlaneseq
  %v2584 = vshrl.u32 %v2583, 7
  %v2585 = vsub.s32 0, %v2584
  %v2586 = vrot.slane %v2581, %v2585
  %v2587 = vlaneseq
  %v2588 = vshrl.u32 %v2587, 7
  %v2589 = vsub.s32 1, %v2588
  %v2590 = vrot.slane %v2581, %v2589
  %v2593 = vmul.f32 %v2502, %v2586
  %v2594 = vmul.f32 %v2503, %v2590
  %v2595 = vmul.f32 %v2504, %v2586
  %v2596 = vmul.f32 %v2505, %v2590
  %v2597 = vmul.f32 %v2506, %v2586
  %v2598 = vmul.f32 %v2507, %v2590
  %v2599 = vmul.f32 %v2508, %v2586
  %v2600 = vmul.f32 %v2509, %v2590
  %v2601 = vmul.f32 %v2510, %v2586
  %v2602 = vmul.f32 %v2511, %v2590
  %v2603 = vmul.f32 %v2512, %v2586
  %v2604 = vmul.f32 %v2513, %v2590
  %v2605 = vmul.f32 %v2514, %v2586
  %v2606 = vmul.f32 %v2515, %v2590
  %v2607 = vld [vmem:[%s3] sm:$0x3]
  %v2609 = vlaneseq
  %v2610 = vshrl.u32 %v2609, 7
  %v2611 = vsub.s32 0, %v2610
  %v2612 = vrot.slane %v2607, %v2611
  %v2613 = vlaneseq
  %v2614 = vshrl.u32 %v2613, 7
  %v2615 = vsub.s32 1, %v2614
  %v2616 = vrot.slane %v2607, %v2615
  %v2619 = vadd.f32 %v2593, %v2612
  %v2620 = vadd.f32 %v2594, %v2616
  %v2621 = vadd.f32 %v2595, %v2612
  %v2622 = vadd.f32 %v2596, %v2616
  %v2623 = vadd.f32 %v2597, %v2612
  %v2624 = vadd.f32 %v2598, %v2616
  %v2625 = vadd.f32 %v2599, %v2612
  %v2626 = vadd.f32 %v2600, %v2616
  %v2627 = vadd.f32 %v2601, %v2612
  %v2628 = vadd.f32 %v2602, %v2616
  %v2629 = vadd.f32 %v2603, %v2612
  %v2630 = vadd.f32 %v2604, %v2616
  %v2631 = vadd.f32 %v2605, %v2612
  %v2632 = vadd.f32 %v2606, %v2616
  %v2633 = vmax.f32 %v2619, 0.0
  %v2634 = vmax.f32 %v2620, 0.0
  %v2635 = vmax.f32 %v2621, 0.0
  %v2636 = vmax.f32 %v2622, 0.0
  %v2637 = vmax.f32 %v2623, 0.0
  %v2638 = vmax.f32 %v2624, 0.0
  %v2639 = vmax.f32 %v2625, 0.0
  %v2640 = vmax.f32 %v2626, 0.0
  %v2641 = vmax.f32 %v2627, 0.0
  %v2642 = vmax.f32 %v2628, 0.0
  %v2643 = vmax.f32 %v2629, 0.0
  %v2644 = vmax.f32 %v2630, 0.0
  %v2645 = vmax.f32 %v2631, 0.0
  %v2646 = vmax.f32 %v2632, 0.0
  %v2647 = vpack.c.bf16 %v2635, %v2633
  %v2648 = vpack.c.bf16 %v2636, %v2634
  %v2649 = vpack.c.bf16 %v2639, %v2637
  %v2650 = vpack.c.bf16 %v2640, %v2638
  %v2651 = vpack.c.bf16 %v2643, %v2641
  %v2652 = vpack.c.bf16 %v2644, %v2642
  %v2653 = vpack.c.bf16 %v2645, %v2645
  %v2654 = vpack.c.bf16 %v2646, %v2646
  %v2663 = vunpack.c.l.b16 %v2647
  %v2664 = vunpack.c.l.b16 %v2648
  %v2665 = vunpack.c.h.b16 %v2647
  %v2666 = vunpack.c.h.b16 %v2648
  %v2667 = vunpack.c.l.b16 %v2649
  %v2668 = vunpack.c.l.b16 %v2650
  %v2669 = vunpack.c.h.b16 %v2649
  %v2670 = vunpack.c.h.b16 %v2650
  %v2671 = vunpack.c.l.b16 %v2651
  %v2672 = vunpack.c.l.b16 %v2652
  %v2673 = vunpack.c.h.b16 %v2651
  %v2674 = vunpack.c.h.b16 %v2652
  %v2675 = vunpack.c.l.b16 %v2653
  %v2676 = vunpack.c.l.b16 %v2654
  %v2677 = vpack.c.b16 %v2664, %v2663
  %v2678 = vpack.c.b16 %v2666, %v2665
  %v2679 = vpack.c.b16 %v2668, %v2667
  %v2680 = vpack.c.b16 %v2670, %v2669
  %v2681 = vpack.c.b16 %v2672, %v2671
  %v2682 = vpack.c.b16 %v2674, %v2673
  %v2683 = vpack.c.b16 %v2676, %v2675
  %2691 = vst [vmem:[%s4] sm:$0xff] %v2677
  %2692 = vst [vmem:[%s4 + $0x8] sm:$0xff] %v2678
  %2693 = vst [vmem:[%s4 + $0x10] sm:$0xff] %v2679
  %2694 = vst [vmem:[%s4 + $0x18] sm:$0xff] %v2680
  %2695 = vst [vmem:[%s4 + $0x20] sm:$0xff] %v2681
  %2696 = vst [vmem:[%s4 + $0x28] sm:$0xff] %v2682
  %2697 = vst [vmem:[%s4 + $0x30] sm:$0x11] %v2683
  // Predicated region
  $region18: #{encoder_a_forward.8} parent=0 // pred_check
    _
  $region19: #{encoder_a_forward.8} parent=0 // pred_check_branch
    %2699 = sbr.rel (0) target = $region21
  $region20: #{encoder_a_forward.8} parent=0 // pred_region
    _
  $region21: #{encoder_a_forward.8} parent=0 // pred_fallthru
    _
  // Predicated region
  $region22: #{encoder_a_forward.8} parent=0 // pred_check
    _
  $region23: #{encoder_a_forward.8} parent=0 // pred_check_branch
    %2701 = sbr.rel (0) target = $region25
  $region24: #{encoder_a_forward.8} parent=0 // pred_region
    _
  $region25: #{encoder_a_forward.8} parent=0 // pred_fallthru
    _

// kernel: encoder_a_forward.9
$region0: #{encoder_a_forward.9}
  #allocation0 [shape = 'u32[]', space=smem, size = 0x4, offset = 0x4, fixed_abs, tag = 'smem constant byte address 0x4 - core index']
  #allocation1 [shape = 'u32[144,128]{1,0:T(1,128)}', space=vmem, size = 0x12000, scoped, tag = 'internal scratch']
  #allocation2 [shape = 'f32[8,512]{1,0:T(8,128)}', space=vmem, size = 0x4000, scoped, tag = 'scratch operand']
  %s0 = inlined_call_operand.vmem [shape: bf16[8,6400], index: 0, kind: input, shape index: {}]
  %s1 = inlined_call_operand.vmem [shape: bf16[6400,512], index: 1, kind: input, shape index: {}]
  %s2 = inlined_call_operand.vmem [shape: f32[1,512], index: 2, kind: input, shape index: {}]
  %s3 = inlined_call_operand.vmem [shape: bf16[512,128], index: 3, kind: input, shape index: {}]
  %s4 = inlined_call_operand.vmem [shape: f32[1,128], index: 4, kind: input, shape index: {}]
  %s5 = inlined_call_operand.vmem [shape: f32[8,128], index: 5, kind: output, shape index: {}]
  %s6 = sld [smem:[#allocation0]]
  $region61: #{encoder_a_forward.9} parent=0
    _
  %s8 = ssub.s32 1, %s6
  %s9 = scalar_select 0, %s8, %s6
  loop: start=0, step=1, limit=7
  $region2: #{encoder_a_forward.9} parent=0 // loop_pre_header
    _
  $region3: #{encoder_a_forward.9} parent=0 // loop_header
    %s11 = sphi 0, %s15
    %p12 = scmp.ge.s32.totalorder %s11, 7
    %s21 = sphi 0, %s23
    %s24 = sphi 0, %s21
    %s25 = sphi 0, %s24
    %s41 = sphi 0, %s25
    %s47 = sphi 0, %s49
    %s50 = sphi 0, %s47
    %s51 = sphi 0, %s50
    %s67 = sphi 0, %s51
    %s71 = sphi 0, %s71
    %s73 = sphi 0, %s71
    %s74 = sphi 0, %s73
    %s88 = sphi 0, %s74
    %s92 = sphi 0, %s92
    %s94 = sphi 0, %s92
    %s95 = sphi 0, %s94
    %s109 = sphi 0, %s95
    %s113 = sphi 0, %s113
    %s115 = sphi 0, %s113
    %s116 = sphi 0, %s115
    %s130 = sphi 0, %s116
    %s134 = sphi 0, %s134
    %s136 = sphi 0, %s134
    %s137 = sphi 0, %s136
    %s151 = sphi 0, %s137
  $region4: #{encoder_a_forward.9} parent=0 // loop_header_branch
    %14 = sbr.rel (%p12) target = $region8
  $region5: #{encoder_a_forward.9} parent=0 // loop_body
    %s16 = ssub.s32 %s11, 1
    %s17 = ssub.s32 %s11, 2
    %s18 = sadd.s32 %s11, 1
    %s19 = ssub.s32 %s11, %s18
    %p20 = scmp.eq.s32.totalorder %s19, 0
    %s22 = sadd.s32 %s21, 1
    %s23 = scalar_select %p20, %s21, %s22
    %p26 = pneg %p20
    %p27 = scmp.eq.s32.totalorder %s11, 4
    %p28 = por %p26, %p27
    %p29 = scmp.ne.s32.totalorder %s21, %s24
    %p30 = scmp.eq.s32.totalorder %s11, 0
    %p31 = por %p29, %p30
    %p32 = scmp.ne.s32.totalorder %s21, %s24
    %p33 = scmp.eq.s32.totalorder %s16, 4
    %p34 = por %p32, %p33
    %p35 = scmp.ne.s32.totalorder %s24, %s25
    %p36 = scmp.eq.s32.totalorder %s16, 0
    %p37 = por %p35, %p36
    %p38 = scmp.ne.s32.totalorder %s24, %s25
    %p39 = scmp.eq.s32.totalorder %s17, 4
    %p40 = por %p38, %p39
    %p42 = scmp.ne.s32.totalorder %s25, %s41
    %p43 = scmp.eq.s32.totalorder %s17, 0
    %p44 = por %p42, %p43
    %s45 = ssub.s32 %s11, %s18
    %p46 = scmp.eq.s32.totalorder %s45, 0
    %s48 = sadd.s32 %s47, 1
    %s49 = scalar_select %p46, %s47, %s48
    %p52 = pneg %p46
    %p53 = scmp.eq.s32.totalorder %s11, 4
    %p54 = por %p52, %p53
    %p55 = scmp.ne.s32.totalorder %s47, %s50
    %p56 = scmp.eq.s32.totalorder %s11, 0
    %p57 = por %p55, %p56
    %p58 = scmp.ne.s32.totalorder %s47, %s50
    %p59 = scmp.eq.s32.totalorder %s16, 4
    %p60 = por %p58, %p59
    %p61 = scmp.ne.s32.totalorder %s50, %s51
    %p62 = scmp.eq.s32.totalorder %s16, 0
    %p63 = por %p61, %p62
    %p64 = scmp.ne.s32.totalorder %s50, %s51
    %p65 = scmp.eq.s32.totalorder %s17, 4
    %p66 = por %p64, %p65
    %p68 = scmp.ne.s32.totalorder %s51, %s67
    %p69 = scmp.eq.s32.totalorder %s17, 0
    %p70 = por %p68, %p69
    %s72 = sadd.s32 %s71, 1
    %p75 = scmp.eq.s32.totalorder %s11, 4
    %p76 = scmp.ne.s32.totalorder %s71, %s73
    %p77 = scmp.eq.s32.totalorder %s11, 0
    %p78 = por %p76, %p77
    %p79 = scmp.ne.s32.totalorder %s71, %s73
    %p80 = scmp.eq.s32.totalorder %s16, 4
    %p81 = por %p79, %p80
    %p82 = scmp.ne.s32.totalorder %s73, %s74
    %p83 = scmp.eq.s32.totalorder %s16, 0
    %p84 = por %p82, %p83
    %p85 = scmp.ne.s32.totalorder %s73, %s74
    %p86 = scmp.eq.s32.totalorder %s17, 4
    %p87 = por %p85, %p86
    %p89 = scmp.ne.s32.totalorder %s74, %s88
    %p90 = scmp.eq.s32.totalorder %s17, 0
    %p91 = por %p89, %p90
    %s93 = sadd.s32 %s92, 1
    %p96 = scmp.eq.s32.totalorder %s11, 4
    %p97 = scmp.ne.s32.totalorder %s92, %s94
    %p98 = scmp.eq.s32.totalorder %s11, 0
    %p99 = por %p97, %p98
    %p100 = scmp.ne.s32.totalorder %s92, %s94
    %p101 = scmp.eq.s32.totalorder %s16, 4
    %p102 = por %p100, %p101
    %p103 = scmp.ne.s32.totalorder %s94, %s95
    %p104 = scmp.eq.s32.totalorder %s16, 0
    %p105 = por %p103, %p104
    %p106 = scmp.ne.s32.totalorder %s94, %s95
    %p107 = scmp.eq.s32.totalorder %s17, 4
    %p108 = por %p106, %p107
    %p110 = scmp.ne.s32.totalorder %s95, %s109
    %p111 = scmp.eq.s32.totalorder %s17, 0
    %p112 = por %p110, %p111
    %s114 = sadd.s32 %s113, 1
    %p117 = scmp.eq.s32.totalorder %s11, 4
    %p118 = scmp.ne.s32.totalorder %s113, %s115
    %p119 = scmp.eq.s32.totalorder %s11, 0
    %p120 = por %p118, %p119
    %p121 = scmp.ne.s32.totalorder %s113, %s115
    %p122 = scmp.eq.s32.totalorder %s16, 4
    %p123 = por %p121, %p122
    %p124 = scmp.ne.s32.totalorder %s115, %s116
    %p125 = scmp.eq.s32.totalorder %s16, 0
    %p126 = por %p124, %p125
    %p127 = scmp.ne.s32.totalorder %s115, %s116
    %p128 = scmp.eq.s32.totalorder %s17, 4
    %p129 = por %p127, %p128
    %p131 = scmp.ne.s32.totalorder %s116, %s130
    %p132 = scmp.eq.s32.totalorder %s17, 0
    %p133 = por %p131, %p132
    %s135 = sadd.s32 %s134, 1
    %p138 = scmp.eq.s32.totalorder %s11, 4
    %p139 = scmp.ne.s32.totalorder %s134, %s136
    %p140 = scmp.eq.s32.totalorder %s11, 0
    %p141 = por %p139, %p140
    %p142 = scmp.ne.s32.totalorder %s134, %s136
    %p143 = scmp.eq.s32.totalorder %s16, 4
    %p144 = por %p142, %p143
    %p145 = scmp.ne.s32.totalorder %s136, %s137
    %p146 = scmp.eq.s32.totalorder %s16, 0
    %p147 = por %p145, %p146
    %p148 = scmp.ne.s32.totalorder %s136, %s137
    %p149 = scmp.eq.s32.totalorder %s17, 4
    %p150 = por %p148, %p149
    %p152 = scmp.ne.s32.totalorder %s137, %s151
    %p153 = scmp.eq.s32.totalorder %s17, 0
    %p154 = por %p152, %p153
    %p155 = scmp.le.s32.totalorder 1, %s11
    %p156 = scmp.lt.s32.totalorder %s11, 6
    %p157 = pnand %p155, %p156
    %p158 = pneg %p157
    // Predicated region
    $region9: #{encoder_a_forward.9} parent=5 // pred_check
      _
    $region10: #{encoder_a_forward.9} parent=5 // pred_check_branch
      %160 = sbr.rel (%p157) target = $region12
    $region11: #{encoder_a_forward.9} parent=5 // pred_region
      %s161 = ssub.s32 %s11, 1
      // Predicated region
      $region13: #{encoder_a_forward.9} parent=11 // pred_check
        %p162 = pneg %p84
      $region14: #{encoder_a_forward.9} parent=11 // pred_check_branch
        %164 = sbr.rel (%p162) target = $region16
      $region15: #{encoder_a_forward.9} parent=11 // pred_region
        _
      $region16: #{encoder_a_forward.9} parent=11 // pred_fallthru
        _
      // Predicated region
      $region17: #{encoder_a_forward.9} parent=11 // pred_check
        %p165 = pneg %p105
      $region18: #{encoder_a_forward.9} parent=11 // pred_check_branch
        %167 = sbr.rel (%p165) target = $region20
      $region19: #{encoder_a_forward.9} parent=11 // pred_region
        _
      $region20: #{encoder_a_forward.9} parent=11 // pred_fallthru
        _
      // Predicated region
      $region21: #{encoder_a_forward.9} parent=11 // pred_check
        %p168 = pneg %p126
      $region22: #{encoder_a_forward.9} parent=11 // pred_check_branch
        %170 = sbr.rel (%p168) target = $region24
      $region23: #{encoder_a_forward.9} parent=11 // pred_region
        _
      $region24: #{encoder_a_forward.9} parent=11 // pred_fallthru
        _
    $region12: #{encoder_a_forward.9} parent=5 // pred_fallthru
      _
    %p171 = scmp.lt.s32.totalorder %s11, 5
    // Predicated region
    $region25: #{encoder_a_forward.9} parent=5 // pred_check
      %p172 = pneg %p171
    $region26: #{encoder_a_forward.9} parent=5 // pred_check_branch
      %174 = sbr.rel (%p172) target = $region28
    $region27: #{encoder_a_forward.9} parent=5 // pred_region
      // Predicated region
      $region29: #{encoder_a_forward.9} parent=27 // pred_check
        %p175 = pneg %p31
      $region30: #{encoder_a_forward.9} parent=27 // pred_check_branch
        %177 = sbr.rel (%p175) target = $region32
      $region31: #{encoder_a_forward.9} parent=27 // pred_region
        %s178 = smul.u32 10, %s11
        %p179 = scmp.lt.s32.totalorder %s178, 49
        %s180 = scalar_select %p179, %s178, 49
        %s181 = smul.addr %s180, 4
        %s182 = scalar_lea.vmem %s0, %s181
        %s183 = smul.u32 10, %s11
      $region32: #{encoder_a_forward.9} parent=27 // pred_fallthru
        _
      // Predicated region
      $region33: #{encoder_a_forward.9} parent=27 // pred_check
        %p184 = pneg %p57
      $region34: #{encoder_a_forward.9} parent=27 // pred_check_branch
        %186 = sbr.rel (%p184) target = $region36
      $region35: #{encoder_a_forward.9} parent=27 // pred_region
        %s187 = smul.u32 160, %s11
        %p188 = scmp.lt.s32.totalorder %s187, 799
        %s189 = scalar_select %p188, %s187, 799
        %s190 = smul.addr %s189, 4
        %s191 = smul.addr %s190, 4
        %s192 = scalar_lea.vmem %s1, %s191
        %s193 = smul.u32 160, %s11
      $region36: #{encoder_a_forward.9} parent=27 // pred_fallthru
        _
    $region28: #{encoder_a_forward.9} parent=5 // pred_fallthru
      _
    %p194 = scmp.le.s32.totalorder 1, %s11
    %p195 = scmp.lt.s32.totalorder %s11, 6
    %p196 = pnand %p194, %p195
    %p197 = pneg %p196
    // Predicated region
    $region37: #{encoder_a_forward.9} parent=5 // pred_check
      _
    $region38: #{encoder_a_forward.9} parent=5 // pred_check_branch
      %199 = sbr.rel (%p196) target = $region40
    $region39: #{encoder_a_forward.9} parent=5 // pred_region
      %s200 = ssub.s32 %s11, 1
      %s201 = smul.u32 10, %s16
      %p202 = scmp.lt.s32.totalorder %s201, 49
      %s203 = scalar_select %p202, %s201, 49
      %s204 = smul.addr %s203, 4
      %s205 = scalar_lea.vmem %s0, %s204
      %p206 = pneg %p37
      %p207 = pneg %p34
      %s208 = smul.u32 160, %s16
      %p209 = scmp.lt.s32.totalorder %s208, 799
      %s210 = scalar_select %p209, %s208, 799
      %s211 = smul.addr %s210, 4
      %s212 = smul.addr %s211, 4
      %s213 = scalar_lea.vmem %s1, %s212
      %p214 = pneg %p63
      %p215 = pneg %p60
      %p216 = pneg %p84
      %p217 = pneg %p81
      %p218 = pneg %p105
      %p219 = pneg %p102
      %p220 = pneg %p126
      %p221 = pneg %p123
      %p222 = pneg %p147
      %p223 = pneg %p144
      %s224 = smul.u32 10, %s16
      %p225 = scmp.lt.s32.totalorder %s224, 49
      %s226 = scalar_select %p225, %s224, 49
      %s227 = smul.addr %s226, 4
      %s228 = scalar_lea.vmem %s0, %s227
      %s229 = smul.u32 10, %s16
      %s230 = smul.u32 160, %s16
      %p231 = scmp.lt.s32.totalorder %s230, 799
      %s232 = scalar_select %p231, %s230, 799
      %s233 = smul.addr %s232, 4
      %s234 = smul.addr %s233, 4
      %s235 = scalar_lea.vmem %s1, %s234
      %s236 = smul.u32 160, %s16
      %p238 = scmp.eq.s32.totalorder %s16, 0
      // Predicated region
      $region41: #{encoder_a_forward.9} parent=39 // pred_check
        %p239 = pneg %p238
      $region42: #{encoder_a_forward.9} parent=39 // pred_check_branch
        %241 = sbr.rel (%p239) target = $region44
      $region43: #{encoder_a_forward.9} parent=39 // pred_region
        %242 = vst [vmem:[#allocation2] sm:$0xff] 0.0
        %243 = vst [vmem:[#allocation2 + $0x8] sm:$0xff] 0.0
        %244 = vst [vmem:[#allocation2 + $0x10] sm:$0xff] 0.0
        %245 = vst [vmem:[#allocation2 + $0x18] sm:$0xff] 0.0
      $region44: #{encoder_a_forward.9} parent=39 // pred_fallthru
        _
      %v246 = vld [vmem:[#allocation2] sm:$0xff]
      %v247 = vld [vmem:[#allocation2 + $0x8] sm:$0xff]
      %v248 = vld [vmem:[#allocation2 + $0x10] sm:$0xff]
      %v249 = vld [vmem:[#allocation2 + $0x18] sm:$0xff]
      %v250 = vld [vmem:[%s228] sm:$0xff]
      %v251 = vld [vmem:[%s228 + $0x8] sm:$0xff]
      %v252 = vld [vmem:[%s228 + $0x10] sm:$0xff]
      %v253 = vld [vmem:[%s228 + $0x18] sm:$0xff]
      %v254 = vld [vmem:[%s228 + $0x20] sm:$0xff]
      %v255 = vld [vmem:[%s235] sm:$0xff]
      %v256 = vld [vmem:[%s235 + $0x8] sm:$0xff]
      %v257 = vld [vmem:[%s235 + $0x10] sm:$0xff]
      %v258 = vld [vmem:[%s235 + $0x18] sm:$0xff]
      %v259 = vld [vmem:[%s235 + $0x20] sm:$0xff]
      %v260 = vld [vmem:[%s235 + $0x28] sm:$0xff]
      %v261 = vld [vmem:[%s235 + $0x30] sm:$0xff]
      %v262 = vld [vmem:[%s235 + $0x38] sm:$0xff]
      %v263 = vld [vmem:[%s235 + $0x40] sm:$0xff]
      %v264 = vld [vmem:[%s235 + $0x48] sm:$0xff]
      %v265 = vld [vmem:[%s235 + $0x50] sm:$0xff]
      %v266 = vld [vmem:[%s235 + $0x58] sm:$0xff]
      %v267 = vld [vmem:[%s235 + $0x60] sm:$0xff]
      %v268 = vld [vmem:[%s235 + $0x68] sm:$0xff]
      %v269 = vld [vmem:[%s235 + $0x70] sm:$0xff]
      %v270 = vld [vmem:[%s235 + $0x78] sm:$0xff]
      %v271 = vld [vmem:[%s235 + $0x80] sm:$0xff]
      %v272 = vld [vmem:[%s235 + $0x88] sm:$0xff]
      %v273 = vld [vmem:[%s235 + $0x90] sm:$0xff]
      %v274 = vld [vmem:[%s235 + $0x98] sm:$0xff]
      %v275 = vld [vmem:[%s235 + $0xa0] sm:$0xff]
      %v276 = vld [vmem:[%s235 + $0xa8] sm:$0xff]
      %v277 = vld [vmem:[%s235 + $0xb0] sm:$0xff]
      %v278 = vld [vmem:[%s235 + $0xb8] sm:$0xff]
      %v279 = vld [vmem:[%s235 + $0xc0] sm:$0xff]
      %v280 = vld [vmem:[%s235 + $0xc8] sm:$0xff]
      %v281 = vld [vmem:[%s235 + $0xd0] sm:$0xff]
      %v282 = vld [vmem:[%s235 + $0xd8] sm:$0xff]
      %v283 = vld [vmem:[%s235 + $0xe0] sm:$0xff]
      %v284 = vld [vmem:[%s235 + $0xe8] sm:$0xff]
      %v285 = vld [vmem:[%s235 + $0xf0] sm:$0xff]
      %v286 = vld [vmem:[%s235 + $0xf8] sm:$0xff]
      %v287 = vld [vmem:[%s235 + $0x100] sm:$0xff]
      %v288 = vld [vmem:[%s235 + $0x108] sm:$0xff]
      %v289 = vld [vmem:[%s235 + $0x110] sm:$0xff]
      %v290 = vld [vmem:[%s235 + $0x118] sm:$0xff]
      %v291 = vld [vmem:[%s235 + $0x120] sm:$0xff]
      %v292 = vld [vmem:[%s235 + $0x128] sm:$0xff]
      %v293 = vld [vmem:[%s235 + $0x130] sm:$0xff]
      %v294 = vld [vmem:[%s235 + $0x138] sm:$0xff]
      %v295 = vld [vmem:[%s235 + $0x140] sm:$0xff]
      %v296 = vld [vmem:[%s235 + $0x148] sm:$0xff]
      %v297 = vld [vmem:[%s235 + $0x150] sm:$0xff]
      %v298 = vld [vmem:[%s235 + $0x158] sm:$0xff]
      %v299 = vld [vmem:[%s235 + $0x160] sm:$0xff]
      %v300 = vld [vmem:[%s235 + $0x168] sm:$0xff]
      %v301 = vld [vmem:[%s235 + $0x170] sm:$0xff]
      %v302 = vld [vmem:[%s235 + $0x178] sm:$0xff]
      %v303 = vld [vmem:[%s235 + $0x180] sm:$0xff]
      %v304 = vld [vmem:[%s235 + $0x188] sm:$0xff]
      %v305 = vld [vmem:[%s235 + $0x190] sm:$0xff]
      %v306 = vld [vmem:[%s235 + $0x198] sm:$0xff]
      %v307 = vld [vmem:[%s235 + $0x1a0] sm:$0xff]
      %v308 = vld [vmem:[%s235 + $0x1a8] sm:$0xff]
      %v309 = vld [vmem:[%s235 + $0x1b0] sm:$0xff]
      %v310 = vld [vmem:[%s235 + $0x1b8] sm:$0xff]
      %v311 = vld [vmem:[%s235 + $0x1c0] sm:$0xff]
      %v312 = vld [vmem:[%s235 + $0x1c8] sm:$0xff]
      %v313 = vld [vmem:[%s235 + $0x1d0] sm:$0xff]
      %v314 = vld [vmem:[%s235 + $0x1d8] sm:$0xff]
      %v315 = vld [vmem:[%s235 + $0x1e0] sm:$0xff]
      %v316 = vld [vmem:[%s235 + $0x1e8] sm:$0xff]
      %v317 = vld [vmem:[%s235 + $0x1f0] sm:$0xff]
      %v318 = vld [vmem:[%s235 + $0x1f8] sm:$0xff]
      %v319 = vld [vmem:[%s235 + $0x200] sm:$0xff]
      %v320 = vld [vmem:[%s235 + $0x208] sm:$0xff]
      %v321 = vld [vmem:[%s235 + $0x210] sm:$0xff]
      %v322 = vld [vmem:[%s235 + $0x218] sm:$0xff]
      %v323 = vld [vmem:[%s235 + $0x220] sm:$0xff]
      %v324 = vld [vmem:[%s235 + $0x228] sm:$0xff]
      %v325 = vld [vmem:[%s235 + $0x230] sm:$0xff]
      %v326 = vld [vmem:[%s235 + $0x238] sm:$0xff]
      %v327 = vld [vmem:[%s235 + $0x240] sm:$0xff]
      %v328 = vld [vmem:[%s235 + $0x248] sm:$0xff]
      %v329 = vld [vmem:[%s235 + $0x250] sm:$0xff]
      %v330 = vld [vmem:[%s235 + $0x258] sm:$0xff]
      %v331 = vld [vmem:[%s235 + $0x260] sm:$0xff]
      %v332 = vld [vmem:[%s235 + $0x268] sm:$0xff]
      %v333 = vld [vmem:[%s235 + $0x270] sm:$0xff]
      %v334 = vld [vmem:[%s235 + $0x278] sm:$0xff]
      %v335 = vld [vmem:[%s235 + $0x280] sm:$0xff]
      %v336 = vld [vmem:[%s235 + $0x288] sm:$0xff]
      %v337 = vld [vmem:[%s235 + $0x290] sm:$0xff]
      %v338 = vld [vmem:[%s235 + $0x298] sm:$0xff]
      %v339 = vld [vmem:[%s235 + $0x2a0] sm:$0xff]
      %v340 = vld [vmem:[%s235 + $0x2a8] sm:$0xff]
      %v341 = vld [vmem:[%s235 + $0x2b0] sm:$0xff]
      %v342 = vld [vmem:[%s235 + $0x2b8] sm:$0xff]
      %v343 = vld [vmem:[%s235 + $0x2c0] sm:$0xff]
      %v344 = vld [vmem:[%s235 + $0x2c8] sm:$0xff]
      %v345 = vld [vmem:[%s235 + $0x2d0] sm:$0xff]
      %v346 = vld [vmem:[%s235 + $0x2d8] sm:$0xff]
      %v347 = vld [vmem:[%s235 + $0x2e0] sm:$0xff]
      %v348 = vld [vmem:[%s235 + $0x2e8] sm:$0xff]
      %v349 = vld [vmem:[%s235 + $0x2f0] sm:$0xff]
      %v350 = vld [vmem:[%s235 + $0x2f8] sm:$0xff]
      %v351 = vld [vmem:[%s235 + $0x300] sm:$0xff]
      %v352 = vld [vmem:[%s235 + $0x308] sm:$0xff]
      %v353 = vld [vmem:[%s235 + $0x310] sm:$0xff]
      %v354 = vld [vmem:[%s235 + $0x318] sm:$0xff]
      %v355 = vld [vmem:[%s235 + $0x320] sm:$0xff]
      %v356 = vld [vmem:[%s235 + $0x328] sm:$0xff]
      %v357 = vld [vmem:[%s235 + $0x330] sm:$0xff]
      %v358 = vld [vmem:[%s235 + $0x338] sm:$0xff]
      %v359 = vld [vmem:[%s235 + $0x340] sm:$0xff]
      %v360 = vld [vmem:[%s235 + $0x348] sm:$0xff]
      %v361 = vld [vmem:[%s235 + $0x350] sm:$0xff]
      %v362 = vld [vmem:[%s235 + $0x358] sm:$0xff]
      %v363 = vld [vmem:[%s235 + $0x360] sm:$0xff]
      %v364 = vld [vmem:[%s235 + $0x368] sm:$0xff]
      %v365 = vld [vmem:[%s235 + $0x370] sm:$0xff]
      %v366 = vld [vmem:[%s235 + $0x378] sm:$0xff]
      %v367 = vld [vmem:[%s235 + $0x380] sm:$0xff]
      %v368 = vld [vmem:[%s235 + $0x388] sm:$0xff]
      %v369 = vld [vmem:[%s235 + $0x390] sm:$0xff]
      %v370 = vld [vmem:[%s235 + $0x398] sm:$0xff]
      %v371 = vld [vmem:[%s235 + $0x3a0] sm:$0xff]
      %v372 = vld [vmem:[%s235 + $0x3a8] sm:$0xff]
      %v373 = vld [vmem:[%s235 + $0x3b0] sm:$0xff]
      %v374 = vld [vmem:[%s235 + $0x3b8] sm:$0xff]
      %v375 = vld [vmem:[%s235 + $0x3c0] sm:$0xff]
      %v376 = vld [vmem:[%s235 + $0x3c8] sm:$0xff]
      %v377 = vld [vmem:[%s235 + $0x3d0] sm:$0xff]
      %v378 = vld [vmem:[%s235 + $0x3d8] sm:$0xff]
      %v379 = vld [vmem:[%s235 + $0x3e0] sm:$0xff]
      %v380 = vld [vmem:[%s235 + $0x3e8] sm:$0xff]
      %v381 = vld [vmem:[%s235 + $0x3f0] sm:$0xff]
      %v382 = vld [vmem:[%s235 + $0x3f8] sm:$0xff]
      %v383 = vld [vmem:[%s235 + $0x400] sm:$0xff]
      %v384 = vld [vmem:[%s235 + $0x408] sm:$0xff]
      %v385 = vld [vmem:[%s235 + $0x410] sm:$0xff]
      %v386 = vld [vmem:[%s235 + $0x418] sm:$0xff]
      %v387 = vld [vmem:[%s235 + $0x420] sm:$0xff]
      %v388 = vld [vmem:[%s235 + $0x428] sm:$0xff]
      %v389 = vld [vmem:[%s235 + $0x430] sm:$0xff]
      %v390 = vld [vmem:[%s235 + $0x438] sm:$0xff]
      %v391 = vld [vmem:[%s235 + $0x440] sm:$0xff]
      %v392 = vld [vmem:[%s235 + $0x448] sm:$0xff]
      %v393 = vld [vmem:[%s235 + $0x450] sm:$0xff]
      %v394 = vld [vmem:[%s235 + $0x458] sm:$0xff]
      %v395 = vld [vmem:[%s235 + $0x460] sm:$0xff]
      %v396 = vld [vmem:[%s235 + $0x468] sm:$0xff]
      %v397 = vld [vmem:[%s235 + $0x470] sm:$0xff]
      %v398 = vld [vmem:[%s235 + $0x478] sm:$0xff]
      %v399 = vld [vmem:[%s235 + $0x480] sm:$0xff]
      %v400 = vld [vmem:[%s235 + $0x488] sm:$0xff]
      %v401 = vld [vmem:[%s235 + $0x490] sm:$0xff]
      %v402 = vld [vmem:[%s235 + $0x498] sm:$0xff]
      %v403 = vld [vmem:[%s235 + $0x4a0] sm:$0xff]
      %v404 = vld [vmem:[%s235 + $0x4a8] sm:$0xff]
      %v405 = vld [vmem:[%s235 + $0x4b0] sm:$0xff]
      %v406 = vld [vmem:[%s235 + $0x4b8] sm:$0xff]
      %v407 = vld [vmem:[%s235 + $0x4c0] sm:$0xff]
      %v408 = vld [vmem:[%s235 + $0x4c8] sm:$0xff]
      %v409 = vld [vmem:[%s235 + $0x4d0] sm:$0xff]
      %v410 = vld [vmem:[%s235 + $0x4d8] sm:$0xff]
      %v411 = vld [vmem:[%s235 + $0x4e0] sm:$0xff]
      %v412 = vld [vmem:[%s235 + $0x4e8] sm:$0xff]
      %v413 = vld [vmem:[%s235 + $0x4f0] sm:$0xff]
      %v414 = vld [vmem:[%s235 + $0x4f8] sm:$0xff]
      %v415 = vld [vmem:[%s235 + $0x500] sm:$0xff]
      %v416 = vld [vmem:[%s235 + $0x508] sm:$0xff]
      %v417 = vld [vmem:[%s235 + $0x510] sm:$0xff]
      %v418 = vld [vmem:[%s235 + $0x518] sm:$0xff]
      %v419 = vld [vmem:[%s235 + $0x520] sm:$0xff]
      %v420 = vld [vmem:[%s235 + $0x528] sm:$0xff]
      %v421 = vld [vmem:[%s235 + $0x530] sm:$0xff]
      %v422 = vld [vmem:[%s235 + $0x538] sm:$0xff]
      %v423 = vld [vmem:[%s235 + $0x540] sm:$0xff]
      %v424 = vld [vmem:[%s235 + $0x548] sm:$0xff]
      %v425 = vld [vmem:[%s235 + $0x550] sm:$0xff]
      %v426 = vld [vmem:[%s235 + $0x558] sm:$0xff]
      %v427 = vld [vmem:[%s235 + $0x560] sm:$0xff]
      %v428 = vld [vmem:[%s235 + $0x568] sm:$0xff]
      %v429 = vld [vmem:[%s235 + $0x570] sm:$0xff]
      %v430 = vld [vmem:[%s235 + $0x578] sm:$0xff]
      %v431 = vld [vmem:[%s235 + $0x580] sm:$0xff]
      %v432 = vld [vmem:[%s235 + $0x588] sm:$0xff]
      %v433 = vld [vmem:[%s235 + $0x590] sm:$0xff]
      %v434 = vld [vmem:[%s235 + $0x598] sm:$0xff]
      %v435 = vld [vmem:[%s235 + $0x5a0] sm:$0xff]
      %v436 = vld [vmem:[%s235 + $0x5a8] sm:$0xff]
      %v437 = vld [vmem:[%s235 + $0x5b0] sm:$0xff]
      %v438 = vld [vmem:[%s235 + $0x5b8] sm:$0xff]
      %v439 = vld [vmem:[%s235 + $0x5c0] sm:$0xff]
      %v440 = vld [vmem:[%s235 + $0x5c8] sm:$0xff]
      %v441 = vld [vmem:[%s235 + $0x5d0] sm:$0xff]
      %v442 = vld [vmem:[%s235 + $0x5d8] sm:$0xff]
      %v443 = vld [vmem:[%s235 + $0x5e0] sm:$0xff]
      %v444 = vld [vmem:[%s235 + $0x5e8] sm:$0xff]
      %v445 = vld [vmem:[%s235 + $0x5f0] sm:$0xff]
      %v446 = vld [vmem:[%s235 + $0x5f8] sm:$0xff]
      %v447 = vld [vmem:[%s235 + $0x600] sm:$0xff]
      %v448 = vld [vmem:[%s235 + $0x608] sm:$0xff]
      %v449 = vld [vmem:[%s235 + $0x610] sm:$0xff]
      %v450 = vld [vmem:[%s235 + $0x618] sm:$0xff]
      %v451 = vld [vmem:[%s235 + $0x620] sm:$0xff]
      %v452 = vld [vmem:[%s235 + $0x628] sm:$0xff]
      %v453 = vld [vmem:[%s235 + $0x630] sm:$0xff]
      %v454 = vld [vmem:[%s235 + $0x638] sm:$0xff]
      %v455 = vld [vmem:[%s235 + $0x640] sm:$0xff]
      %v456 = vld [vmem:[%s235 + $0x648] sm:$0xff]
      %v457 = vld [vmem:[%s235 + $0x650] sm:$0xff]
      %v458 = vld [vmem:[%s235 + $0x658] sm:$0xff]
      %v459 = vld [vmem:[%s235 + $0x660] sm:$0xff]
      %v460 = vld [vmem:[%s235 + $0x668] sm:$0xff]
      %v461 = vld [vmem:[%s235 + $0x670] sm:$0xff]
      %v462 = vld [vmem:[%s235 + $0x678] sm:$0xff]
      %v463 = vld [vmem:[%s235 + $0x680] sm:$0xff]
      %v464 = vld [vmem:[%s235 + $0x688] sm:$0xff]
      %v465 = vld [vmem:[%s235 + $0x690] sm:$0xff]
      %v466 = vld [vmem:[%s235 + $0x698] sm:$0xff]
      %v467 = vld [vmem:[%s235 + $0x6a0] sm:$0xff]
      %v468 = vld [vmem:[%s235 + $0x6a8] sm:$0xff]
      %v469 = vld [vmem:[%s235 + $0x6b0] sm:$0xff]
      %v470 = vld [vmem:[%s235 + $0x6b8] sm:$0xff]
      %v471 = vld [vmem:[%s235 + $0x6c0] sm:$0xff]
      %v472 = vld [vmem:[%s235 + $0x6c8] sm:$0xff]
      %v473 = vld [vmem:[%s235 + $0x6d0] sm:$0xff]
      %v474 = vld [vmem:[%s235 + $0x6d8] sm:$0xff]
      %v475 = vld [vmem:[%s235 + $0x6e0] sm:$0xff]
      %v476 = vld [vmem:[%s235 + $0x6e8] sm:$0xff]
      %v477 = vld [vmem:[%s235 + $0x6f0] sm:$0xff]
      %v478 = vld [vmem:[%s235 + $0x6f8] sm:$0xff]
      %v479 = vld [vmem:[%s235 + $0x700] sm:$0xff]
      %v480 = vld [vmem:[%s235 + $0x708] sm:$0xff]
      %v481 = vld [vmem:[%s235 + $0x710] sm:$0xff]
      %v482 = vld [vmem:[%s235 + $0x718] sm:$0xff]
      %v483 = vld [vmem:[%s235 + $0x720] sm:$0xff]
      %v484 = vld [vmem:[%s235 + $0x728] sm:$0xff]
      %v485 = vld [vmem:[%s235 + $0x730] sm:$0xff]
      %v486 = vld [vmem:[%s235 + $0x738] sm:$0xff]
      %v487 = vld [vmem:[%s235 + $0x740] sm:$0xff]
      %v488 = vld [vmem:[%s235 + $0x748] sm:$0xff]
      %v489 = vld [vmem:[%s235 + $0x750] sm:$0xff]
      %v490 = vld [vmem:[%s235 + $0x758] sm:$0xff]
      %v491 = vld [vmem:[%s235 + $0x760] sm:$0xff]
      %v492 = vld [vmem:[%s235 + $0x768] sm:$0xff]
      %v493 = vld [vmem:[%s235 + $0x770] sm:$0xff]
      %v494 = vld [vmem:[%s235 + $0x778] sm:$0xff]
      %v495 = vld [vmem:[%s235 + $0x780] sm:$0xff]
      %v496 = vld [vmem:[%s235 + $0x788] sm:$0xff]
      %v497 = vld [vmem:[%s235 + $0x790] sm:$0xff]
      %v498 = vld [vmem:[%s235 + $0x798] sm:$0xff]
      %v499 = vld [vmem:[%s235 + $0x7a0] sm:$0xff]
      %v500 = vld [vmem:[%s235 + $0x7a8] sm:$0xff]
      %v501 = vld [vmem:[%s235 + $0x7b0] sm:$0xff]
      %v502 = vld [vmem:[%s235 + $0x7b8] sm:$0xff]
      %v503 = vld [vmem:[%s235 + $0x7c0] sm:$0xff]
      %v504 = vld [vmem:[%s235 + $0x7c8] sm:$0xff]
      %v505 = vld [vmem:[%s235 + $0x7d0] sm:$0xff]
      %v506 = vld [vmem:[%s235 + $0x7d8] sm:$0xff]
      %v507 = vld [vmem:[%s235 + $0x7e0] sm:$0xff]
      %v508 = vld [vmem:[%s235 + $0x7e8] sm:$0xff]
      %v509 = vld [vmem:[%s235 + $0x7f0] sm:$0xff]
      %v510 = vld [vmem:[%s235 + $0x7f8] sm:$0xff]
      %v511 = vld [vmem:[%s235 + $0x800] sm:$0xff]
      %v512 = vld [vmem:[%s235 + $0x808] sm:$0xff]
      %v513 = vld [vmem:[%s235 + $0x810] sm:$0xff]
      %v514 = vld [vmem:[%s235 + $0x818] sm:$0xff]
      %v515 = vld [vmem:[%s235 + $0x820] sm:$0xff]
      %v516 = vld [vmem:[%s235 + $0x828] sm:$0xff]
      %v517 = vld [vmem:[%s235 + $0x830] sm:$0xff]
      %v518 = vld [vmem:[%s235 + $0x838] sm:$0xff]
      %v519 = vld [vmem:[%s235 + $0x840] sm:$0xff]
      %v520 = vld [vmem:[%s235 + $0x848] sm:$0xff]
      %v521 = vld [vmem:[%s235 + $0x850] sm:$0xff]
      %v522 = vld [vmem:[%s235 + $0x858] sm:$0xff]
      %v523 = vld [vmem:[%s235 + $0x860] sm:$0xff]
      %v524 = vld [vmem:[%s235 + $0x868] sm:$0xff]
      %v525 = vld [vmem:[%s235 + $0x870] sm:$0xff]
      %v526 = vld [vmem:[%s235 + $0x878] sm:$0xff]
      %v527 = vld [vmem:[%s235 + $0x880] sm:$0xff]
      %v528 = vld [vmem:[%s235 + $0x888] sm:$0xff]
      %v529 = vld [vmem:[%s235 + $0x890] sm:$0xff]
      %v530 = vld [vmem:[%s235 + $0x898] sm:$0xff]
      %v531 = vld [vmem:[%s235 + $0x8a0] sm:$0xff]
      %v532 = vld [vmem:[%s235 + $0x8a8] sm:$0xff]
      %v533 = vld [vmem:[%s235 + $0x8b0] sm:$0xff]
      %v534 = vld [vmem:[%s235 + $0x8b8] sm:$0xff]
      %v535 = vld [vmem:[%s235 + $0x8c0] sm:$0xff]
      %v536 = vld [vmem:[%s235 + $0x8c8] sm:$0xff]
      %v537 = vld [vmem:[%s235 + $0x8d0] sm:$0xff]
      %v538 = vld [vmem:[%s235 + $0x8d8] sm:$0xff]
      %v539 = vld [vmem:[%s235 + $0x8e0] sm:$0xff]
      %v540 = vld [vmem:[%s235 + $0x8e8] sm:$0xff]
      %v541 = vld [vmem:[%s235 + $0x8f0] sm:$0xff]
      %v542 = vld [vmem:[%s235 + $0x8f8] sm:$0xff]
      %v543 = vld [vmem:[%s235 + $0x900] sm:$0xff]
      %v544 = vld [vmem:[%s235 + $0x908] sm:$0xff]
      %v545 = vld [vmem:[%s235 + $0x910] sm:$0xff]
      %v546 = vld [vmem:[%s235 + $0x918] sm:$0xff]
      %v547 = vld [vmem:[%s235 + $0x920] sm:$0xff]
      %v548 = vld [vmem:[%s235 + $0x928] sm:$0xff]
      %v549 = vld [vmem:[%s235 + $0x930] sm:$0xff]
      %v550 = vld [vmem:[%s235 + $0x938] sm:$0xff]
      %v551 = vld [vmem:[%s235 + $0x940] sm:$0xff]
      %v552 = vld [vmem:[%s235 + $0x948] sm:$0xff]
      %v553 = vld [vmem:[%s235 + $0x950] sm:$0xff]
      %v554 = vld [vmem:[%s235 + $0x958] sm:$0xff]
      %v555 = vld [vmem:[%s235 + $0x960] sm:$0xff]
      %v556 = vld [vmem:[%s235 + $0x968] sm:$0xff]
      %v557 = vld [vmem:[%s235 + $0x970] sm:$0xff]
      %v558 = vld [vmem:[%s235 + $0x978] sm:$0xff]
      %v559 = vld [vmem:[%s235 + $0x980] sm:$0xff]
      %v560 = vld [vmem:[%s235 + $0x988] sm:$0xff]
      %v561 = vld [vmem:[%s235 + $0x990] sm:$0xff]
      %v562 = vld [vmem:[%s235 + $0x998] sm:$0xff]
      %v563 = vld [vmem:[%s235 + $0x9a0] sm:$0xff]
      %v564 = vld [vmem:[%s235 + $0x9a8] sm:$0xff]
      %v565 = vld [vmem:[%s235 + $0x9b0] sm:$0xff]
      %v566 = vld [vmem:[%s235 + $0x9b8] sm:$0xff]
      %v567 = vld [vmem:[%s235 + $0x9c0] sm:$0xff]
      %v568 = vld [vmem:[%s235 + $0x9c8] sm:$0xff]
      %v569 = vld [vmem:[%s235 + $0x9d0] sm:$0xff]
      %v570 = vld [vmem:[%s235 + $0x9d8] sm:$0xff]
      %v571 = vld [vmem:[%s235 + $0x9e0] sm:$0xff]
      %v572 = vld [vmem:[%s235 + $0x9e8] sm:$0xff]
      %v573 = vld [vmem:[%s235 + $0x9f0] sm:$0xff]
      %v574 = vld [vmem:[%s235 + $0x9f8] sm:$0xff]
      %v580 = vunpack.c.l.b16 %v250
      %v581 = vunpack.c.h.b16 %v250
      %v582 = vunpack.c.l.b16 %v251
      %v583 = vunpack.c.h.b16 %v251
      %v584 = vunpack.c.l.b16 %v252
      %v585 = vunpack.c.h.b16 %v252
      %v586 = vunpack.c.l.b16 %v253
      %v587 = vunpack.c.h.b16 %v253
      %v588 = vunpack.c.l.b16 %v254
      %v589 = vunpack.c.h.b16 %v254
      %v590 = vpack.c.b16 %v580, %v580
      %v591 = vpack.c.b16 %v581, %v581
      %v592 = vpack.c.b16 %v582, %v582
      %v593 = vpack.c.b16 %v583, %v583
      %v594 = vpack.c.b16 %v584, %v584
      %v595 = vpack.c.b16 %v585, %v585
      %v596 = vpack.c.b16 %v586, %v586
      %v597 = vpack.c.b16 %v587, %v587
      %v598 = vpack.c.b16 %v588, %v588
      %v599 = vpack.c.b16 %v589, %v589
      %v930 = vunpack.c.l.b16 %v255
      %v931 = vunpack.c.h.b16 %v255
      %v932 = vunpack.c.l.b16 %v256
      %v933 = vunpack.c.h.b16 %v256
      %v934 = vunpack.c.l.b16 %v257
      %v935 = vunpack.c.h.b16 %v257
      %v936 = vunpack.c.l.b16 %v258
      %v937 = vunpack.c.h.b16 %v258
      %v938 = vunpack.c.l.b16 %v259
      %v939 = vunpack.c.h.b16 %v259
      %v940 = vunpack.c.l.b16 %v260
      %v941 = vunpack.c.h.b16 %v260
      %v942 = vunpack.c.l.b16 %v261
      %v943 = vunpack.c.h.b16 %v261
      %v944 = vunpack.c.l.b16 %v262
      %v945 = vunpack.c.h.b16 %v262
      %v946 = vunpack.c.l.b16 %v263
      %v947 = vunpack.c.h.b16 %v263
      %v948 = vunpack.c.l.b16 %v264
      %v949 = vunpack.c.h.b16 %v264
      %v950 = vunpack.c.l.b16 %v265
      %v951 = vunpack.c.h.b16 %v265
      %v952 = vunpack.c.l.b16 %v266
      %v953 = vunpack.c.h.b16 %v266
      %v954 = vunpack.c.l.b16 %v267
      %v955 = vunpack.c.h.b16 %v267
      %v956 = vunpack.c.l.b16 %v268
      %v957 = vunpack.c.h.b16 %v268
      %v958 = vunpack.c.l.b16 %v269
      %v959 = vunpack.c.h.b16 %v269
      %v960 = vunpack.c.l.b16 %v270
      %v961 = vunpack.c.h.b16 %v270
      %v962 = vunpack.c.l.b16 %v271
      %v963 = vunpack.c.h.b16 %v271
      %v964 = vunpack.c.l.b16 %v272
      %v965 = vunpack.c.h.b16 %v272
      %v966 = vunpack.c.l.b16 %v273
      %v967 = vunpack.c.h.b16 %v273
      %v968 = vunpack.c.l.b16 %v274
      %v969 = vunpack.c.h.b16 %v274
      %v970 = vunpack.c.l.b16 %v275
      %v971 = vunpack.c.h.b16 %v275
      %v972 = vunpack.c.l.b16 %v276
      %v973 = vunpack.c.h.b16 %v276
      %v974 = vunpack.c.l.b16 %v277
      %v975 = vunpack.c.h.b16 %v277
      %v976 = vunpack.c.l.b16 %v278
      %v977 = vunpack.c.h.b16 %v278
      %v978 = vunpack.c.l.b16 %v279
      %v979 = vunpack.c.h.b16 %v279
      %v980 = vunpack.c.l.b16 %v280
      %v981 = vunpack.c.h.b16 %v280
      %v982 = vunpack.c.l.b16 %v281
      %v983 = vunpack.c.h.b16 %v281
      %v984 = vunpack.c.l.b16 %v282
      %v985 = vunpack.c.h.b16 %v282
      %v986 = vunpack.c.l.b16 %v283
      %v987 = vunpack.c.h.b16 %v283
      %v988 = vunpack.c.l.b16 %v284
      %v989 = vunpack.c.h.b16 %v284
      %v990 = vunpack.c.l.b16 %v285
      %v991 = vunpack.c.h.b16 %v285
      %v992 = vunpack.c.l.b16 %v286
      %v993 = vunpack.c.h.b16 %v286
      %v994 = vunpack.c.l.b16 %v287
      %v995 = vunpack.c.h.b16 %v287
      %v996 = vunpack.c.l.b16 %v288
      %v997 = vunpack.c.h.b16 %v288
      %v998 = vunpack.c.l.b16 %v289
      %v999 = vunpack.c.h.b16 %v289
      %v1000 = vunpack.c.l.b16 %v290
      %v1001 = vunpack.c.h.b16 %v290
      %v1002 = vunpack.c.l.b16 %v291
      %v1003 = vunpack.c.h.b16 %v291
      %v1004 = vunpack.c.l.b16 %v292
      %v1005 = vunpack.c.h.b16 %v292
      %v1006 = vunpack.c.l.b16 %v293
      %v1007 = vunpack.c.h.b16 %v293
      %v1008 = vunpack.c.l.b16 %v294
      %v1009 = vunpack.c.h.b16 %v294
      %v1010 = vunpack.c.l.b16 %v295
      %v1011 = vunpack.c.h.b16 %v295
      %v1012 = vunpack.c.l.b16 %v296
      %v1013 = vunpack.c.h.b16 %v296
      %v1014 = vunpack.c.l.b16 %v297
      %v1015 = vunpack.c.h.b16 %v297
      %v1016 = vunpack.c.l.b16 %v298
      %v1017 = vunpack.c.h.b16 %v298
      %v1018 = vunpack.c.l.b16 %v299
      %v1019 = vunpack.c.h.b16 %v299
      %v1020 = vunpack.c.l.b16 %v300
      %v1021 = vunpack.c.h.b16 %v300
      %v1022 = vunpack.c.l.b16 %v301
      %v1023 = vunpack.c.h.b16 %v301
      %v1024 = vunpack.c.l.b16 %v302
      %v1025 = vunpack.c.h.b16 %v302
      %v1026 = vunpack.c.l.b16 %v303
      %v1027 = vunpack.c.h.b16 %v303
      %v1028 = vunpack.c.l.b16 %v304
      %v1029 = vunpack.c.h.b16 %v304
      %v1030 = vunpack.c.l.b16 %v305
      %v1031 = vunpack.c.h.b16 %v305
      %v1032 = vunpack.c.l.b16 %v306
      %v1033 = vunpack.c.h.b16 %v306
      %v1034 = vunpack.c.l.b16 %v307
      %v1035 = vunpack.c.h.b16 %v307
      %v1036 = vunpack.c.l.b16 %v308
      %v1037 = vunpack.c.h.b16 %v308
      %v1038 = vunpack.c.l.b16 %v309
      %v1039 = vunpack.c.h.b16 %v309
      %v1040 = vunpack.c.l.b16 %v310
      %v1041 = vunpack.c.h.b16 %v310
      %v1042 = vunpack.c.l.b16 %v311
      %v1043 = vunpack.c.h.b16 %v311
      %v1044 = vunpack.c.l.b16 %v312
      %v1045 = vunpack.c.h.b16 %v312
      %v1046 = vunpack.c.l.b16 %v313
      %v1047 = vunpack.c.h.b16 %v313
      %v1048 = vunpack.c.l.b16 %v314
      %v1049 = vunpack.c.h.b16 %v314
      %v1050 = vunpack.c.l.b16 %v315
      %v1051 = vunpack.c.h.b16 %v315
      %v1052 = vunpack.c.l.b16 %v316
      %v1053 = vunpack.c.h.b16 %v316
      %v1054 = vunpack.c.l.b16 %v317
      %v1055 = vunpack.c.h.b16 %v317
      %v1056 = vunpack.c.l.b16 %v318
      %v1057 = vunpack.c.h.b16 %v318
      %v1058 = vunpack.c.l.b16 %v319
      %v1059 = vunpack.c.h.b16 %v319
      %v1060 = vunpack.c.l.b16 %v320
      %v1061 = vunpack.c.h.b16 %v320
      %v1062 = vunpack.c.l.b16 %v321
      %v1063 = vunpack.c.h.b16 %v321
      %v1064 = vunpack.c.l.b16 %v322
      %v1065 = vunpack.c.h.b16 %v322
      %v1066 = vunpack.c.l.b16 %v323
      %v1067 = vunpack.c.h.b16 %v323
      %v1068 = vunpack.c.l.b16 %v324
      %v1069 = vunpack.c.h.b16 %v324
      %v1070 = vunpack.c.l.b16 %v325
      %v1071 = vunpack.c.h.b16 %v325
      %v1072 = vunpack.c.l.b16 %v326
      %v1073 = vunpack.c.h.b16 %v326
      %v1074 = vunpack.c.l.b16 %v327
      %v1075 = vunpack.c.h.b16 %v327
      %v1076 = vunpack.c.l.b16 %v328
      %v1077 = vunpack.c.h.b16 %v328
      %v1078 = vunpack.c.l.b16 %v329
      %v1079 = vunpack.c.h.b16 %v329
      %v1080 = vunpack.c.l.b16 %v330
      %v1081 = vunpack.c.h.b16 %v330
      %v1082 = vunpack.c.l.b16 %v331
      %v1083 = vunpack.c.h.b16 %v331
      %v1084 = vunpack.c.l.b16 %v332
      %v1085 = vunpack.c.h.b16 %v332
      %v1086 = vunpack.c.l.b16 %v333
      %v1087 = vunpack.c.h.b16 %v333
      %v1088 = vunpack.c.l.b16 %v334
      %v1089 = vunpack.c.h.b16 %v334
      %v1090 = vunpack.c.l.b16 %v335
      %v1091 = vunpack.c.h.b16 %v335
      %v1092 = vunpack.c.l.b16 %v336
      %v1093 = vunpack.c.h.b16 %v336
      %v1094 = vunpack.c.l.b16 %v337
      %v1095 = vunpack.c.h.b16 %v337
      %v1096 = vunpack.c.l.b16 %v338
      %v1097 = vunpack.c.h.b16 %v338
      %v1098 = vunpack.c.l.b16 %v339
      %v1099 = vunpack.c.h.b16 %v339
      %v1100 = vunpack.c.l.b16 %v340
      %v1101 = vunpack.c.h.b16 %v340
      %v1102 = vunpack.c.l.b16 %v341
      %v1103 = vunpack.c.h.b16 %v341
      %v1104 = vunpack.c.l.b16 %v342
      %v1105 = vunpack.c.h.b16 %v342
      %v1106 = vunpack.c.l.b16 %v343
      %v1107 = vunpack.c.h.b16 %v343
      %v1108 = vunpack.c.l.b16 %v344
      %v1109 = vunpack.c.h.b16 %v344
      %v1110 = vunpack.c.l.b16 %v345
      %v1111 = vunpack.c.h.b16 %v345
      %v1112 = vunpack.c.l.b16 %v346
      %v1113 = vunpack.c.h.b16 %v346
      %v1114 = vunpack.c.l.b16 %v347
      %v1115 = vunpack.c.h.b16 %v347
      %v1116 = vunpack.c.l.b16 %v348
      %v1117 = vunpack.c.h.b16 %v348
      %v1118 = vunpack.c.l.b16 %v349
      %v1119 = vunpack.c.h.b16 %v349
      %v1120 = vunpack.c.l.b16 %v350
      %v1121 = vunpack.c.h.b16 %v350
      %v1122 = vunpack.c.l.b16 %v351
      %v1123 = vunpack.c.h.b16 %v351
      %v1124 = vunpack.c.l.b16 %v352
      %v1125 = vunpack.c.h.b16 %v352
      %v1126 = vunpack.c.l.b16 %v353
      %v1127 = vunpack.c.h.b16 %v353
      %v1128 = vunpack.c.l.b16 %v354
      %v1129 = vunpack.c.h.b16 %v354
      %v1130 = vunpack.c.l.b16 %v355
      %v1131 = vunpack.c.h.b16 %v355
      %v1132 = vunpack.c.l.b16 %v356
      %v1133 = vunpack.c.h.b16 %v356
      %v1134 = vunpack.c.l.b16 %v357
      %v1135 = vunpack.c.h.b16 %v357
      %v1136 = vunpack.c.l.b16 %v358
      %v1137 = vunpack.c.h.b16 %v358
      %v1138 = vunpack.c.l.b16 %v359
      %v1139 = vunpack.c.h.b16 %v359
      %v1140 = vunpack.c.l.b16 %v360
      %v1141 = vunpack.c.h.b16 %v360
      %v1142 = vunpack.c.l.b16 %v361
      %v1143 = vunpack.c.h.b16 %v361
      %v1144 = vunpack.c.l.b16 %v362
      %v1145 = vunpack.c.h.b16 %v362
      %v1146 = vunpack.c.l.b16 %v363
      %v1147 = vunpack.c.h.b16 %v363
      %v1148 = vunpack.c.l.b16 %v364
      %v1149 = vunpack.c.h.b16 %v364
      %v1150 = vunpack.c.l.b16 %v365
      %v1151 = vunpack.c.h.b16 %v365
      %v1152 = vunpack.c.l.b16 %v366
      %v1153 = vunpack.c.h.b16 %v366
      %v1154 = vunpack.c.l.b16 %v367
      %v1155 = vunpack.c.h.b16 %v367
      %v1156 = vunpack.c.l.b16 %v368
      %v1157 = vunpack.c.h.b16 %v368
      %v1158 = vunpack.c.l.b16 %v369
      %v1159 = vunpack.c.h.b16 %v369
      %v1160 = vunpack.c.l.b16 %v370
      %v1161 = vunpack.c.h.b16 %v370
      %v1162 = vunpack.c.l.b16 %v371
      %v1163 = vunpack.c.h.b16 %v371
      %v1164 = vunpack.c.l.b16 %v372
      %v1165 = vunpack.c.h.b16 %v372
      %v1166 = vunpack.c.l.b16 %v373
      %v1167 = vunpack.c.h.b16 %v373
      %v1168 = vunpack.c.l.b16 %v374
      %v1169 = vunpack.c.h.b16 %v374
      %v1170 = vunpack.c.l.b16 %v375
      %v1171 = vunpack.c.h.b16 %v375
      %v1172 = vunpack.c.l.b16 %v376
      %v1173 = vunpack.c.h.b16 %v376
      %v1174 = vunpack.c.l.b16 %v377
      %v1175 = vunpack.c.h.b16 %v377
      %v1176 = vunpack.c.l.b16 %v378
      %v1177 = vunpack.c.h.b16 %v378
      %v1178 = vunpack.c.l.b16 %v379
      %v1179 = vunpack.c.h.b16 %v379
      %v1180 = vunpack.c.l.b16 %v380
      %v1181 = vunpack.c.h.b16 %v380
      %v1182 = vunpack.c.l.b16 %v381
      %v1183 = vunpack.c.h.b16 %v381
      %v1184 = vunpack.c.l.b16 %v382
      %v1185 = vunpack.c.h.b16 %v382
      %v1186 = vunpack.c.l.b16 %v383
      %v1187 = vunpack.c.h.b16 %v383
      %v1188 = vunpack.c.l.b16 %v384
      %v1189 = vunpack.c.h.b16 %v384
      %v1190 = vunpack.c.l.b16 %v385
      %v1191 = vunpack.c.h.b16 %v385
      %v1192 = vunpack.c.l.b16 %v386
      %v1193 = vunpack.c.h.b16 %v386
      %v1194 = vunpack.c.l.b16 %v387
      %v1195 = vunpack.c.h.b16 %v387
      %v1196 = vunpack.c.l.b16 %v388
      %v1197 = vunpack.c.h.b16 %v388
      %v1198 = vunpack.c.l.b16 %v389
      %v1199 = vunpack.c.h.b16 %v389
      %v1200 = vunpack.c.l.b16 %v390
      %v1201 = vunpack.c.h.b16 %v390
      %v1202 = vunpack.c.l.b16 %v391
      %v1203 = vunpack.c.h.b16 %v391
      %v1204 = vunpack.c.l.b16 %v392
      %v1205 = vunpack.c.h.b16 %v392
      %v1206 = vunpack.c.l.b16 %v393
      %v1207 = vunpack.c.h.b16 %v393
      %v1208 = vunpack.c.l.b16 %v394
      %v1209 = vunpack.c.h.b16 %v394
      %v1210 = vunpack.c.l.b16 %v395
      %v1211 = vunpack.c.h.b16 %v395
      %v1212 = vunpack.c.l.b16 %v396
      %v1213 = vunpack.c.h.b16 %v396
      %v1214 = vunpack.c.l.b16 %v397
      %v1215 = vunpack.c.h.b16 %v397
      %v1216 = vunpack.c.l.b16 %v398
      %v1217 = vunpack.c.h.b16 %v398
      %v1218 = vunpack.c.l.b16 %v399
      %v1219 = vunpack.c.h.b16 %v399
      %v1220 = vunpack.c.l.b16 %v400
      %v1221 = vunpack.c.h.b16 %v400
      %v1222 = vunpack.c.l.b16 %v401
      %v1223 = vunpack.c.h.b16 %v401
      %v1224 = vunpack.c.l.b16 %v402
      %v1225 = vunpack.c.h.b16 %v402
      %v1226 = vunpack.c.l.b16 %v403
      %v1227 = vunpack.c.h.b16 %v403
      %v1228 = vunpack.c.l.b16 %v404
      %v1229 = vunpack.c.h.b16 %v404
      %v1230 = vunpack.c.l.b16 %v405
      %v1231 = vunpack.c.h.b16 %v405
      %v1232 = vunpack.c.l.b16 %v406
      %v1233 = vunpack.c.h.b16 %v406
      %v1234 = vunpack.c.l.b16 %v407
      %v1235 = vunpack.c.h.b16 %v407
      %v1236 = vunpack.c.l.b16 %v408
      %v1237 = vunpack.c.h.b16 %v408
      %v1238 = vunpack.c.l.b16 %v409
      %v1239 = vunpack.c.h.b16 %v409
      %v1240 = vunpack.c.l.b16 %v410
      %v1241 = vunpack.c.h.b16 %v410
      %v1242 = vunpack.c.l.b16 %v411
      %v1243 = vunpack.c.h.b16 %v411
      %v1244 = vunpack.c.l.b16 %v412
      %v1245 = vunpack.c.h.b16 %v412
      %v1246 = vunpack.c.l.b16 %v413
      %v1247 = vunpack.c.h.b16 %v413
      %v1248 = vunpack.c.l.b16 %v414
      %v1249 = vunpack.c.h.b16 %v414
      %v1250 = vunpack.c.l.b16 %v415
      %v1251 = vunpack.c.h.b16 %v415
      %v1252 = vunpack.c.l.b16 %v416
      %v1253 = vunpack.c.h.b16 %v416
      %v1254 = vunpack.c.l.b16 %v417
      %v1255 = vunpack.c.h.b16 %v417
      %v1256 = vunpack.c.l.b16 %v418
      %v1257 = vunpack.c.h.b16 %v418
      %v1258 = vunpack.c.l.b16 %v419
      %v1259 = vunpack.c.h.b16 %v419
      %v1260 = vunpack.c.l.b16 %v420
      %v1261 = vunpack.c.h.b16 %v420
      %v1262 = vunpack.c.l.b16 %v421
      %v1263 = vunpack.c.h.b16 %v421
      %v1264 = vunpack.c.l.b16 %v422
      %v1265 = vunpack.c.h.b16 %v422
      %v1266 = vunpack.c.l.b16 %v423
      %v1267 = vunpack.c.h.b16 %v423
      %v1268 = vunpack.c.l.b16 %v424
      %v1269 = vunpack.c.h.b16 %v424
      %v1270 = vunpack.c.l.b16 %v425
      %v1271 = vunpack.c.h.b16 %v425
      %v1272 = vunpack.c.l.b16 %v426
      %v1273 = vunpack.c.h.b16 %v426
      %v1274 = vunpack.c.l.b16 %v427
      %v1275 = vunpack.c.h.b16 %v427
      %v1276 = vunpack.c.l.b16 %v428
      %v1277 = vunpack.c.h.b16 %v428
      %v1278 = vunpack.c.l.b16 %v429
      %v1279 = vunpack.c.h.b16 %v429
      %v1280 = vunpack.c.l.b16 %v430
      %v1281 = vunpack.c.h.b16 %v430
      %v1282 = vunpack.c.l.b16 %v431
      %v1283 = vunpack.c.h.b16 %v431
      %v1284 = vunpack.c.l.b16 %v432
      %v1285 = vunpack.c.h.b16 %v432
      %v1286 = vunpack.c.l.b16 %v433
      %v1287 = vunpack.c.h.b16 %v433
      %v1288 = vunpack.c.l.b16 %v434
      %v1289 = vunpack.c.h.b16 %v434
      %v1290 = vunpack.c.l.b16 %v435
      %v1291 = vunpack.c.h.b16 %v435
      %v1292 = vunpack.c.l.b16 %v436
      %v1293 = vunpack.c.h.b16 %v436
      %v1294 = vunpack.c.l.b16 %v437
      %v1295 = vunpack.c.h.b16 %v437
      %v1296 = vunpack.c.l.b16 %v438
      %v1297 = vunpack.c.h.b16 %v438
      %v1298 = vunpack.c.l.b16 %v439
      %v1299 = vunpack.c.h.b16 %v439
      %v1300 = vunpack.c.l.b16 %v440
      %v1301 = vunpack.c.h.b16 %v440
      %v1302 = vunpack.c.l.b16 %v441
      %v1303 = vunpack.c.h.b16 %v441
      %v1304 = vunpack.c.l.b16 %v442
      %v1305 = vunpack.c.h.b16 %v442
      %v1306 = vunpack.c.l.b16 %v443
      %v1307 = vunpack.c.h.b16 %v443
      %v1308 = vunpack.c.l.b16 %v444
      %v1309 = vunpack.c.h.b16 %v444
      %v1310 = vunpack.c.l.b16 %v445
      %v1311 = vunpack.c.h.b16 %v445
      %v1312 = vunpack.c.l.b16 %v446
      %v1313 = vunpack.c.h.b16 %v446
      %v1314 = vunpack.c.l.b16 %v447
      %v1315 = vunpack.c.h.b16 %v447
      %v1316 = vunpack.c.l.b16 %v448
      %v1317 = vunpack.c.h.b16 %v448
      %v1318 = vunpack.c.l.b16 %v449
      %v1319 = vunpack.c.h.b16 %v449
      %v1320 = vunpack.c.l.b16 %v450
      %v1321 = vunpack.c.h.b16 %v450
      %v1322 = vunpack.c.l.b16 %v451
      %v1323 = vunpack.c.h.b16 %v451
      %v1324 = vunpack.c.l.b16 %v452
      %v1325 = vunpack.c.h.b16 %v452
      %v1326 = vunpack.c.l.b16 %v453
      %v1327 = vunpack.c.h.b16 %v453
      %v1328 = vunpack.c.l.b16 %v454
      %v1329 = vunpack.c.h.b16 %v454
      %v1330 = vunpack.c.l.b16 %v455
      %v1331 = vunpack.c.h.b16 %v455
      %v1332 = vunpack.c.l.b16 %v456
      %v1333 = vunpack.c.h.b16 %v456
      %v1334 = vunpack.c.l.b16 %v457
      %v1335 = vunpack.c.h.b16 %v457
      %v1336 = vunpack.c.l.b16 %v458
      %v1337 = vunpack.c.h.b16 %v458
      %v1338 = vunpack.c.l.b16 %v459
      %v1339 = vunpack.c.h.b16 %v459
      %v1340 = vunpack.c.l.b16 %v460
      %v1341 = vunpack.c.h.b16 %v460
      %v1342 = vunpack.c.l.b16 %v461
      %v1343 = vunpack.c.h.b16 %v461
      %v1344 = vunpack.c.l.b16 %v462
      %v1345 = vunpack.c.h.b16 %v462
      %v1346 = vunpack.c.l.b16 %v463
      %v1347 = vunpack.c.h.b16 %v463
      %v1348 = vunpack.c.l.b16 %v464
      %v1349 = vunpack.c.h.b16 %v464
      %v1350 = vunpack.c.l.b16 %v465
      %v1351 = vunpack.c.h.b16 %v465
      %v1352 = vunpack.c.l.b16 %v466
      %v1353 = vunpack.c.h.b16 %v466
      %v1354 = vunpack.c.l.b16 %v467
      %v1355 = vunpack.c.h.b16 %v467
      %v1356 = vunpack.c.l.b16 %v468
      %v1357 = vunpack.c.h.b16 %v468
      %v1358 = vunpack.c.l.b16 %v469
      %v1359 = vunpack.c.h.b16 %v469
      %v1360 = vunpack.c.l.b16 %v470
      %v1361 = vunpack.c.h.b16 %v470
      %v1362 = vunpack.c.l.b16 %v471
      %v1363 = vunpack.c.h.b16 %v471
      %v1364 = vunpack.c.l.b16 %v472
      %v1365 = vunpack.c.h.b16 %v472
      %v1366 = vunpack.c.l.b16 %v473
      %v1367 = vunpack.c.h.b16 %v473
      %v1368 = vunpack.c.l.b16 %v474
      %v1369 = vunpack.c.h.b16 %v474
      %v1370 = vunpack.c.l.b16 %v475
      %v1371 = vunpack.c.h.b16 %v475
      %v1372 = vunpack.c.l.b16 %v476
      %v1373 = vunpack.c.h.b16 %v476
      %v1374 = vunpack.c.l.b16 %v477
      %v1375 = vunpack.c.h.b16 %v477
      %v1376 = vunpack.c.l.b16 %v478
      %v1377 = vunpack.c.h.b16 %v478
      %v1378 = vunpack.c.l.b16 %v479
      %v1379 = vunpack.c.h.b16 %v479
      %v1380 = vunpack.c.l.b16 %v480
      %v1381 = vunpack.c.h.b16 %v480
      %v1382 = vunpack.c.l.b16 %v481
      %v1383 = vunpack.c.h.b16 %v481
      %v1384 = vunpack.c.l.b16 %v482
      %v1385 = vunpack.c.h.b16 %v482
      %v1386 = vunpack.c.l.b16 %v483
      %v1387 = vunpack.c.h.b16 %v483
      %v1388 = vunpack.c.l.b16 %v484
      %v1389 = vunpack.c.h.b16 %v484
      %v1390 = vunpack.c.l.b16 %v485
      %v1391 = vunpack.c.h.b16 %v485
      %v1392 = vunpack.c.l.b16 %v486
      %v1393 = vunpack.c.h.b16 %v486
      %v1394 = vunpack.c.l.b16 %v487
      %v1395 = vunpack.c.h.b16 %v487
      %v1396 = vunpack.c.l.b16 %v488
      %v1397 = vunpack.c.h.b16 %v488
      %v1398 = vunpack.c.l.b16 %v489
      %v1399 = vunpack.c.h.b16 %v489
      %v1400 = vunpack.c.l.b16 %v490
      %v1401 = vunpack.c.h.b16 %v490
      %v1402 = vunpack.c.l.b16 %v491
      %v1403 = vunpack.c.h.b16 %v491
      %v1404 = vunpack.c.l.b16 %v492
      %v1405 = vunpack.c.h.b16 %v492
      %v1406 = vunpack.c.l.b16 %v493
      %v1407 = vunpack.c.h.b16 %v493
      %v1408 = vunpack.c.l.b16 %v494
      %v1409 = vunpack.c.h.b16 %v494
      %v1410 = vunpack.c.l.b16 %v495
      %v1411 = vunpack.c.h.b16 %v495
      %v1412 = vunpack.c.l.b16 %v496
      %v1413 = vunpack.c.h.b16 %v496
      %v1414 = vunpack.c.l.b16 %v497
      %v1415 = vunpack.c.h.b16 %v497
      %v1416 = vunpack.c.l.b16 %v498
      %v1417 = vunpack.c.h.b16 %v498
      %v1418 = vunpack.c.l.b16 %v499
      %v1419 = vunpack.c.h.b16 %v499
      %v1420 = vunpack.c.l.b16 %v500
      %v1421 = vunpack.c.h.b16 %v500
      %v1422 = vunpack.c.l.b16 %v501
      %v1423 = vunpack.c.h.b16 %v501
      %v1424 = vunpack.c.l.b16 %v502
      %v1425 = vunpack.c.h.b16 %v502
      %v1426 = vunpack.c.l.b16 %v503
      %v1427 = vunpack.c.h.b16 %v503
      %v1428 = vunpack.c.l.b16 %v504
      %v1429 = vunpack.c.h.b16 %v504
      %v1430 = vunpack.c.l.b16 %v505
      %v1431 = vunpack.c.h.b16 %v505
      %v1432 = vunpack.c.l.b16 %v506
      %v1433 = vunpack.c.h.b16 %v506
      %v1434 = vunpack.c.l.b16 %v507
      %v1435 = vunpack.c.h.b16 %v507
      %v1436 = vunpack.c.l.b16 %v508
      %v1437 = vunpack.c.h.b16 %v508
      %v1438 = vunpack.c.l.b16 %v509
      %v1439 = vunpack.c.h.b16 %v509
      %v1440 = vunpack.c.l.b16 %v510
      %v1441 = vunpack.c.h.b16 %v510
      %v1442 = vunpack.c.l.b16 %v511
      %v1443 = vunpack.c.h.b16 %v511
      %v1444 = vunpack.c.l.b16 %v512
      %v1445 = vunpack.c.h.b16 %v512
      %v1446 = vunpack.c.l.b16 %v513
      %v1447 = vunpack.c.h.b16 %v513
      %v1448 = vunpack.c.l.b16 %v514
      %v1449 = vunpack.c.h.b16 %v514
      %v1450 = vunpack.c.l.b16 %v515
      %v1451 = vunpack.c.h.b16 %v515
      %v1452 = vunpack.c.l.b16 %v516
      %v1453 = vunpack.c.h.b16 %v516
      %v1454 = vunpack.c.l.b16 %v517
      %v1455 = vunpack.c.h.b16 %v517
      %v1456 = vunpack.c.l.b16 %v518
      %v1457 = vunpack.c.h.b16 %v518
      %v1458 = vunpack.c.l.b16 %v519
      %v1459 = vunpack.c.h.b16 %v519
      %v1460 = vunpack.c.l.b16 %v520
      %v1461 = vunpack.c.h.b16 %v520
      %v1462 = vunpack.c.l.b16 %v521
      %v1463 = vunpack.c.h.b16 %v521
      %v1464 = vunpack.c.l.b16 %v522
      %v1465 = vunpack.c.h.b16 %v522
      %v1466 = vunpack.c.l.b16 %v523
      %v1467 = vunpack.c.h.b16 %v523
      %v1468 = vunpack.c.l.b16 %v524
      %v1469 = vunpack.c.h.b16 %v524
      %v1470 = vunpack.c.l.b16 %v525
      %v1471 = vunpack.c.h.b16 %v525
      %v1472 = vunpack.c.l.b16 %v526
      %v1473 = vunpack.c.h.b16 %v526
      %v1474 = vunpack.c.l.b16 %v527
      %v1475 = vunpack.c.h.b16 %v527
      %v1476 = vunpack.c.l.b16 %v528
      %v1477 = vunpack.c.h.b16 %v528
      %v1478 = vunpack.c.l.b16 %v529
      %v1479 = vunpack.c.h.b16 %v529
      %v1480 = vunpack.c.l.b16 %v530
      %v1481 = vunpack.c.h.b16 %v530
      %v1482 = vunpack.c.l.b16 %v531
      %v1483 = vunpack.c.h.b16 %v531
      %v1484 = vunpack.c.l.b16 %v532
      %v1485 = vunpack.c.h.b16 %v532
      %v1486 = vunpack.c.l.b16 %v533
      %v1487 = vunpack.c.h.b16 %v533
      %v1488 = vunpack.c.l.b16 %v534
      %v1489 = vunpack.c.h.b16 %v534
      %v1490 = vunpack.c.l.b16 %v535
      %v1491 = vunpack.c.h.b16 %v535
      %v1492 = vunpack.c.l.b16 %v536
      %v1493 = vunpack.c.h.b16 %v536
      %v1494 = vunpack.c.l.b16 %v537
      %v1495 = vunpack.c.h.b16 %v537
      %v1496 = vunpack.c.l.b16 %v538
      %v1497 = vunpack.c.h.b16 %v538
      %v1498 = vunpack.c.l.b16 %v539
      %v1499 = vunpack.c.h.b16 %v539
      %v1500 = vunpack.c.l.b16 %v540
      %v1501 = vunpack.c.h.b16 %v540
      %v1502 = vunpack.c.l.b16 %v541
      %v1503 = vunpack.c.h.b16 %v541
      %v1504 = vunpack.c.l.b16 %v542
      %v1505 = vunpack.c.h.b16 %v542
      %v1506 = vunpack.c.l.b16 %v543
      %v1507 = vunpack.c.h.b16 %v543
      %v1508 = vunpack.c.l.b16 %v544
      %v1509 = vunpack.c.h.b16 %v544
      %v1510 = vunpack.c.l.b16 %v545
      %v1511 = vunpack.c.h.b16 %v545
      %v1512 = vunpack.c.l.b16 %v546
      %v1513 = vunpack.c.h.b16 %v546
      %v1514 = vunpack.c.l.b16 %v547
      %v1515 = vunpack.c.h.b16 %v547
      %v1516 = vunpack.c.l.b16 %v548
      %v1517 = vunpack.c.h.b16 %v548
      %v1518 = vunpack.c.l.b16 %v549
      %v1519 = vunpack.c.h.b16 %v549
      %v1520 = vunpack.c.l.b16 %v550
      %v1521 = vunpack.c.h.b16 %v550
      %v1522 = vunpack.c.l.b16 %v551
      %v1523 = vunpack.c.h.b16 %v551
      %v1524 = vunpack.c.l.b16 %v552
      %v1525 = vunpack.c.h.b16 %v552
      %v1526 = vunpack.c.l.b16 %v553
      %v1527 = vunpack.c.h.b16 %v553
      %v1528 = vunpack.c.l.b16 %v554
      %v1529 = vunpack.c.h.b16 %v554
      %v1530 = vunpack.c.l.b16 %v555
      %v1531 = vunpack.c.h.b16 %v555
      %v1532 = vunpack.c.l.b16 %v556
      %v1533 = vunpack.c.h.b16 %v556
      %v1534 = vunpack.c.l.b16 %v557
      %v1535 = vunpack.c.h.b16 %v557
      %v1536 = vunpack.c.l.b16 %v558
      %v1537 = vunpack.c.h.b16 %v558
      %v1538 = vunpack.c.l.b16 %v559
      %v1539 = vunpack.c.h.b16 %v559
      %v1540 = vunpack.c.l.b16 %v560
      %v1541 = vunpack.c.h.b16 %v560
      %v1542 = vunpack.c.l.b16 %v561
      %v1543 = vunpack.c.h.b16 %v561
      %v1544 = vunpack.c.l.b16 %v562
      %v1545 = vunpack.c.h.b16 %v562
      %v1546 = vunpack.c.l.b16 %v563
      %v1547 = vunpack.c.h.b16 %v563
      %v1548 = vunpack.c.l.b16 %v564
      %v1549 = vunpack.c.h.b16 %v564
      %v1550 = vunpack.c.l.b16 %v565
      %v1551 = vunpack.c.h.b16 %v565
      %v1552 = vunpack.c.l.b16 %v566
      %v1553 = vunpack.c.h.b16 %v566
      %v1554 = vunpack.c.l.b16 %v567
      %v1555 = vunpack.c.h.b16 %v567
      %v1556 = vunpack.c.l.b16 %v568
      %v1557 = vunpack.c.h.b16 %v568
      %v1558 = vunpack.c.l.b16 %v569
      %v1559 = vunpack.c.h.b16 %v569
      %v1560 = vunpack.c.l.b16 %v570
      %v1561 = vunpack.c.h.b16 %v570
      %v1562 = vunpack.c.l.b16 %v571
      %v1563 = vunpack.c.h.b16 %v571
      %v1564 = vunpack.c.l.b16 %v572
      %v1565 = vunpack.c.h.b16 %v572
      %v1566 = vunpack.c.l.b16 %v573
      %v1567 = vunpack.c.h.b16 %v573
      %v1568 = vunpack.c.l.b16 %v574
      %v1569 = vunpack.c.h.b16 %v574
      %v1570 = vpack.c.b16 %v934, %v930
      %v1571 = vpack.c.b16 %v935, %v931
      %v1572 = vpack.c.b16 %v936, %v932
      %v1573 = vpack.c.b16 %v937, %v933
      %v1574 = vpack.c.b16 %v942, %v938
      %v1575 = vpack.c.b16 %v943, %v939
      %v1576 = vpack.c.b16 %v944, %v940
      %v1577 = vpack.c.b16 %v945, %v941
      %v1578 = vpack.c.b16 %v950, %v946
      %v1579 = vpack.c.b16 %v951, %v947
      %v1580 = vpack.c.b16 %v952, %v948
      %v1581 = vpack.c.b16 %v953, %v949
      %v1582 = vpack.c.b16 %v958, %v954
      %v1583 = vpack.c.b16 %v959, %v955
      %v1584 = vpack.c.b16 %v960, %v956
      %v1585 = vpack.c.b16 %v961, %v957
      %v1586 = vpack.c.b16 %v966, %v962
      %v1587 = vpack.c.b16 %v967, %v963
      %v1588 = vpack.c.b16 %v968, %v964
      %v1589 = vpack.c.b16 %v969, %v965
      %v1590 = vpack.c.b16 %v974, %v970
      %v1591 = vpack.c.b16 %v975, %v971
      %v1592 = vpack.c.b16 %v976, %v972
      %v1593 = vpack.c.b16 %v977, %v973
      %v1594 = vpack.c.b16 %v982, %v978
      %v1595 = vpack.c.b16 %v983, %v979
      %v1596 = vpack.c.b16 %v984, %v980
      %v1597 = vpack.c.b16 %v985, %v981
      %v1598 = vpack.c.b16 %v990, %v986
      %v1599 = vpack.c.b16 %v991, %v987
      %v1600 = vpack.c.b16 %v992, %v988
      %v1601 = vpack.c.b16 %v993, %v989
      %v1602 = vpack.c.b16 %v998, %v994
      %v1603 = vpack.c.b16 %v999, %v995
      %v1604 = vpack.c.b16 %v1000, %v996
      %v1605 = vpack.c.b16 %v1001, %v997
      %v1606 = vpack.c.b16 %v1006, %v1002
      %v1607 = vpack.c.b16 %v1007, %v1003
      %v1608 = vpack.c.b16 %v1008, %v1004
      %v1609 = vpack.c.b16 %v1009, %v1005
      %v1610 = vpack.c.b16 %v1014, %v1010
      %v1611 = vpack.c.b16 %v1015, %v1011
      %v1612 = vpack.c.b16 %v1016, %v1012
      %v1613 = vpack.c.b16 %v1017, %v1013
      %v1614 = vpack.c.b16 %v1022, %v1018
      %v1615 = vpack.c.b16 %v1023, %v1019
      %v1616 = vpack.c.b16 %v1024, %v1020
      %v1617 = vpack.c.b16 %v1025, %v1021
      %v1618 = vpack.c.b16 %v1030, %v1026
      %v1619 = vpack.c.b16 %v1031, %v1027
      %v1620 = vpack.c.b16 %v1032, %v1028
      %v1621 = vpack.c.b16 %v1033, %v1029
      %v1622 = vpack.c.b16 %v1038, %v1034
      %v1623 = vpack.c.b16 %v1039, %v1035
      %v1624 = vpack.c.b16 %v1040, %v1036
      %v1625 = vpack.c.b16 %v1041, %v1037
      %v1626 = vpack.c.b16 %v1046, %v1042
      %v1627 = vpack.c.b16 %v1047, %v1043
      %v1628 = vpack.c.b16 %v1048, %v1044
      %v1629 = vpack.c.b16 %v1049, %v1045
      %v1630 = vpack.c.b16 %v1054, %v1050
      %v1631 = vpack.c.b16 %v1055, %v1051
      %v1632 = vpack.c.b16 %v1056, %v1052
      %v1633 = vpack.c.b16 %v1057, %v1053
      %v1634 = vpack.c.b16 %v1062, %v1058
      %v1635 = vpack.c.b16 %v1063, %v1059
      %v1636 = vpack.c.b16 %v1064, %v1060
      %v1637 = vpack.c.b16 %v1065, %v1061
      %v1638 = vpack.c.b16 %v1070, %v1066
      %v1639 = vpack.c.b16 %v1071, %v1067
      %v1640 = vpack.c.b16 %v1072, %v1068
      %v1641 = vpack.c.b16 %v1073, %v1069
      %v1642 = vpack.c.b16 %v1078, %v1074
      %v1643 = vpack.c.b16 %v1079, %v1075
      %v1644 = vpack.c.b16 %v1080, %v1076
      %v1645 = vpack.c.b16 %v1081, %v1077
      %v1646 = vpack.c.b16 %v1086, %v1082
      %v1647 = vpack.c.b16 %v1087, %v1083
      %v1648 = vpack.c.b16 %v1088, %v1084
      %v1649 = vpack.c.b16 %v1089, %v1085
      %v1650 = vpack.c.b16 %v1094, %v1090
      %v1651 = vpack.c.b16 %v1095, %v1091
      %v1652 = vpack.c.b16 %v1096, %v1092
      %v1653 = vpack.c.b16 %v1097, %v1093
      %v1654 = vpack.c.b16 %v1102, %v1098
      %v1655 = vpack.c.b16 %v1103, %v1099
      %v1656 = vpack.c.b16 %v1104, %v1100
      %v1657 = vpack.c.b16 %v1105, %v1101
      %v1658 = vpack.c.b16 %v1110, %v1106
      %v1659 = vpack.c.b16 %v1111, %v1107
      %v1660 = vpack.c.b16 %v1112, %v1108
      %v1661 = vpack.c.b16 %v1113, %v1109
      %v1662 = vpack.c.b16 %v1118, %v1114
      %v1663 = vpack.c.b16 %v1119, %v1115
      %v1664 = vpack.c.b16 %v1120, %v1116
      %v1665 = vpack.c.b16 %v1121, %v1117
      %v1666 = vpack.c.b16 %v1126, %v1122
      %v1667 = vpack.c.b16 %v1127, %v1123
      %v1668 = vpack.c.b16 %v1128, %v1124
      %v1669 = vpack.c.b16 %v1129, %v1125
      %v1670 = vpack.c.b16 %v1134, %v1130
      %v1671 = vpack.c.b16 %v1135, %v1131
      %v1672 = vpack.c.b16 %v1136, %v1132
      %v1673 = vpack.c.b16 %v1137, %v1133
      %v1674 = vpack.c.b16 %v1142, %v1138
      %v1675 = vpack.c.b16 %v1143, %v1139
      %v1676 = vpack.c.b16 %v1144, %v1140
      %v1677 = vpack.c.b16 %v1145, %v1141
      %v1678 = vpack.c.b16 %v1150, %v1146
      %v1679 = vpack.c.b16 %v1151, %v1147
      %v1680 = vpack.c.b16 %v1152, %v1148
      %v1681 = vpack.c.b16 %v1153, %v1149
      %v1682 = vpack.c.b16 %v1158, %v1154
      %v1683 = vpack.c.b16 %v1159, %v1155
      %v1684 = vpack.c.b16 %v1160, %v1156
      %v1685 = vpack.c.b16 %v1161, %v1157
      %v1686 = vpack.c.b16 %v1166, %v1162
      %v1687 = vpack.c.b16 %v1167, %v1163
      %v1688 = vpack.c.b16 %v1168, %v1164
      %v1689 = vpack.c.b16 %v1169, %v1165
      %v1690 = vpack.c.b16 %v1174, %v1170
      %v1691 = vpack.c.b16 %v1175, %v1171
      %v1692 = vpack.c.b16 %v1176, %v1172
      %v1693 = vpack.c.b16 %v1177, %v1173
      %v1694 = vpack.c.b16 %v1182, %v1178
      %v1695 = vpack.c.b16 %v1183, %v1179
      %v1696 = vpack.c.b16 %v1184, %v1180
      %v1697 = vpack.c.b16 %v1185, %v1181
      %v1698 = vpack.c.b16 %v1190, %v1186
      %v1699 = vpack.c.b16 %v1191, %v1187
      %v1700 = vpack.c.b16 %v1192, %v1188
      %v1701 = vpack.c.b16 %v1193, %v1189
      %v1702 = vpack.c.b16 %v1198, %v1194
      %v1703 = vpack.c.b16 %v1199, %v1195
      %v1704 = vpack.c.b16 %v1200, %v1196
      %v1705 = vpack.c.b16 %v1201, %v1197
      %v1706 = vpack.c.b16 %v1206, %v1202
      %v1707 = vpack.c.b16 %v1207, %v1203
      %v1708 = vpack.c.b16 %v1208, %v1204
      %v1709 = vpack.c.b16 %v1209, %v1205
      %v1710 = vpack.c.b16 %v1214, %v1210
      %v1711 = vpack.c.b16 %v1215, %v1211
      %v1712 = vpack.c.b16 %v1216, %v1212
      %v1713 = vpack.c.b16 %v1217, %v1213
      %v1714 = vpack.c.b16 %v1222, %v1218
      %v1715 = vpack.c.b16 %v1223, %v1219
      %v1716 = vpack.c.b16 %v1224, %v1220
      %v1717 = vpack.c.b16 %v1225, %v1221
      %v1718 = vpack.c.b16 %v1230, %v1226
      %v1719 = vpack.c.b16 %v1231, %v1227
      %v1720 = vpack.c.b16 %v1232, %v1228
      %v1721 = vpack.c.b16 %v1233, %v1229
      %v1722 = vpack.c.b16 %v1238, %v1234
      %v1723 = vpack.c.b16 %v1239, %v1235
      %v1724 = vpack.c.b16 %v1240, %v1236
      %v1725 = vpack.c.b16 %v1241, %v1237
      %v1726 = vpack.c.b16 %v1246, %v1242
      %v1727 = vpack.c.b16 %v1247, %v1243
      %v1728 = vpack.c.b16 %v1248, %v1244
      %v1729 = vpack.c.b16 %v1249, %v1245
      %v1730 = vpack.c.b16 %v1254, %v1250
      %v1731 = vpack.c.b16 %v1255, %v1251
      %v1732 = vpack.c.b16 %v1256, %v1252
      %v1733 = vpack.c.b16 %v1257, %v1253
      %v1734 = vpack.c.b16 %v1262, %v1258
      %v1735 = vpack.c.b16 %v1263, %v1259
      %v1736 = vpack.c.b16 %v1264, %v1260
      %v1737 = vpack.c.b16 %v1265, %v1261
      %v1738 = vpack.c.b16 %v1270, %v1266
      %v1739 = vpack.c.b16 %v1271, %v1267
      %v1740 = vpack.c.b16 %v1272, %v1268
      %v1741 = vpack.c.b16 %v1273, %v1269
      %v1742 = vpack.c.b16 %v1278, %v1274
      %v1743 = vpack.c.b16 %v1279, %v1275
      %v1744 = vpack.c.b16 %v1280, %v1276
      %v1745 = vpack.c.b16 %v1281, %v1277
      %v1746 = vpack.c.b16 %v1286, %v1282
      %v1747 = vpack.c.b16 %v1287, %v1283
      %v1748 = vpack.c.b16 %v1288, %v1284
      %v1749 = vpack.c.b16 %v1289, %v1285
      %v1750 = vpack.c.b16 %v1294, %v1290
      %v1751 = vpack.c.b16 %v1295, %v1291
      %v1752 = vpack.c.b16 %v1296, %v1292
      %v1753 = vpack.c.b16 %v1297, %v1293
      %v1754 = vpack.c.b16 %v1302, %v1298
      %v1755 = vpack.c.b16 %v1303, %v1299
      %v1756 = vpack.c.b16 %v1304, %v1300
      %v1757 = vpack.c.b16 %v1305, %v1301
      %v1758 = vpack.c.b16 %v1310, %v1306
      %v1759 = vpack.c.b16 %v1311, %v1307
      %v1760 = vpack.c.b16 %v1312, %v1308
      %v1761 = vpack.c.b16 %v1313, %v1309
      %v1762 = vpack.c.b16 %v1318, %v1314
      %v1763 = vpack.c.b16 %v1319, %v1315
      %v1764 = vpack.c.b16 %v1320, %v1316
      %v1765 = vpack.c.b16 %v1321, %v1317
      %v1766 = vpack.c.b16 %v1326, %v1322
      %v1767 = vpack.c.b16 %v1327, %v1323
      %v1768 = vpack.c.b16 %v1328, %v1324
      %v1769 = vpack.c.b16 %v1329, %v1325
      %v1770 = vpack.c.b16 %v1334, %v1330
      %v1771 = vpack.c.b16 %v1335, %v1331
      %v1772 = vpack.c.b16 %v1336, %v1332
      %v1773 = vpack.c.b16 %v1337, %v1333
      %v1774 = vpack.c.b16 %v1342, %v1338
      %v1775 = vpack.c.b16 %v1343, %v1339
      %v1776 = vpack.c.b16 %v1344, %v1340
      %v1777 = vpack.c.b16 %v1345, %v1341
      %v1778 = vpack.c.b16 %v1350, %v1346
      %v1779 = vpack.c.b16 %v1351, %v1347
      %v1780 = vpack.c.b16 %v1352, %v1348
      %v1781 = vpack.c.b16 %v1353, %v1349
      %v1782 = vpack.c.b16 %v1358, %v1354
      %v1783 = vpack.c.b16 %v1359, %v1355
      %v1784 = vpack.c.b16 %v1360, %v1356
      %v1785 = vpack.c.b16 %v1361, %v1357
      %v1786 = vpack.c.b16 %v1366, %v1362
      %v1787 = vpack.c.b16 %v1367, %v1363
      %v1788 = vpack.c.b16 %v1368, %v1364
      %v1789 = vpack.c.b16 %v1369, %v1365
      %v1790 = vpack.c.b16 %v1374, %v1370
      %v1791 = vpack.c.b16 %v1375, %v1371
      %v1792 = vpack.c.b16 %v1376, %v1372
      %v1793 = vpack.c.b16 %v1377, %v1373
      %v1794 = vpack.c.b16 %v1382, %v1378
      %v1795 = vpack.c.b16 %v1383, %v1379
      %v1796 = vpack.c.b16 %v1384, %v1380
      %v1797 = vpack.c.b16 %v1385, %v1381
      %v1798 = vpack.c.b16 %v1390, %v1386
      %v1799 = vpack.c.b16 %v1391, %v1387
      %v1800 = vpack.c.b16 %v1392, %v1388
      %v1801 = vpack.c.b16 %v1393, %v1389
      %v1802 = vpack.c.b16 %v1398, %v1394
      %v1803 = vpack.c.b16 %v1399, %v1395
      %v1804 = vpack.c.b16 %v1400, %v1396
      %v1805 = vpack.c.b16 %v1401, %v1397
      %v1806 = vpack.c.b16 %v1406, %v1402
      %v1807 = vpack.c.b16 %v1407, %v1403
      %v1808 = vpack.c.b16 %v1408, %v1404
      %v1809 = vpack.c.b16 %v1409, %v1405
      %v1810 = vpack.c.b16 %v1414, %v1410
      %v1811 = vpack.c.b16 %v1415, %v1411
      %v1812 = vpack.c.b16 %v1416, %v1412
      %v1813 = vpack.c.b16 %v1417, %v1413
      %v1814 = vpack.c.b16 %v1422, %v1418
      %v1815 = vpack.c.b16 %v1423, %v1419
      %v1816 = vpack.c.b16 %v1424, %v1420
      %v1817 = vpack.c.b16 %v1425, %v1421
      %v1818 = vpack.c.b16 %v1430, %v1426
      %v1819 = vpack.c.b16 %v1431, %v1427
      %v1820 = vpack.c.b16 %v1432, %v1428
      %v1821 = vpack.c.b16 %v1433, %v1429
      %v1822 = vpack.c.b16 %v1438, %v1434
      %v1823 = vpack.c.b16 %v1439, %v1435
      %v1824 = vpack.c.b16 %v1440, %v1436
      %v1825 = vpack.c.b16 %v1441, %v1437
      %v1826 = vpack.c.b16 %v1446, %v1442
      %v1827 = vpack.c.b16 %v1447, %v1443
      %v1828 = vpack.c.b16 %v1448, %v1444
      %v1829 = vpack.c.b16 %v1449, %v1445
      %v1830 = vpack.c.b16 %v1454, %v1450
      %v1831 = vpack.c.b16 %v1455, %v1451
      %v1832 = vpack.c.b16 %v1456, %v1452
      %v1833 = vpack.c.b16 %v1457, %v1453
      %v1834 = vpack.c.b16 %v1462, %v1458
      %v1835 = vpack.c.b16 %v1463, %v1459
      %v1836 = vpack.c.b16 %v1464, %v1460
      %v1837 = vpack.c.b16 %v1465, %v1461
      %v1838 = vpack.c.b16 %v1470, %v1466
      %v1839 = vpack.c.b16 %v1471, %v1467
      %v1840 = vpack.c.b16 %v1472, %v1468
      %v1841 = vpack.c.b16 %v1473, %v1469
      %v1842 = vpack.c.b16 %v1478, %v1474
      %v1843 = vpack.c.b16 %v1479, %v1475
      %v1844 = vpack.c.b16 %v1480, %v1476
      %v1845 = vpack.c.b16 %v1481, %v1477
      %v1846 = vpack.c.b16 %v1486, %v1482
      %v1847 = vpack.c.b16 %v1487, %v1483
      %v1848 = vpack.c.b16 %v1488, %v1484
      %v1849 = vpack.c.b16 %v1489, %v1485
      %v1850 = vpack.c.b16 %v1494, %v1490
      %v1851 = vpack.c.b16 %v1495, %v1491
      %v1852 = vpack.c.b16 %v1496, %v1492
      %v1853 = vpack.c.b16 %v1497, %v1493
      %v1854 = vpack.c.b16 %v1502, %v1498
      %v1855 = vpack.c.b16 %v1503, %v1499
      %v1856 = vpack.c.b16 %v1504, %v1500
      %v1857 = vpack.c.b16 %v1505, %v1501
      %v1858 = vpack.c.b16 %v1510, %v1506
      %v1859 = vpack.c.b16 %v1511, %v1507
      %v1860 = vpack.c.b16 %v1512, %v1508
      %v1861 = vpack.c.b16 %v1513, %v1509
      %v1862 = vpack.c.b16 %v1518, %v1514
      %v1863 = vpack.c.b16 %v1519, %v1515
      %v1864 = vpack.c.b16 %v1520, %v1516
      %v1865 = vpack.c.b16 %v1521, %v1517
      %v1866 = vpack.c.b16 %v1526, %v1522
      %v1867 = vpack.c.b16 %v1527, %v1523
      %v1868 = vpack.c.b16 %v1528, %v1524
      %v1869 = vpack.c.b16 %v1529, %v1525
      %v1870 = vpack.c.b16 %v1534, %v1530
      %v1871 = vpack.c.b16 %v1535, %v1531
      %v1872 = vpack.c.b16 %v1536, %v1532
      %v1873 = vpack.c.b16 %v1537, %v1533
      %v1874 = vpack.c.b16 %v1542, %v1538
      %v1875 = vpack.c.b16 %v1543, %v1539
      %v1876 = vpack.c.b16 %v1544, %v1540
      %v1877 = vpack.c.b16 %v1545, %v1541
      %v1878 = vpack.c.b16 %v1550, %v1546
      %v1879 = vpack.c.b16 %v1551, %v1547
      %v1880 = vpack.c.b16 %v1552, %v1548
      %v1881 = vpack.c.b16 %v1553, %v1549
      %v1882 = vpack.c.b16 %v1558, %v1554
      %v1883 = vpack.c.b16 %v1559, %v1555
      %v1884 = vpack.c.b16 %v1560, %v1556
      %v1885 = vpack.c.b16 %v1561, %v1557
      %v1886 = vpack.c.b16 %v1566, %v1562
      %v1887 = vpack.c.b16 %v1567, %v1563
      %v1888 = vpack.c.b16 %v1568, %v1564
      %v1889 = vpack.c.b16 %v1569, %v1565
      %2210 = vmatprep.subr.bf16.mxu0 %v1599
      %2211 = vmatpush1.bf16.msra.mxu0 %v1598
      %2212 = vmatprep.subr.bf16.mxu0 %v1595
      %2213 = vmatpush1.bf16.msra.mxu0 %v1594
      %2214 = vmatprep.subr.bf16.mxu0 %v1591
      %2215 = vmatpush1.bf16.msra.mxu0 %v1590
      %2216 = vmatprep.subr.bf16.mxu0 %v1587
      %2217 = vmatpush1.bf16.msra.mxu0 %v1586
      %2218 = vmatprep.subr.bf16.mxu0 %v1583
      %2219 = vmatpush1.bf16.msra.mxu0 %v1582
      %2220 = vmatprep.subr.bf16.mxu0 %v1579
      %2221 = vmatpush1.bf16.msra.mxu0 %v1578
      %2222 = vmatprep.subr.bf16.mxu0 %v1575
      %2223 = vmatpush1.bf16.msra.mxu0 %v1574
      %2224 = vmatprep.subr.bf16.mxu0 %v1571
      %2225 = vmatpush1.bf16.msra.mxu0 %v1570
      %2226 = vmatprep.subr.bf16.mxu0 %v1631
      %2227 = vmatpush2.bf16.msra.mxu0 %v1630
      %2228 = vmatprep.subr.bf16.mxu0 %v1627
      %2229 = vmatpush2.bf16.msra.mxu0 %v1626
      %2230 = vmatprep.subr.bf16.mxu0 %v1623
      %2231 = vmatpush2.bf16.msra.mxu0 %v1622
      %2232 = vmatprep.subr.bf16.mxu0 %v1619
      %2233 = vmatpush2.bf16.msra.mxu0 %v1618
      %2234 = vmatprep.subr.bf16.mxu0 %v1615
      %2235 = vmatpush2.bf16.msra.mxu0 %v1614
      %2236 = vmatprep.subr.bf16.mxu0 %v1611
      %2237 = vmatpush2.bf16.msra.mxu0 %v1610
      %2238 = vmatprep.subr.bf16.mxu0 %v1607
      %2239 = vmatpush2.bf16.msra.mxu0 %v1606
      %2240 = vmatprep.subr.bf16.mxu0 %v1603
      %2241 = vmatpush2.bf16.msra.mxu0 %v1602
      %2242 = vmatprep.mubr.bf16.mxu0 %v591
      %2243 = vmatmul.mubr.bf16.gmra.mxu0 %v590
      %v2244 = vpop.f32.mrf.mxu0
      %v2245 = vadd.f32 0.0, %v2244
      %v2246 = vpop.f32.mrf.mxu0
      %v2247 = vadd.f32 0.0, %v2246
      %v2248 = vpop.f32.mrf.mxu0
      %v2249 = vpop.f32.mrf.mxu0
      %2250 = vdwg.mxu0
      %2251 = vmatprep.subr.bf16.mxu0 %v1663
      %2252 = vmatpush1.bf16.msra.mxu0 %v1662
      %2253 = vmatprep.subr.bf16.mxu0 %v1659
      %2254 = vmatpush1.bf16.msra.mxu0 %v1658
      %2255 = vmatprep.subr.bf16.mxu0 %v1655
      %2256 = vmatpush1.bf16.msra.mxu0 %v1654
      %2257 = vmatprep.subr.bf16.mxu0 %v1651
      %2258 = vmatpush1.bf16.msra.mxu0 %v1650
      %2259 = vmatprep.subr.bf16.mxu0 %v1647
      %2260 = vmatpush1.bf16.msra.mxu0 %v1646
      %2261 = vmatprep.subr.bf16.mxu0 %v1643
      %2262 = vmatpush1.bf16.msra.mxu0 %v1642
      %2263 = vmatprep.subr.bf16.mxu0 %v1639
      %2264 = vmatpush1.bf16.msra.mxu0 %v1638
      %2265 = vmatprep.subr.bf16.mxu0 %v1635
      %2266 = vmatpush1.bf16.msra.mxu0 %v1634
      %2267 = vmatprep.subr.bf16.mxu0 %v1695
      %2268 = vmatpush2.bf16.msra.mxu0 %v1694
      %2269 = vmatprep.subr.bf16.mxu0 %v1691
      %2270 = vmatpush2.bf16.msra.mxu0 %v1690
      %2271 = vmatprep.subr.bf16.mxu0 %v1687
      %2272 = vmatpush2.bf16.msra.mxu0 %v1686
      %2273 = vmatprep.subr.bf16.mxu0 %v1683
      %2274 = vmatpush2.bf16.msra.mxu0 %v1682
      %2275 = vmatprep.subr.bf16.mxu0 %v1679
      %2276 = vmatpush2.bf16.msra.mxu0 %v1678
      %2277 = vmatprep.subr.bf16.mxu0 %v1675
      %2278 = vmatpush2.bf16.msra.mxu0 %v1674
      %2279 = vmatprep.subr.bf16.mxu0 %v1671
      %2280 = vmatpush2.bf16.msra.mxu0 %v1670
      %2281 = vmatprep.subr.bf16.mxu0 %v1667
      %2282 = vmatpush2.bf16.msra.mxu0 %v1666
      %2283 = vmatprep.mubr.bf16.mxu0 %v593
      %2284 = vmatmul.mubr.bf16.gmra.mxu0 %v592
      %v2285 = vpop.f32.mrf.mxu0
      %v2286 = vadd.f32 %v2245, %v2285
      %v2287 = vpop.f32.mrf.mxu0
      %v2288 = vadd.f32 %v2247, %v2287
      %v2289 = vpop.f32.mrf.mxu0
      %v2290 = vpop.f32.mrf.mxu0
      %2291 = vdwg.mxu0
      %2292 = vmatprep.subr.bf16.mxu0 %v1727
      %2293 = vmatpush1.bf16.msra.mxu0 %v1726
      %2294 = vmatprep.subr.bf16.mxu0 %v1723
      %2295 = vmatpush1.bf16.msra.mxu0 %v1722
      %2296 = vmatprep.subr.bf16.mxu0 %v1719
      %2297 = vmatpush1.bf16.msra.mxu0 %v1718
      %2298 = vmatprep.subr.bf16.mxu0 %v1715
      %2299 = vmatpush1.bf16.msra.mxu0 %v1714
      %2300 = vmatprep.subr.bf16.mxu0 %v1711
      %2301 = vmatpush1.bf16.msra.mxu0 %v1710
      %2302 = vmatprep.subr.bf16.mxu0 %v1707
      %2303 = vmatpush1.bf16.msra.mxu0 %v1706
      %2304 = vmatprep.subr.bf16.mxu0 %v1703
      %2305 = vmatpush1.bf16.msra.mxu0 %v1702
      %2306 = vmatprep.subr.bf16.mxu0 %v1699
      %2307 = vmatpush1.bf16.msra.mxu0 %v1698
      %2308 = vmatprep.subr.bf16.mxu0 %v1759
      %2309 = vmatpush2.bf16.msra.mxu0 %v1758
      %2310 = vmatprep.subr.bf16.mxu0 %v1755
      %2311 = vmatpush2.bf16.msra.mxu0 %v1754
      %2312 = vmatprep.subr.bf16.mxu0 %v1751
      %2313 = vmatpush2.bf16.msra.mxu0 %v1750
      %2314 = vmatprep.subr.bf16.mxu0 %v1747
      %2315 = vmatpush2.bf16.msra.mxu0 %v1746
      %2316 = vmatprep.subr.bf16.mxu0 %v1743
      %2317 = vmatpush2.bf16.msra.mxu0 %v1742
      %2318 = vmatprep.subr.bf16.mxu0 %v1739
      %2319 = vmatpush2.bf16.msra.mxu0 %v1738
      %2320 = vmatprep.subr.bf16.mxu0 %v1735
      %2321 = vmatpush2.bf16.msra.mxu0 %v1734
      %2322 = vmatprep.subr.bf16.mxu0 %v1731
      %2323 = vmatpush2.bf16.msra.mxu0 %v1730
      %2324 = vmatprep.mubr.bf16.mxu0 %v595
      %2325 = vmatmul.mubr.bf16.gmra.mxu0 %v594
      %v2326 = vpop.f32.mrf.mxu0
      %v2327 = vadd.f32 %v2286, %v2326
      %v2328 = vpop.f32.mrf.mxu0
      %v2329 = vadd.f32 %v2288, %v2328
      %v2330 = vpop.f32.mrf.mxu0
      %v2331 = vpop.f32.mrf.mxu0
      %2332 = vdwg.mxu0
      %2333 = vmatprep.subr.bf16.mxu0 %v1791
      %2334 = vmatpush1.bf16.msra.mxu0 %v1790
      %2335 = vmatprep.subr.bf16.mxu0 %v1787
      %2336 = vmatpush1.bf16.msra.mxu0 %v1786
      %2337 = vmatprep.subr.bf16.mxu0 %v1783
      %2338 = vmatpush1.bf16.msra.mxu0 %v1782
      %2339 = vmatprep.subr.bf16.mxu0 %v1779
      %2340 = vmatpush1.bf16.msra.mxu0 %v1778
      %2341 = vmatprep.subr.bf16.mxu0 %v1775
      %2342 = vmatpush1.bf16.msra.mxu0 %v1774
      %2343 = vmatprep.subr.bf16.mxu0 %v1771
      %2344 = vmatpush1.bf16.msra.mxu0 %v1770
      %2345 = vmatprep.subr.bf16.mxu0 %v1767
      %2346 = vmatpush1.bf16.msra.mxu0 %v1766
      %2347 = vmatprep.subr.bf16.mxu0 %v1763
      %2348 = vmatpush1.bf16.msra.mxu0 %v1762
      %2349 = vmatprep.subr.bf16.mxu0 %v1823
      %2350 = vmatpush2.bf16.msra.mxu0 %v1822
      %2351 = vmatprep.subr.bf16.mxu0 %v1819
      %2352 = vmatpush2.bf16.msra.mxu0 %v1818
      %2353 = vmatprep.subr.bf16.mxu0 %v1815
      %2354 = vmatpush2.bf16.msra.mxu0 %v1814
      %2355 = vmatprep.subr.bf16.mxu0 %v1811
      %2356 = vmatpush2.bf16.msra.mxu0 %v1810
      %2357 = vmatprep.subr.bf16.mxu0 %v1807
      %2358 = vmatpush2.bf16.msra.mxu0 %v1806
      %2359 = vmatprep.subr.bf16.mxu0 %v1803
      %2360 = vmatpush2.bf16.msra.mxu0 %v1802
      %2361 = vmatprep.subr.bf16.mxu0 %v1799
      %2362 = vmatpush2.bf16.msra.mxu0 %v1798
      %2363 = vmatprep.subr.bf16.mxu0 %v1795
      %2364 = vmatpush2.bf16.msra.mxu0 %v1794
      %2365 = vmatprep.mubr.bf16.mxu0 %v597
      %2366 = vmatmul.mubr.bf16.gmra.mxu0 %v596
      %v2367 = vpop.f32.mrf.mxu0
      %v2368 = vadd.f32 %v2327, %v2367
      %v2369 = vpop.f32.mrf.mxu0
      %v2370 = vadd.f32 %v2329, %v2369
      %v2371 = vpop.f32.mrf.mxu0
      %v2372 = vpop.f32.mrf.mxu0
      %2373 = vdwg.mxu0
      %2374 = vmatprep.subr.bf16.mxu0 %v1855
      %2375 = vmatpush1.bf16.msra.mxu0 %v1854
      %2376 = vmatprep.subr.bf16.mxu0 %v1851
      %2377 = vmatpush1.bf16.msra.mxu0 %v1850
      %2378 = vmatprep.subr.bf16.mxu0 %v1847
      %2379 = vmatpush1.bf16.msra.mxu0 %v1846
      %2380 = vmatprep.subr.bf16.mxu0 %v1843
      %2381 = vmatpush1.bf16.msra.mxu0 %v1842
      %2382 = vmatprep.subr.bf16.mxu0 %v1839
      %2383 = vmatpush1.bf16.msra.mxu0 %v1838
      %2384 = vmatprep.subr.bf16.mxu0 %v1835
      %2385 = vmatpush1.bf16.msra.mxu0 %v1834
      %2386 = vmatprep.subr.bf16.mxu0 %v1831
      %2387 = vmatpush1.bf16.msra.mxu0 %v1830
      %2388 = vmatprep.subr.bf16.mxu0 %v1827
      %2389 = vmatpush1.bf16.msra.mxu0 %v1826
      %2390 = vmatprep.subr.bf16.mxu0 %v1887
      %2391 = vmatpush2.bf16.msra.mxu0 %v1886
      %2392 = vmatprep.subr.bf16.mxu0 %v1883
      %2393 = vmatpush2.bf16.msra.mxu0 %v1882
      %2394 = vmatprep.subr.bf16.mxu0 %v1879
      %2395 = vmatpush2.bf16.msra.mxu0 %v1878
      %2396 = vmatprep.subr.bf16.mxu0 %v1875
      %2397 = vmatpush2.bf16.msra.mxu0 %v1874
      %2398 = vmatprep.subr.bf16.mxu0 %v1871
      %2399 = vmatpush2.bf16.msra.mxu0 %v1870
      %2400 = vmatprep.subr.bf16.mxu0 %v1867
      %2401 = vmatpush2.bf16.msra.mxu0 %v1866
      %2402 = vmatprep.subr.bf16.mxu0 %v1863
      %2403 = vmatpush2.bf16.msra.mxu0 %v1862
      %2404 = vmatprep.subr.bf16.mxu0 %v1859
      %2405 = vmatpush2.bf16.msra.mxu0 %v1858
      %2406 = vmatprep.mubr.bf16.mxu0 %v599
      %2407 = vmatmul.mubr.bf16.gmra.mxu0 %v598
      %v2408 = vpop.f32.mrf.mxu0
      %v2409 = vadd.f32 %v2368, %v2408
      %v2410 = vpop.f32.mrf.mxu0
      %v2411 = vadd.f32 %v2370, %v2410
      %v2412 = vpop.f32.mrf.mxu0
      %v2413 = vpop.f32.mrf.mxu0
      %2414 = vdwg.mxu0
      %2415 = vmatprep.subr.bf16.mxu0 %v1601
      %2416 = vmatpush1.bf16.msra.mxu0 %v1600
      %2417 = vmatprep.subr.bf16.mxu0 %v1597
      %2418 = vmatpush1.bf16.msra.mxu0 %v1596
      %2419 = vmatprep.subr.bf16.mxu0 %v1593
      %2420 = vmatpush1.bf16.msra.mxu0 %v1592
      %2421 = vmatprep.subr.bf16.mxu0 %v1589
      %2422 = vmatpush1.bf16.msra.mxu0 %v1588
      %2423 = vmatprep.subr.bf16.mxu0 %v1585
      %2424 = vmatpush1.bf16.msra.mxu0 %v1584
      %2425 = vmatprep.subr.bf16.mxu0 %v1581
      %2426 = vmatpush1.bf16.msra.mxu0 %v1580
      %2427 = vmatprep.subr.bf16.mxu0 %v1577
      %2428 = vmatpush1.bf16.msra.mxu0 %v1576
      %2429 = vmatprep.subr.bf16.mxu0 %v1573
      %2430 = vmatpush1.bf16.msra.mxu0 %v1572
      %2431 = vmatprep.subr.bf16.mxu0 %v1633
      %2432 = vmatpush2.bf16.msra.mxu0 %v1632
      %2433 = vmatprep.subr.bf16.mxu0 %v1629
      %2434 = vmatpush2.bf16.msra.mxu0 %v1628
      %2435 = vmatprep.subr.bf16.mxu0 %v1625
      %2436 = vmatpush2.bf16.msra.mxu0 %v1624
      %2437 = vmatprep.subr.bf16.mxu0 %v1621
      %2438 = vmatpush2.bf16.msra.mxu0 %v1620
      %2439 = vmatprep.subr.bf16.mxu0 %v1617
      %2440 = vmatpush2.bf16.msra.mxu0 %v1616
      %2441 = vmatprep.subr.bf16.mxu0 %v1613
      %2442 = vmatpush2.bf16.msra.mxu0 %v1612
      %2443 = vmatprep.subr.bf16.mxu0 %v1609
      %2444 = vmatpush2.bf16.msra.mxu0 %v1608
      %2445 = vmatprep.subr.bf16.mxu0 %v1605
      %2446 = vmatpush2.bf16.msra.mxu0 %v1604
      %2447 = vmatprep.mubr.bf16.mxu0 %v591
      %2448 = vmatmul.mubr.bf16.gmra.mxu0 %v590
      %v2449 = vpop.f32.mrf.mxu0
      %v2450 = vadd.f32 0.0, %v2449
      %v2451 = vpop.f32.mrf.mxu0
      %v2452 = vadd.f32 0.0, %v2451
      %v2453 = vpop.f32.mrf.mxu0
      %v2454 = vpop.f32.mrf.mxu0
      %2455 = vdwg.mxu0
      %2456 = vmatprep.subr.bf16.mxu0 %v1665
      %2457 = vmatpush1.bf16.msra.mxu0 %v1664
      %2458 = vmatprep.subr.bf16.mxu0 %v1661
      %2459 = vmatpush1.bf16.msra.mxu0 %v1660
      %2460 = vmatprep.subr.bf16.mxu0 %v1657
      %2461 = vmatpush1.bf16.msra.mxu0 %v1656
      %2462 = vmatprep.subr.bf16.mxu0 %v1653
      %2463 = vmatpush1.bf16.msra.mxu0 %v1652
      %2464 = vmatprep.subr.bf16.mxu0 %v1649
      %2465 = vmatpush1.bf16.msra.mxu0 %v1648
      %2466 = vmatprep.subr.bf16.mxu0 %v1645
      %2467 = vmatpush1.bf16.msra.mxu0 %v1644
      %2468 = vmatprep.subr.bf16.mxu0 %v1641
      %2469 = vmatpush1.bf16.msra.mxu0 %v1640
      %2470 = vmatprep.subr.bf16.mxu0 %v1637
      %2471 = vmatpush1.bf16.msra.mxu0 %v1636
      %2472 = vmatprep.subr.bf16.mxu0 %v1697
      %2473 = vmatpush2.bf16.msra.mxu0 %v1696
      %2474 = vmatprep.subr.bf16.mxu0 %v1693
      %2475 = vmatpush2.bf16.msra.mxu0 %v1692
      %2476 = vmatprep.subr.bf16.mxu0 %v1689
      %2477 = vmatpush2.bf16.msra.mxu0 %v1688
      %2478 = vmatprep.subr.bf16.mxu0 %v1685
      %2479 = vmatpush2.bf16.msra.mxu0 %v1684
      %2480 = vmatprep.subr.bf16.mxu0 %v1681
      %2481 = vmatpush2.bf16.msra.mxu0 %v1680
      %2482 = vmatprep.subr.bf16.mxu0 %v1677
      %2483 = vmatpush2.bf16.msra.mxu0 %v1676
      %2484 = vmatprep.subr.bf16.mxu0 %v1673
      %2485 = vmatpush2.bf16.msra.mxu0 %v1672
      %2486 = vmatprep.subr.bf16.mxu0 %v1669
      %2487 = vmatpush2.bf16.msra.mxu0 %v1668
      %2488 = vmatprep.mubr.bf16.mxu0 %v593
      %2489 = vmatmul.mubr.bf16.gmra.mxu0 %v592
      %v2490 = vpop.f32.mrf.mxu0
      %v2491 = vadd.f32 %v2450, %v2490
      %v2492 = vpop.f32.mrf.mxu0
      %v2493 = vadd.f32 %v2452, %v2492
      %v2494 = vpop.f32.mrf.mxu0
      %v2495 = vpop.f32.mrf.mxu0
      %2496 = vdwg.mxu0
      %2497 = vmatprep.subr.bf16.mxu0 %v1729
      %2498 = vmatpush1.bf16.msra.mxu0 %v1728
      %2499 = vmatprep.subr.bf16.mxu0 %v1725
      %2500 = vmatpush1.bf16.msra.mxu0 %v1724
      %2501 = vmatprep.subr.bf16.mxu0 %v1721
      %2502 = vmatpush1.bf16.msra.mxu0 %v1720
      %2503 = vmatprep.subr.bf16.mxu0 %v1717
      %2504 = vmatpush1.bf16.msra.mxu0 %v1716
      %2505 = vmatprep.subr.bf16.mxu0 %v1713
      %2506 = vmatpush1.bf16.msra.mxu0 %v1712
      %2507 = vmatprep.subr.bf16.mxu0 %v1709
      %2508 = vmatpush1.bf16.msra.mxu0 %v1708
      %2509 = vmatprep.subr.bf16.mxu0 %v1705
      %2510 = vmatpush1.bf16.msra.mxu0 %v1704
      %2511 = vmatprep.subr.bf16.mxu0 %v1701
      %2512 = vmatpush1.bf16.msra.mxu0 %v1700
      %2513 = vmatprep.subr.bf16.mxu0 %v1761
      %2514 = vmatpush2.bf16.msra.mxu0 %v1760
      %2515 = vmatprep.subr.bf16.mxu0 %v1757
      %2516 = vmatpush2.bf16.msra.mxu0 %v1756
      %2517 = vmatprep.subr.bf16.mxu0 %v1753
      %2518 = vmatpush2.bf16.msra.mxu0 %v1752
      %2519 = vmatprep.subr.bf16.mxu0 %v1749
      %2520 = vmatpush2.bf16.msra.mxu0 %v1748
      %2521 = vmatprep.subr.bf16.mxu0 %v1745
      %2522 = vmatpush2.bf16.msra.mxu0 %v1744
      %2523 = vmatprep.subr.bf16.mxu0 %v1741
      %2524 = vmatpush2.bf16.msra.mxu0 %v1740
      %2525 = vmatprep.subr.bf16.mxu0 %v1737
      %2526 = vmatpush2.bf16.msra.mxu0 %v1736
      %2527 = vmatprep.subr.bf16.mxu0 %v1733
      %2528 = vmatpush2.bf16.msra.mxu0 %v1732
      %2529 = vmatprep.mubr.bf16.mxu0 %v595
      %2530 = vmatmul.mubr.bf16.gmra.mxu0 %v594
      %v2531 = vpop.f32.mrf.mxu0
      %v2532 = vadd.f32 %v2491, %v2531
      %v2533 = vpop.f32.mrf.mxu0
      %v2534 = vadd.f32 %v2493, %v2533
      %v2535 = vpop.f32.mrf.mxu0
      %v2536 = vpop.f32.mrf.mxu0
      %2537 = vdwg.mxu0
      %2538 = vmatprep.subr.bf16.mxu0 %v1793
      %2539 = vmatpush1.bf16.msra.mxu0 %v1792
      %2540 = vmatprep.subr.bf16.mxu0 %v1789
      %2541 = vmatpush1.bf16.msra.mxu0 %v1788
      %2542 = vmatprep.subr.bf16.mxu0 %v1785
      %2543 = vmatpush1.bf16.msra.mxu0 %v1784
      %2544 = vmatprep.subr.bf16.mxu0 %v1781
      %2545 = vmatpush1.bf16.msra.mxu0 %v1780
      %2546 = vmatprep.subr.bf16.mxu0 %v1777
      %2547 = vmatpush1.bf16.msra.mxu0 %v1776
      %2548 = vmatprep.subr.bf16.mxu0 %v1773
      %2549 = vmatpush1.bf16.msra.mxu0 %v1772
      %2550 = vmatprep.subr.bf16.mxu0 %v1769
      %2551 = vmatpush1.bf16.msra.mxu0 %v1768
      %2552 = vmatprep.subr.bf16.mxu0 %v1765
      %2553 = vmatpush1.bf16.msra.mxu0 %v1764
      %2554 = vmatprep.subr.bf16.mxu0 %v1825
      %2555 = vmatpush2.bf16.msra.mxu0 %v1824
      %2556 = vmatprep.subr.bf16.mxu0 %v1821
      %2557 = vmatpush2.bf16.msra.mxu0 %v1820
      %2558 = vmatprep.subr.bf16.mxu0 %v1817
      %2559 = vmatpush2.bf16.msra.mxu0 %v1816
      %2560 = vmatprep.subr.bf16.mxu0 %v1813
      %2561 = vmatpush2.bf16.msra.mxu0 %v1812
      %2562 = vmatprep.subr.bf16.mxu0 %v1809
      %2563 = vmatpush2.bf16.msra.mxu0 %v1808
      %2564 = vmatprep.subr.bf16.mxu0 %v1805
      %2565 = vmatpush2.bf16.msra.mxu0 %v1804
      %2566 = vmatprep.subr.bf16.mxu0 %v1801
      %2567 = vmatpush2.bf16.msra.mxu0 %v1800
      %2568 = vmatprep.subr.bf16.mxu0 %v1797
      %2569 = vmatpush2.bf16.msra.mxu0 %v1796
      %2570 = vmatprep.mubr.bf16.mxu0 %v597
      %2571 = vmatmul.mubr.bf16.gmra.mxu0 %v596
      %v2572 = vpop.f32.mrf.mxu0
      %v2573 = vadd.f32 %v2532, %v2572
      %v2574 = vpop.f32.mrf.mxu0
      %v2575 = vadd.f32 %v2534, %v2574
      %v2576 = vpop.f32.mrf.mxu0
      %v2577 = vpop.f32.mrf.mxu0
      %2578 = vdwg.mxu0
      %2579 = vmatprep.subr.bf16.mxu0 %v1857
      %2580 = vmatpush1.bf16.msra.mxu0 %v1856
      %2581 = vmatprep.subr.bf16.mxu0 %v1853
      %2582 = vmatpush1.bf16.msra.mxu0 %v1852
      %2583 = vmatprep.subr.bf16.mxu0 %v1849
      %2584 = vmatpush1.bf16.msra.mxu0 %v1848
      %2585 = vmatprep.subr.bf16.mxu0 %v1845
      %2586 = vmatpush1.bf16.msra.mxu0 %v1844
      %2587 = vmatprep.subr.bf16.mxu0 %v1841
      %2588 = vmatpush1.bf16.msra.mxu0 %v1840
      %2589 = vmatprep.subr.bf16.mxu0 %v1837
      %2590 = vmatpush1.bf16.msra.mxu0 %v1836
      %2591 = vmatprep.subr.bf16.mxu0 %v1833
      %2592 = vmatpush1.bf16.msra.mxu0 %v1832
      %2593 = vmatprep.subr.bf16.mxu0 %v1829
      %2594 = vmatpush1.bf16.msra.mxu0 %v1828
      %2595 = vmatprep.subr.bf16.mxu0 %v1889
      %2596 = vmatpush2.bf16.msra.mxu0 %v1888
      %2597 = vmatprep.subr.bf16.mxu0 %v1885
      %2598 = vmatpush2.bf16.msra.mxu0 %v1884
      %2599 = vmatprep.subr.bf16.mxu0 %v1881
      %2600 = vmatpush2.bf16.msra.mxu0 %v1880
      %2601 = vmatprep.subr.bf16.mxu0 %v1877
      %2602 = vmatpush2.bf16.msra.mxu0 %v1876
      %2603 = vmatprep.subr.bf16.mxu0 %v1873
      %2604 = vmatpush2.bf16.msra.mxu0 %v1872
      %2605 = vmatprep.subr.bf16.mxu0 %v1869
      %2606 = vmatpush2.bf16.msra.mxu0 %v1868
      %2607 = vmatprep.subr.bf16.mxu0 %v1865
      %2608 = vmatpush2.bf16.msra.mxu0 %v1864
      %2609 = vmatprep.subr.bf16.mxu0 %v1861
      %2610 = vmatpush2.bf16.msra.mxu0 %v1860
      %2611 = vmatprep.mubr.bf16.mxu0 %v599
      %2612 = vmatmul.mubr.bf16.gmra.mxu0 %v598
      %v2613 = vpop.f32.mrf.mxu0
      %v2614 = vadd.f32 %v2573, %v2613
      %v2615 = vpop.f32.mrf.mxu0
      %v2616 = vadd.f32 %v2575, %v2615
      %v2617 = vpop.f32.mrf.mxu0
      %v2618 = vpop.f32.mrf.mxu0
      %2619 = vdwg.mxu0
      %v2620 = vadd.f32 %v246, %v2409
      %v2621 = vadd.f32 %v247, %v2411
      %v2622 = vadd.f32 %v248, %v2614
      %v2623 = vadd.f32 %v249, %v2616
      %2624 = vst [vmem:[#allocation2] sm:$0xff] %v2620
      %2625 = vst [vmem:[#allocation2 + $0x8] sm:$0xff] %v2621
      %2626 = vst [vmem:[#allocation2 + $0x10] sm:$0xff] %v2622
      %2627 = vst [vmem:[#allocation2 + $0x18] sm:$0xff] %v2623
      %p2628 = scmp.eq.s32.totalorder %s16, 4
      // Predicated region
      $region45: #{encoder_a_forward.9} parent=39 // pred_check
        %p2629 = pneg %p2628
      $region46: #{encoder_a_forward.9} parent=39 // pred_check_branch
        %2631 = sbr.rel (%p2629) target = $region48
      $region47: #{encoder_a_forward.9} parent=39 // pred_region
        %v2632 = vld [vmem:[#allocation2] sm:$0xff]
        %v2633 = vld [vmem:[#allocation2 + $0x8] sm:$0xff]
        %v2634 = vld [vmem:[#allocation2 + $0x10] sm:$0xff]
        %v2635 = vld [vmem:[#allocation2 + $0x18] sm:$0xff]
        %v2636 = vld [vmem:[%s2] sm:$0xf]
        %v2638 = vlaneseq
        %v2639 = vshrl.u32 %v2638, 7
        %v2640 = vsub.s32 0, %v2639
        %v2641 = vrot.slane %v2636, %v2640
        %v2642 = vlaneseq
        %v2643 = vshrl.u32 %v2642, 7
        %v2644 = vsub.s32 1, %v2643
        %v2645 = vrot.slane %v2636, %v2644
        %v2646 = vlaneseq
        %v2647 = vshrl.u32 %v2646, 7
        %v2648 = vsub.s32 2, %v2647
        %v2649 = vrot.slane %v2636, %v2648
        %v2650 = vlaneseq
        %v2651 = vshrl.u32 %v2650, 7
        %v2652 = vsub.s32 3, %v2651
        %v2653 = vrot.slane %v2636, %v2652
        %v2658 = vadd.f32 %v2632, %v2641
        %v2659 = vadd.f32 %v2633, %v2645
        %v2660 = vadd.f32 %v2634, %v2649
        %v2661 = vadd.f32 %v2635, %v2653
        %v2662 = vmax.f32 %v2658, 0.0
        %v2663 = vmax.f32 %v2659, 0.0
        %v2664 = vmax.f32 %v2660, 0.0
        %v2665 = vmax.f32 %v2661, 0.0
        %v2666 = vpack.c.bf16 %v2662, %v2662
        %v2667 = vpack.c.bf16 %v2663, %v2663
        %v2668 = vpack.c.bf16 %v2664, %v2664
        %v2669 = vpack.c.bf16 %v2665, %v2665
        %v2670 = vld [vmem:[%s3] sm:$0xf]
        %v2671 = vld [vmem:[%s3 + $0x4] sm:$0xf]
        %v2672 = vld [vmem:[%s3 + $0x8] sm:$0xf]
        %v2673 = vld [vmem:[%s3 + $0xc] sm:$0xf]
        %v2674 = vld [vmem:[%s3 + $0x10] sm:$0xf]
        %v2675 = vld [vmem:[%s3 + $0x14] sm:$0xf]
        %v2676 = vld [vmem:[%s3 + $0x18] sm:$0xf]
        %v2677 = vld [vmem:[%s3 + $0x1c] sm:$0xf]
        %v2678 = vld [vmem:[%s3 + $0x20] sm:$0xf]
        %v2679 = vld [vmem:[%s3 + $0x24] sm:$0xf]
        %v2680 = vld [vmem:[%s3 + $0x28] sm:$0xf]
        %v2681 = vld [vmem:[%s3 + $0x2c] sm:$0xf]
        %v2682 = vld [vmem:[%s3 + $0x30] sm:$0xf]
        %v2683 = vld [vmem:[%s3 + $0x34] sm:$0xf]
        %v2684 = vld [vmem:[%s3 + $0x38] sm:$0xf]
        %v2685 = vld [vmem:[%s3 + $0x3c] sm:$0xf]
        %v2686 = vld [vmem:[%s3 + $0x40] sm:$0xf]
        %v2687 = vld [vmem:[%s3 + $0x44] sm:$0xf]
        %v2688 = vld [vmem:[%s3 + $0x48] sm:$0xf]
        %v2689 = vld [vmem:[%s3 + $0x4c] sm:$0xf]
        %v2690 = vld [vmem:[%s3 + $0x50] sm:$0xf]
        %v2691 = vld [vmem:[%s3 + $0x54] sm:$0xf]
        %v2692 = vld [vmem:[%s3 + $0x58] sm:$0xf]
        %v2693 = vld [vmem:[%s3 + $0x5c] sm:$0xf]
        %v2694 = vld [vmem:[%s3 + $0x60] sm:$0xf]
        %v2695 = vld [vmem:[%s3 + $0x64] sm:$0xf]
        %v2696 = vld [vmem:[%s3 + $0x68] sm:$0xf]
        %v2697 = vld [vmem:[%s3 + $0x6c] sm:$0xf]
        %v2698 = vld [vmem:[%s3 + $0x70] sm:$0xf]
        %v2699 = vld [vmem:[%s3 + $0x74] sm:$0xf]
        %v2700 = vld [vmem:[%s3 + $0x78] sm:$0xf]
        %v2701 = vld [vmem:[%s3 + $0x7c] sm:$0xf]
        %v2702 = vld [vmem:[%s3 + $0x80] sm:$0xf]
        %v2703 = vld [vmem:[%s3 + $0x84] sm:$0xf]
        %v2704 = vld [vmem:[%s3 + $0x88] sm:$0xf]
        %v2705 = vld [vmem:[%s3 + $0x8c] sm:$0xf]
        %v2706 = vld [vmem:[%s3 + $0x90] sm:$0xf]
        %v2707 = vld [vmem:[%s3 + $0x94] sm:$0xf]
        %v2708 = vld [vmem:[%s3 + $0x98] sm:$0xf]
        %v2709 = vld [vmem:[%s3 + $0x9c] sm:$0xf]
        %v2710 = vld [vmem:[%s3 + $0xa0] sm:$0xf]
        %v2711 = vld [vmem:[%s3 + $0xa4] sm:$0xf]
        %v2712 = vld [vmem:[%s3 + $0xa8] sm:$0xf]
        %v2713 = vld [vmem:[%s3 + $0xac] sm:$0xf]
        %v2714 = vld [vmem:[%s3 + $0xb0] sm:$0xf]
        %v2715 = vld [vmem:[%s3 + $0xb4] sm:$0xf]
        %v2716 = vld [vmem:[%s3 + $0xb8] sm:$0xf]
        %v2717 = vld [vmem:[%s3 + $0xbc] sm:$0xf]
        %v2718 = vld [vmem:[%s3 + $0xc0] sm:$0xf]
        %v2719 = vld [vmem:[%s3 + $0xc4] sm:$0xf]
        %v2720 = vld [vmem:[%s3 + $0xc8] sm:$0xf]
        %v2721 = vld [vmem:[%s3 + $0xcc] sm:$0xf]
        %v2722 = vld [vmem:[%s3 + $0xd0] sm:$0xf]
        %v2723 = vld [vmem:[%s3 + $0xd4] sm:$0xf]
        %v2724 = vld [vmem:[%s3 + $0xd8] sm:$0xf]
        %v2725 = vld [vmem:[%s3 + $0xdc] sm:$0xf]
        %v2726 = vld [vmem:[%s3 + $0xe0] sm:$0xf]
        %v2727 = vld [vmem:[%s3 + $0xe4] sm:$0xf]
        %v2728 = vld [vmem:[%s3 + $0xe8] sm:$0xf]
        %v2729 = vld [vmem:[%s3 + $0xec] sm:$0xf]
        %v2730 = vld [vmem:[%s3 + $0xf0] sm:$0xf]
        %v2731 = vld [vmem:[%s3 + $0xf4] sm:$0xf]
        %v2732 = vld [vmem:[%s3 + $0xf8] sm:$0xf]
        %v2733 = vld [vmem:[%s3 + $0xfc] sm:$0xf]
        %v2734 = vld [vmem:[%s4] sm:$0x1]
        %v2736 = vlaneseq
        %v2737 = vshrl.u32 %v2736, 7
        %v2738 = vsub.s32 0, %v2737
        %v2739 = vrot.slane %v2734, %v2738
        %v2805 = vunpack.c.l.b16 %v2670
        %v2806 = vunpack.c.l.b16 %v2671
        %v2807 = vunpack.c.l.b16 %v2672
        %v2808 = vunpack.c.l.b16 %v2673
        %v2809 = vunpack.c.l.b16 %v2674
        %v2810 = vunpack.c.l.b16 %v2675
        %v2811 = vunpack.c.l.b16 %v2676
        %v2812 = vunpack.c.l.b16 %v2677
        %v2813 = vunpack.c.l.b16 %v2678
        %v2814 = vunpack.c.l.b16 %v2679
        %v2815 = vunpack.c.l.b16 %v2680
        %v2816 = vunpack.c.l.b16 %v2681
        %v2817 = vunpack.c.l.b16 %v2682
        %v2818 = vunpack.c.l.b16 %v2683
        %v2819 = vunpack.c.l.b16 %v2684
        %v2820 = vunpack.c.l.b16 %v2685
        %v2821 = vunpack.c.l.b16 %v2686
        %v2822 = vunpack.c.l.b16 %v2687
        %v2823 = vunpack.c.l.b16 %v2688
        %v2824 = vunpack.c.l.b16 %v2689
        %v2825 = vunpack.c.l.b16 %v2690
        %v2826 = vunpack.c.l.b16 %v2691
        %v2827 = vunpack.c.l.b16 %v2692
        %v2828 = vunpack.c.l.b16 %v2693
        %v2829 = vunpack.c.l.b16 %v2694
        %v2830 = vunpack.c.l.b16 %v2695
        %v2831 = vunpack.c.l.b16 %v2696
        %v2832 = vunpack.c.l.b16 %v2697
        %v2833 = vunpack.c.l.b16 %v2698
        %v2834 = vunpack.c.l.b16 %v2699
        %v2835 = vunpack.c.l.b16 %v2700
        %v2836 = vunpack.c.l.b16 %v2701
        %v2837 = vunpack.c.l.b16 %v2702
        %v2838 = vunpack.c.l.b16 %v2703
        %v2839 = vunpack.c.l.b16 %v2704
        %v2840 = vunpack.c.l.b16 %v2705
        %v2841 = vunpack.c.l.b16 %v2706
        %v2842 = vunpack.c.l.b16 %v2707
        %v2843 = vunpack.c.l.b16 %v2708
        %v2844 = vunpack.c.l.b16 %v2709
        %v2845 = vunpack.c.l.b16 %v2710
        %v2846 = vunpack.c.l.b16 %v2711
        %v2847 = vunpack.c.l.b16 %v2712
        %v2848 = vunpack.c.l.b16 %v2713
        %v2849 = vunpack.c.l.b16 %v2714
        %v2850 = vunpack.c.l.b16 %v2715
        %v2851 = vunpack.c.l.b16 %v2716
        %v2852 = vunpack.c.l.b16 %v2717
        %v2853 = vunpack.c.l.b16 %v2718
        %v2854 = vunpack.c.l.b16 %v2719
        %v2855 = vunpack.c.l.b16 %v2720
        %v2856 = vunpack.c.l.b16 %v2721
        %v2857 = vunpack.c.l.b16 %v2722
        %v2858 = vunpack.c.l.b16 %v2723
        %v2859 = vunpack.c.l.b16 %v2724
        %v2860 = vunpack.c.l.b16 %v2725
        %v2861 = vunpack.c.l.b16 %v2726
        %v2862 = vunpack.c.l.b16 %v2727
        %v2863 = vunpack.c.l.b16 %v2728
        %v2864 = vunpack.c.l.b16 %v2729
        %v2865 = vunpack.c.l.b16 %v2730
        %v2866 = vunpack.c.l.b16 %v2731
        %v2867 = vunpack.c.l.b16 %v2732
        %v2868 = vunpack.c.l.b16 %v2733
        %v2869 = vpack.c.b16 %v2806, %v2805
        %v2870 = vpack.c.b16 %v2808, %v2807
        %v2871 = vpack.c.b16 %v2810, %v2809
        %v2872 = vpack.c.b16 %v2812, %v2811
        %v2873 = vpack.c.b16 %v2814, %v2813
        %v2874 = vpack.c.b16 %v2816, %v2815
        %v2875 = vpack.c.b16 %v2818, %v2817
        %v2876 = vpack.c.b16 %v2820, %v2819
        %v2877 = vpack.c.b16 %v2822, %v2821
        %v2878 = vpack.c.b16 %v2824, %v2823
        %v2879 = vpack.c.b16 %v2826, %v2825
        %v2880 = vpack.c.b16 %v2828, %v2827
        %v2881 = vpack.c.b16 %v2830, %v2829
        %v2882 = vpack.c.b16 %v2832, %v2831
        %v2883 = vpack.c.b16 %v2834, %v2833
        %v2884 = vpack.c.b16 %v2836, %v2835
        %v2885 = vpack.c.b16 %v2838, %v2837
        %v2886 = vpack.c.b16 %v2840, %v2839
        %v2887 = vpack.c.b16 %v2842, %v2841
        %v2888 = vpack.c.b16 %v2844, %v2843
        %v2889 = vpack.c.b16 %v2846, %v2845
        %v2890 = vpack.c.b16 %v2848, %v2847
        %v2891 = vpack.c.b16 %v2850, %v2849
        %v2892 = vpack.c.b16 %v2852, %v2851
        %v2893 = vpack.c.b16 %v2854, %v2853
        %v2894 = vpack.c.b16 %v2856, %v2855
        %v2895 = vpack.c.b16 %v2858, %v2857
        %v2896 = vpack.c.b16 %v2860, %v2859
        %v2897 = vpack.c.b16 %v2862, %v2861
        %v2898 = vpack.c.b16 %v2864, %v2863
        %v2899 = vpack.c.b16 %v2866, %v2865
        %v2900 = vpack.c.b16 %v2868, %v2867
        %2933 = vmatprep.subr.bf16.mxu0 0
        %2934 = vmatpush1.bf16.msra.mxu0 %v2876
        %2935 = vmatprep.subr.bf16.mxu0 0
        %2936 = vmatpush1.bf16.msra.mxu0 %v2875
        %2937 = vmatprep.subr.bf16.mxu0 0
        %2938 = vmatpush1.bf16.msra.mxu0 %v2874
        %2939 = vmatprep.subr.bf16.mxu0 0
        %2940 = vmatpush1.bf16.msra.mxu0 %v2873
        %2941 = vmatprep.subr.bf16.mxu0 0
        %2942 = vmatpush1.bf16.msra.mxu0 %v2872
        %2943 = vmatprep.subr.bf16.mxu0 0
        %2944 = vmatpush1.bf16.msra.mxu0 %v2871
        %2945 = vmatprep.subr.bf16.mxu0 0
        %2946 = vmatpush1.bf16.msra.mxu0 %v2870
        %2947 = vmatprep.subr.bf16.mxu0 0
        %2948 = vmatpush1.bf16.msra.mxu0 %v2869
        %2949 = vmatprep.subr.bf16.mxu0 0
        %2950 = vmatpush2.bf16.msra.mxu0 %v2884
        %2951 = vmatprep.subr.bf16.mxu0 0
        %2952 = vmatpush2.bf16.msra.mxu0 %v2883
        %2953 = vmatprep.subr.bf16.mxu0 0
        %2954 = vmatpush2.bf16.msra.mxu0 %v2882
        %2955 = vmatprep.subr.bf16.mxu0 0
        %2956 = vmatpush2.bf16.msra.mxu0 %v2881
        %2957 = vmatprep.subr.bf16.mxu0 0
        %2958 = vmatpush2.bf16.msra.mxu0 %v2880
        %2959 = vmatprep.subr.bf16.mxu0 0
        %2960 = vmatpush2.bf16.msra.mxu0 %v2879
        %2961 = vmatprep.subr.bf16.mxu0 0
        %2962 = vmatpush2.bf16.msra.mxu0 %v2878
        %2963 = vmatprep.subr.bf16.mxu0 0
        %2964 = vmatpush2.bf16.msra.mxu0 %v2877
        %2965 = vmatprep.mubr.bf16.mxu0 %v2667
        %2966 = vmatmul.mubr.bf16.gmra.mxu0 %v2666
        %v2967 = vpop.f32.mrf.mxu0
        %v2968 = vadd.f32 %v2739, %v2967
        %v2969 = vpop.f32.mrf.mxu0
        %v2970 = vpop.f32.mrf.mxu0
        %v2971 = vpop.f32.mrf.mxu0
        %2972 = vdwg.mxu0
        %2973 = vmatprep.subr.bf16.mxu0 0
        %2974 = vmatpush1.bf16.msra.mxu0 %v2892
        %2975 = vmatprep.subr.bf16.mxu0 0
        %2976 = vmatpush1.bf16.msra.mxu0 %v2891
        %2977 = vmatprep.subr.bf16.mxu0 0
        %2978 = vmatpush1.bf16.msra.mxu0 %v2890
        %2979 = vmatprep.subr.bf16.mxu0 0
        %2980 = vmatpush1.bf16.msra.mxu0 %v2889
        %2981 = vmatprep.subr.bf16.mxu0 0
        %2982 = vmatpush1.bf16.msra.mxu0 %v2888
        %2983 = vmatprep.subr.bf16.mxu0 0
        %2984 = vmatpush1.bf16.msra.mxu0 %v2887
        %2985 = vmatprep.subr.bf16.mxu0 0
        %2986 = vmatpush1.bf16.msra.mxu0 %v2886
        %2987 = vmatprep.subr.bf16.mxu0 0
        %2988 = vmatpush1.bf16.msra.mxu0 %v2885
        %2989 = vmatprep.subr.bf16.mxu0 0
        %2990 = vmatpush2.bf16.msra.mxu0 %v2900
        %2991 = vmatprep.subr.bf16.mxu0 0
        %2992 = vmatpush2.bf16.msra.mxu0 %v2899
        %2993 = vmatprep.subr.bf16.mxu0 0
        %2994 = vmatpush2.bf16.msra.mxu0 %v2898
        %2995 = vmatprep.subr.bf16.mxu0 0
        %2996 = vmatpush2.bf16.msra.mxu0 %v2897
        %2997 = vmatprep.subr.bf16.mxu0 0
        %2998 = vmatpush2.bf16.msra.mxu0 %v2896
        %2999 = vmatprep.subr.bf16.mxu0 0
        %3000 = vmatpush2.bf16.msra.mxu0 %v2895
        %3001 = vmatprep.subr.bf16.mxu0 0
        %3002 = vmatpush2.bf16.msra.mxu0 %v2894
        %3003 = vmatprep.subr.bf16.mxu0 0
        %3004 = vmatpush2.bf16.msra.mxu0 %v2893
        %3005 = vmatprep.mubr.bf16.mxu0 %v2669
        %3006 = vmatmul.mubr.bf16.gmra.mxu0 %v2668
        %v3007 = vpop.f32.mrf.mxu0
        %v3008 = vadd.f32 %v2968, %v3007
        %v3009 = vpop.f32.mrf.mxu0
        %v3010 = vpop.f32.mrf.mxu0
        %v3011 = vpop.f32.mrf.mxu0
        %3012 = vdwg.mxu0
        %3013 = vst [vmem:[%s5] sm:$0xff] %v3008
      $region48: #{encoder_a_forward.9} parent=39 // pred_fallthru
        _
      // Predicated region
      $region49: #{encoder_a_forward.9} parent=39 // pred_check
        %p3014 = pneg %p144
      $region50: #{encoder_a_forward.9} parent=39 // pred_check_branch
        %3016 = sbr.rel (%p3014) target = $region52
      $region51: #{encoder_a_forward.9} parent=39 // pred_region
        _
      $region52: #{encoder_a_forward.9} parent=39 // pred_fallthru
        _
      // Predicated region
      $region53: #{encoder_a_forward.9} parent=39 // pred_check
        %p3017 = pneg %p144
      $region54: #{encoder_a_forward.9} parent=39 // pred_check_branch
        %3019 = sbr.rel (%p3017) target = $region56
      $region55: #{encoder_a_forward.9} parent=39 // pred_region
        _
      $region56: #{encoder_a_forward.9} parent=39 // pred_fallthru
        _
    $region40: #{encoder_a_forward.9} parent=5 // pred_fallthru
      _
    %p3020 = scmp.le.s32.totalorder 2, %s11
    // Predicated region
    $region57: #{encoder_a_forward.9} parent=5 // pred_check
      %p3021 = pneg %p3020
    $region58: #{encoder_a_forward.9} parent=5 // pred_check_branch
      %3023 = sbr.rel (%p3021) target = $region60
    $region59: #{encoder_a_forward.9} parent=5 // pred_region
      %s3024 = ssub.s32 %s11, 2
    $region60: #{encoder_a_forward.9} parent=5 // pred_fallthru
      _
  $region6: #{encoder_a_forward.9} parent=0 // loop_footer
    %s15 = sadd.s32 1, %s11
  $region7: #{encoder_a_forward.9} parent=0 // loop_footer_branch
    %10 = sbr.rel target = $region3
  $region8: #{encoder_a_forward.9} parent=0 // loop_exit
    _

</llo_original>
